<compile_context>
chip_gen: v5e
topology: v5e:2x2
jax: 0.10.0
libtpu: 0.0.40
codegen_flags: <defaults>
</compile_context>

<pallas_src>
import functools
import math

import jax
import jax.numpy as jnp
from jax import lax
from jax.experimental import pallas as pl
from jax.experimental.pallas import tpu as pltpu

# ---------------------------------------------------------------------------
# Static geometry: FC1's 9216 = 64 * 12 * 12 pins the input spatial size to 28x28.
# ---------------------------------------------------------------------------
H_IN = W_IN = 28
C1_OUT, C2_OUT = 32, 64
H1 = W1 = 26                 # conv1 valid output (width-26 raster)
H2 = W2 = 24                 # conv2 valid output
HP = WP = 12                 # after 2x2 max-pool
P1 = H1 * W1                 # 676 conv1 raster rows
P1_PAD = 680                 # + 4 zero-pad rows (multiple of 8)
P2 = H2 * W1                 # 624 conv2 raster rows (cols 24,25 are wrap junk)
POOL_ROWS = HP * WP          # 144
FC1_IN = POOL_ROWS * C2_OUT  # 9216
FC1_OUT = 128

# Static sanity checks for the raster-shift trick (review correctness concern):
# (a) conv2's largest tap offset stays inside the padded c1 slab;
# (b) for VALID conv2 columns (w2 < 24) every tap reads a VALID conv1 row, so
#     pad rows / wrap columns only feed conv2 columns >= 24, which the pool
#     (columns 0..23 only) never reads.
assert (P2 - 1) + 2 * W1 + 2 < P1_PAD
assert (H2 - 1 + 2) * W1 + (W2 - 1 + 2) < P1


# ---------------------------------------------------------------------------
# Kernel 1: fused conv1 + ReLU + conv2 + ReLU + 2x2 max-pool (G images / step)
# ---------------------------------------------------------------------------
def _conv_pool_kernel(x_ref, w1_ref, b1_ref, w2_ref, b2_ref, out_ref,
                      c1_ref, c2_ref, *, g_imgs):
    f32 = jnp.float32
    for g in range(g_imgs):
        # conv1: one MXU matmul per image over the wrapper-built im2col
        # (680, K1_PAD) x (K1_PAD, 32), f32 accumulation; pad rows give relu(b1).
        a1 = jnp.dot(x_ref[g], w1_ref[...], preferred_element_type=f32)   # (680, 32)
        c1_ref[g] = jnp.maximum(a1 + b1_ref[...], 0.0).astype(c1_ref.dtype)

        # conv2: single K=288 bf16 MXU matmul; LHS is the concat of the 9 shifted
        # (624, 32) bands of c1 (in-VMEM im2col, no per-tap accumulator RMW).
        lhs = jnp.concatenate(
            [c1_ref[g, pl.ds(dh * W1 + dw, P2), :]
             for dh in range(3) for dw in range(3)],
            axis=1)                                                        # (624, 288) bf16
        a2 = jnp.dot(lhs, w2_ref[...], preferred_element_type=f32)        # (624, 64)
        c2_ref[...] = jnp.maximum(a2 + b2_ref[...], 0.0)

        # 2x2 / stride-2 max-pool over the valid 24x24 region; assemble the 12
        # row-groups and store the whole (144, 64) pooled tile once per image.
        pieces = []
        for p in range(HP):
            base = 2 * p * W1
            e0 = c2_ref[pl.ds(base, WP, 2), :]            # row 2p,   even cols
            o0 = c2_ref[pl.ds(base + 1, WP, 2), :]        # row 2p,   odd  cols
            e1 = c2_ref[pl.ds(base + W1, WP, 2), :]       # row 2p+1, even cols
            o1 = c2_ref[pl.ds(base + W1 + 1, WP, 2), :]   # row 2p+1, odd  cols
            pieces.append(jnp.maximum(jnp.maximum(e0, o0), jnp.maximum(e1, o1)))
        out_ref[g] = jnp.concatenate(pieces, axis=0).astype(out_ref.dtype)


def conv_pool_block(x_col, w1, b1, w2, b2, *, g_imgs):
    B, rows, k1 = x_col.shape
    assert rows == P1_PAD and B % g_imgs == 0
    kernel = functools.partial(_conv_pool_kernel, g_imgs=g_imgs)
    return pl.pallas_call(
        kernel,
        out_shape=jax.ShapeDtypeStruct((B, POOL_ROWS, C2_OUT), jnp.bfloat16),
        grid=(B // g_imgs,),
        in_specs=[
            pl.BlockSpec((g_imgs, P1_PAD, k1), lambda b: (b, 0, 0)),
            pl.BlockSpec((k1, C1_OUT), lambda b: (0, 0)),
            pl.BlockSpec((1, C1_OUT), lambda b: (0, 0)),
            pl.BlockSpec((9 * C1_OUT, C2_OUT), lambda b: (0, 0)),
            pl.BlockSpec((1, C2_OUT), lambda b: (0, 0)),
        ],
        out_specs=pl.BlockSpec((g_imgs, POOL_ROWS, C2_OUT), lambda b: (b, 0, 0)),
        scratch_shapes=[
            pltpu.VMEM((g_imgs, P1_PAD, C1_OUT), jnp.bfloat16),  # conv1 activations
            pltpu.VMEM((P2, C2_OUT), jnp.float32),               # conv2 activations (reused per image)
        ],
        compiler_params=pltpu.CompilerParams(
            dimension_semantics=("parallel",),   # batch tiles split across TensorCores
            vmem_limit_bytes=32 * 1024 * 1024,
        ),
    )(x_col, w1, b1, w2, b2)


# ---------------------------------------------------------------------------
# Kernel 2: fused FC1 (+ReLU) + FC2; K tiled (2 chunks) on an "arbitrary" axis,
# batch (M) tiles on a "parallel" axis.
# ---------------------------------------------------------------------------
def _fc_kernel(x_ref, w3_ref, b3_ref, w4_ref, b4_ref, out_ref, acc_ref):
    k = pl.program_id(1)

    @pl.when(k == 0)
    def _init():
        acc_ref[...] = jnp.zeros_like(acc_ref)

    acc_ref[...] += jnp.dot(x_ref[...], w3_ref[...],
                            preferred_element_type=jnp.float32)

    @pl.when(k == pl.num_programs(1) - 1)
    def _finalize():
        h = jnp.maximum(acc_ref[...] + b3_ref[...], 0.0)                  # FC1 + ReLU
        out = jnp.dot(h.astype(jnp.bfloat16), w4_ref[...],
                      preferred_element_type=jnp.float32) + b4_ref[...]   # FC2
        out_ref[...] = out.astype(out_ref.dtype)


def fc_block(flat, w3, b3, w4, b4, *, block_k=4608):
    B, K = flat.shape
    n_hidden = w3.shape[1]
    n_out = w4.shape[1]
    bm = B if B <= 128 else 128          # demo batches fit one M tile
    assert B % bm == 0 and K % block_k == 0
    grid = (B // bm, K // block_k)
    return pl.pallas_call(
        _fc_kernel,
        out_shape=jax.ShapeDtypeStruct((B, n_out), jnp.float32),
        grid=grid,
        in_specs=[
            pl.BlockSpec((bm, block_k), lambda i, k: (i, k)),
            pl.BlockSpec((block_k, n_hidden), lambda i, k: (k, 0)),
            pl.BlockSpec((1, n_hidden), lambda i, k: (0, 0)),
            pl.BlockSpec((n_hidden, n_out), lambda i, k: (0, 0)),
            pl.BlockSpec((1, n_out), lambda i, k: (0, 0)),
        ],
        out_specs=pl.BlockSpec((bm, n_out), lambda i, k: (i, 0)),
        scratch_shapes=[pltpu.VMEM((bm, n_hidden), jnp.float32)],
        compiler_params=pltpu.CompilerParams(
            dimension_semantics=("parallel", "arbitrary"),
            vmem_limit_bytes=32 * 1024 * 1024,
        ),
    )(flat, w3, b3, w4, b4)


# ---------------------------------------------------------------------------
# Parameters: created in PyTorch layouts, repacked once into kernel layouts.
# ---------------------------------------------------------------------------
def init_torch_layout_params(key, in_channels, output_dim):
    ks = jax.random.split(key, 8)

    def w(k, shape, fan_in):
        return jax.random.normal(k, shape, jnp.float32) / jnp.sqrt(float(fan_in))

    return {
        "conv1_w": w(ks[0], (C1_OUT, in_channels, 3, 3), 9 * in_channels),
        "conv1_b": 0.05 * jax.random.normal(ks[1], (C1_OUT,), jnp.float32),
        "conv2_w": w(ks[2], (C2_OUT, C1_OUT, 3, 3), 9 * C1_OUT),
        "conv2_b": 0.05 * jax.random.normal(ks[3], (C2_OUT,), jnp.float32),
        "fc1_w": w(ks[4], (FC1_OUT, FC1_IN), FC1_IN),
        "fc1_b": 0.05 * jax.random.normal(ks[5], (FC1_OUT,), jnp.float32),
        "fc2_w": w(ks[6], (output_dim, FC1_OUT), FC1_OUT),
        "fc2_b": 0.05 * jax.random.normal(ks[7], (output_dim,), jnp.float32),
    }


def _k1_pad(cin):
    return max(16, ((9 * cin + 15) // 16) * 16)


def convert_params(tp):
    """One-time repack of PyTorch-layout weights into the kernel layouts (all bf16)."""
    cin = tp["conv1_w"].shape[1]
    out_dim = tp["fc2_w"].shape[0]
    k1 = 9 * cin
    k1p = _k1_pad(cin)
    # Conv weights -> im2col rows in (kh, kw, cin) order; conv1 rows zero-padded to k1p.
    w1 = tp["conv1_w"].transpose(2, 3, 1, 0).reshape(k1, C1_OUT)
    w1 = jnp.pad(w1, ((0, k1p - k1), (0, 0))).astype(jnp.bfloat16)
    w2 = (tp["conv2_w"].transpose(2, 3, 1, 0)
          .reshape(9 * C1_OUT, C2_OUT).astype(jnp.bfloat16))
    # FC1: permute the 9216 input rows from torch's NCHW flatten (c, p, q) order to
    # the kernel's pooled (p, q, c) order -> no activation transpose needed.
    w3 = (tp["fc1_w"].T.reshape(C2_OUT, HP, WP, FC1_OUT)
          .transpose(1, 2, 0, 3).reshape(FC1_IN, FC1_OUT).astype(jnp.bfloat16))
    w4 = tp["fc2_w"].T.astype(jnp.bfloat16)
    return {
        "w1": w1, "b1": tp["conv1_b"].reshape(1, C1_OUT).astype(jnp.float32),
        "w2": w2, "b2": tp["conv2_b"].reshape(1, C2_OUT).astype(jnp.float32),
        "w3": w3, "b3": tp["fc1_b"].reshape(1, FC1_OUT).astype(jnp.float32),
        "w4": w4, "b4": tp["fc2_b"].reshape(1, out_dim).astype(jnp.float32),
    }


# ---------------------------------------------------------------------------
# Forward pass
# ---------------------------------------------------------------------------
def simple_cnn_forward(params, x_nchw, *, max_images_per_step=16):
    B, cin, H, W = x_nchw.shape
    assert (H, W) == (H_IN, W_IN), "FC1's 9216 inputs imply a 28x28 image"
    g_imgs = math.gcd(B, max_images_per_step)   # images per kernel-1 grid step

    # NCHW -> NHWC (bf16), then conv1 im2col with (kh, kw, ci) lane order,
    # zero-padded to 680 rows / K1_PAD lanes per image (layout plumbing in XLA).
    x = jnp.transpose(x_nchw, (0, 2, 3, 1)).astype(jnp.bfloat16)
    cols = [x[:, kh:kh + H1, kw:kw + W1, :] for kh in range(3) for kw in range(3)]
    x_col = jnp.concatenate(cols, axis=-1).reshape(B, P1, 9 * cin)
    x_col = jnp.pad(x_col, ((0, 0), (0, P1_PAD - P1), (0, _k1_pad(cin) - 9 * cin)))

    pooled = conv_pool_block(x_col, params["w1"], params["b1"],
                             params["w2"], params["b2"],
                             g_imgs=g_imgs)                     # (B, 144, 64) bf16
    flat = pooled.reshape(B, FC1_IN)                            # free row-major reshape
    return fc_block(flat, params["w3"], params["b3"], params["w4"], params["b4"])


# ---------------------------------------------------------------------------
# Pure-JAX reference (PyTorch semantics, torch-layout weights, f32 HIGHEST)
# ---------------------------------------------------------------------------
def reference_forward(tp, x_nchw):
    dn = ("NCHW", "OIHW", "NCHW")
    hi = lax.Precision.HIGHEST
    y = lax.conv_general_dilated(x_nchw, tp["conv1_w"], (1, 1), "VALID",
                                 dimension_numbers=dn, precision=hi)
    y = jax.nn.relu(y + tp["conv1_b"].reshape(1, -1, 1, 1))
    y = lax.conv_general_dilated(y, tp["conv2_w"], (1, 1), "VALID",
                                 dimension_numbers=dn, precision=hi)
    y = jax.nn.relu(y + tp["conv2_b"].reshape(1, -1, 1, 1))
    y = lax.reduce_window(y, -jnp.inf, lax.max, (1, 1, 2, 2), (1, 1, 2, 2), "VALID")
    y = y.reshape(y.shape[0], -1)                     # torch x.view(B, -1) on NCHW
    y = jax.nn.relu(jnp.dot(y, tp["fc1_w"].T, precision=hi) + tp["fc1_b"])
    return jnp.dot(y, tp["fc2_w"].T, precision=hi) + tp["fc2_b"]


if __name__ == "__main__":
    batch, in_channels, output_dim = 2, 1, 10
    key = jax.random.PRNGKey(0)
    k_x, k_p = jax.random.split(key)

    x = jax.random.normal(k_x, (batch, in_channels, H_IN, W_IN), jnp.float32)
    torch_params = init_torch_layout_params(k_p, in_channels, output_dim)
    params = convert_params(torch_params)

    fwd = jax.jit(simple_cnn_forward)
    y = fwd(params, x)
    jax.block_until_ready(y)
    assert y.shape == (batch, output_dim) and y.dtype == jnp.float32

    # bf16 operands (inference path) vs f32-HIGHEST reference -> loose tolerance.
    y_ref = reference_forward(torch_params, x)
    max_err = float(jnp.max(jnp.abs(y - y_ref)))
    assert max_err < 1e-1, f"kernel/reference mismatch: max|err|={max_err}"
    print("KERNEL_OK")
</pallas_src>

<mosaic_0001>
module attributes {stable_mosaic.version = 11 : i64} {
  func.func @_conv_pool_kernel(%arg0: i32, %arg1: memref<2x680x16xbf16, #tpu.memory_space<vmem>>, %arg2: memref<16x32xbf16, #tpu.memory_space<vmem>>, %arg3: memref<1x32xf32, #tpu.memory_space<vmem>>, %arg4: memref<288x64xbf16, #tpu.memory_space<vmem>>, %arg5: memref<1x64xf32, #tpu.memory_space<vmem>>, %arg6: memref<2x144x64xbf16, #tpu.memory_space<vmem>>, %arg7: memref<2x680x32xbf16, #tpu.memory_space<vmem>>, %arg8: memref<624x64xf32, #tpu.memory_space<vmem>>) attributes {dimension_semantics = [#tpu.dimension_semantics<parallel>], iteration_bounds = array<i64: 1>, scalar_prefetch = 0 : i64, scratch_operands = 2 : i64, tpu.core_type = #tpu.core_type<tc>, window_params = [{transform_indices = @transform_0, window_bounds = array<i64: 2, 680, 16>}, {pipeline_mode = #tpu.pipeline_mode<synchronous>, transform_indices = @transform_1, window_bounds = array<i64: 16, 32>}, {pipeline_mode = #tpu.pipeline_mode<synchronous>, transform_indices = @transform_2, window_bounds = array<i64: 1, 32>}, {pipeline_mode = #tpu.pipeline_mode<synchronous>, transform_indices = @transform_3, window_bounds = array<i64: 288, 64>}, {pipeline_mode = #tpu.pipeline_mode<synchronous>, transform_indices = @transform_4, window_bounds = array<i64: 1, 64>}, {transform_indices = @transform_5, window_bounds = array<i64: 2, 144, 64>}]} {
    %c0 = arith.constant 0 : index
    %c0_0 = arith.constant 0 : index
    %c0_1 = arith.constant 0 : index
    %0 = vector.load %arg1[%c0, %c0_0, %c0_1] : memref<2x680x16xbf16, #tpu.memory_space<vmem>>, vector<1x680x16xbf16>
    %1 = vector.shape_cast %0 : vector<1x680x16xbf16> to vector<680x16xbf16>
    %c0_2 = arith.constant 0 : index
    %c0_3 = arith.constant 0 : index
    %2 = vector.load %arg2[%c0_2, %c0_3] : memref<16x32xbf16, #tpu.memory_space<vmem>>, vector<16x32xbf16>
    %cst = arith.constant dense<0.000000e+00> : vector<680x32xf32>
    %3 = tpu.matmul %1, %2, %cst {dimension_numbers = #tpu.dot_dimension_numbers<[1], [0], [0], [1], [0, 0, 1, 1], [], []>} : vector<680x16xbf16>, vector<16x32xbf16>, vector<680x32xf32> -> vector<680x32xf32>
    %c0_4 = arith.constant 0 : index
    %c0_5 = arith.constant 0 : index
    %4 = vector.load %arg3[%c0_4, %c0_5] : memref<1x32xf32, #tpu.memory_space<vmem>>, vector<1x32xf32>
    %5 = vector.broadcast %4 : vector<1x32xf32> to vector<680x32xf32>
    %6 = arith.addf %3, %5 : vector<680x32xf32>
    %cst_6 = arith.constant 0.000000e+00 : f32
    %7 = vector.broadcast %cst_6 : f32 to vector<680x32xf32>
    %8 = arith.maximumf %6, %7 : vector<680x32xf32>
    %9 = arith.truncf %8 : vector<680x32xf32> to vector<680x32xbf16>
    %c0_7 = arith.constant 0 : index
    %c0_8 = arith.constant 0 : index
    %c0_9 = arith.constant 0 : index
    %10 = vector.load %arg7[%c0_7, %c0_8, %c0_9] : memref<2x680x32xbf16, #tpu.memory_space<vmem>>, vector<1x680x32xbf16>
    %11 = vector.shape_cast %10 : vector<1x680x32xbf16> to vector<680x32xbf16>
    %12 = vector.shape_cast %9 : vector<680x32xbf16> to vector<1x680x32xbf16>
    tpu.vector_store %arg7[%c0_7, %c0_8, %c0_9], %12 {strides = array<i32>} : memref<2x680x32xbf16, #tpu.memory_space<vmem>>, vector<1x680x32xbf16>,
    %c0_10 = arith.constant 0 : index
    %c0_11 = arith.constant 0 : index
    %c0_12 = arith.constant 0 : index
    %13 = vector.load %arg7[%c0_10, %c0_11, %c0_12] : memref<2x680x32xbf16, #tpu.memory_space<vmem>>, vector<1x624x32xbf16>
    %14 = vector.shape_cast %13 : vector<1x624x32xbf16> to vector<624x32xbf16>
    %c0_13 = arith.constant 0 : index
    %c1 = arith.constant 1 : index
    %c0_14 = arith.constant 0 : index
    %15 = vector.load %arg7[%c0_13, %c1, %c0_14] : memref<2x680x32xbf16, #tpu.memory_space<vmem>>, vector<1x624x32xbf16>
    %16 = vector.shape_cast %15 : vector<1x624x32xbf16> to vector<624x32xbf16>
    %c0_15 = arith.constant 0 : index
    %c2 = arith.constant 2 : index
    %c0_16 = arith.constant 0 : index
    %17 = vector.load %arg7[%c0_15, %c2, %c0_16] : memref<2x680x32xbf16, #tpu.memory_space<vmem>>, vector<1x624x32xbf16>
    %18 = vector.shape_cast %17 : vector<1x624x32xbf16> to vector<624x32xbf16>
    %c0_17 = arith.constant 0 : index
    %c26 = arith.constant 26 : index
    %c0_18 = arith.constant 0 : index
    %19 = vector.load %arg7[%c0_17, %c26, %c0_18] : memref<2x680x32xbf16, #tpu.memory_space<vmem>>, vector<1x624x32xbf16>
    %20 = vector.shape_cast %19 : vector<1x624x32xbf16> to vector<624x32xbf16>
    %c0_19 = arith.constant 0 : index
    %c27 = arith.constant 27 : index
    %c0_20 = arith.constant 0 : index
    %21 = vector.load %arg7[%c0_19, %c27, %c0_20] : memref<2x680x32xbf16, #tpu.memory_space<vmem>>, vector<1x624x32xbf16>
    %22 = vector.shape_cast %21 : vector<1x624x32xbf16> to vector<624x32xbf16>
    %c0_21 = arith.constant 0 : index
    %c28 = arith.constant 28 : index
    %c0_22 = arith.constant 0 : index
    %23 = vector.load %arg7[%c0_21, %c28, %c0_22] : memref<2x680x32xbf16, #tpu.memory_space<vmem>>, vector<1x624x32xbf16>
    %24 = vector.shape_cast %23 : vector<1x624x32xbf16> to vector<624x32xbf16>
    %c0_23 = arith.constant 0 : index
    %c52 = arith.constant 52 : index
    %c0_24 = arith.constant 0 : index
    %25 = vector.load %arg7[%c0_23, %c52, %c0_24] : memref<2x680x32xbf16, #tpu.memory_space<vmem>>, vector<1x624x32xbf16>
    %26 = vector.shape_cast %25 : vector<1x624x32xbf16> to vector<624x32xbf16>
    %c0_25 = arith.constant 0 : index
    %c53 = arith.constant 53 : index
    %c0_26 = arith.constant 0 : index
    %27 = vector.load %arg7[%c0_25, %c53, %c0_26] : memref<2x680x32xbf16, #tpu.memory_space<vmem>>, vector<1x624x32xbf16>
    %28 = vector.shape_cast %27 : vector<1x624x32xbf16> to vector<624x32xbf16>
    %c0_27 = arith.constant 0 : index
    %c54 = arith.constant 54 : index
    %c0_28 = arith.constant 0 : index
    %29 = vector.load %arg7[%c0_27, %c54, %c0_28] : memref<2x680x32xbf16, #tpu.memory_space<vmem>>, vector<1x624x32xbf16>
    %30 = vector.shape_cast %29 : vector<1x624x32xbf16> to vector<624x32xbf16>
    %31 = tpu.concatenate %14, %16, %18, %20, %22, %24, %26, %28, %30 in 1 : vector<624x32xbf16>, vector<624x32xbf16>, vector<624x32xbf16>, vector<624x32xbf16>, vector<624x32xbf16>, vector<624x32xbf16>, vector<624x32xbf16>, vector<624x32xbf16>, vector<624x32xbf16> -> vector<624x288xbf16>
    %c0_29 = arith.constant 0 : index
    %c0_30 = arith.constant 0 : index
    %32 = vector.load %arg4[%c0_29, %c0_30] : memref<288x64xbf16, #tpu.memory_space<vmem>>, vector<288x64xbf16>
    %cst_31 = arith.constant dense<0.000000e+00> : vector<624x64xf32>
    %33 = tpu.matmul %31, %32, %cst_31 {dimension_numbers = #tpu.dot_dimension_numbers<[1], [0], [0], [1], [0, 0, 1, 1], [], []>} : vector<624x288xbf16>, vector<288x64xbf16>, vector<624x64xf32> -> vector<624x64xf32>
    %c0_32 = arith.constant 0 : index
    %c0_33 = arith.constant 0 : index
    %34 = vector.load %arg5[%c0_32, %c0_33] : memref<1x64xf32, #tpu.memory_space<vmem>>, vector<1x64xf32>
    %35 = vector.broadcast %34 : vector<1x64xf32> to vector<624x64xf32>
    %36 = arith.addf %33, %35 : vector<624x64xf32>
    %cst_34 = arith.constant 0.000000e+00 : f32
    %37 = vector.broadcast %cst_34 : f32 to vector<624x64xf32>
    %38 = arith.maximumf %36, %37 : vector<624x64xf32>
    %c0_35 = arith.constant 0 : index
    %c0_36 = arith.constant 0 : index
    %39 = vector.load %arg8[%c0_35, %c0_36] : memref<624x64xf32, #tpu.memory_space<vmem>>, vector<624x64xf32>
    tpu.vector_store %arg8[%c0_35, %c0_36], %38 {strides = array<i32>} : memref<624x64xf32, #tpu.memory_space<vmem>>, vector<624x64xf32>,
    %c0_37 = arith.constant 0 : index
    %c0_38 = arith.constant 0 : index
    %40 = tpu.strided_load %arg8[%c0_37, %c0_38] {strides = array<i32: 2, 1>} : memref<624x64xf32, #tpu.memory_space<vmem>>, vector<12x64xf32>
    %c1_39 = arith.constant 1 : index
    %c0_40 = arith.constant 0 : index
    %41 = tpu.strided_load %arg8[%c1_39, %c0_40] {strides = array<i32: 2, 1>} : memref<624x64xf32, #tpu.memory_space<vmem>>, vector<12x64xf32>
    %c26_41 = arith.constant 26 : index
    %c0_42 = arith.constant 0 : index
    %42 = tpu.strided_load %arg8[%c26_41, %c0_42] {strides = array<i32: 2, 1>} : memref<624x64xf32, #tpu.memory_space<vmem>>, vector<12x64xf32>
    %c27_43 = arith.constant 27 : index
    %c0_44 = arith.constant 0 : index
    %43 = tpu.strided_load %arg8[%c27_43, %c0_44] {strides = array<i32: 2, 1>} : memref<624x64xf32, #tpu.memory_space<vmem>>, vector<12x64xf32>
    %44 = arith.maximumf %40, %41 : vector<12x64xf32>
    %45 = arith.maximumf %42, %43 : vector<12x64xf32>
    %46 = arith.maximumf %44, %45 : vector<12x64xf32>
    %c52_45 = arith.constant 52 : index
    %c0_46 = arith.constant 0 : index
    %47 = tpu.strided_load %arg8[%c52_45, %c0_46] {strides = array<i32: 2, 1>} : memref<624x64xf32, #tpu.memory_space<vmem>>, vector<12x64xf32>
    %c53_47 = arith.constant 53 : index
    %c0_48 = arith.constant 0 : index
    %48 = tpu.strided_load %arg8[%c53_47, %c0_48] {strides = array<i32: 2, 1>} : memref<624x64xf32, #tpu.memory_space<vmem>>, vector<12x64xf32>
    %c78 = arith.constant 78 : index
    %c0_49 = arith.constant 0 : index
    %49 = tpu.strided_load %arg8[%c78, %c0_49] {strides = array<i32: 2, 1>} : memref<624x64xf32, #tpu.memory_space<vmem>>, vector<12x64xf32>
    %c79 = arith.constant 79 : index
    %c0_50 = arith.constant 0 : index
    %50 = tpu.strided_load %arg8[%c79, %c0_50] {strides = array<i32: 2, 1>} : memref<624x64xf32, #tpu.memory_space<vmem>>, vector<12x64xf32>
    %51 = arith.maximumf %47, %48 : vector<12x64xf32>
    %52 = arith.maximumf %49, %50 : vector<12x64xf32>
    %53 = arith.maximumf %51, %52 : vector<12x64xf32>
    %c104 = arith.constant 104 : index
    %c0_51 = arith.constant 0 : index
    %54 = tpu.strided_load %arg8[%c104, %c0_51] {strides = array<i32: 2, 1>} : memref<624x64xf32, #tpu.memory_space<vmem>>, vector<12x64xf32>
    %c105 = arith.constant 105 : index
    %c0_52 = arith.constant 0 : index
    %55 = tpu.strided_load %arg8[%c105, %c0_52] {strides = array<i32: 2, 1>} : memref<624x64xf32, #tpu.memory_space<vmem>>, vector<12x64xf32>
    %c130 = arith.constant 130 : index
    %c0_53 = arith.constant 0 : index
    %56 = tpu.strided_load %arg8[%c130, %c0_53] {strides = array<i32: 2, 1>} : memref<624x64xf32, #tpu.memory_space<vmem>>, vector<12x64xf32>
    %c131 = arith.constant 131 : index
    %c0_54 = arith.constant 0 : index
    %57 = tpu.strided_load %arg8[%c131, %c0_54] {strides = array<i32: 2, 1>} : memref<624x64xf32, #tpu.memory_space<vmem>>, vector<12x64xf32>
    %58 = arith.maximumf %54, %55 : vector<12x64xf32>
    %59 = arith.maximumf %56, %57 : vector<12x64xf32>
    %60 = arith.maximumf %58, %59 : vector<12x64xf32>
    %c156 = arith.constant 156 : index
    %c0_55 = arith.constant 0 : index
    %61 = tpu.strided_load %arg8[%c156, %c0_55] {strides = array<i32: 2, 1>} : memref<624x64xf32, #tpu.memory_space<vmem>>, vector<12x64xf32>
    %c157 = arith.constant 157 : index
    %c0_56 = arith.constant 0 : index
    %62 = tpu.strided_load %arg8[%c157, %c0_56] {strides = array<i32: 2, 1>} : memref<624x64xf32, #tpu.memory_space<vmem>>, vector<12x64xf32>
    %c182 = arith.constant 182 : index
    %c0_57 = arith.constant 0 : index
    %63 = tpu.strided_load %arg8[%c182, %c0_57] {strides = array<i32: 2, 1>} : memref<624x64xf32, #tpu.memory_space<vmem>>, vector<12x64xf32>
    %c183 = arith.constant 183 : index
    %c0_58 = arith.constant 0 : index
    %64 = tpu.strided_load %arg8[%c183, %c0_58] {strides = array<i32: 2, 1>} : memref<624x64xf32, #tpu.memory_space<vmem>>, vector<12x64xf32>
    %65 = arith.maximumf %61, %62 : vector<12x64xf32>
    %66 = arith.maximumf %63, %64 : vector<12x64xf32>
    %67 = arith.maximumf %65, %66 : vector<12x64xf32>
    %c208 = arith.constant 208 : index
    %c0_59 = arith.constant 0 : index
    %68 = tpu.strided_load %arg8[%c208, %c0_59] {strides = array<i32: 2, 1>} : memref<624x64xf32, #tpu.memory_space<vmem>>, vector<12x64xf32>
    %c209 = arith.constant 209 : index
    %c0_60 = arith.constant 0 : index
    %69 = tpu.strided_load %arg8[%c209, %c0_60] {strides = array<i32: 2, 1>} : memref<624x64xf32, #tpu.memory_space<vmem>>, vector<12x64xf32>
    %c234 = arith.constant 234 : index
    %c0_61 = arith.constant 0 : index
    %70 = tpu.strided_load %arg8[%c234, %c0_61] {strides = array<i32: 2, 1>} : memref<624x64xf32, #tpu.memory_space<vmem>>, vector<12x64xf32>
    %c235 = arith.constant 235 : index
    %c0_62 = arith.constant 0 : index
    %71 = tpu.strided_load %arg8[%c235, %c0_62] {strides = array<i32: 2, 1>} : memref<624x64xf32, #tpu.memory_space<vmem>>, vector<12x64xf32>
    %72 = arith.maximumf %68, %69 : vector<12x64xf32>
    %73 = arith.maximumf %70, %71 : vector<12x64xf32>
    %74 = arith.maximumf %72, %73 : vector<12x64xf32>
    %c260 = arith.constant 260 : index
    %c0_63 = arith.constant 0 : index
    %75 = tpu.strided_load %arg8[%c260, %c0_63] {strides = array<i32: 2, 1>} : memref<624x64xf32, #tpu.memory_space<vmem>>, vector<12x64xf32>
    %c261 = arith.constant 261 : index
    %c0_64 = arith.constant 0 : index
    %76 = tpu.strided_load %arg8[%c261, %c0_64] {strides = array<i32: 2, 1>} : memref<624x64xf32, #tpu.memory_space<vmem>>, vector<12x64xf32>
    %c286 = arith.constant 286 : index
    %c0_65 = arith.constant 0 : index
    %77 = tpu.strided_load %arg8[%c286, %c0_65] {strides = array<i32: 2, 1>} : memref<624x64xf32, #tpu.memory_space<vmem>>, vector<12x64xf32>
    %c287 = arith.constant 287 : index
    %c0_66 = arith.constant 0 : index
    %78 = tpu.strided_load %arg8[%c287, %c0_66] {strides = array<i32: 2, 1>} : memref<624x64xf32, #tpu.memory_space<vmem>>, vector<12x64xf32>
    %79 = arith.maximumf %75, %76 : vector<12x64xf32>
    %80 = arith.maximumf %77, %78 : vector<12x64xf32>
    %81 = arith.maximumf %79, %80 : vector<12x64xf32>
    %c312 = arith.constant 312 : index
    %c0_67 = arith.constant 0 : index
    %82 = tpu.strided_load %arg8[%c312, %c0_67] {strides = array<i32: 2, 1>} : memref<624x64xf32, #tpu.memory_space<vmem>>, vector<12x64xf32>
    %c313 = arith.constant 313 : index
    %c0_68 = arith.constant 0 : index
    %83 = tpu.strided_load %arg8[%c313, %c0_68] {strides = array<i32: 2, 1>} : memref<624x64xf32, #tpu.memory_space<vmem>>, vector<12x64xf32>
    %c338 = arith.constant 338 : index
    %c0_69 = arith.constant 0 : index
    %84 = tpu.strided_load %arg8[%c338, %c0_69] {strides = array<i32: 2, 1>} : memref<624x64xf32, #tpu.memory_space<vmem>>, vector<12x64xf32>
    %c339 = arith.constant 339 : index
    %c0_70 = arith.constant 0 : index
    %85 = tpu.strided_load %arg8[%c339, %c0_70] {strides = array<i32: 2, 1>} : memref<624x64xf32, #tpu.memory_space<vmem>>, vector<12x64xf32>
    %86 = arith.maximumf %82, %83 : vector<12x64xf32>
    %87 = arith.maximumf %84, %85 : vector<12x64xf32>
    %88 = arith.maximumf %86, %87 : vector<12x64xf32>
    %c364 = arith.constant 364 : index
    %c0_71 = arith.constant 0 : index
    %89 = tpu.strided_load %arg8[%c364, %c0_71] {strides = array<i32: 2, 1>} : memref<624x64xf32, #tpu.memory_space<vmem>>, vector<12x64xf32>
    %c365 = arith.constant 365 : index
    %c0_72 = arith.constant 0 : index
    %90 = tpu.strided_load %arg8[%c365, %c0_72] {strides = array<i32: 2, 1>} : memref<624x64xf32, #tpu.memory_space<vmem>>, vector<12x64xf32>
    %c390 = arith.constant 390 : index
    %c0_73 = arith.constant 0 : index
    %91 = tpu.strided_load %arg8[%c390, %c0_73] {strides = array<i32: 2, 1>} : memref<624x64xf32, #tpu.memory_space<vmem>>, vector<12x64xf32>
    %c391 = arith.constant 391 : index
    %c0_74 = arith.constant 0 : index
    %92 = tpu.strided_load %arg8[%c391, %c0_74] {strides = array<i32: 2, 1>} : memref<624x64xf32, #tpu.memory_space<vmem>>, vector<12x64xf32>
    %93 = arith.maximumf %89, %90 : vector<12x64xf32>
    %94 = arith.maximumf %91, %92 : vector<12x64xf32>
    %95 = arith.maximumf %93, %94 : vector<12x64xf32>
    %c416 = arith.constant 416 : index
    %c0_75 = arith.constant 0 : index
    %96 = tpu.strided_load %arg8[%c416, %c0_75] {strides = array<i32: 2, 1>} : memref<624x64xf32, #tpu.memory_space<vmem>>, vector<12x64xf32>
    %c417 = arith.constant 417 : index
    %c0_76 = arith.constant 0 : index
    %97 = tpu.strided_load %arg8[%c417, %c0_76] {strides = array<i32: 2, 1>} : memref<624x64xf32, #tpu.memory_space<vmem>>, vector<12x64xf32>
    %c442 = arith.constant 442 : index
    %c0_77 = arith.constant 0 : index
    %98 = tpu.strided_load %arg8[%c442, %c0_77] {strides = array<i32: 2, 1>} : memref<624x64xf32, #tpu.memory_space<vmem>>, vector<12x64xf32>
    %c443 = arith.constant 443 : index
    %c0_78 = arith.constant 0 : index
    %99 = tpu.strided_load %arg8[%c443, %c0_78] {strides = array<i32: 2, 1>} : memref<624x64xf32, #tpu.memory_space<vmem>>, vector<12x64xf32>
    %100 = arith.maximumf %96, %97 : vector<12x64xf32>
    %101 = arith.maximumf %98, %99 : vector<12x64xf32>
    %102 = arith.maximumf %100, %101 : vector<12x64xf32>
    %c468 = arith.constant 468 : index
    %c0_79 = arith.constant 0 : index
    %103 = tpu.strided_load %arg8[%c468, %c0_79] {strides = array<i32: 2, 1>} : memref<624x64xf32, #tpu.memory_space<vmem>>, vector<12x64xf32>
    %c469 = arith.constant 469 : index
    %c0_80 = arith.constant 0 : index
    %104 = tpu.strided_load %arg8[%c469, %c0_80] {strides = array<i32: 2, 1>} : memref<624x64xf32, #tpu.memory_space<vmem>>, vector<12x64xf32>
    %c494 = arith.constant 494 : index
    %c0_81 = arith.constant 0 : index
    %105 = tpu.strided_load %arg8[%c494, %c0_81] {strides = array<i32: 2, 1>} : memref<624x64xf32, #tpu.memory_space<vmem>>, vector<12x64xf32>
    %c495 = arith.constant 495 : index
    %c0_82 = arith.constant 0 : index
    %106 = tpu.strided_load %arg8[%c495, %c0_82] {strides = array<i32: 2, 1>} : memref<624x64xf32, #tpu.memory_space<vmem>>, vector<12x64xf32>
    %107 = arith.maximumf %103, %104 : vector<12x64xf32>
    %108 = arith.maximumf %105, %106 : vector<12x64xf32>
    %109 = arith.maximumf %107, %108 : vector<12x64xf32>
    %c520 = arith.constant 520 : index
    %c0_83 = arith.constant 0 : index
    %110 = tpu.strided_load %arg8[%c520, %c0_83] {strides = array<i32: 2, 1>} : memref<624x64xf32, #tpu.memory_space<vmem>>, vector<12x64xf32>
    %c521 = arith.constant 521 : index
    %c0_84 = arith.constant 0 : index
    %111 = tpu.strided_load %arg8[%c521, %c0_84] {strides = array<i32: 2, 1>} : memref<624x64xf32, #tpu.memory_space<vmem>>, vector<12x64xf32>
    %c546 = arith.constant 546 : index
    %c0_85 = arith.constant 0 : index
    %112 = tpu.strided_load %arg8[%c546, %c0_85] {strides = array<i32: 2, 1>} : memref<624x64xf32, #tpu.memory_space<vmem>>, vector<12x64xf32>
    %c547 = arith.constant 547 : index
    %c0_86 = arith.constant 0 : index
    %113 = tpu.strided_load %arg8[%c547, %c0_86] {strides = array<i32: 2, 1>} : memref<624x64xf32, #tpu.memory_space<vmem>>, vector<12x64xf32>
    %114 = arith.maximumf %110, %111 : vector<12x64xf32>
    %115 = arith.maximumf %112, %113 : vector<12x64xf32>
    %116 = arith.maximumf %114, %115 : vector<12x64xf32>
    %c572 = arith.constant 572 : index
    %c0_87 = arith.constant 0 : index
    %117 = tpu.strided_load %arg8[%c572, %c0_87] {strides = array<i32: 2, 1>} : memref<624x64xf32, #tpu.memory_space<vmem>>, vector<12x64xf32>
    %c573 = arith.constant 573 : index
    %c0_88 = arith.constant 0 : index
    %118 = tpu.strided_load %arg8[%c573, %c0_88] {strides = array<i32: 2, 1>} : memref<624x64xf32, #tpu.memory_space<vmem>>, vector<12x64xf32>
    %c598 = arith.constant 598 : index
    %c0_89 = arith.constant 0 : index
    %119 = tpu.strided_load %arg8[%c598, %c0_89] {strides = array<i32: 2, 1>} : memref<624x64xf32, #tpu.memory_space<vmem>>, vector<12x64xf32>
    %c599 = arith.constant 599 : index
    %c0_90 = arith.constant 0 : index
    %120 = tpu.strided_load %arg8[%c599, %c0_90] {strides = array<i32: 2, 1>} : memref<624x64xf32, #tpu.memory_space<vmem>>, vector<12x64xf32>
    %121 = arith.maximumf %117, %118 : vector<12x64xf32>
    %122 = arith.maximumf %119, %120 : vector<12x64xf32>
    %123 = arith.maximumf %121, %122 : vector<12x64xf32>
    %124 = tpu.concatenate %46, %53, %60, %67, %74, %81, %88, %95, %102, %109, %116, %123 in 0 : vector<12x64xf32>, vector<12x64xf32>, vector<12x64xf32>, vector<12x64xf32>, vector<12x64xf32>, vector<12x64xf32>, vector<12x64xf32>, vector<12x64xf32>, vector<12x64xf32>, vector<12x64xf32>, vector<12x64xf32>, vector<12x64xf32> -> vector<144x64xf32>
    %125 = arith.truncf %124 : vector<144x64xf32> to vector<144x64xbf16>
    %c0_91 = arith.constant 0 : index
    %c0_92 = arith.constant 0 : index
    %c0_93 = arith.constant 0 : index
    %126 = vector.load %arg6[%c0_91, %c0_92, %c0_93] : memref<2x144x64xbf16, #tpu.memory_space<vmem>>, vector<1x144x64xbf16>
    %127 = vector.shape_cast %126 : vector<1x144x64xbf16> to vector<144x64xbf16>
    %128 = vector.shape_cast %125 : vector<144x64xbf16> to vector<1x144x64xbf16>
    tpu.vector_store %arg6[%c0_91, %c0_92, %c0_93], %128 {strides = array<i32>} : memref<2x144x64xbf16, #tpu.memory_space<vmem>>, vector<1x144x64xbf16>,
    %c1_94 = arith.constant 1 : index
    %c0_95 = arith.constant 0 : index
    %c0_96 = arith.constant 0 : index
    %129 = vector.load %arg1[%c1_94, %c0_95, %c0_96] : memref<2x680x16xbf16, #tpu.memory_space<vmem>>, vector<1x680x16xbf16>
    %130 = vector.shape_cast %129 : vector<1x680x16xbf16> to vector<680x16xbf16>
    %c0_97 = arith.constant 0 : index
    %c0_98 = arith.constant 0 : index
    %131 = vector.load %arg2[%c0_97, %c0_98] : memref<16x32xbf16, #tpu.memory_space<vmem>>, vector<16x32xbf16>
    %cst_99 = arith.constant dense<0.000000e+00> : vector<680x32xf32>
    %132 = tpu.matmul %130, %131, %cst_99 {dimension_numbers = #tpu.dot_dimension_numbers<[1], [0], [0], [1], [0, 0, 1, 1], [], []>} : vector<680x16xbf16>, vector<16x32xbf16>, vector<680x32xf32> -> vector<680x32xf32>
    %c0_100 = arith.constant 0 : index
    %c0_101 = arith.constant 0 : index
    %133 = vector.load %arg3[%c0_100, %c0_101] : memref<1x32xf32, #tpu.memory_space<vmem>>, vector<1x32xf32>
    %134 = vector.broadcast %133 : vector<1x32xf32> to vector<680x32xf32>
    %135 = arith.addf %132, %134 : vector<680x32xf32>
    %cst_102 = arith.constant 0.000000e+00 : f32
    %136 = vector.broadcast %cst_102 : f32 to vector<680x32xf32>
    %137 = arith.maximumf %135, %136 : vector<680x32xf32>
    %138 = arith.truncf %137 : vector<680x32xf32> to vector<680x32xbf16>
    %c1_103 = arith.constant 1 : index
    %c0_104 = arith.constant 0 : index
    %c0_105 = arith.constant 0 : index
    %139 = vector.load %arg7[%c1_103, %c0_104, %c0_105] : memref<2x680x32xbf16, #tpu.memory_space<vmem>>, vector<1x680x32xbf16>
    %140 = vector.shape_cast %139 : vector<1x680x32xbf16> to vector<680x32xbf16>
    %141 = vector.shape_cast %138 : vector<680x32xbf16> to vector<1x680x32xbf16>
    tpu.vector_store %arg7[%c1_103, %c0_104, %c0_105], %141 {strides = array<i32>} : memref<2x680x32xbf16, #tpu.memory_space<vmem>>, vector<1x680x32xbf16>,
    %c1_106 = arith.constant 1 : index
    %c0_107 = arith.constant 0 : index
    %c0_108 = arith.constant 0 : index
    %142 = vector.load %arg7[%c1_106, %c0_107, %c0_108] : memref<2x680x32xbf16, #tpu.memory_space<vmem>>, vector<1x624x32xbf16>
    %143 = vector.shape_cast %142 : vector<1x624x32xbf16> to vector<624x32xbf16>
    %c1_109 = arith.constant 1 : index
    %c1_110 = arith.constant 1 : index
    %c0_111 = arith.constant 0 : index
    %144 = vector.load %arg7[%c1_109, %c1_110, %c0_111] : memref<2x680x32xbf16, #tpu.memory_space<vmem>>, vector<1x624x32xbf16>
    %145 = vector.shape_cast %144 : vector<1x624x32xbf16> to vector<624x32xbf16>
    %c1_112 = arith.constant 1 : index
    %c2_113 = arith.constant 2 : index
    %c0_114 = arith.constant 0 : index
    %146 = vector.load %arg7[%c1_112, %c2_113, %c0_114] : memref<2x680x32xbf16, #tpu.memory_space<vmem>>, vector<1x624x32xbf16>
    %147 = vector.shape_cast %146 : vector<1x624x32xbf16> to vector<624x32xbf16>
    %c1_115 = arith.constant 1 : index
    %c26_116 = arith.constant 26 : index
    %c0_117 = arith.constant 0 : index
    %148 = vector.load %arg7[%c1_115, %c26_116, %c0_117] : memref<2x680x32xbf16, #tpu.memory_space<vmem>>, vector<1x624x32xbf16>
    %149 = vector.shape_cast %148 : vector<1x624x32xbf16> to vector<624x32xbf16>
    %c1_118 = arith.constant 1 : index
    %c27_119 = arith.constant 27 : index
    %c0_120 = arith.constant 0 : index
    %150 = vector.load %arg7[%c1_118, %c27_119, %c0_120] : memref<2x680x32xbf16, #tpu.memory_space<vmem>>, vector<1x624x32xbf16>
    %151 = vector.shape_cast %150 : vector<1x624x32xbf16> to vector<624x32xbf16>
    %c1_121 = arith.constant 1 : index
    %c28_122 = arith.constant 28 : index
    %c0_123 = arith.constant 0 : index
    %152 = vector.load %arg7[%c1_121, %c28_122, %c0_123] : memref<2x680x32xbf16, #tpu.memory_space<vmem>>, vector<1x624x32xbf16>
    %153 = vector.shape_cast %152 : vector<1x624x32xbf16> to vector<624x32xbf16>
    %c1_124 = arith.constant 1 : index
    %c52_125 = arith.constant 52 : index
    %c0_126 = arith.constant 0 : index
    %154 = vector.load %arg7[%c1_124, %c52_125, %c0_126] : memref<2x680x32xbf16, #tpu.memory_space<vmem>>, vector<1x624x32xbf16>
    %155 = vector.shape_cast %154 : vector<1x624x32xbf16> to vector<624x32xbf16>
    %c1_127 = arith.constant 1 : index
    %c53_128 = arith.constant 53 : index
    %c0_129 = arith.constant 0 : index
    %156 = vector.load %arg7[%c1_127, %c53_128, %c0_129] : memref<2x680x32xbf16, #tpu.memory_space<vmem>>, vector<1x624x32xbf16>
    %157 = vector.shape_cast %156 : vector<1x624x32xbf16> to vector<624x32xbf16>
    %c1_130 = arith.constant 1 : index
    %c54_131 = arith.constant 54 : index
    %c0_132 = arith.constant 0 : index
    %158 = vector.load %arg7[%c1_130, %c54_131, %c0_132] : memref<2x680x32xbf16, #tpu.memory_space<vmem>>, vector<1x624x32xbf16>
    %159 = vector.shape_cast %158 : vector<1x624x32xbf16> to vector<624x32xbf16>
    %160 = tpu.concatenate %143, %145, %147, %149, %151, %153, %155, %157, %159 in 1 : vector<624x32xbf16>, vector<624x32xbf16>, vector<624x32xbf16>, vector<624x32xbf16>, vector<624x32xbf16>, vector<624x32xbf16>, vector<624x32xbf16>, vector<624x32xbf16>, vector<624x32xbf16> -> vector<624x288xbf16>
    %c0_133 = arith.constant 0 : index
    %c0_134 = arith.constant 0 : index
    %161 = vector.load %arg4[%c0_133, %c0_134] : memref<288x64xbf16, #tpu.memory_space<vmem>>, vector<288x64xbf16>
    %cst_135 = arith.constant dense<0.000000e+00> : vector<624x64xf32>
    %162 = tpu.matmul %160, %161, %cst_135 {dimension_numbers = #tpu.dot_dimension_numbers<[1], [0], [0], [1], [0, 0, 1, 1], [], []>} : vector<624x288xbf16>, vector<288x64xbf16>, vector<624x64xf32> -> vector<624x64xf32>
    %c0_136 = arith.constant 0 : index
    %c0_137 = arith.constant 0 : index
    %163 = vector.load %arg5[%c0_136, %c0_137] : memref<1x64xf32, #tpu.memory_space<vmem>>, vector<1x64xf32>
    %164 = vector.broadcast %163 : vector<1x64xf32> to vector<624x64xf32>
    %165 = arith.addf %162, %164 : vector<624x64xf32>
    %cst_138 = arith.constant 0.000000e+00 : f32
    %166 = vector.broadcast %cst_138 : f32 to vector<624x64xf32>
    %167 = arith.maximumf %165, %166 : vector<624x64xf32>
    %c0_139 = arith.constant 0 : index
    %c0_140 = arith.constant 0 : index
    %168 = vector.load %arg8[%c0_139, %c0_140] : memref<624x64xf32, #tpu.memory_space<vmem>>, vector<624x64xf32>
    tpu.vector_store %arg8[%c0_139, %c0_140], %167 {strides = array<i32>} : memref<624x64xf32, #tpu.memory_space<vmem>>, vector<624x64xf32>,
    %c0_141 = arith.constant 0 : index
    %c0_142 = arith.constant 0 : index
    %169 = tpu.strided_load %arg8[%c0_141, %c0_142] {strides = array<i32: 2, 1>} : memref<624x64xf32, #tpu.memory_space<vmem>>, vector<12x64xf32>
    %c1_143 = arith.constant 1 : index
    %c0_144 = arith.constant 0 : index
    %170 = tpu.strided_load %arg8[%c1_143, %c0_144] {strides = array<i32: 2, 1>} : memref<624x64xf32, #tpu.memory_space<vmem>>, vector<12x64xf32>
    %c26_145 = arith.constant 26 : index
    %c0_146 = arith.constant 0 : index
    %171 = tpu.strided_load %arg8[%c26_145, %c0_146] {strides = array<i32: 2, 1>} : memref<624x64xf32, #tpu.memory_space<vmem>>, vector<12x64xf32>
    %c27_147 = arith.constant 27 : index
    %c0_148 = arith.constant 0 : index
    %172 = tpu.strided_load %arg8[%c27_147, %c0_148] {strides = array<i32: 2, 1>} : memref<624x64xf32, #tpu.memory_space<vmem>>, vector<12x64xf32>
    %173 = arith.maximumf %169, %170 : vector<12x64xf32>
    %174 = arith.maximumf %171, %172 : vector<12x64xf32>
    %175 = arith.maximumf %173, %174 : vector<12x64xf32>
    %c52_149 = arith.constant 52 : index
    %c0_150 = arith.constant 0 : index
    %176 = tpu.strided_load %arg8[%c52_149, %c0_150] {strides = array<i32: 2, 1>} : memref<624x64xf32, #tpu.memory_space<vmem>>, vector<12x64xf32>
    %c53_151 = arith.constant 53 : index
    %c0_152 = arith.constant 0 : index
    %177 = tpu.strided_load %arg8[%c53_151, %c0_152] {strides = array<i32: 2, 1>} : memref<624x64xf32, #tpu.memory_space<vmem>>, vector<12x64xf32>
    %c78_153 = arith.constant 78 : index
    %c0_154 = arith.constant 0 : index
    %178 = tpu.strided_load %arg8[%c78_153, %c0_154] {strides = array<i32: 2, 1>} : memref<624x64xf32, #tpu.memory_space<vmem>>, vector<12x64xf32>
    %c79_155 = arith.constant 79 : index
    %c0_156 = arith.constant 0 : index
    %179 = tpu.strided_load %arg8[%c79_155, %c0_156] {strides = array<i32: 2, 1>} : memref<624x64xf32, #tpu.memory_space<vmem>>, vector<12x64xf32>
    %180 = arith.maximumf %176, %177 : vector<12x64xf32>
    %181 = arith.maximumf %178, %179 : vector<12x64xf32>
    %182 = arith.maximumf %180, %181 : vector<12x64xf32>
    %c104_157 = arith.constant 104 : index
    %c0_158 = arith.constant 0 : index
    %183 = tpu.strided_load %arg8[%c104_157, %c0_158] {strides = array<i32: 2, 1>} : memref<624x64xf32, #tpu.memory_space<vmem>>, vector<12x64xf32>
    %c105_159 = arith.constant 105 : index
    %c0_160 = arith.constant 0 : index
    %184 = tpu.strided_load %arg8[%c105_159, %c0_160] {strides = array<i32: 2, 1>} : memref<624x64xf32, #tpu.memory_space<vmem>>, vector<12x64xf32>
    %c130_161 = arith.constant 130 : index
    %c0_162 = arith.constant 0 : index
    %185 = tpu.strided_load %arg8[%c130_161, %c0_162] {strides = array<i32: 2, 1>} : memref<624x64xf32, #tpu.memory_space<vmem>>, vector<12x64xf32>
    %c131_163 = arith.constant 131 : index
    %c0_164 = arith.constant 0 : index
    %186 = tpu.strided_load %arg8[%c131_163, %c0_164] {strides = array<i32: 2, 1>} : memref<624x64xf32, #tpu.memory_space<vmem>>, vector<12x64xf32>
    %187 = arith.maximumf %183, %184 : vector<12x64xf32>
    %188 = arith.maximumf %185, %186 : vector<12x64xf32>
    %189 = arith.maximumf %187, %188 : vector<12x64xf32>
    %c156_165 = arith.constant 156 : index
    %c0_166 = arith.constant 0 : index
    %190 = tpu.strided_load %arg8[%c156_165, %c0_166] {strides = array<i32: 2, 1>} : memref<624x64xf32, #tpu.memory_space<vmem>>, vector<12x64xf32>
    %c157_167 = arith.constant 157 : index
    %c0_168 = arith.constant 0 : index
    %191 = tpu.strided_load %arg8[%c157_167, %c0_168] {strides = array<i32: 2, 1>} : memref<624x64xf32, #tpu.memory_space<vmem>>, vector<12x64xf32>
    %c182_169 = arith.constant 182 : index
    %c0_170 = arith.constant 0 : index
    %192 = tpu.strided_load %arg8[%c182_169, %c0_170] {strides = array<i32: 2, 1>} : memref<624x64xf32, #tpu.memory_space<vmem>>, vector<12x64xf32>
    %c183_171 = arith.constant 183 : index
    %c0_172 = arith.constant 0 : index
    %193 = tpu.strided_load %arg8[%c183_171, %c0_172] {strides = array<i32: 2, 1>} : memref<624x64xf32, #tpu.memory_space<vmem>>, vector<12x64xf32>
    %194 = arith.maximumf %190, %191 : vector<12x64xf32>
    %195 = arith.maximumf %192, %193 : vector<12x64xf32>
    %196 = arith.maximumf %194, %195 : vector<12x64xf32>
    %c208_173 = arith.constant 208 : index
    %c0_174 = arith.constant 0 : index
    %197 = tpu.strided_load %arg8[%c208_173, %c0_174] {strides = array<i32: 2, 1>} : memref<624x64xf32, #tpu.memory_space<vmem>>, vector<12x64xf32>
    %c209_175 = arith.constant 209 : index
    %c0_176 = arith.constant 0 : index
    %198 = tpu.strided_load %arg8[%c209_175, %c0_176] {strides = array<i32: 2, 1>} : memref<624x64xf32, #tpu.memory_space<vmem>>, vector<12x64xf32>
    %c234_177 = arith.constant 234 : index
    %c0_178 = arith.constant 0 : index
    %199 = tpu.strided_load %arg8[%c234_177, %c0_178] {strides = array<i32: 2, 1>} : memref<624x64xf32, #tpu.memory_space<vmem>>, vector<12x64xf32>
    %c235_179 = arith.constant 235 : index
    %c0_180 = arith.constant 0 : index
    %200 = tpu.strided_load %arg8[%c235_179, %c0_180] {strides = array<i32: 2, 1>} : memref<624x64xf32, #tpu.memory_space<vmem>>, vector<12x64xf32>
    %201 = arith.maximumf %197, %198 : vector<12x64xf32>
    %202 = arith.maximumf %199, %200 : vector<12x64xf32>
    %203 = arith.maximumf %201, %202 : vector<12x64xf32>
    %c260_181 = arith.constant 260 : index
    %c0_182 = arith.constant 0 : index
    %204 = tpu.strided_load %arg8[%c260_181, %c0_182] {strides = array<i32: 2, 1>} : memref<624x64xf32, #tpu.memory_space<vmem>>, vector<12x64xf32>
    %c261_183 = arith.constant 261 : index
    %c0_184 = arith.constant 0 : index
    %205 = tpu.strided_load %arg8[%c261_183, %c0_184] {strides = array<i32: 2, 1>} : memref<624x64xf32, #tpu.memory_space<vmem>>, vector<12x64xf32>
    %c286_185 = arith.constant 286 : index
    %c0_186 = arith.constant 0 : index
    %206 = tpu.strided_load %arg8[%c286_185, %c0_186] {strides = array<i32: 2, 1>} : memref<624x64xf32, #tpu.memory_space<vmem>>, vector<12x64xf32>
    %c287_187 = arith.constant 287 : index
    %c0_188 = arith.constant 0 : index
    %207 = tpu.strided_load %arg8[%c287_187, %c0_188] {strides = array<i32: 2, 1>} : memref<624x64xf32, #tpu.memory_space<vmem>>, vector<12x64xf32>
    %208 = arith.maximumf %204, %205 : vector<12x64xf32>
    %209 = arith.maximumf %206, %207 : vector<12x64xf32>
    %210 = arith.maximumf %208, %209 : vector<12x64xf32>
    %c312_189 = arith.constant 312 : index
    %c0_190 = arith.constant 0 : index
    %211 = tpu.strided_load %arg8[%c312_189, %c0_190] {strides = array<i32: 2, 1>} : memref<624x64xf32, #tpu.memory_space<vmem>>, vector<12x64xf32>
    %c313_191 = arith.constant 313 : index
    %c0_192 = arith.constant 0 : index
    %212 = tpu.strided_load %arg8[%c313_191, %c0_192] {strides = array<i32: 2, 1>} : memref<624x64xf32, #tpu.memory_space<vmem>>, vector<12x64xf32>
    %c338_193 = arith.constant 338 : index
    %c0_194 = arith.constant 0 : index
    %213 = tpu.strided_load %arg8[%c338_193, %c0_194] {strides = array<i32: 2, 1>} : memref<624x64xf32, #tpu.memory_space<vmem>>, vector<12x64xf32>
    %c339_195 = arith.constant 339 : index
    %c0_196 = arith.constant 0 : index
    %214 = tpu.strided_load %arg8[%c339_195, %c0_196] {strides = array<i32: 2, 1>} : memref<624x64xf32, #tpu.memory_space<vmem>>, vector<12x64xf32>
    %215 = arith.maximumf %211, %212 : vector<12x64xf32>
    %216 = arith.maximumf %213, %214 : vector<12x64xf32>
    %217 = arith.maximumf %215, %216 : vector<12x64xf32>
    %c364_197 = arith.constant 364 : index
    %c0_198 = arith.constant 0 : index
    %218 = tpu.strided_load %arg8[%c364_197, %c0_198] {strides = array<i32: 2, 1>} : memref<624x64xf32, #tpu.memory_space<vmem>>, vector<12x64xf32>
    %c365_199 = arith.constant 365 : index
    %c0_200 = arith.constant 0 : index
    %219 = tpu.strided_load %arg8[%c365_199, %c0_200] {strides = array<i32: 2, 1>} : memref<624x64xf32, #tpu.memory_space<vmem>>, vector<12x64xf32>
    %c390_201 = arith.constant 390 : index
    %c0_202 = arith.constant 0 : index
    %220 = tpu.strided_load %arg8[%c390_201, %c0_202] {strides = array<i32: 2, 1>} : memref<624x64xf32, #tpu.memory_space<vmem>>, vector<12x64xf32>
    %c391_203 = arith.constant 391 : index
    %c0_204 = arith.constant 0 : index
    %221 = tpu.strided_load %arg8[%c391_203, %c0_204] {strides = array<i32: 2, 1>} : memref<624x64xf32, #tpu.memory_space<vmem>>, vector<12x64xf32>
    %222 = arith.maximumf %218, %219 : vector<12x64xf32>
    %223 = arith.maximumf %220, %221 : vector<12x64xf32>
    %224 = arith.maximumf %222, %223 : vector<12x64xf32>
    %c416_205 = arith.constant 416 : index
    %c0_206 = arith.constant 0 : index
    %225 = tpu.strided_load %arg8[%c416_205, %c0_206] {strides = array<i32: 2, 1>} : memref<624x64xf32, #tpu.memory_space<vmem>>, vector<12x64xf32>
    %c417_207 = arith.constant 417 : index
    %c0_208 = arith.constant 0 : index
    %226 = tpu.strided_load %arg8[%c417_207, %c0_208] {strides = array<i32: 2, 1>} : memref<624x64xf32, #tpu.memory_space<vmem>>, vector<12x64xf32>
    %c442_209 = arith.constant 442 : index
    %c0_210 = arith.constant 0 : index
    %227 = tpu.strided_load %arg8[%c442_209, %c0_210] {strides = array<i32: 2, 1>} : memref<624x64xf32, #tpu.memory_space<vmem>>, vector<12x64xf32>
    %c443_211 = arith.constant 443 : index
    %c0_212 = arith.constant 0 : index
    %228 = tpu.strided_load %arg8[%c443_211, %c0_212] {strides = array<i32: 2, 1>} : memref<624x64xf32, #tpu.memory_space<vmem>>, vector<12x64xf32>
    %229 = arith.maximumf %225, %226 : vector<12x64xf32>
    %230 = arith.maximumf %227, %228 : vector<12x64xf32>
    %231 = arith.maximumf %229, %230 : vector<12x64xf32>
    %c468_213 = arith.constant 468 : index
    %c0_214 = arith.constant 0 : index
    %232 = tpu.strided_load %arg8[%c468_213, %c0_214] {strides = array<i32: 2, 1>} : memref<624x64xf32, #tpu.memory_space<vmem>>, vector<12x64xf32>
    %c469_215 = arith.constant 469 : index
    %c0_216 = arith.constant 0 : index
    %233 = tpu.strided_load %arg8[%c469_215, %c0_216] {strides = array<i32: 2, 1>} : memref<624x64xf32, #tpu.memory_space<vmem>>, vector<12x64xf32>
    %c494_217 = arith.constant 494 : index
    %c0_218 = arith.constant 0 : index
    %234 = tpu.strided_load %arg8[%c494_217, %c0_218] {strides = array<i32: 2, 1>} : memref<624x64xf32, #tpu.memory_space<vmem>>, vector<12x64xf32>
    %c495_219 = arith.constant 495 : index
    %c0_220 = arith.constant 0 : index
    %235 = tpu.strided_load %arg8[%c495_219, %c0_220] {strides = array<i32: 2, 1>} : memref<624x64xf32, #tpu.memory_space<vmem>>, vector<12x64xf32>
    %236 = arith.maximumf %232, %233 : vector<12x64xf32>
    %237 = arith.maximumf %234, %235 : vector<12x64xf32>
    %238 = arith.maximumf %236, %237 : vector<12x64xf32>
    %c520_221 = arith.constant 520 : index
    %c0_222 = arith.constant 0 : index
    %239 = tpu.strided_load %arg8[%c520_221, %c0_222] {strides = array<i32: 2, 1>} : memref<624x64xf32, #tpu.memory_space<vmem>>, vector<12x64xf32>
    %c521_223 = arith.constant 521 : index
    %c0_224 = arith.constant 0 : index
    %240 = tpu.strided_load %arg8[%c521_223, %c0_224] {strides = array<i32: 2, 1>} : memref<624x64xf32, #tpu.memory_space<vmem>>, vector<12x64xf32>
    %c546_225 = arith.constant 546 : index
    %c0_226 = arith.constant 0 : index
    %241 = tpu.strided_load %arg8[%c546_225, %c0_226] {strides = array<i32: 2, 1>} : memref<624x64xf32, #tpu.memory_space<vmem>>, vector<12x64xf32>
    %c547_227 = arith.constant 547 : index
    %c0_228 = arith.constant 0 : index
    %242 = tpu.strided_load %arg8[%c547_227, %c0_228] {strides = array<i32: 2, 1>} : memref<624x64xf32, #tpu.memory_space<vmem>>, vector<12x64xf32>
    %243 = arith.maximumf %239, %240 : vector<12x64xf32>
    %244 = arith.maximumf %241, %242 : vector<12x64xf32>
    %245 = arith.maximumf %243, %244 : vector<12x64xf32>
    %c572_229 = arith.constant 572 : index
    %c0_230 = arith.constant 0 : index
    %246 = tpu.strided_load %arg8[%c572_229, %c0_230] {strides = array<i32: 2, 1>} : memref<624x64xf32, #tpu.memory_space<vmem>>, vector<12x64xf32>
    %c573_231 = arith.constant 573 : index
    %c0_232 = arith.constant 0 : index
    %247 = tpu.strided_load %arg8[%c573_231, %c0_232] {strides = array<i32: 2, 1>} : memref<624x64xf32, #tpu.memory_space<vmem>>, vector<12x64xf32>
    %c598_233 = arith.constant 598 : index
    %c0_234 = arith.constant 0 : index
    %248 = tpu.strided_load %arg8[%c598_233, %c0_234] {strides = array<i32: 2, 1>} : memref<624x64xf32, #tpu.memory_space<vmem>>, vector<12x64xf32>
    %c599_235 = arith.constant 599 : index
    %c0_236 = arith.constant 0 : index
    %249 = tpu.strided_load %arg8[%c599_235, %c0_236] {strides = array<i32: 2, 1>} : memref<624x64xf32, #tpu.memory_space<vmem>>, vector<12x64xf32>
    %250 = arith.maximumf %246, %247 : vector<12x64xf32>
    %251 = arith.maximumf %248, %249 : vector<12x64xf32>
    %252 = arith.maximumf %250, %251 : vector<12x64xf32>
    %253 = tpu.concatenate %175, %182, %189, %196, %203, %210, %217, %224, %231, %238, %245, %252 in 0 : vector<12x64xf32>, vector<12x64xf32>, vector<12x64xf32>, vector<12x64xf32>, vector<12x64xf32>, vector<12x64xf32>, vector<12x64xf32>, vector<12x64xf32>, vector<12x64xf32>, vector<12x64xf32>, vector<12x64xf32>, vector<12x64xf32> -> vector<144x64xf32>
    %254 = arith.truncf %253 : vector<144x64xf32> to vector<144x64xbf16>
    %c1_237 = arith.constant 1 : index
    %c0_238 = arith.constant 0 : index
    %c0_239 = arith.constant 0 : index
    %255 = vector.load %arg6[%c1_237, %c0_238, %c0_239] : memref<2x144x64xbf16, #tpu.memory_space<vmem>>, vector<1x144x64xbf16>
    %256 = vector.shape_cast %255 : vector<1x144x64xbf16> to vector<144x64xbf16>
    %257 = vector.shape_cast %254 : vector<144x64xbf16> to vector<1x144x64xbf16>
    tpu.vector_store %arg6[%c1_237, %c0_238, %c0_239], %257 {strides = array<i32>} : memref<2x144x64xbf16, #tpu.memory_space<vmem>>, vector<1x144x64xbf16>,
    return
  }
  func.func @transform_0(%arg0: i32) -> (i32, i32, i32) {
    %c0_i32 = arith.constant 0 : i32
    %c0_i32_0 = arith.constant 0 : i32
    %c0_i32_1 = arith.constant 0 : i32
    return %arg0, %c0_i32, %c0_i32_0 : i32, i32, i32
  }
  func.func @transform_1(%arg0: i32) -> (i32, i32) {
    %c0_i32 = arith.constant 0 : i32
    %c0_i32_0 = arith.constant 0 : i32
    %c0_i32_1 = arith.constant 0 : i32
    return %c0_i32, %c0_i32_0 : i32, i32
  }
  func.func @transform_2(%arg0: i32) -> (i32, i32) {
    %c0_i32 = arith.constant 0 : i32
    %c0_i32_0 = arith.constant 0 : i32
    %c0_i32_1 = arith.constant 0 : i32
    return %c0_i32, %c0_i32_0 : i32, i32
  }
  func.func @transform_3(%arg0: i32) -> (i32, i32) {
    %c0_i32 = arith.constant 0 : i32
    %c0_i32_0 = arith.constant 0 : i32
    %c0_i32_1 = arith.constant 0 : i32
    return %c0_i32, %c0_i32_0 : i32, i32
  }
  func.func @transform_4(%arg0: i32) -> (i32, i32) {
    %c0_i32 = arith.constant 0 : i32
    %c0_i32_0 = arith.constant 0 : i32
    %c0_i32_1 = arith.constant 0 : i32
    return %c0_i32, %c0_i32_0 : i32, i32
  }
  func.func @transform_5(%arg0: i32) -> (i32, i32, i32) {
    %c0_i32 = arith.constant 0 : i32
    %c0_i32_0 = arith.constant 0 : i32
    %c0_i32_1 = arith.constant 0 : i32
    return %arg0, %c0_i32, %c0_i32_0 : i32, i32, i32
  }
}

module attributes {stable_mosaic.version = 11 : i64} {
  func.func @_fc_kernel(%arg0: i32, %arg1: i32, %arg2: memref<2x4608xbf16, #tpu.memory_space<vmem>>, %arg3: memref<4608x128xbf16, #tpu.memory_space<vmem>>, %arg4: memref<1x128xf32, #tpu.memory_space<vmem>>, %arg5: memref<128x10xbf16, #tpu.memory_space<vmem>>, %arg6: memref<1x10xf32, #tpu.memory_space<vmem>>, %arg7: memref<2x10xf32, #tpu.memory_space<vmem>>, %arg8: memref<2x128xf32, #tpu.memory_space<vmem>>) attributes {dimension_semantics = [#tpu.dimension_semantics<parallel>, #tpu.dimension_semantics<arbitrary>], iteration_bounds = array<i64: 1, 2>, scalar_prefetch = 0 : i64, scratch_operands = 1 : i64, tpu.core_type = #tpu.core_type<tc>, window_params = [{transform_indices = @transform_0, window_bounds = array<i64: 2, 4608>}, {transform_indices = @transform_1, window_bounds = array<i64: 4608, 128>}, {pipeline_mode = #tpu.pipeline_mode<synchronous>, transform_indices = @transform_2, window_bounds = array<i64: 1, 128>}, {pipeline_mode = #tpu.pipeline_mode<synchronous>, transform_indices = @transform_3, window_bounds = array<i64: 128, 10>}, {pipeline_mode = #tpu.pipeline_mode<synchronous>, transform_indices = @transform_4, window_bounds = array<i64: 1, 10>}, {transform_indices = @transform_5, window_bounds = array<i64: 2, 10>}]} {
    %c0_i32 = arith.constant 0 : i32
    %0 = arith.cmpi eq, %arg1, %c0_i32 : i32
    %1 = arith.extui %0 : i1 to i32
    %c0_i32_0 = arith.constant 0 : i32
    %2 = arith.cmpi ne, %1, %c0_i32_0 : i32
    scf.if %2 {
      %cst_9 = arith.constant 0.000000e+00 : f32
      %12 = vector.broadcast %cst_9 : f32 to vector<2x128xf32>
      %c0_10 = arith.constant 0 : index
      %c0_11 = arith.constant 0 : index
      %13 = vector.load %arg8[%c0_10, %c0_11] : memref<2x128xf32, #tpu.memory_space<vmem>>, vector<2x128xf32>
      tpu.vector_store %arg8[%c0_10, %c0_11], %12 {strides = array<i32>} : memref<2x128xf32, #tpu.memory_space<vmem>>, vector<2x128xf32>,
    } else {
    }
    %c0 = arith.constant 0 : index
    %c0_1 = arith.constant 0 : index
    %3 = vector.load %arg8[%c0, %c0_1] : memref<2x128xf32, #tpu.memory_space<vmem>>, vector<2x128xf32>
    %c0_2 = arith.constant 0 : index
    %c0_3 = arith.constant 0 : index
    %4 = vector.load %arg2[%c0_2, %c0_3] : memref<2x4608xbf16, #tpu.memory_space<vmem>>, vector<2x4608xbf16>
    %c0_4 = arith.constant 0 : index
    %c0_5 = arith.constant 0 : index
    %5 = vector.load %arg3[%c0_4, %c0_5] : memref<4608x128xbf16, #tpu.memory_space<vmem>>, vector<4608x128xbf16>
    %cst = arith.constant dense<0.000000e+00> : vector<2x128xf32>
    %6 = tpu.matmul %4, %5, %cst {dimension_numbers = #tpu.dot_dimension_numbers<[1], [0], [0], [1], [0, 0, 1, 1], [], []>} : vector<2x4608xbf16>, vector<4608x128xbf16>, vector<2x128xf32> -> vector<2x128xf32>
    %7 = arith.addf %3, %6 : vector<2x128xf32>
    %c0_6 = arith.constant 0 : index
    %c0_7 = arith.constant 0 : index
    %8 = vector.load %arg8[%c0_6, %c0_7] : memref<2x128xf32, #tpu.memory_space<vmem>>, vector<2x128xf32>
    tpu.vector_store %arg8[%c0_6, %c0_7], %7 {strides = array<i32>} : memref<2x128xf32, #tpu.memory_space<vmem>>, vector<2x128xf32>,
    %c1_i32 = arith.constant 1 : i32
    %9 = arith.cmpi eq, %arg1, %c1_i32 : i32
    %10 = arith.extui %9 : i1 to i32
    %c0_i32_8 = arith.constant 0 : i32
    %11 = arith.cmpi ne, %10, %c0_i32_8 : i32
    scf.if %11 {
      %c0_9 = arith.constant 0 : index
      %c0_10 = arith.constant 0 : index
      %12 = vector.load %arg8[%c0_9, %c0_10] : memref<2x128xf32, #tpu.memory_space<vmem>>, vector<2x128xf32>
      %c0_11 = arith.constant 0 : index
      %c0_12 = arith.constant 0 : index
      %13 = vector.load %arg4[%c0_11, %c0_12] : memref<1x128xf32, #tpu.memory_space<vmem>>, vector<1x128xf32>
      %14 = vector.broadcast %13 : vector<1x128xf32> to vector<2x128xf32>
      %15 = arith.addf %12, %14 : vector<2x128xf32>
      %cst_13 = arith.constant 0.000000e+00 : f32
      %16 = vector.broadcast %cst_13 : f32 to vector<2x128xf32>
      %17 = arith.maximumf %15, %16 : vector<2x128xf32>
      %18 = arith.truncf %17 : vector<2x128xf32> to vector<2x128xbf16>
      %c0_14 = arith.constant 0 : index
      %c0_15 = arith.constant 0 : index
      %19 = vector.load %arg5[%c0_14, %c0_15] : memref<128x10xbf16, #tpu.memory_space<vmem>>, vector<128x10xbf16>
      %cst_16 = arith.constant dense<0.000000e+00> : vector<2x10xf32>
      %20 = tpu.matmul %18, %19, %cst_16 {dimension_numbers = #tpu.dot_dimension_numbers<[1], [0], [0], [1], [0, 0, 1, 1], [], []>} : vector<2x128xbf16>, vector<128x10xbf16>, vector<2x10xf32> -> vector<2x10xf32>
      %c0_17 = arith.constant 0 : index
      %c0_18 = arith.constant 0 : index
      %21 = vector.load %arg6[%c0_17, %c0_18] : memref<1x10xf32, #tpu.memory_space<vmem>>, vector<1x10xf32>
      %22 = vector.broadcast %21 : vector<1x10xf32> to vector<2x10xf32>
      %23 = arith.addf %20, %22 : vector<2x10xf32>
      %c0_19 = arith.constant 0 : index
      %c0_20 = arith.constant 0 : index
      %24 = vector.load %arg7[%c0_19, %c0_20] : memref<2x10xf32, #tpu.memory_space<vmem>>, vector<2x10xf32>
      tpu.vector_store %arg7[%c0_19, %c0_20], %23 {strides = array<i32>} : memref<2x10xf32, #tpu.memory_space<vmem>>, vector<2x10xf32>,
    } else {
    }
    return
  }
  func.func @transform_0(%arg0: i32, %arg1: i32) -> (i32, i32) {
    %c0_i32 = arith.constant 0 : i32
    return %arg0, %arg1 : i32, i32
  }
  func.func @transform_1(%arg0: i32, %arg1: i32) -> (i32, i32) {
    %c0_i32 = arith.constant 0 : i32
    %c0_i32_0 = arith.constant 0 : i32
    return %arg1, %c0_i32 : i32, i32
  }
  func.func @transform_2(%arg0: i32, %arg1: i32) -> (i32, i32) {
    %c0_i32 = arith.constant 0 : i32
    %c0_i32_0 = arith.constant 0 : i32
    %c0_i32_1 = arith.constant 0 : i32
    return %c0_i32, %c0_i32_0 : i32, i32
  }
  func.func @transform_3(%arg0: i32, %arg1: i32) -> (i32, i32) {
    %c0_i32 = arith.constant 0 : i32
    %c0_i32_0 = arith.constant 0 : i32
    %c0_i32_1 = arith.constant 0 : i32
    return %c0_i32, %c0_i32_0 : i32, i32
  }
  func.func @transform_4(%arg0: i32, %arg1: i32) -> (i32, i32) {
    %c0_i32 = arith.constant 0 : i32
    %c0_i32_0 = arith.constant 0 : i32
    %c0_i32_1 = arith.constant 0 : i32
    return %c0_i32, %c0_i32_0 : i32, i32
  }
  func.func @transform_5(%arg0: i32, %arg1: i32) -> (i32, i32) {
    %c0_i32 = arith.constant 0 : i32
    %c0_i32_0 = arith.constant 0 : i32
    return %arg0, %c0_i32 : i32, i32
  }
}

</mosaic_0001>

<llo_original>
// kernel: simple_cnn_forward.3
$region0: #{simple_cnn_forward.3}
  #allocation0 [shape = 'u32[]', space=smem, size = 0x4, offset = 0x4, fixed_abs, tag = 'smem constant byte address 0x4 - core index']
  #allocation1 [shape = 'u32[72,128]{1,0:T(1,128)}', space=vmem, size = 0x9000, scoped, tag = 'internal scratch']
  #allocation2 [shape = 'f32[2,128]{1,0:T(2,128)}', space=vmem, size = 0x400, scoped, tag = 'scratch operand']
  %s0 = inlined_call_operand.vmem [shape: bf16[2,9216], index: 0, kind: input, shape index: {}]
  %s1 = inlined_call_operand.hbm [shape: bf16[9216,128], index: 1, kind: input, shape index: {}]
  %s2 = inlined_call_operand.hbm [shape: f32[1,128], index: 2, kind: input, shape index: {}]
  %s3 = inlined_call_operand.vmem [shape: bf16[128,10], index: 3, kind: input, shape index: {}]
  %s4 = inlined_call_operand.hbm [shape: f32[1,10], index: 4, kind: input, shape index: {}]
  %s5 = inlined_call_operand.hbm [shape: f32[2,10], index: 5, kind: output, shape index: {}]
  %s6 = sld [smem:[#allocation0]]
  $region73: #{simple_cnn_forward.3} parent=0
    _
  %s8 = ssub.s32 1, %s6
  %s9 = scalar_select 0, %s8, %s6
  $region1: #{simple_cnn_forward.3} parent=0
    #allocation3 [shape = 'u8[2359296]{0}', space=vmem, size = 0x240000, scoped, tag = 'input window, operand 1']
    #allocation4 [shape = 's32[2]{0}', space=sflag, size = 0x8, scoped, tag = 'scoped memory for simple_cnn_forward.3']
    #allocation5 [shape = 's32[2]{0}', space=sflag, size = 0x8, scoped, tag = 'scoped memory for simple_cnn_forward.3']
    #allocation6 [shape = 'u8[512]{0}', space=vmem, size = 0x400, scoped, tag = 'input window, operand 2, single buffered']
    #allocation7 [shape = 's32[1]{0}', space=sflag, size = 0x4, scoped, tag = 'scoped memory for simple_cnn_forward.3']
    #allocation8 [shape = 'u8[512]{0}', space=vmem, size = 0x400, scoped, tag = 'input window, operand 4, single buffered']
    #allocation9 [shape = 'u8[1024]{0}', space=vmem, size = 0x400, scoped, tag = 'output window, operand 0, single buffered']
    %10 = vsyncpa [#allocation4], 0
    %s11 = scalar_lea.sflag [#allocation4], 1
    %12 = vsyncpa %s11, 0
    %13 = vsyncpa [#allocation7], 0
    %14 = vsyncpa [#allocation5], 0
    loop: start=0, step=1, limit=4
    $region2: #{simple_cnn_forward.3} parent=1 // loop_pre_header
      _
    $region3: #{simple_cnn_forward.3} parent=1 // loop_header
      %s16 = sphi 0, %s20
      %p17 = scmp.ge.s32.totalorder %s16, 4
      %s23 = sphi 0, %s35
      %s24 = sphi 0, %s31
      %s25 = sphi 0, %s23
      %s26 = sphi 0, %s24
      %s27 = sphi 0, %s25
      %s28 = sphi 0, %s26
      %s40 = sphi 0, %s42
      %s43 = sphi 0, %s40
      %s44 = sphi 0, %s43
      %s60 = sphi 0, %s44
      %s66 = sphi 0, %s68
      %s69 = sphi 0, %s66
      %s70 = sphi 0, %s69
      %s86 = sphi 0, %s70
      %s90 = sphi 0, %s90
      %s92 = sphi 0, %s90
      %s93 = sphi 0, %s92
      %s107 = sphi 0, %s93
      %s111 = sphi 0, %s111
      %s113 = sphi 0, %s111
      %s114 = sphi 0, %s113
      %s128 = sphi 0, %s114
      %s132 = sphi 0, %s132
      %s134 = sphi 0, %s132
      %s135 = sphi 0, %s134
      %s149 = sphi 0, %s135
      %s155 = sphi 0, %s157
      %s158 = sphi 0, %s155
      %s159 = sphi 0, %s158
      %s175 = sphi 0, %s159
    $region4: #{simple_cnn_forward.3} parent=1 // loop_header_branch
      %19 = sbr.rel (%p17) target = $region8
    $region5: #{simple_cnn_forward.3} parent=1 // loop_body
      %s21 = ssub.s32 %s16, 1
      %s22 = ssub.s32 %s16, 2
      %s29 = sadd.s32 1, %s24
      %p30 = scmp.ge.s32.totalorder %s29, 2
      %s31 = scalar_select %p30, 0, %s29
      %s32 = sadd.s32 1, %s23
      %s33 = scalar_select %p30, %s32, %s23
      %p34 = scmp.ge.s32.totalorder %s33, 1
      %s35 = scalar_select %p34, 0, %s33
      %s36 = ssub.s32 %s23, %s35
      %s37 = ssub.s32 %s24, %s31
      %s38 = sor.u32 %s36, %s37
      %p39 = scmp.eq.s32.totalorder %s38, 0
      %s41 = sadd.s32 %s40, 1
      %s42 = scalar_select %p39, %s40, %s41
      %p45 = pneg %p39
      %p46 = scmp.eq.s32.totalorder %s16, 1
      %p47 = por %p45, %p46
      %p48 = scmp.ne.s32.totalorder %s40, %s43
      %p49 = scmp.eq.s32.totalorder %s16, 0
      %p50 = por %p48, %p49
      %p51 = scmp.ne.s32.totalorder %s40, %s43
      %p52 = scmp.eq.s32.totalorder %s21, 1
      %p53 = por %p51, %p52
      %p54 = scmp.ne.s32.totalorder %s43, %s44
      %p55 = scmp.eq.s32.totalorder %s21, 0
      %p56 = por %p54, %p55
      %p57 = scmp.ne.s32.totalorder %s43, %s44
      %p58 = scmp.eq.s32.totalorder %s22, 1
      %p59 = por %p57, %p58
      %p61 = scmp.ne.s32.totalorder %s44, %s60
      %p62 = scmp.eq.s32.totalorder %s22, 0
      %p63 = por %p61, %p62
      %s64 = ssub.s32 %s24, %s31
      %p65 = scmp.eq.s32.totalorder %s64, 0
      %s67 = sadd.s32 %s66, 1
      %s68 = scalar_select %p65, %s66, %s67
      %p71 = pneg %p65
      %p72 = scmp.eq.s32.totalorder %s16, 1
      %p73 = por %p71, %p72
      %p74 = scmp.ne.s32.totalorder %s66, %s69
      %p75 = scmp.eq.s32.totalorder %s16, 0
      %p76 = por %p74, %p75
      %p77 = scmp.ne.s32.totalorder %s66, %s69
      %p78 = scmp.eq.s32.totalorder %s21, 1
      %p79 = por %p77, %p78
      %p80 = scmp.ne.s32.totalorder %s69, %s70
      %p81 = scmp.eq.s32.totalorder %s21, 0
      %p82 = por %p80, %p81
      %p83 = scmp.ne.s32.totalorder %s69, %s70
      %p84 = scmp.eq.s32.totalorder %s22, 1
      %p85 = por %p83, %p84
      %p87 = scmp.ne.s32.totalorder %s70, %s86
      %p88 = scmp.eq.s32.totalorder %s22, 0
      %p89 = por %p87, %p88
      %s91 = sadd.s32 %s90, 1
      %p94 = scmp.eq.s32.totalorder %s16, 1
      %p95 = scmp.ne.s32.totalorder %s90, %s92
      %p96 = scmp.eq.s32.totalorder %s16, 0
      %p97 = por %p95, %p96
      %p98 = scmp.ne.s32.totalorder %s90, %s92
      %p99 = scmp.eq.s32.totalorder %s21, 1
      %p100 = por %p98, %p99
      %p101 = scmp.ne.s32.totalorder %s92, %s93
      %p102 = scmp.eq.s32.totalorder %s21, 0
      %p103 = por %p101, %p102
      %p104 = scmp.ne.s32.totalorder %s92, %s93
      %p105 = scmp.eq.s32.totalorder %s22, 1
      %p106 = por %p104, %p105
      %p108 = scmp.ne.s32.totalorder %s93, %s107
      %p109 = scmp.eq.s32.totalorder %s22, 0
      %p110 = por %p108, %p109
      %s112 = sadd.s32 %s111, 1
      %p115 = scmp.eq.s32.totalorder %s16, 1
      %p116 = scmp.ne.s32.totalorder %s111, %s113
      %p117 = scmp.eq.s32.totalorder %s16, 0
      %p118 = por %p116, %p117
      %p119 = scmp.ne.s32.totalorder %s111, %s113
      %p120 = scmp.eq.s32.totalorder %s21, 1
      %p121 = por %p119, %p120
      %p122 = scmp.ne.s32.totalorder %s113, %s114
      %p123 = scmp.eq.s32.totalorder %s21, 0
      %p124 = por %p122, %p123
      %p125 = scmp.ne.s32.totalorder %s113, %s114
      %p126 = scmp.eq.s32.totalorder %s22, 1
      %p127 = por %p125, %p126
      %p129 = scmp.ne.s32.totalorder %s114, %s128
      %p130 = scmp.eq.s32.totalorder %s22, 0
      %p131 = por %p129, %p130
      %s133 = sadd.s32 %s132, 1
      %p136 = scmp.eq.s32.totalorder %s16, 1
      %p137 = scmp.ne.s32.totalorder %s132, %s134
      %p138 = scmp.eq.s32.totalorder %s16, 0
      %p139 = por %p137, %p138
      %p140 = scmp.ne.s32.totalorder %s132, %s134
      %p141 = scmp.eq.s32.totalorder %s21, 1
      %p142 = por %p140, %p141
      %p143 = scmp.ne.s32.totalorder %s134, %s135
      %p144 = scmp.eq.s32.totalorder %s21, 0
      %p145 = por %p143, %p144
      %p146 = scmp.ne.s32.totalorder %s134, %s135
      %p147 = scmp.eq.s32.totalorder %s22, 1
      %p148 = por %p146, %p147
      %p150 = scmp.ne.s32.totalorder %s135, %s149
      %p151 = scmp.eq.s32.totalorder %s22, 0
      %p152 = por %p150, %p151
      %s153 = ssub.s32 %s23, %s35
      %p154 = scmp.eq.s32.totalorder %s153, 0
      %s156 = sadd.s32 %s155, 1
      %s157 = scalar_select %p154, %s155, %s156
      %p160 = pneg %p154
      %p161 = scmp.eq.s32.totalorder %s16, 1
      %p162 = por %p160, %p161
      %p163 = scmp.ne.s32.totalorder %s155, %s158
      %p164 = scmp.eq.s32.totalorder %s16, 0
      %p165 = por %p163, %p164
      %p166 = scmp.ne.s32.totalorder %s155, %s158
      %p167 = scmp.eq.s32.totalorder %s21, 1
      %p168 = por %p166, %p167
      %p169 = scmp.ne.s32.totalorder %s158, %s159
      %p170 = scmp.eq.s32.totalorder %s21, 0
      %p171 = por %p169, %p170
      %p172 = scmp.ne.s32.totalorder %s158, %s159
      %p173 = scmp.eq.s32.totalorder %s22, 1
      %p174 = por %p172, %p173
      %p176 = scmp.ne.s32.totalorder %s159, %s175
      %p177 = scmp.eq.s32.totalorder %s22, 0
      %p178 = por %p176, %p177
      %p179 = scmp.le.s32.totalorder 1, %s16
      %p180 = scmp.lt.s32.totalorder %s16, 3
      %p181 = pnand %p179, %p180
      %p182 = pneg %p181
      // Predicated region
      $region9: #{simple_cnn_forward.3} parent=5 // pred_check
        _
      $region10: #{simple_cnn_forward.3} parent=5 // pred_check_branch
        %184 = sbr.rel (%p181) target = $region12
      $region11: #{simple_cnn_forward.3} parent=5 // pred_region
        %s185 = ssub.s32 %s16, 1
        // Predicated region
        $region13: #{simple_cnn_forward.3} parent=11 // pred_check
          %p186 = pneg %p103
        $region14: #{simple_cnn_forward.3} parent=11 // pred_check_branch
          %188 = sbr.rel (%p186) target = $region16
        $region15: #{simple_cnn_forward.3} parent=11 // pred_region
          %190 = vsyncadd [#allocation7], 0
          %s192 = sshll.u32 %s2, 4
          %s193 = int_to_ptr.hbm [resolvable:$true] %s192
          %s194 = sshll.u32 [#allocation6], 4
          %s195 = int_to_ptr.vmem [resolvable:$true] %s194
          %197 = dma.hbm_to_vmem [thread:$0]  %s193, 16, %s195, [#allocation7]
        $region16: #{simple_cnn_forward.3} parent=11 // pred_fallthru
          _
        // Predicated region
        $region17: #{simple_cnn_forward.3} parent=11 // pred_check
          %p198 = pneg %p124
        $region18: #{simple_cnn_forward.3} parent=11 // pred_check_branch
          %200 = sbr.rel (%p198) target = $region20
        $region19: #{simple_cnn_forward.3} parent=11 // pred_region
          _
        $region20: #{simple_cnn_forward.3} parent=11 // pred_fallthru
          _
        // Predicated region
        $region21: #{simple_cnn_forward.3} parent=11 // pred_check
          %p201 = pneg %p145
        $region22: #{simple_cnn_forward.3} parent=11 // pred_check_branch
          %203 = sbr.rel (%p201) target = $region24
        $region23: #{simple_cnn_forward.3} parent=11 // pred_region
          %205 = vsyncadd [#allocation7], 0
          %s207 = sshll.u32 %s4, 4
          %s208 = int_to_ptr.hbm [resolvable:$true] %s207
          %s209 = sshll.u32 [#allocation8], 4
          %s210 = int_to_ptr.vmem [resolvable:$true] %s209
          %212 = dma.hbm_to_vmem [thread:$0]  %s208, 16, %s210, [#allocation7]
        $region24: #{simple_cnn_forward.3} parent=11 // pred_fallthru
          _
      $region12: #{simple_cnn_forward.3} parent=5 // pred_fallthru
        _
      %p213 = scmp.lt.s32.totalorder %s16, 2
      // Predicated region
      $region25: #{simple_cnn_forward.3} parent=5 // pred_check
        %p214 = pneg %p213
      $region26: #{simple_cnn_forward.3} parent=5 // pred_check_branch
        %216 = sbr.rel (%p214) target = $region28
      $region27: #{simple_cnn_forward.3} parent=5 // pred_region
        // Predicated region
        $region29: #{simple_cnn_forward.3} parent=27 // pred_check
          %p217 = pneg %p50
        $region30: #{simple_cnn_forward.3} parent=27 // pred_check_branch
          %219 = sbr.rel (%p217) target = $region32
        $region31: #{simple_cnn_forward.3} parent=27 // pred_region
          %s220 = smul.u32 36, %s24
          %p221 = scmp.lt.s32.totalorder %s23, 0
          %s222 = scalar_select %p221, %s23, 0
          %p223 = scmp.lt.s32.totalorder %s220, 71
          %s224 = scalar_select %p223, %s220, 71
          %s225 = smul.addr %s222, 72
          %s226 = sadd.s32 %s224, %s225
          %s227 = scalar_lea.vmem %s0, %s226
          %s228 = smul.u32 36, %s24
        $region32: #{simple_cnn_forward.3} parent=27 // pred_fallthru
          _
        // Predicated region
        $region33: #{simple_cnn_forward.3} parent=27 // pred_check
          %p229 = pneg %p76
        $region34: #{simple_cnn_forward.3} parent=27 // pred_check_branch
          %231 = sbr.rel (%p229) target = $region36
        $region35: #{simple_cnn_forward.3} parent=27 // pred_region
          %s232 = sand.u32 %s66, 1
          %s233 = scalar_lea.sflag [#allocation4], %s232
          %s234 = sand.u32 %s66, 1
          %s235 = smul.addr %s234, 2304
          %s236 = scalar_lea.vmem [#allocation3], %s235
          %s237 = smul.u32 576, %s24
          %239 = vsyncadd %s233, 0
          %s240 = smul.addr %s237, 4
          %s241 = scalar_lea.hbm %s1, %s240
          %s242 = sshll.u32 %s241, 4
          %s243 = int_to_ptr.hbm [resolvable:$true] %s242
          %s244 = sshll.u32 %s236, 4
          %s245 = int_to_ptr.vmem [resolvable:$true] %s244
          %250 = dma.hbm_to_vmem [thread:$0]  %s243, 36864, %s245, %s233, 64, 64, 4
        $region36: #{simple_cnn_forward.3} parent=27 // pred_fallthru
          _
      $region28: #{simple_cnn_forward.3} parent=5 // pred_fallthru
        _
      %p251 = scmp.le.s32.totalorder 1, %s16
      %p252 = scmp.lt.s32.totalorder %s16, 3
      %p253 = pnand %p251, %p252
      %p254 = pneg %p253
      // Predicated region
      $region37: #{simple_cnn_forward.3} parent=5 // pred_check
        _
      $region38: #{simple_cnn_forward.3} parent=5 // pred_check_branch
        %256 = sbr.rel (%p253) target = $region40
      $region39: #{simple_cnn_forward.3} parent=5 // pred_region
        %s257 = ssub.s32 %s16, 1
        %s258 = sand.u32 %s69, 1
        %s259 = scalar_lea.sflag [#allocation4], %s258
        %s260 = sand.u32 %s69, 1
        %s261 = smul.addr %s260, 2304
        %s262 = scalar_lea.vmem [#allocation3], %s261
        // Predicated region
        $region41: #{simple_cnn_forward.3} parent=39 // pred_check
          %p263 = pneg %p82
        $region42: #{simple_cnn_forward.3} parent=39 // pred_check_branch
          %265 = sbr.rel (%p263) target = $region44
        $region43: #{simple_cnn_forward.3} parent=39 // pred_region
          %267 = dma.done %s259, 36864
        $region44: #{simple_cnn_forward.3} parent=39 // pred_fallthru
          _
        // Predicated region
        $region45: #{simple_cnn_forward.3} parent=39 // pred_check
          %p268 = pneg %p103
        $region46: #{simple_cnn_forward.3} parent=39 // pred_check_branch
          %270 = sbr.rel (%p268) target = $region48
        $region47: #{simple_cnn_forward.3} parent=39 // pred_region
          %272 = dma.done [#allocation7], 16
        $region48: #{simple_cnn_forward.3} parent=39 // pred_fallthru
          _
        // Predicated region
        $region49: #{simple_cnn_forward.3} parent=39 // pred_check
          %p273 = pneg %p145
        $region50: #{simple_cnn_forward.3} parent=39 // pred_check_branch
          %275 = sbr.rel (%p273) target = $region52
        $region51: #{simple_cnn_forward.3} parent=39 // pred_region
          %277 = dma.done [#allocation7], 16
        $region52: #{simple_cnn_forward.3} parent=39 // pred_fallthru
          _
        %s278 = smul.u32 36, %s26
        %p279 = scmp.lt.s32.totalorder %s25, 0
        %s280 = scalar_select %p279, %s25, 0
        %p281 = scmp.lt.s32.totalorder %s278, 71
        %s282 = scalar_select %p281, %s278, 71
        %s283 = smul.addr %s280, 72
        %s284 = sadd.s32 %s282, %s283
        %s285 = scalar_lea.vmem %s0, %s284
        %p286 = pneg %p56
        %p287 = pneg %p53
        %s288 = sand.u32 %s69, 1
        %s289 = scalar_lea.sflag [#allocation4], %s288
        %s290 = sand.u32 %s69, 1
        %s291 = smul.addr %s290, 2304
        %s292 = scalar_lea.vmem [#allocation3], %s291
        %p293 = pneg %p82
        %p294 = pneg %p79
        %p295 = pneg %p103
        %p296 = pneg %p100
        %p297 = pneg %p124
        %p298 = pneg %p121
        %p299 = pneg %p145
        %p300 = pneg %p142
        %p301 = pneg %p171
        %p302 = pneg %p168
        %s303 = smul.u32 36, %s26
        %p304 = scmp.lt.s32.totalorder %s25, 0
        %s305 = scalar_select %p304, %s25, 0
        %p306 = scmp.lt.s32.totalorder %s303, 71
        %s307 = scalar_select %p306, %s303, 71
        %s308 = smul.addr %s305, 72
        %s309 = sadd.s32 %s307, %s308
        %s310 = scalar_lea.vmem %s0, %s309
        %s311 = smul.u32 36, %s26
        %s312 = smul.u32 576, %s26
        %p313 = scmp.eq.s32.totalorder %s26, 0
        // Predicated region
        $region53: #{simple_cnn_forward.3} parent=39 // pred_check
          %p314 = pneg %p313
        $region54: #{simple_cnn_forward.3} parent=39 // pred_check_branch
          %316 = sbr.rel (%p314) target = $region56
        $region55: #{simple_cnn_forward.3} parent=39 // pred_region
          %317 = vst [vmem:[#allocation2] sm:$0x3] 0.0
        $region56: #{simple_cnn_forward.3} parent=39 // pred_fallthru
          _
        %v318 = vld [vmem:[#allocation2] sm:$0x3]
        %v319 = vld [vmem:[%s310] sm:$0xff]
        %v320 = vld [vmem:[%s310 + $0x8] sm:$0xff]
        %v321 = vld [vmem:[%s310 + $0x10] sm:$0xff]
        %v322 = vld [vmem:[%s310 + $0x18] sm:$0xff]
        %v323 = vld [vmem:[%s310 + $0x20] sm:$0xf]
        %v324 = vld [vmem:[%s262] sm:$0xf]
        %v325 = vld [vmem:[%s262 + $0x4] sm:$0xf]
        %v326 = vld [vmem:[%s262 + $0x8] sm:$0xf]
        %v327 = vld [vmem:[%s262 + $0xc] sm:$0xf]
        %v328 = vld [vmem:[%s262 + $0x10] sm:$0xf]
        %v329 = vld [vmem:[%s262 + $0x14] sm:$0xf]
        %v330 = vld [vmem:[%s262 + $0x18] sm:$0xf]
        %v331 = vld [vmem:[%s262 + $0x1c] sm:$0xf]
        %v332 = vld [vmem:[%s262 + $0x20] sm:$0xf]
        %v333 = vld [vmem:[%s262 + $0x24] sm:$0xf]
        %v334 = vld [vmem:[%s262 + $0x28] sm:$0xf]
        %v335 = vld [vmem:[%s262 + $0x2c] sm:$0xf]
        %v336 = vld [vmem:[%s262 + $0x30] sm:$0xf]
        %v337 = vld [vmem:[%s262 + $0x34] sm:$0xf]
        %v338 = vld [vmem:[%s262 + $0x38] sm:$0xf]
        %v339 = vld [vmem:[%s262 + $0x3c] sm:$0xf]
        %v340 = vld [vmem:[%s262 + $0x40] sm:$0xf]
        %v341 = vld [vmem:[%s262 + $0x44] sm:$0xf]
        %v342 = vld [vmem:[%s262 + $0x48] sm:$0xf]
        %v343 = vld [vmem:[%s262 + $0x4c] sm:$0xf]
        %v344 = vld [vmem:[%s262 + $0x50] sm:$0xf]
        %v345 = vld [vmem:[%s262 + $0x54] sm:$0xf]
        %v346 = vld [vmem:[%s262 + $0x58] sm:$0xf]
        %v347 = vld [vmem:[%s262 + $0x5c] sm:$0xf]
        %v348 = vld [vmem:[%s262 + $0x60] sm:$0xf]
        %v349 = vld [vmem:[%s262 + $0x64] sm:$0xf]
        %v350 = vld [vmem:[%s262 + $0x68] sm:$0xf]
        %v351 = vld [vmem:[%s262 + $0x6c] sm:$0xf]
        %v352 = vld [vmem:[%s262 + $0x70] sm:$0xf]
        %v353 = vld [vmem:[%s262 + $0x74] sm:$0xf]
        %v354 = vld [vmem:[%s262 + $0x78] sm:$0xf]
        %v355 = vld [vmem:[%s262 + $0x7c] sm:$0xf]
        %v356 = vld [vmem:[%s262 + $0x80] sm:$0xf]
        %v357 = vld [vmem:[%s262 + $0x84] sm:$0xf]
        %v358 = vld [vmem:[%s262 + $0x88] sm:$0xf]
        %v359 = vld [vmem:[%s262 + $0x8c] sm:$0xf]
        %v360 = vld [vmem:[%s262 + $0x90] sm:$0xf]
        %v361 = vld [vmem:[%s262 + $0x94] sm:$0xf]
        %v362 = vld [vmem:[%s262 + $0x98] sm:$0xf]
        %v363 = vld [vmem:[%s262 + $0x9c] sm:$0xf]
        %v364 = vld [vmem:[%s262 + $0xa0] sm:$0xf]
        %v365 = vld [vmem:[%s262 + $0xa4] sm:$0xf]
        %v366 = vld [vmem:[%s262 + $0xa8] sm:$0xf]
        %v367 = vld [vmem:[%s262 + $0xac] sm:$0xf]
        %v368 = vld [vmem:[%s262 + $0xb0] sm:$0xf]
        %v369 = vld [vmem:[%s262 + $0xb4] sm:$0xf]
        %v370 = vld [vmem:[%s262 + $0xb8] sm:$0xf]
        %v371 = vld [vmem:[%s262 + $0xbc] sm:$0xf]
        %v372 = vld [vmem:[%s262 + $0xc0] sm:$0xf]
        %v373 = vld [vmem:[%s262 + $0xc4] sm:$0xf]
        %v374 = vld [vmem:[%s262 + $0xc8] sm:$0xf]
        %v375 = vld [vmem:[%s262 + $0xcc] sm:$0xf]
        %v376 = vld [vmem:[%s262 + $0xd0] sm:$0xf]
        %v377 = vld [vmem:[%s262 + $0xd4] sm:$0xf]
        %v378 = vld [vmem:[%s262 + $0xd8] sm:$0xf]
        %v379 = vld [vmem:[%s262 + $0xdc] sm:$0xf]
        %v380 = vld [vmem:[%s262 + $0xe0] sm:$0xf]
        %v381 = vld [vmem:[%s262 + $0xe4] sm:$0xf]
        %v382 = vld [vmem:[%s262 + $0xe8] sm:$0xf]
        %v383 = vld [vmem:[%s262 + $0xec] sm:$0xf]
        %v384 = vld [vmem:[%s262 + $0xf0] sm:$0xf]
        %v385 = vld [vmem:[%s262 + $0xf4] sm:$0xf]
        %v386 = vld [vmem:[%s262 + $0xf8] sm:$0xf]
        %v387 = vld [vmem:[%s262 + $0xfc] sm:$0xf]
        %v388 = vld [vmem:[%s262 + $0x100] sm:$0xf]
        %v389 = vld [vmem:[%s262 + $0x104] sm:$0xf]
        %v390 = vld [vmem:[%s262 + $0x108] sm:$0xf]
        %v391 = vld [vmem:[%s262 + $0x10c] sm:$0xf]
        %v392 = vld [vmem:[%s262 + $0x110] sm:$0xf]
        %v393 = vld [vmem:[%s262 + $0x114] sm:$0xf]
        %v394 = vld [vmem:[%s262 + $0x118] sm:$0xf]
        %v395 = vld [vmem:[%s262 + $0x11c] sm:$0xf]
        %v396 = vld [vmem:[%s262 + $0x120] sm:$0xf]
        %v397 = vld [vmem:[%s262 + $0x124] sm:$0xf]
        %v398 = vld [vmem:[%s262 + $0x128] sm:$0xf]
        %v399 = vld [vmem:[%s262 + $0x12c] sm:$0xf]
        %v400 = vld [vmem:[%s262 + $0x130] sm:$0xf]
        %v401 = vld [vmem:[%s262 + $0x134] sm:$0xf]
        %v402 = vld [vmem:[%s262 + $0x138] sm:$0xf]
        %v403 = vld [vmem:[%s262 + $0x13c] sm:$0xf]
        %v404 = vld [vmem:[%s262 + $0x140] sm:$0xf]
        %v405 = vld [vmem:[%s262 + $0x144] sm:$0xf]
        %v406 = vld [vmem:[%s262 + $0x148] sm:$0xf]
        %v407 = vld [vmem:[%s262 + $0x14c] sm:$0xf]
        %v408 = vld [vmem:[%s262 + $0x150] sm:$0xf]
        %v409 = vld [vmem:[%s262 + $0x154] sm:$0xf]
        %v410 = vld [vmem:[%s262 + $0x158] sm:$0xf]
        %v411 = vld [vmem:[%s262 + $0x15c] sm:$0xf]
        %v412 = vld [vmem:[%s262 + $0x160] sm:$0xf]
        %v413 = vld [vmem:[%s262 + $0x164] sm:$0xf]
        %v414 = vld [vmem:[%s262 + $0x168] sm:$0xf]
        %v415 = vld [vmem:[%s262 + $0x16c] sm:$0xf]
        %v416 = vld [vmem:[%s262 + $0x170] sm:$0xf]
        %v417 = vld [vmem:[%s262 + $0x174] sm:$0xf]
        %v418 = vld [vmem:[%s262 + $0x178] sm:$0xf]
        %v419 = vld [vmem:[%s262 + $0x17c] sm:$0xf]
        %v420 = vld [vmem:[%s262 + $0x180] sm:$0xf]
        %v421 = vld [vmem:[%s262 + $0x184] sm:$0xf]
        %v422 = vld [vmem:[%s262 + $0x188] sm:$0xf]
        %v423 = vld [vmem:[%s262 + $0x18c] sm:$0xf]
        %v424 = vld [vmem:[%s262 + $0x190] sm:$0xf]
        %v425 = vld [vmem:[%s262 + $0x194] sm:$0xf]
        %v426 = vld [vmem:[%s262 + $0x198] sm:$0xf]
        %v427 = vld [vmem:[%s262 + $0x19c] sm:$0xf]
        %v428 = vld [vmem:[%s262 + $0x1a0] sm:$0xf]
        %v429 = vld [vmem:[%s262 + $0x1a4] sm:$0xf]
        %v430 = vld [vmem:[%s262 + $0x1a8] sm:$0xf]
        %v431 = vld [vmem:[%s262 + $0x1ac] sm:$0xf]
        %v432 = vld [vmem:[%s262 + $0x1b0] sm:$0xf]
        %v433 = vld [vmem:[%s262 + $0x1b4] sm:$0xf]
        %v434 = vld [vmem:[%s262 + $0x1b8] sm:$0xf]
        %v435 = vld [vmem:[%s262 + $0x1bc] sm:$0xf]
        %v436 = vld [vmem:[%s262 + $0x1c0] sm:$0xf]
        %v437 = vld [vmem:[%s262 + $0x1c4] sm:$0xf]
        %v438 = vld [vmem:[%s262 + $0x1c8] sm:$0xf]
        %v439 = vld [vmem:[%s262 + $0x1cc] sm:$0xf]
        %v440 = vld [vmem:[%s262 + $0x1d0] sm:$0xf]
        %v441 = vld [vmem:[%s262 + $0x1d4] sm:$0xf]
        %v442 = vld [vmem:[%s262 + $0x1d8] sm:$0xf]
        %v443 = vld [vmem:[%s262 + $0x1dc] sm:$0xf]
        %v444 = vld [vmem:[%s262 + $0x1e0] sm:$0xf]
        %v445 = vld [vmem:[%s262 + $0x1e4] sm:$0xf]
        %v446 = vld [vmem:[%s262 + $0x1e8] sm:$0xf]
        %v447 = vld [vmem:[%s262 + $0x1ec] sm:$0xf]
        %v448 = vld [vmem:[%s262 + $0x1f0] sm:$0xf]
        %v449 = vld [vmem:[%s262 + $0x1f4] sm:$0xf]
        %v450 = vld [vmem:[%s262 + $0x1f8] sm:$0xf]
        %v451 = vld [vmem:[%s262 + $0x1fc] sm:$0xf]
        %v452 = vld [vmem:[%s262 + $0x200] sm:$0xf]
        %v453 = vld [vmem:[%s262 + $0x204] sm:$0xf]
        %v454 = vld [vmem:[%s262 + $0x208] sm:$0xf]
        %v455 = vld [vmem:[%s262 + $0x20c] sm:$0xf]
        %v456 = vld [vmem:[%s262 + $0x210] sm:$0xf]
        %v457 = vld [vmem:[%s262 + $0x214] sm:$0xf]
        %v458 = vld [vmem:[%s262 + $0x218] sm:$0xf]
        %v459 = vld [vmem:[%s262 + $0x21c] sm:$0xf]
        %v460 = vld [vmem:[%s262 + $0x220] sm:$0xf]
        %v461 = vld [vmem:[%s262 + $0x224] sm:$0xf]
        %v462 = vld [vmem:[%s262 + $0x228] sm:$0xf]
        %v463 = vld [vmem:[%s262 + $0x22c] sm:$0xf]
        %v464 = vld [vmem:[%s262 + $0x230] sm:$0xf]
        %v465 = vld [vmem:[%s262 + $0x234] sm:$0xf]
        %v466 = vld [vmem:[%s262 + $0x238] sm:$0xf]
        %v467 = vld [vmem:[%s262 + $0x23c] sm:$0xf]
        %v468 = vld [vmem:[%s262 + $0x240] sm:$0xf]
        %v469 = vld [vmem:[%s262 + $0x244] sm:$0xf]
        %v470 = vld [vmem:[%s262 + $0x248] sm:$0xf]
        %v471 = vld [vmem:[%s262 + $0x24c] sm:$0xf]
        %v472 = vld [vmem:[%s262 + $0x250] sm:$0xf]
        %v473 = vld [vmem:[%s262 + $0x254] sm:$0xf]
        %v474 = vld [vmem:[%s262 + $0x258] sm:$0xf]
        %v475 = vld [vmem:[%s262 + $0x25c] sm:$0xf]
        %v476 = vld [vmem:[%s262 + $0x260] sm:$0xf]
        %v477 = vld [vmem:[%s262 + $0x264] sm:$0xf]
        %v478 = vld [vmem:[%s262 + $0x268] sm:$0xf]
        %v479 = vld [vmem:[%s262 + $0x26c] sm:$0xf]
        %v480 = vld [vmem:[%s262 + $0x270] sm:$0xf]
        %v481 = vld [vmem:[%s262 + $0x274] sm:$0xf]
        %v482 = vld [vmem:[%s262 + $0x278] sm:$0xf]
        %v483 = vld [vmem:[%s262 + $0x27c] sm:$0xf]
        %v484 = vld [vmem:[%s262 + $0x280] sm:$0xf]
        %v485 = vld [vmem:[%s262 + $0x284] sm:$0xf]
        %v486 = vld [vmem:[%s262 + $0x288] sm:$0xf]
        %v487 = vld [vmem:[%s262 + $0x28c] sm:$0xf]
        %v488 = vld [vmem:[%s262 + $0x290] sm:$0xf]
        %v489 = vld [vmem:[%s262 + $0x294] sm:$0xf]
        %v490 = vld [vmem:[%s262 + $0x298] sm:$0xf]
        %v491 = vld [vmem:[%s262 + $0x29c] sm:$0xf]
        %v492 = vld [vmem:[%s262 + $0x2a0] sm:$0xf]
        %v493 = vld [vmem:[%s262 + $0x2a4] sm:$0xf]
        %v494 = vld [vmem:[%s262 + $0x2a8] sm:$0xf]
        %v495 = vld [vmem:[%s262 + $0x2ac] sm:$0xf]
        %v496 = vld [vmem:[%s262 + $0x2b0] sm:$0xf]
        %v497 = vld [vmem:[%s262 + $0x2b4] sm:$0xf]
        %v498 = vld [vmem:[%s262 + $0x2b8] sm:$0xf]
        %v499 = vld [vmem:[%s262 + $0x2bc] sm:$0xf]
        %v500 = vld [vmem:[%s262 + $0x2c0] sm:$0xf]
        %v501 = vld [vmem:[%s262 + $0x2c4] sm:$0xf]
        %v502 = vld [vmem:[%s262 + $0x2c8] sm:$0xf]
        %v503 = vld [vmem:[%s262 + $0x2cc] sm:$0xf]
        %v504 = vld [vmem:[%s262 + $0x2d0] sm:$0xf]
        %v505 = vld [vmem:[%s262 + $0x2d4] sm:$0xf]
        %v506 = vld [vmem:[%s262 + $0x2d8] sm:$0xf]
        %v507 = vld [vmem:[%s262 + $0x2dc] sm:$0xf]
        %v508 = vld [vmem:[%s262 + $0x2e0] sm:$0xf]
        %v509 = vld [vmem:[%s262 + $0x2e4] sm:$0xf]
        %v510 = vld [vmem:[%s262 + $0x2e8] sm:$0xf]
        %v511 = vld [vmem:[%s262 + $0x2ec] sm:$0xf]
        %v512 = vld [vmem:[%s262 + $0x2f0] sm:$0xf]
        %v513 = vld [vmem:[%s262 + $0x2f4] sm:$0xf]
        %v514 = vld [vmem:[%s262 + $0x2f8] sm:$0xf]
        %v515 = vld [vmem:[%s262 + $0x2fc] sm:$0xf]
        %v516 = vld [vmem:[%s262 + $0x300] sm:$0xf]
        %v517 = vld [vmem:[%s262 + $0x304] sm:$0xf]
        %v518 = vld [vmem:[%s262 + $0x308] sm:$0xf]
        %v519 = vld [vmem:[%s262 + $0x30c] sm:$0xf]
        %v520 = vld [vmem:[%s262 + $0x310] sm:$0xf]
        %v521 = vld [vmem:[%s262 + $0x314] sm:$0xf]
        %v522 = vld [vmem:[%s262 + $0x318] sm:$0xf]
        %v523 = vld [vmem:[%s262 + $0x31c] sm:$0xf]
        %v524 = vld [vmem:[%s262 + $0x320] sm:$0xf]
        %v525 = vld [vmem:[%s262 + $0x324] sm:$0xf]
        %v526 = vld [vmem:[%s262 + $0x328] sm:$0xf]
        %v527 = vld [vmem:[%s262 + $0x32c] sm:$0xf]
        %v528 = vld [vmem:[%s262 + $0x330] sm:$0xf]
        %v529 = vld [vmem:[%s262 + $0x334] sm:$0xf]
        %v530 = vld [vmem:[%s262 + $0x338] sm:$0xf]
        %v531 = vld [vmem:[%s262 + $0x33c] sm:$0xf]
        %v532 = vld [vmem:[%s262 + $0x340] sm:$0xf]
        %v533 = vld [vmem:[%s262 + $0x344] sm:$0xf]
        %v534 = vld [vmem:[%s262 + $0x348] sm:$0xf]
        %v535 = vld [vmem:[%s262 + $0x34c] sm:$0xf]
        %v536 = vld [vmem:[%s262 + $0x350] sm:$0xf]
        %v537 = vld [vmem:[%s262 + $0x354] sm:$0xf]
        %v538 = vld [vmem:[%s262 + $0x358] sm:$0xf]
        %v539 = vld [vmem:[%s262 + $0x35c] sm:$0xf]
        %v540 = vld [vmem:[%s262 + $0x360] sm:$0xf]
        %v541 = vld [vmem:[%s262 + $0x364] sm:$0xf]
        %v542 = vld [vmem:[%s262 + $0x368] sm:$0xf]
        %v543 = vld [vmem:[%s262 + $0x36c] sm:$0xf]
        %v544 = vld [vmem:[%s262 + $0x370] sm:$0xf]
        %v545 = vld [vmem:[%s262 + $0x374] sm:$0xf]
        %v546 = vld [vmem:[%s262 + $0x378] sm:$0xf]
        %v547 = vld [vmem:[%s262 + $0x37c] sm:$0xf]
        %v548 = vld [vmem:[%s262 + $0x380] sm:$0xf]
        %v549 = vld [vmem:[%s262 + $0x384] sm:$0xf]
        %v550 = vld [vmem:[%s262 + $0x388] sm:$0xf]
        %v551 = vld [vmem:[%s262 + $0x38c] sm:$0xf]
        %v552 = vld [vmem:[%s262 + $0x390] sm:$0xf]
        %v553 = vld [vmem:[%s262 + $0x394] sm:$0xf]
        %v554 = vld [vmem:[%s262 + $0x398] sm:$0xf]
        %v555 = vld [vmem:[%s262 + $0x39c] sm:$0xf]
        %v556 = vld [vmem:[%s262 + $0x3a0] sm:$0xf]
        %v557 = vld [vmem:[%s262 + $0x3a4] sm:$0xf]
        %v558 = vld [vmem:[%s262 + $0x3a8] sm:$0xf]
        %v559 = vld [vmem:[%s262 + $0x3ac] sm:$0xf]
        %v560 = vld [vmem:[%s262 + $0x3b0] sm:$0xf]
        %v561 = vld [vmem:[%s262 + $0x3b4] sm:$0xf]
        %v562 = vld [vmem:[%s262 + $0x3b8] sm:$0xf]
        %v563 = vld [vmem:[%s262 + $0x3bc] sm:$0xf]
        %v564 = vld [vmem:[%s262 + $0x3c0] sm:$0xf]
        %v565 = vld [vmem:[%s262 + $0x3c4] sm:$0xf]
        %v566 = vld [vmem:[%s262 + $0x3c8] sm:$0xf]
        %v567 = vld [vmem:[%s262 + $0x3cc] sm:$0xf]
        %v568 = vld [vmem:[%s262 + $0x3d0] sm:$0xf]
        %v569 = vld [vmem:[%s262 + $0x3d4] sm:$0xf]
        %v570 = vld [vmem:[%s262 + $0x3d8] sm:$0xf]
        %v571 = vld [vmem:[%s262 + $0x3dc] sm:$0xf]
        %v572 = vld [vmem:[%s262 + $0x3e0] sm:$0xf]
        %v573 = vld [vmem:[%s262 + $0x3e4] sm:$0xf]
        %v574 = vld [vmem:[%s262 + $0x3e8] sm:$0xf]
        %v575 = vld [vmem:[%s262 + $0x3ec] sm:$0xf]
        %v576 = vld [vmem:[%s262 + $0x3f0] sm:$0xf]
        %v577 = vld [vmem:[%s262 + $0x3f4] sm:$0xf]
        %v578 = vld [vmem:[%s262 + $0x3f8] sm:$0xf]
        %v579 = vld [vmem:[%s262 + $0x3fc] sm:$0xf]
        %v580 = vld [vmem:[%s262 + $0x400] sm:$0xf]
        %v581 = vld [vmem:[%s262 + $0x404] sm:$0xf]
        %v582 = vld [vmem:[%s262 + $0x408] sm:$0xf]
        %v583 = vld [vmem:[%s262 + $0x40c] sm:$0xf]
        %v584 = vld [vmem:[%s262 + $0x410] sm:$0xf]
        %v585 = vld [vmem:[%s262 + $0x414] sm:$0xf]
        %v586 = vld [vmem:[%s262 + $0x418] sm:$0xf]
        %v587 = vld [vmem:[%s262 + $0x41c] sm:$0xf]
        %v588 = vld [vmem:[%s262 + $0x420] sm:$0xf]
        %v589 = vld [vmem:[%s262 + $0x424] sm:$0xf]
        %v590 = vld [vmem:[%s262 + $0x428] sm:$0xf]
        %v591 = vld [vmem:[%s262 + $0x42c] sm:$0xf]
        %v592 = vld [vmem:[%s262 + $0x430] sm:$0xf]
        %v593 = vld [vmem:[%s262 + $0x434] sm:$0xf]
        %v594 = vld [vmem:[%s262 + $0x438] sm:$0xf]
        %v595 = vld [vmem:[%s262 + $0x43c] sm:$0xf]
        %v596 = vld [vmem:[%s262 + $0x440] sm:$0xf]
        %v597 = vld [vmem:[%s262 + $0x444] sm:$0xf]
        %v598 = vld [vmem:[%s262 + $0x448] sm:$0xf]
        %v599 = vld [vmem:[%s262 + $0x44c] sm:$0xf]
        %v600 = vld [vmem:[%s262 + $0x450] sm:$0xf]
        %v601 = vld [vmem:[%s262 + $0x454] sm:$0xf]
        %v602 = vld [vmem:[%s262 + $0x458] sm:$0xf]
        %v603 = vld [vmem:[%s262 + $0x45c] sm:$0xf]
        %v604 = vld [vmem:[%s262 + $0x460] sm:$0xf]
        %v605 = vld [vmem:[%s262 + $0x464] sm:$0xf]
        %v606 = vld [vmem:[%s262 + $0x468] sm:$0xf]
        %v607 = vld [vmem:[%s262 + $0x46c] sm:$0xf]
        %v608 = vld [vmem:[%s262 + $0x470] sm:$0xf]
        %v609 = vld [vmem:[%s262 + $0x474] sm:$0xf]
        %v610 = vld [vmem:[%s262 + $0x478] sm:$0xf]
        %v611 = vld [vmem:[%s262 + $0x47c] sm:$0xf]
        %v612 = vld [vmem:[%s262 + $0x480] sm:$0xf]
        %v613 = vld [vmem:[%s262 + $0x484] sm:$0xf]
        %v614 = vld [vmem:[%s262 + $0x488] sm:$0xf]
        %v615 = vld [vmem:[%s262 + $0x48c] sm:$0xf]
        %v616 = vld [vmem:[%s262 + $0x490] sm:$0xf]
        %v617 = vld [vmem:[%s262 + $0x494] sm:$0xf]
        %v618 = vld [vmem:[%s262 + $0x498] sm:$0xf]
        %v619 = vld [vmem:[%s262 + $0x49c] sm:$0xf]
        %v620 = vld [vmem:[%s262 + $0x4a0] sm:$0xf]
        %v621 = vld [vmem:[%s262 + $0x4a4] sm:$0xf]
        %v622 = vld [vmem:[%s262 + $0x4a8] sm:$0xf]
        %v623 = vld [vmem:[%s262 + $0x4ac] sm:$0xf]
        %v624 = vld [vmem:[%s262 + $0x4b0] sm:$0xf]
        %v625 = vld [vmem:[%s262 + $0x4b4] sm:$0xf]
        %v626 = vld [vmem:[%s262 + $0x4b8] sm:$0xf]
        %v627 = vld [vmem:[%s262 + $0x4bc] sm:$0xf]
        %v628 = vld [vmem:[%s262 + $0x4c0] sm:$0xf]
        %v629 = vld [vmem:[%s262 + $0x4c4] sm:$0xf]
        %v630 = vld [vmem:[%s262 + $0x4c8] sm:$0xf]
        %v631 = vld [vmem:[%s262 + $0x4cc] sm:$0xf]
        %v632 = vld [vmem:[%s262 + $0x4d0] sm:$0xf]
        %v633 = vld [vmem:[%s262 + $0x4d4] sm:$0xf]
        %v634 = vld [vmem:[%s262 + $0x4d8] sm:$0xf]
        %v635 = vld [vmem:[%s262 + $0x4dc] sm:$0xf]
        %v636 = vld [vmem:[%s262 + $0x4e0] sm:$0xf]
        %v637 = vld [vmem:[%s262 + $0x4e4] sm:$0xf]
        %v638 = vld [vmem:[%s262 + $0x4e8] sm:$0xf]
        %v639 = vld [vmem:[%s262 + $0x4ec] sm:$0xf]
        %v640 = vld [vmem:[%s262 + $0x4f0] sm:$0xf]
        %v641 = vld [vmem:[%s262 + $0x4f4] sm:$0xf]
        %v642 = vld [vmem:[%s262 + $0x4f8] sm:$0xf]
        %v643 = vld [vmem:[%s262 + $0x4fc] sm:$0xf]
        %v644 = vld [vmem:[%s262 + $0x500] sm:$0xf]
        %v645 = vld [vmem:[%s262 + $0x504] sm:$0xf]
        %v646 = vld [vmem:[%s262 + $0x508] sm:$0xf]
        %v647 = vld [vmem:[%s262 + $0x50c] sm:$0xf]
        %v648 = vld [vmem:[%s262 + $0x510] sm:$0xf]
        %v649 = vld [vmem:[%s262 + $0x514] sm:$0xf]
        %v650 = vld [vmem:[%s262 + $0x518] sm:$0xf]
        %v651 = vld [vmem:[%s262 + $0x51c] sm:$0xf]
        %v652 = vld [vmem:[%s262 + $0x520] sm:$0xf]
        %v653 = vld [vmem:[%s262 + $0x524] sm:$0xf]
        %v654 = vld [vmem:[%s262 + $0x528] sm:$0xf]
        %v655 = vld [vmem:[%s262 + $0x52c] sm:$0xf]
        %v656 = vld [vmem:[%s262 + $0x530] sm:$0xf]
        %v657 = vld [vmem:[%s262 + $0x534] sm:$0xf]
        %v658 = vld [vmem:[%s262 + $0x538] sm:$0xf]
        %v659 = vld [vmem:[%s262 + $0x53c] sm:$0xf]
        %v660 = vld [vmem:[%s262 + $0x540] sm:$0xf]
        %v661 = vld [vmem:[%s262 + $0x544] sm:$0xf]
        %v662 = vld [vmem:[%s262 + $0x548] sm:$0xf]
        %v663 = vld [vmem:[%s262 + $0x54c] sm:$0xf]
        %v664 = vld [vmem:[%s262 + $0x550] sm:$0xf]
        %v665 = vld [vmem:[%s262 + $0x554] sm:$0xf]
        %v666 = vld [vmem:[%s262 + $0x558] sm:$0xf]
        %v667 = vld [vmem:[%s262 + $0x55c] sm:$0xf]
        %v668 = vld [vmem:[%s262 + $0x560] sm:$0xf]
        %v669 = vld [vmem:[%s262 + $0x564] sm:$0xf]
        %v670 = vld [vmem:[%s262 + $0x568] sm:$0xf]
        %v671 = vld [vmem:[%s262 + $0x56c] sm:$0xf]
        %v672 = vld [vmem:[%s262 + $0x570] sm:$0xf]
        %v673 = vld [vmem:[%s262 + $0x574] sm:$0xf]
        %v674 = vld [vmem:[%s262 + $0x578] sm:$0xf]
        %v675 = vld [vmem:[%s262 + $0x57c] sm:$0xf]
        %v676 = vld [vmem:[%s262 + $0x580] sm:$0xf]
        %v677 = vld [vmem:[%s262 + $0x584] sm:$0xf]
        %v678 = vld [vmem:[%s262 + $0x588] sm:$0xf]
        %v679 = vld [vmem:[%s262 + $0x58c] sm:$0xf]
        %v680 = vld [vmem:[%s262 + $0x590] sm:$0xf]
        %v681 = vld [vmem:[%s262 + $0x594] sm:$0xf]
        %v682 = vld [vmem:[%s262 + $0x598] sm:$0xf]
        %v683 = vld [vmem:[%s262 + $0x59c] sm:$0xf]
        %v684 = vld [vmem:[%s262 + $0x5a0] sm:$0xf]
        %v685 = vld [vmem:[%s262 + $0x5a4] sm:$0xf]
        %v686 = vld [vmem:[%s262 + $0x5a8] sm:$0xf]
        %v687 = vld [vmem:[%s262 + $0x5ac] sm:$0xf]
        %v688 = vld [vmem:[%s262 + $0x5b0] sm:$0xf]
        %v689 = vld [vmem:[%s262 + $0x5b4] sm:$0xf]
        %v690 = vld [vmem:[%s262 + $0x5b8] sm:$0xf]
        %v691 = vld [vmem:[%s262 + $0x5bc] sm:$0xf]
        %v692 = vld [vmem:[%s262 + $0x5c0] sm:$0xf]
        %v693 = vld [vmem:[%s262 + $0x5c4] sm:$0xf]
        %v694 = vld [vmem:[%s262 + $0x5c8] sm:$0xf]
        %v695 = vld [vmem:[%s262 + $0x5cc] sm:$0xf]
        %v696 = vld [vmem:[%s262 + $0x5d0] sm:$0xf]
        %v697 = vld [vmem:[%s262 + $0x5d4] sm:$0xf]
        %v698 = vld [vmem:[%s262 + $0x5d8] sm:$0xf]
        %v699 = vld [vmem:[%s262 + $0x5dc] sm:$0xf]
        %v700 = vld [vmem:[%s262 + $0x5e0] sm:$0xf]
        %v701 = vld [vmem:[%s262 + $0x5e4] sm:$0xf]
        %v702 = vld [vmem:[%s262 + $0x5e8] sm:$0xf]
        %v703 = vld [vmem:[%s262 + $0x5ec] sm:$0xf]
        %v704 = vld [vmem:[%s262 + $0x5f0] sm:$0xf]
        %v705 = vld [vmem:[%s262 + $0x5f4] sm:$0xf]
        %v706 = vld [vmem:[%s262 + $0x5f8] sm:$0xf]
        %v707 = vld [vmem:[%s262 + $0x5fc] sm:$0xf]
        %v708 = vld [vmem:[%s262 + $0x600] sm:$0xf]
        %v709 = vld [vmem:[%s262 + $0x604] sm:$0xf]
        %v710 = vld [vmem:[%s262 + $0x608] sm:$0xf]
        %v711 = vld [vmem:[%s262 + $0x60c] sm:$0xf]
        %v712 = vld [vmem:[%s262 + $0x610] sm:$0xf]
        %v713 = vld [vmem:[%s262 + $0x614] sm:$0xf]
        %v714 = vld [vmem:[%s262 + $0x618] sm:$0xf]
        %v715 = vld [vmem:[%s262 + $0x61c] sm:$0xf]
        %v716 = vld [vmem:[%s262 + $0x620] sm:$0xf]
        %v717 = vld [vmem:[%s262 + $0x624] sm:$0xf]
        %v718 = vld [vmem:[%s262 + $0x628] sm:$0xf]
        %v719 = vld [vmem:[%s262 + $0x62c] sm:$0xf]
        %v720 = vld [vmem:[%s262 + $0x630] sm:$0xf]
        %v721 = vld [vmem:[%s262 + $0x634] sm:$0xf]
        %v722 = vld [vmem:[%s262 + $0x638] sm:$0xf]
        %v723 = vld [vmem:[%s262 + $0x63c] sm:$0xf]
        %v724 = vld [vmem:[%s262 + $0x640] sm:$0xf]
        %v725 = vld [vmem:[%s262 + $0x644] sm:$0xf]
        %v726 = vld [vmem:[%s262 + $0x648] sm:$0xf]
        %v727 = vld [vmem:[%s262 + $0x64c] sm:$0xf]
        %v728 = vld [vmem:[%s262 + $0x650] sm:$0xf]
        %v729 = vld [vmem:[%s262 + $0x654] sm:$0xf]
        %v730 = vld [vmem:[%s262 + $0x658] sm:$0xf]
        %v731 = vld [vmem:[%s262 + $0x65c] sm:$0xf]
        %v732 = vld [vmem:[%s262 + $0x660] sm:$0xf]
        %v733 = vld [vmem:[%s262 + $0x664] sm:$0xf]
        %v734 = vld [vmem:[%s262 + $0x668] sm:$0xf]
        %v735 = vld [vmem:[%s262 + $0x66c] sm:$0xf]
        %v736 = vld [vmem:[%s262 + $0x670] sm:$0xf]
        %v737 = vld [vmem:[%s262 + $0x674] sm:$0xf]
        %v738 = vld [vmem:[%s262 + $0x678] sm:$0xf]
        %v739 = vld [vmem:[%s262 + $0x67c] sm:$0xf]
        %v740 = vld [vmem:[%s262 + $0x680] sm:$0xf]
        %v741 = vld [vmem:[%s262 + $0x684] sm:$0xf]
        %v742 = vld [vmem:[%s262 + $0x688] sm:$0xf]
        %v743 = vld [vmem:[%s262 + $0x68c] sm:$0xf]
        %v744 = vld [vmem:[%s262 + $0x690] sm:$0xf]
        %v745 = vld [vmem:[%s262 + $0x694] sm:$0xf]
        %v746 = vld [vmem:[%s262 + $0x698] sm:$0xf]
        %v747 = vld [vmem:[%s262 + $0x69c] sm:$0xf]
        %v748 = vld [vmem:[%s262 + $0x6a0] sm:$0xf]
        %v749 = vld [vmem:[%s262 + $0x6a4] sm:$0xf]
        %v750 = vld [vmem:[%s262 + $0x6a8] sm:$0xf]
        %v751 = vld [vmem:[%s262 + $0x6ac] sm:$0xf]
        %v752 = vld [vmem:[%s262 + $0x6b0] sm:$0xf]
        %v753 = vld [vmem:[%s262 + $0x6b4] sm:$0xf]
        %v754 = vld [vmem:[%s262 + $0x6b8] sm:$0xf]
        %v755 = vld [vmem:[%s262 + $0x6bc] sm:$0xf]
        %v756 = vld [vmem:[%s262 + $0x6c0] sm:$0xf]
        %v757 = vld [vmem:[%s262 + $0x6c4] sm:$0xf]
        %v758 = vld [vmem:[%s262 + $0x6c8] sm:$0xf]
        %v759 = vld [vmem:[%s262 + $0x6cc] sm:$0xf]
        %v760 = vld [vmem:[%s262 + $0x6d0] sm:$0xf]
        %v761 = vld [vmem:[%s262 + $0x6d4] sm:$0xf]
        %v762 = vld [vmem:[%s262 + $0x6d8] sm:$0xf]
        %v763 = vld [vmem:[%s262 + $0x6dc] sm:$0xf]
        %v764 = vld [vmem:[%s262 + $0x6e0] sm:$0xf]
        %v765 = vld [vmem:[%s262 + $0x6e4] sm:$0xf]
        %v766 = vld [vmem:[%s262 + $0x6e8] sm:$0xf]
        %v767 = vld [vmem:[%s262 + $0x6ec] sm:$0xf]
        %v768 = vld [vmem:[%s262 + $0x6f0] sm:$0xf]
        %v769 = vld [vmem:[%s262 + $0x6f4] sm:$0xf]
        %v770 = vld [vmem:[%s262 + $0x6f8] sm:$0xf]
        %v771 = vld [vmem:[%s262 + $0x6fc] sm:$0xf]
        %v772 = vld [vmem:[%s262 + $0x700] sm:$0xf]
        %v773 = vld [vmem:[%s262 + $0x704] sm:$0xf]
        %v774 = vld [vmem:[%s262 + $0x708] sm:$0xf]
        %v775 = vld [vmem:[%s262 + $0x70c] sm:$0xf]
        %v776 = vld [vmem:[%s262 + $0x710] sm:$0xf]
        %v777 = vld [vmem:[%s262 + $0x714] sm:$0xf]
        %v778 = vld [vmem:[%s262 + $0x718] sm:$0xf]
        %v779 = vld [vmem:[%s262 + $0x71c] sm:$0xf]
        %v780 = vld [vmem:[%s262 + $0x720] sm:$0xf]
        %v781 = vld [vmem:[%s262 + $0x724] sm:$0xf]
        %v782 = vld [vmem:[%s262 + $0x728] sm:$0xf]
        %v783 = vld [vmem:[%s262 + $0x72c] sm:$0xf]
        %v784 = vld [vmem:[%s262 + $0x730] sm:$0xf]
        %v785 = vld [vmem:[%s262 + $0x734] sm:$0xf]
        %v786 = vld [vmem:[%s262 + $0x738] sm:$0xf]
        %v787 = vld [vmem:[%s262 + $0x73c] sm:$0xf]
        %v788 = vld [vmem:[%s262 + $0x740] sm:$0xf]
        %v789 = vld [vmem:[%s262 + $0x744] sm:$0xf]
        %v790 = vld [vmem:[%s262 + $0x748] sm:$0xf]
        %v791 = vld [vmem:[%s262 + $0x74c] sm:$0xf]
        %v792 = vld [vmem:[%s262 + $0x750] sm:$0xf]
        %v793 = vld [vmem:[%s262 + $0x754] sm:$0xf]
        %v794 = vld [vmem:[%s262 + $0x758] sm:$0xf]
        %v795 = vld [vmem:[%s262 + $0x75c] sm:$0xf]
        %v796 = vld [vmem:[%s262 + $0x760] sm:$0xf]
        %v797 = vld [vmem:[%s262 + $0x764] sm:$0xf]
        %v798 = vld [vmem:[%s262 + $0x768] sm:$0xf]
        %v799 = vld [vmem:[%s262 + $0x76c] sm:$0xf]
        %v800 = vld [vmem:[%s262 + $0x770] sm:$0xf]
        %v801 = vld [vmem:[%s262 + $0x774] sm:$0xf]
        %v802 = vld [vmem:[%s262 + $0x778] sm:$0xf]
        %v803 = vld [vmem:[%s262 + $0x77c] sm:$0xf]
        %v804 = vld [vmem:[%s262 + $0x780] sm:$0xf]
        %v805 = vld [vmem:[%s262 + $0x784] sm:$0xf]
        %v806 = vld [vmem:[%s262 + $0x788] sm:$0xf]
        %v807 = vld [vmem:[%s262 + $0x78c] sm:$0xf]
        %v808 = vld [vmem:[%s262 + $0x790] sm:$0xf]
        %v809 = vld [vmem:[%s262 + $0x794] sm:$0xf]
        %v810 = vld [vmem:[%s262 + $0x798] sm:$0xf]
        %v811 = vld [vmem:[%s262 + $0x79c] sm:$0xf]
        %v812 = vld [vmem:[%s262 + $0x7a0] sm:$0xf]
        %v813 = vld [vmem:[%s262 + $0x7a4] sm:$0xf]
        %v814 = vld [vmem:[%s262 + $0x7a8] sm:$0xf]
        %v815 = vld [vmem:[%s262 + $0x7ac] sm:$0xf]
        %v816 = vld [vmem:[%s262 + $0x7b0] sm:$0xf]
        %v817 = vld [vmem:[%s262 + $0x7b4] sm:$0xf]
        %v818 = vld [vmem:[%s262 + $0x7b8] sm:$0xf]
        %v819 = vld [vmem:[%s262 + $0x7bc] sm:$0xf]
        %v820 = vld [vmem:[%s262 + $0x7c0] sm:$0xf]
        %v821 = vld [vmem:[%s262 + $0x7c4] sm:$0xf]
        %v822 = vld [vmem:[%s262 + $0x7c8] sm:$0xf]
        %v823 = vld [vmem:[%s262 + $0x7cc] sm:$0xf]
        %v824 = vld [vmem:[%s262 + $0x7d0] sm:$0xf]
        %v825 = vld [vmem:[%s262 + $0x7d4] sm:$0xf]
        %v826 = vld [vmem:[%s262 + $0x7d8] sm:$0xf]
        %v827 = vld [vmem:[%s262 + $0x7dc] sm:$0xf]
        %v828 = vld [vmem:[%s262 + $0x7e0] sm:$0xf]
        %v829 = vld [vmem:[%s262 + $0x7e4] sm:$0xf]
        %v830 = vld [vmem:[%s262 + $0x7e8] sm:$0xf]
        %v831 = vld [vmem:[%s262 + $0x7ec] sm:$0xf]
        %v832 = vld [vmem:[%s262 + $0x7f0] sm:$0xf]
        %v833 = vld [vmem:[%s262 + $0x7f4] sm:$0xf]
        %v834 = vld [vmem:[%s262 + $0x7f8] sm:$0xf]
        %v835 = vld [vmem:[%s262 + $0x7fc] sm:$0xf]
        %v836 = vld [vmem:[%s262 + $0x800] sm:$0xf]
        %v837 = vld [vmem:[%s262 + $0x804] sm:$0xf]
        %v838 = vld [vmem:[%s262 + $0x808] sm:$0xf]
        %v839 = vld [vmem:[%s262 + $0x80c] sm:$0xf]
        %v840 = vld [vmem:[%s262 + $0x810] sm:$0xf]
        %v841 = vld [vmem:[%s262 + $0x814] sm:$0xf]
        %v842 = vld [vmem:[%s262 + $0x818] sm:$0xf]
        %v843 = vld [vmem:[%s262 + $0x81c] sm:$0xf]
        %v844 = vld [vmem:[%s262 + $0x820] sm:$0xf]
        %v845 = vld [vmem:[%s262 + $0x824] sm:$0xf]
        %v846 = vld [vmem:[%s262 + $0x828] sm:$0xf]
        %v847 = vld [vmem:[%s262 + $0x82c] sm:$0xf]
        %v848 = vld [vmem:[%s262 + $0x830] sm:$0xf]
        %v849 = vld [vmem:[%s262 + $0x834] sm:$0xf]
        %v850 = vld [vmem:[%s262 + $0x838] sm:$0xf]
        %v851 = vld [vmem:[%s262 + $0x83c] sm:$0xf]
        %v852 = vld [vmem:[%s262 + $0x840] sm:$0xf]
        %v853 = vld [vmem:[%s262 + $0x844] sm:$0xf]
        %v854 = vld [vmem:[%s262 + $0x848] sm:$0xf]
        %v855 = vld [vmem:[%s262 + $0x84c] sm:$0xf]
        %v856 = vld [vmem:[%s262 + $0x850] sm:$0xf]
        %v857 = vld [vmem:[%s262 + $0x854] sm:$0xf]
        %v858 = vld [vmem:[%s262 + $0x858] sm:$0xf]
        %v859 = vld [vmem:[%s262 + $0x85c] sm:$0xf]
        %v860 = vld [vmem:[%s262 + $0x860] sm:$0xf]
        %v861 = vld [vmem:[%s262 + $0x864] sm:$0xf]
        %v862 = vld [vmem:[%s262 + $0x868] sm:$0xf]
        %v863 = vld [vmem:[%s262 + $0x86c] sm:$0xf]
        %v864 = vld [vmem:[%s262 + $0x870] sm:$0xf]
        %v865 = vld [vmem:[%s262 + $0x874] sm:$0xf]
        %v866 = vld [vmem:[%s262 + $0x878] sm:$0xf]
        %v867 = vld [vmem:[%s262 + $0x87c] sm:$0xf]
        %v868 = vld [vmem:[%s262 + $0x880] sm:$0xf]
        %v869 = vld [vmem:[%s262 + $0x884] sm:$0xf]
        %v870 = vld [vmem:[%s262 + $0x888] sm:$0xf]
        %v871 = vld [vmem:[%s262 + $0x88c] sm:$0xf]
        %v872 = vld [vmem:[%s262 + $0x890] sm:$0xf]
        %v873 = vld [vmem:[%s262 + $0x894] sm:$0xf]
        %v874 = vld [vmem:[%s262 + $0x898] sm:$0xf]
        %v875 = vld [vmem:[%s262 + $0x89c] sm:$0xf]
        %v876 = vld [vmem:[%s262 + $0x8a0] sm:$0xf]
        %v877 = vld [vmem:[%s262 + $0x8a4] sm:$0xf]
        %v878 = vld [vmem:[%s262 + $0x8a8] sm:$0xf]
        %v879 = vld [vmem:[%s262 + $0x8ac] sm:$0xf]
        %v880 = vld [vmem:[%s262 + $0x8b0] sm:$0xf]
        %v881 = vld [vmem:[%s262 + $0x8b4] sm:$0xf]
        %v882 = vld [vmem:[%s262 + $0x8b8] sm:$0xf]
        %v883 = vld [vmem:[%s262 + $0x8bc] sm:$0xf]
        %v884 = vld [vmem:[%s262 + $0x8c0] sm:$0xf]
        %v885 = vld [vmem:[%s262 + $0x8c4] sm:$0xf]
        %v886 = vld [vmem:[%s262 + $0x8c8] sm:$0xf]
        %v887 = vld [vmem:[%s262 + $0x8cc] sm:$0xf]
        %v888 = vld [vmem:[%s262 + $0x8d0] sm:$0xf]
        %v889 = vld [vmem:[%s262 + $0x8d4] sm:$0xf]
        %v890 = vld [vmem:[%s262 + $0x8d8] sm:$0xf]
        %v891 = vld [vmem:[%s262 + $0x8dc] sm:$0xf]
        %v892 = vld [vmem:[%s262 + $0x8e0] sm:$0xf]
        %v893 = vld [vmem:[%s262 + $0x8e4] sm:$0xf]
        %v894 = vld [vmem:[%s262 + $0x8e8] sm:$0xf]
        %v895 = vld [vmem:[%s262 + $0x8ec] sm:$0xf]
        %v896 = vld [vmem:[%s262 + $0x8f0] sm:$0xf]
        %v897 = vld [vmem:[%s262 + $0x8f4] sm:$0xf]
        %v898 = vld [vmem:[%s262 + $0x8f8] sm:$0xf]
        %v899 = vld [vmem:[%s262 + $0x8fc] sm:$0xf]
        %901 = vst [vmem:[#allocation1] ss:$9 sm:$0xff] %v319
        %v902 = vld [vmem:[#allocation1] sm:$0xff]
        %v903 = vld [vmem:[#allocation1 + $0x9] sm:$0xff]
        %v904 = vld [vmem:[#allocation1 + $0x12] sm:$0xff]
        %v905 = vld [vmem:[#allocation1 + $0x1b] sm:$0xff]
        %v906 = vld [vmem:[#allocation1 + $0x24] sm:$0xff]
        %v907 = vld [vmem:[#allocation1 + $0x2d] sm:$0xff]
        %v908 = vld [vmem:[#allocation1 + $0x36] sm:$0xff]
        %v909 = vld [vmem:[#allocation1 + $0x3f] sm:$0xff]
        %911 = vst [vmem:[#allocation1] ss:$9 sm:$0xff] %v320
        %v912 = vld [vmem:[#allocation1] sm:$0xff]
        %v913 = vld [vmem:[#allocation1 + $0x9] sm:$0xff]
        %v914 = vld [vmem:[#allocation1 + $0x12] sm:$0xff]
        %v915 = vld [vmem:[#allocation1 + $0x1b] sm:$0xff]
        %v916 = vld [vmem:[#allocation1 + $0x24] sm:$0xff]
        %v917 = vld [vmem:[#allocation1 + $0x2d] sm:$0xff]
        %v918 = vld [vmem:[#allocation1 + $0x36] sm:$0xff]
        %v919 = vld [vmem:[#allocation1 + $0x3f] sm:$0xff]
        %921 = vst [vmem:[#allocation1] ss:$9 sm:$0xff] %v321
        %v922 = vld [vmem:[#allocation1] sm:$0xff]
        %v923 = vld [vmem:[#allocation1 + $0x9] sm:$0xff]
        %v924 = vld [vmem:[#allocation1 + $0x12] sm:$0xff]
        %v925 = vld [vmem:[#allocation1 + $0x1b] sm:$0xff]
        %v926 = vld [vmem:[#allocation1 + $0x24] sm:$0xff]
        %v927 = vld [vmem:[#allocation1 + $0x2d] sm:$0xff]
        %v928 = vld [vmem:[#allocation1 + $0x36] sm:$0xff]
        %v929 = vld [vmem:[#allocation1 + $0x3f] sm:$0xff]
        %931 = vst [vmem:[#allocation1] ss:$9 sm:$0xff] %v322
        %v932 = vld [vmem:[#allocation1] sm:$0xff]
        %v933 = vld [vmem:[#allocation1 + $0x9] sm:$0xff]
        %v934 = vld [vmem:[#allocation1 + $0x12] sm:$0xff]
        %v935 = vld [vmem:[#allocation1 + $0x1b] sm:$0xff]
        %v936 = vld [vmem:[#allocation1 + $0x24] sm:$0xff]
        %v937 = vld [vmem:[#allocation1 + $0x2d] sm:$0xff]
        %v938 = vld [vmem:[#allocation1 + $0x36] sm:$0xff]
        %v939 = vld [vmem:[#allocation1 + $0x3f] sm:$0xff]
        %941 = vst [vmem:[#allocation1] ss:$9 sm:$0xff] %v323
        %v942 = vld [vmem:[#allocation1] sm:$0xff]
        %v943 = vld [vmem:[#allocation1 + $0x9] sm:$0xff]
        %v944 = vld [vmem:[#allocation1 + $0x12] sm:$0xff]
        %v945 = vld [vmem:[#allocation1 + $0x1b] sm:$0xff]
        %v1558 = vunpack.c.l.b16 %v324
        %v1559 = vunpack.c.l.b16 %v325
        %v1560 = vunpack.c.l.b16 %v326
        %v1561 = vunpack.c.l.b16 %v327
        %v1562 = vunpack.c.l.b16 %v328
        %v1563 = vunpack.c.l.b16 %v329
        %v1564 = vunpack.c.l.b16 %v330
        %v1565 = vunpack.c.l.b16 %v331
        %v1566 = vunpack.c.l.b16 %v332
        %v1567 = vunpack.c.l.b16 %v333
        %v1568 = vunpack.c.l.b16 %v334
        %v1569 = vunpack.c.l.b16 %v335
        %v1570 = vunpack.c.l.b16 %v336
        %v1571 = vunpack.c.l.b16 %v337
        %v1572 = vunpack.c.l.b16 %v338
        %v1573 = vunpack.c.l.b16 %v339
        %v1574 = vunpack.c.l.b16 %v340
        %v1575 = vunpack.c.l.b16 %v341
        %v1576 = vunpack.c.l.b16 %v342
        %v1577 = vunpack.c.l.b16 %v343
        %v1578 = vunpack.c.l.b16 %v344
        %v1579 = vunpack.c.l.b16 %v345
        %v1580 = vunpack.c.l.b16 %v346
        %v1581 = vunpack.c.l.b16 %v347
        %v1582 = vunpack.c.l.b16 %v348
        %v1583 = vunpack.c.l.b16 %v349
        %v1584 = vunpack.c.l.b16 %v350
        %v1585 = vunpack.c.l.b16 %v351
        %v1586 = vunpack.c.l.b16 %v352
        %v1587 = vunpack.c.l.b16 %v353
        %v1588 = vunpack.c.l.b16 %v354
        %v1589 = vunpack.c.l.b16 %v355
        %v1590 = vunpack.c.l.b16 %v356
        %v1591 = vunpack.c.l.b16 %v357
        %v1592 = vunpack.c.l.b16 %v358
        %v1593 = vunpack.c.l.b16 %v359
        %v1594 = vunpack.c.l.b16 %v360
        %v1595 = vunpack.c.l.b16 %v361
        %v1596 = vunpack.c.l.b16 %v362
        %v1597 = vunpack.c.l.b16 %v363
        %v1598 = vunpack.c.l.b16 %v364
        %v1599 = vunpack.c.l.b16 %v365
        %v1600 = vunpack.c.l.b16 %v366
        %v1601 = vunpack.c.l.b16 %v367
        %v1602 = vunpack.c.l.b16 %v368
        %v1603 = vunpack.c.l.b16 %v369
        %v1604 = vunpack.c.l.b16 %v370
        %v1605 = vunpack.c.l.b16 %v371
        %v1606 = vunpack.c.l.b16 %v372
        %v1607 = vunpack.c.l.b16 %v373
        %v1608 = vunpack.c.l.b16 %v374
        %v1609 = vunpack.c.l.b16 %v375
        %v1610 = vunpack.c.l.b16 %v376
        %v1611 = vunpack.c.l.b16 %v377
        %v1612 = vunpack.c.l.b16 %v378
        %v1613 = vunpack.c.l.b16 %v379
        %v1614 = vunpack.c.l.b16 %v380
        %v1615 = vunpack.c.l.b16 %v381
        %v1616 = vunpack.c.l.b16 %v382
        %v1617 = vunpack.c.l.b16 %v383
        %v1618 = vunpack.c.l.b16 %v384
        %v1619 = vunpack.c.l.b16 %v385
        %v1620 = vunpack.c.l.b16 %v386
        %v1621 = vunpack.c.l.b16 %v387
        %v1622 = vunpack.c.l.b16 %v388
        %v1623 = vunpack.c.l.b16 %v389
        %v1624 = vunpack.c.l.b16 %v390
        %v1625 = vunpack.c.l.b16 %v391
        %v1626 = vunpack.c.l.b16 %v392
        %v1627 = vunpack.c.l.b16 %v393
        %v1628 = vunpack.c.l.b16 %v394
        %v1629 = vunpack.c.l.b16 %v395
        %v1630 = vunpack.c.l.b16 %v396
        %v1631 = vunpack.c.l.b16 %v397
        %v1632 = vunpack.c.l.b16 %v398
        %v1633 = vunpack.c.l.b16 %v399
        %v1634 = vunpack.c.l.b16 %v400
        %v1635 = vunpack.c.l.b16 %v401
        %v1636 = vunpack.c.l.b16 %v402
        %v1637 = vunpack.c.l.b16 %v403
        %v1638 = vunpack.c.l.b16 %v404
        %v1639 = vunpack.c.l.b16 %v405
        %v1640 = vunpack.c.l.b16 %v406
        %v1641 = vunpack.c.l.b16 %v407
        %v1642 = vunpack.c.l.b16 %v408
        %v1643 = vunpack.c.l.b16 %v409
        %v1644 = vunpack.c.l.b16 %v410
        %v1645 = vunpack.c.l.b16 %v411
        %v1646 = vunpack.c.l.b16 %v412
        %v1647 = vunpack.c.l.b16 %v413
        %v1648 = vunpack.c.l.b16 %v414
        %v1649 = vunpack.c.l.b16 %v415
        %v1650 = vunpack.c.l.b16 %v416
        %v1651 = vunpack.c.l.b16 %v417
        %v1652 = vunpack.c.l.b16 %v418
        %v1653 = vunpack.c.l.b16 %v419
        %v1654 = vunpack.c.l.b16 %v420
        %v1655 = vunpack.c.l.b16 %v421
        %v1656 = vunpack.c.l.b16 %v422
        %v1657 = vunpack.c.l.b16 %v423
        %v1658 = vunpack.c.l.b16 %v424
        %v1659 = vunpack.c.l.b16 %v425
        %v1660 = vunpack.c.l.b16 %v426
        %v1661 = vunpack.c.l.b16 %v427
        %v1662 = vunpack.c.l.b16 %v428
        %v1663 = vunpack.c.l.b16 %v429
        %v1664 = vunpack.c.l.b16 %v430
        %v1665 = vunpack.c.l.b16 %v431
        %v1666 = vunpack.c.l.b16 %v432
        %v1667 = vunpack.c.l.b16 %v433
        %v1668 = vunpack.c.l.b16 %v434
        %v1669 = vunpack.c.l.b16 %v435
        %v1670 = vunpack.c.l.b16 %v436
        %v1671 = vunpack.c.l.b16 %v437
        %v1672 = vunpack.c.l.b16 %v438
        %v1673 = vunpack.c.l.b16 %v439
        %v1674 = vunpack.c.l.b16 %v440
        %v1675 = vunpack.c.l.b16 %v441
        %v1676 = vunpack.c.l.b16 %v442
        %v1677 = vunpack.c.l.b16 %v443
        %v1678 = vunpack.c.l.b16 %v444
        %v1679 = vunpack.c.l.b16 %v445
        %v1680 = vunpack.c.l.b16 %v446
        %v1681 = vunpack.c.l.b16 %v447
        %v1682 = vunpack.c.l.b16 %v448
        %v1683 = vunpack.c.l.b16 %v449
        %v1684 = vunpack.c.l.b16 %v450
        %v1685 = vunpack.c.l.b16 %v451
        %v1686 = vunpack.c.l.b16 %v452
        %v1687 = vunpack.c.l.b16 %v453
        %v1688 = vunpack.c.l.b16 %v454
        %v1689 = vunpack.c.l.b16 %v455
        %v1690 = vunpack.c.l.b16 %v456
        %v1691 = vunpack.c.l.b16 %v457
        %v1692 = vunpack.c.l.b16 %v458
        %v1693 = vunpack.c.l.b16 %v459
        %v1694 = vunpack.c.l.b16 %v460
        %v1695 = vunpack.c.l.b16 %v461
        %v1696 = vunpack.c.l.b16 %v462
        %v1697 = vunpack.c.l.b16 %v463
        %v1698 = vunpack.c.l.b16 %v464
        %v1699 = vunpack.c.l.b16 %v465
        %v1700 = vunpack.c.l.b16 %v466
        %v1701 = vunpack.c.l.b16 %v467
        %v1702 = vunpack.c.l.b16 %v468
        %v1703 = vunpack.c.l.b16 %v469
        %v1704 = vunpack.c.l.b16 %v470
        %v1705 = vunpack.c.l.b16 %v471
        %v1706 = vunpack.c.l.b16 %v472
        %v1707 = vunpack.c.l.b16 %v473
        %v1708 = vunpack.c.l.b16 %v474
        %v1709 = vunpack.c.l.b16 %v475
        %v1710 = vunpack.c.l.b16 %v476
        %v1711 = vunpack.c.l.b16 %v477
        %v1712 = vunpack.c.l.b16 %v478
        %v1713 = vunpack.c.l.b16 %v479
        %v1714 = vunpack.c.l.b16 %v480
        %v1715 = vunpack.c.l.b16 %v481
        %v1716 = vunpack.c.l.b16 %v482
        %v1717 = vunpack.c.l.b16 %v483
        %v1718 = vunpack.c.l.b16 %v484
        %v1719 = vunpack.c.l.b16 %v485
        %v1720 = vunpack.c.l.b16 %v486
        %v1721 = vunpack.c.l.b16 %v487
        %v1722 = vunpack.c.l.b16 %v488
        %v1723 = vunpack.c.l.b16 %v489
        %v1724 = vunpack.c.l.b16 %v490
        %v1725 = vunpack.c.l.b16 %v491
        %v1726 = vunpack.c.l.b16 %v492
        %v1727 = vunpack.c.l.b16 %v493
        %v1728 = vunpack.c.l.b16 %v494
        %v1729 = vunpack.c.l.b16 %v495
        %v1730 = vunpack.c.l.b16 %v496
        %v1731 = vunpack.c.l.b16 %v497
        %v1732 = vunpack.c.l.b16 %v498
        %v1733 = vunpack.c.l.b16 %v499
        %v1734 = vunpack.c.l.b16 %v500
        %v1735 = vunpack.c.l.b16 %v501
        %v1736 = vunpack.c.l.b16 %v502
        %v1737 = vunpack.c.l.b16 %v503
        %v1738 = vunpack.c.l.b16 %v504
        %v1739 = vunpack.c.l.b16 %v505
        %v1740 = vunpack.c.l.b16 %v506
        %v1741 = vunpack.c.l.b16 %v507
        %v1742 = vunpack.c.l.b16 %v508
        %v1743 = vunpack.c.l.b16 %v509
        %v1744 = vunpack.c.l.b16 %v510
        %v1745 = vunpack.c.l.b16 %v511
        %v1746 = vunpack.c.l.b16 %v512
        %v1747 = vunpack.c.l.b16 %v513
        %v1748 = vunpack.c.l.b16 %v514
        %v1749 = vunpack.c.l.b16 %v515
        %v1750 = vunpack.c.l.b16 %v516
        %v1751 = vunpack.c.l.b16 %v517
        %v1752 = vunpack.c.l.b16 %v518
        %v1753 = vunpack.c.l.b16 %v519
        %v1754 = vunpack.c.l.b16 %v520
        %v1755 = vunpack.c.l.b16 %v521
        %v1756 = vunpack.c.l.b16 %v522
        %v1757 = vunpack.c.l.b16 %v523
        %v1758 = vunpack.c.l.b16 %v524
        %v1759 = vunpack.c.l.b16 %v525
        %v1760 = vunpack.c.l.b16 %v526
        %v1761 = vunpack.c.l.b16 %v527
        %v1762 = vunpack.c.l.b16 %v528
        %v1763 = vunpack.c.l.b16 %v529
        %v1764 = vunpack.c.l.b16 %v530
        %v1765 = vunpack.c.l.b16 %v531
        %v1766 = vunpack.c.l.b16 %v532
        %v1767 = vunpack.c.l.b16 %v533
        %v1768 = vunpack.c.l.b16 %v534
        %v1769 = vunpack.c.l.b16 %v535
        %v1770 = vunpack.c.l.b16 %v536
        %v1771 = vunpack.c.l.b16 %v537
        %v1772 = vunpack.c.l.b16 %v538
        %v1773 = vunpack.c.l.b16 %v539
        %v1774 = vunpack.c.l.b16 %v540
        %v1775 = vunpack.c.l.b16 %v541
        %v1776 = vunpack.c.l.b16 %v542
        %v1777 = vunpack.c.l.b16 %v543
        %v1778 = vunpack.c.l.b16 %v544
        %v1779 = vunpack.c.l.b16 %v545
        %v1780 = vunpack.c.l.b16 %v546
        %v1781 = vunpack.c.l.b16 %v547
        %v1782 = vunpack.c.l.b16 %v548
        %v1783 = vunpack.c.l.b16 %v549
        %v1784 = vunpack.c.l.b16 %v550
        %v1785 = vunpack.c.l.b16 %v551
        %v1786 = vunpack.c.l.b16 %v552
        %v1787 = vunpack.c.l.b16 %v553
        %v1788 = vunpack.c.l.b16 %v554
        %v1789 = vunpack.c.l.b16 %v555
        %v1790 = vunpack.c.l.b16 %v556
        %v1791 = vunpack.c.l.b16 %v557
        %v1792 = vunpack.c.l.b16 %v558
        %v1793 = vunpack.c.l.b16 %v559
        %v1794 = vunpack.c.l.b16 %v560
        %v1795 = vunpack.c.l.b16 %v561
        %v1796 = vunpack.c.l.b16 %v562
        %v1797 = vunpack.c.l.b16 %v563
        %v1798 = vunpack.c.l.b16 %v564
        %v1799 = vunpack.c.l.b16 %v565
        %v1800 = vunpack.c.l.b16 %v566
        %v1801 = vunpack.c.l.b16 %v567
        %v1802 = vunpack.c.l.b16 %v568
        %v1803 = vunpack.c.l.b16 %v569
        %v1804 = vunpack.c.l.b16 %v570
        %v1805 = vunpack.c.l.b16 %v571
        %v1806 = vunpack.c.l.b16 %v572
        %v1807 = vunpack.c.l.b16 %v573
        %v1808 = vunpack.c.l.b16 %v574
        %v1809 = vunpack.c.l.b16 %v575
        %v1810 = vunpack.c.l.b16 %v576
        %v1811 = vunpack.c.l.b16 %v577
        %v1812 = vunpack.c.l.b16 %v578
        %v1813 = vunpack.c.l.b16 %v579
        %v1814 = vunpack.c.l.b16 %v580
        %v1815 = vunpack.c.l.b16 %v581
        %v1816 = vunpack.c.l.b16 %v582
        %v1817 = vunpack.c.l.b16 %v583
        %v1818 = vunpack.c.l.b16 %v584
        %v1819 = vunpack.c.l.b16 %v585
        %v1820 = vunpack.c.l.b16 %v586
        %v1821 = vunpack.c.l.b16 %v587
        %v1822 = vunpack.c.l.b16 %v588
        %v1823 = vunpack.c.l.b16 %v589
        %v1824 = vunpack.c.l.b16 %v590
        %v1825 = vunpack.c.l.b16 %v591
        %v1826 = vunpack.c.l.b16 %v592
        %v1827 = vunpack.c.l.b16 %v593
        %v1828 = vunpack.c.l.b16 %v594
        %v1829 = vunpack.c.l.b16 %v595
        %v1830 = vunpack.c.l.b16 %v596
        %v1831 = vunpack.c.l.b16 %v597
        %v1832 = vunpack.c.l.b16 %v598
        %v1833 = vunpack.c.l.b16 %v599
        %v1834 = vunpack.c.l.b16 %v600
        %v1835 = vunpack.c.l.b16 %v601
        %v1836 = vunpack.c.l.b16 %v602
        %v1837 = vunpack.c.l.b16 %v603
        %v1838 = vunpack.c.l.b16 %v604
        %v1839 = vunpack.c.l.b16 %v605
        %v1840 = vunpack.c.l.b16 %v606
        %v1841 = vunpack.c.l.b16 %v607
        %v1842 = vunpack.c.l.b16 %v608
        %v1843 = vunpack.c.l.b16 %v609
        %v1844 = vunpack.c.l.b16 %v610
        %v1845 = vunpack.c.l.b16 %v611
        %v1846 = vunpack.c.l.b16 %v612
        %v1847 = vunpack.c.l.b16 %v613
        %v1848 = vunpack.c.l.b16 %v614
        %v1849 = vunpack.c.l.b16 %v615
        %v1850 = vunpack.c.l.b16 %v616
        %v1851 = vunpack.c.l.b16 %v617
        %v1852 = vunpack.c.l.b16 %v618
        %v1853 = vunpack.c.l.b16 %v619
        %v1854 = vunpack.c.l.b16 %v620
        %v1855 = vunpack.c.l.b16 %v621
        %v1856 = vunpack.c.l.b16 %v622
        %v1857 = vunpack.c.l.b16 %v623
        %v1858 = vunpack.c.l.b16 %v624
        %v1859 = vunpack.c.l.b16 %v625
        %v1860 = vunpack.c.l.b16 %v626
        %v1861 = vunpack.c.l.b16 %v627
        %v1862 = vunpack.c.l.b16 %v628
        %v1863 = vunpack.c.l.b16 %v629
        %v1864 = vunpack.c.l.b16 %v630
        %v1865 = vunpack.c.l.b16 %v631
        %v1866 = vunpack.c.l.b16 %v632
        %v1867 = vunpack.c.l.b16 %v633
        %v1868 = vunpack.c.l.b16 %v634
        %v1869 = vunpack.c.l.b16 %v635
        %v1870 = vunpack.c.l.b16 %v636
        %v1871 = vunpack.c.l.b16 %v637
        %v1872 = vunpack.c.l.b16 %v638
        %v1873 = vunpack.c.l.b16 %v639
        %v1874 = vunpack.c.l.b16 %v640
        %v1875 = vunpack.c.l.b16 %v641
        %v1876 = vunpack.c.l.b16 %v642
        %v1877 = vunpack.c.l.b16 %v643
        %v1878 = vunpack.c.l.b16 %v644
        %v1879 = vunpack.c.l.b16 %v645
        %v1880 = vunpack.c.l.b16 %v646
        %v1881 = vunpack.c.l.b16 %v647
        %v1882 = vunpack.c.l.b16 %v648
        %v1883 = vunpack.c.l.b16 %v649
        %v1884 = vunpack.c.l.b16 %v650
        %v1885 = vunpack.c.l.b16 %v651
        %v1886 = vunpack.c.l.b16 %v652
        %v1887 = vunpack.c.l.b16 %v653
        %v1888 = vunpack.c.l.b16 %v654
        %v1889 = vunpack.c.l.b16 %v655
        %v1890 = vunpack.c.l.b16 %v656
        %v1891 = vunpack.c.l.b16 %v657
        %v1892 = vunpack.c.l.b16 %v658
        %v1893 = vunpack.c.l.b16 %v659
        %v1894 = vunpack.c.l.b16 %v660
        %v1895 = vunpack.c.l.b16 %v661
        %v1896 = vunpack.c.l.b16 %v662
        %v1897 = vunpack.c.l.b16 %v663
        %v1898 = vunpack.c.l.b16 %v664
        %v1899 = vunpack.c.l.b16 %v665
        %v1900 = vunpack.c.l.b16 %v666
        %v1901 = vunpack.c.l.b16 %v667
        %v1902 = vunpack.c.l.b16 %v668
        %v1903 = vunpack.c.l.b16 %v669
        %v1904 = vunpack.c.l.b16 %v670
        %v1905 = vunpack.c.l.b16 %v671
        %v1906 = vunpack.c.l.b16 %v672
        %v1907 = vunpack.c.l.b16 %v673
        %v1908 = vunpack.c.l.b16 %v674
        %v1909 = vunpack.c.l.b16 %v675
        %v1910 = vunpack.c.l.b16 %v676
        %v1911 = vunpack.c.l.b16 %v677
        %v1912 = vunpack.c.l.b16 %v678
        %v1913 = vunpack.c.l.b16 %v679
        %v1914 = vunpack.c.l.b16 %v680
        %v1915 = vunpack.c.l.b16 %v681
        %v1916 = vunpack.c.l.b16 %v682
        %v1917 = vunpack.c.l.b16 %v683
        %v1918 = vunpack.c.l.b16 %v684
        %v1919 = vunpack.c.l.b16 %v685
        %v1920 = vunpack.c.l.b16 %v686
        %v1921 = vunpack.c.l.b16 %v687
        %v1922 = vunpack.c.l.b16 %v688
        %v1923 = vunpack.c.l.b16 %v689
        %v1924 = vunpack.c.l.b16 %v690
        %v1925 = vunpack.c.l.b16 %v691
        %v1926 = vunpack.c.l.b16 %v692
        %v1927 = vunpack.c.l.b16 %v693
        %v1928 = vunpack.c.l.b16 %v694
        %v1929 = vunpack.c.l.b16 %v695
        %v1930 = vunpack.c.l.b16 %v696
        %v1931 = vunpack.c.l.b16 %v697
        %v1932 = vunpack.c.l.b16 %v698
        %v1933 = vunpack.c.l.b16 %v699
        %v1934 = vunpack.c.l.b16 %v700
        %v1935 = vunpack.c.l.b16 %v701
        %v1936 = vunpack.c.l.b16 %v702
        %v1937 = vunpack.c.l.b16 %v703
        %v1938 = vunpack.c.l.b16 %v704
        %v1939 = vunpack.c.l.b16 %v705
        %v1940 = vunpack.c.l.b16 %v706
        %v1941 = vunpack.c.l.b16 %v707
        %v1942 = vunpack.c.l.b16 %v708
        %v1943 = vunpack.c.l.b16 %v709
        %v1944 = vunpack.c.l.b16 %v710
        %v1945 = vunpack.c.l.b16 %v711
        %v1946 = vunpack.c.l.b16 %v712
        %v1947 = vunpack.c.l.b16 %v713
        %v1948 = vunpack.c.l.b16 %v714
        %v1949 = vunpack.c.l.b16 %v715
        %v1950 = vunpack.c.l.b16 %v716
        %v1951 = vunpack.c.l.b16 %v717
        %v1952 = vunpack.c.l.b16 %v718
        %v1953 = vunpack.c.l.b16 %v719
        %v1954 = vunpack.c.l.b16 %v720
        %v1955 = vunpack.c.l.b16 %v721
        %v1956 = vunpack.c.l.b16 %v722
        %v1957 = vunpack.c.l.b16 %v723
        %v1958 = vunpack.c.l.b16 %v724
        %v1959 = vunpack.c.l.b16 %v725
        %v1960 = vunpack.c.l.b16 %v726
        %v1961 = vunpack.c.l.b16 %v727
        %v1962 = vunpack.c.l.b16 %v728
        %v1963 = vunpack.c.l.b16 %v729
        %v1964 = vunpack.c.l.b16 %v730
        %v1965 = vunpack.c.l.b16 %v731
        %v1966 = vunpack.c.l.b16 %v732
        %v1967 = vunpack.c.l.b16 %v733
        %v1968 = vunpack.c.l.b16 %v734
        %v1969 = vunpack.c.l.b16 %v735
        %v1970 = vunpack.c.l.b16 %v736
        %v1971 = vunpack.c.l.b16 %v737
        %v1972 = vunpack.c.l.b16 %v738
        %v1973 = vunpack.c.l.b16 %v739
        %v1974 = vunpack.c.l.b16 %v740
        %v1975 = vunpack.c.l.b16 %v741
        %v1976 = vunpack.c.l.b16 %v742
        %v1977 = vunpack.c.l.b16 %v743
        %v1978 = vunpack.c.l.b16 %v744
        %v1979 = vunpack.c.l.b16 %v745
        %v1980 = vunpack.c.l.b16 %v746
        %v1981 = vunpack.c.l.b16 %v747
        %v1982 = vunpack.c.l.b16 %v748
        %v1983 = vunpack.c.l.b16 %v749
        %v1984 = vunpack.c.l.b16 %v750
        %v1985 = vunpack.c.l.b16 %v751
        %v1986 = vunpack.c.l.b16 %v752
        %v1987 = vunpack.c.l.b16 %v753
        %v1988 = vunpack.c.l.b16 %v754
        %v1989 = vunpack.c.l.b16 %v755
        %v1990 = vunpack.c.l.b16 %v756
        %v1991 = vunpack.c.l.b16 %v757
        %v1992 = vunpack.c.l.b16 %v758
        %v1993 = vunpack.c.l.b16 %v759
        %v1994 = vunpack.c.l.b16 %v760
        %v1995 = vunpack.c.l.b16 %v761
        %v1996 = vunpack.c.l.b16 %v762
        %v1997 = vunpack.c.l.b16 %v763
        %v1998 = vunpack.c.l.b16 %v764
        %v1999 = vunpack.c.l.b16 %v765
        %v2000 = vunpack.c.l.b16 %v766
        %v2001 = vunpack.c.l.b16 %v767
        %v2002 = vunpack.c.l.b16 %v768
        %v2003 = vunpack.c.l.b16 %v769
        %v2004 = vunpack.c.l.b16 %v770
        %v2005 = vunpack.c.l.b16 %v771
        %v2006 = vunpack.c.l.b16 %v772
        %v2007 = vunpack.c.l.b16 %v773
        %v2008 = vunpack.c.l.b16 %v774
        %v2009 = vunpack.c.l.b16 %v775
        %v2010 = vunpack.c.l.b16 %v776
        %v2011 = vunpack.c.l.b16 %v777
        %v2012 = vunpack.c.l.b16 %v778
        %v2013 = vunpack.c.l.b16 %v779
        %v2014 = vunpack.c.l.b16 %v780
        %v2015 = vunpack.c.l.b16 %v781
        %v2016 = vunpack.c.l.b16 %v782
        %v2017 = vunpack.c.l.b16 %v783
        %v2018 = vunpack.c.l.b16 %v784
        %v2019 = vunpack.c.l.b16 %v785
        %v2020 = vunpack.c.l.b16 %v786
        %v2021 = vunpack.c.l.b16 %v787
        %v2022 = vunpack.c.l.b16 %v788
        %v2023 = vunpack.c.l.b16 %v789
        %v2024 = vunpack.c.l.b16 %v790
        %v2025 = vunpack.c.l.b16 %v791
        %v2026 = vunpack.c.l.b16 %v792
        %v2027 = vunpack.c.l.b16 %v793
        %v2028 = vunpack.c.l.b16 %v794
        %v2029 = vunpack.c.l.b16 %v795
        %v2030 = vunpack.c.l.b16 %v796
        %v2031 = vunpack.c.l.b16 %v797
        %v2032 = vunpack.c.l.b16 %v798
        %v2033 = vunpack.c.l.b16 %v799
        %v2034 = vunpack.c.l.b16 %v800
        %v2035 = vunpack.c.l.b16 %v801
        %v2036 = vunpack.c.l.b16 %v802
        %v2037 = vunpack.c.l.b16 %v803
        %v2038 = vunpack.c.l.b16 %v804
        %v2039 = vunpack.c.l.b16 %v805
        %v2040 = vunpack.c.l.b16 %v806
        %v2041 = vunpack.c.l.b16 %v807
        %v2042 = vunpack.c.l.b16 %v808
        %v2043 = vunpack.c.l.b16 %v809
        %v2044 = vunpack.c.l.b16 %v810
        %v2045 = vunpack.c.l.b16 %v811
        %v2046 = vunpack.c.l.b16 %v812
        %v2047 = vunpack.c.l.b16 %v813
        %v2048 = vunpack.c.l.b16 %v814
        %v2049 = vunpack.c.l.b16 %v815
        %v2050 = vunpack.c.l.b16 %v816
        %v2051 = vunpack.c.l.b16 %v817
        %v2052 = vunpack.c.l.b16 %v818
        %v2053 = vunpack.c.l.b16 %v819
        %v2054 = vunpack.c.l.b16 %v820
        %v2055 = vunpack.c.l.b16 %v821
        %v2056 = vunpack.c.l.b16 %v822
        %v2057 = vunpack.c.l.b16 %v823
        %v2058 = vunpack.c.l.b16 %v824
        %v2059 = vunpack.c.l.b16 %v825
        %v2060 = vunpack.c.l.b16 %v826
        %v2061 = vunpack.c.l.b16 %v827
        %v2062 = vunpack.c.l.b16 %v828
        %v2063 = vunpack.c.l.b16 %v829
        %v2064 = vunpack.c.l.b16 %v830
        %v2065 = vunpack.c.l.b16 %v831
        %v2066 = vunpack.c.l.b16 %v832
        %v2067 = vunpack.c.l.b16 %v833
        %v2068 = vunpack.c.l.b16 %v834
        %v2069 = vunpack.c.l.b16 %v835
        %v2070 = vunpack.c.l.b16 %v836
        %v2071 = vunpack.c.l.b16 %v837
        %v2072 = vunpack.c.l.b16 %v838
        %v2073 = vunpack.c.l.b16 %v839
        %v2074 = vunpack.c.l.b16 %v840
        %v2075 = vunpack.c.l.b16 %v841
        %v2076 = vunpack.c.l.b16 %v842
        %v2077 = vunpack.c.l.b16 %v843
        %v2078 = vunpack.c.l.b16 %v844
        %v2079 = vunpack.c.l.b16 %v845
        %v2080 = vunpack.c.l.b16 %v846
        %v2081 = vunpack.c.l.b16 %v847
        %v2082 = vunpack.c.l.b16 %v848
        %v2083 = vunpack.c.l.b16 %v849
        %v2084 = vunpack.c.l.b16 %v850
        %v2085 = vunpack.c.l.b16 %v851
        %v2086 = vunpack.c.l.b16 %v852
        %v2087 = vunpack.c.l.b16 %v853
        %v2088 = vunpack.c.l.b16 %v854
        %v2089 = vunpack.c.l.b16 %v855
        %v2090 = vunpack.c.l.b16 %v856
        %v2091 = vunpack.c.l.b16 %v857
        %v2092 = vunpack.c.l.b16 %v858
        %v2093 = vunpack.c.l.b16 %v859
        %v2094 = vunpack.c.l.b16 %v860
        %v2095 = vunpack.c.l.b16 %v861
        %v2096 = vunpack.c.l.b16 %v862
        %v2097 = vunpack.c.l.b16 %v863
        %v2098 = vunpack.c.l.b16 %v864
        %v2099 = vunpack.c.l.b16 %v865
        %v2100 = vunpack.c.l.b16 %v866
        %v2101 = vunpack.c.l.b16 %v867
        %v2102 = vunpack.c.l.b16 %v868
        %v2103 = vunpack.c.l.b16 %v869
        %v2104 = vunpack.c.l.b16 %v870
        %v2105 = vunpack.c.l.b16 %v871
        %v2106 = vunpack.c.l.b16 %v872
        %v2107 = vunpack.c.l.b16 %v873
        %v2108 = vunpack.c.l.b16 %v874
        %v2109 = vunpack.c.l.b16 %v875
        %v2110 = vunpack.c.l.b16 %v876
        %v2111 = vunpack.c.l.b16 %v877
        %v2112 = vunpack.c.l.b16 %v878
        %v2113 = vunpack.c.l.b16 %v879
        %v2114 = vunpack.c.l.b16 %v880
        %v2115 = vunpack.c.l.b16 %v881
        %v2116 = vunpack.c.l.b16 %v882
        %v2117 = vunpack.c.l.b16 %v883
        %v2118 = vunpack.c.l.b16 %v884
        %v2119 = vunpack.c.l.b16 %v885
        %v2120 = vunpack.c.l.b16 %v886
        %v2121 = vunpack.c.l.b16 %v887
        %v2122 = vunpack.c.l.b16 %v888
        %v2123 = vunpack.c.l.b16 %v889
        %v2124 = vunpack.c.l.b16 %v890
        %v2125 = vunpack.c.l.b16 %v891
        %v2126 = vunpack.c.l.b16 %v892
        %v2127 = vunpack.c.l.b16 %v893
        %v2128 = vunpack.c.l.b16 %v894
        %v2129 = vunpack.c.l.b16 %v895
        %v2130 = vunpack.c.l.b16 %v896
        %v2131 = vunpack.c.l.b16 %v897
        %v2132 = vunpack.c.l.b16 %v898
        %v2133 = vunpack.c.l.b16 %v899
        %v2134 = vpack.c.b16 %v1559, %v1558
        %v2135 = vpack.c.b16 %v1561, %v1560
        %v2136 = vpack.c.b16 %v1563, %v1562
        %v2137 = vpack.c.b16 %v1565, %v1564
        %v2138 = vpack.c.b16 %v1567, %v1566
        %v2139 = vpack.c.b16 %v1569, %v1568
        %v2140 = vpack.c.b16 %v1571, %v1570
        %v2141 = vpack.c.b16 %v1573, %v1572
        %v2142 = vpack.c.b16 %v1575, %v1574
        %v2143 = vpack.c.b16 %v1577, %v1576
        %v2144 = vpack.c.b16 %v1579, %v1578
        %v2145 = vpack.c.b16 %v1581, %v1580
        %v2146 = vpack.c.b16 %v1583, %v1582
        %v2147 = vpack.c.b16 %v1585, %v1584
        %v2148 = vpack.c.b16 %v1587, %v1586
        %v2149 = vpack.c.b16 %v1589, %v1588
        %v2150 = vpack.c.b16 %v1591, %v1590
        %v2151 = vpack.c.b16 %v1593, %v1592
        %v2152 = vpack.c.b16 %v1595, %v1594
        %v2153 = vpack.c.b16 %v1597, %v1596
        %v2154 = vpack.c.b16 %v1599, %v1598
        %v2155 = vpack.c.b16 %v1601, %v1600
        %v2156 = vpack.c.b16 %v1603, %v1602
        %v2157 = vpack.c.b16 %v1605, %v1604
        %v2158 = vpack.c.b16 %v1607, %v1606
        %v2159 = vpack.c.b16 %v1609, %v1608
        %v2160 = vpack.c.b16 %v1611, %v1610
        %v2161 = vpack.c.b16 %v1613, %v1612
        %v2162 = vpack.c.b16 %v1615, %v1614
        %v2163 = vpack.c.b16 %v1617, %v1616
        %v2164 = vpack.c.b16 %v1619, %v1618
        %v2165 = vpack.c.b16 %v1621, %v1620
        %v2166 = vpack.c.b16 %v1623, %v1622
        %v2167 = vpack.c.b16 %v1625, %v1624
        %v2168 = vpack.c.b16 %v1627, %v1626
        %v2169 = vpack.c.b16 %v1629, %v1628
        %v2170 = vpack.c.b16 %v1631, %v1630
        %v2171 = vpack.c.b16 %v1633, %v1632
        %v2172 = vpack.c.b16 %v1635, %v1634
        %v2173 = vpack.c.b16 %v1637, %v1636
        %v2174 = vpack.c.b16 %v1639, %v1638
        %v2175 = vpack.c.b16 %v1641, %v1640
        %v2176 = vpack.c.b16 %v1643, %v1642
        %v2177 = vpack.c.b16 %v1645, %v1644
        %v2178 = vpack.c.b16 %v1647, %v1646
        %v2179 = vpack.c.b16 %v1649, %v1648
        %v2180 = vpack.c.b16 %v1651, %v1650
        %v2181 = vpack.c.b16 %v1653, %v1652
        %v2182 = vpack.c.b16 %v1655, %v1654
        %v2183 = vpack.c.b16 %v1657, %v1656
        %v2184 = vpack.c.b16 %v1659, %v1658
        %v2185 = vpack.c.b16 %v1661, %v1660
        %v2186 = vpack.c.b16 %v1663, %v1662
        %v2187 = vpack.c.b16 %v1665, %v1664
        %v2188 = vpack.c.b16 %v1667, %v1666
        %v2189 = vpack.c.b16 %v1669, %v1668
        %v2190 = vpack.c.b16 %v1671, %v1670
        %v2191 = vpack.c.b16 %v1673, %v1672
        %v2192 = vpack.c.b16 %v1675, %v1674
        %v2193 = vpack.c.b16 %v1677, %v1676
        %v2194 = vpack.c.b16 %v1679, %v1678
        %v2195 = vpack.c.b16 %v1681, %v1680
        %v2196 = vpack.c.b16 %v1683, %v1682
        %v2197 = vpack.c.b16 %v1685, %v1684
        %v2198 = vpack.c.b16 %v1687, %v1686
        %v2199 = vpack.c.b16 %v1689, %v1688
        %v2200 = vpack.c.b16 %v1691, %v1690
        %v2201 = vpack.c.b16 %v1693, %v1692
        %v2202 = vpack.c.b16 %v1695, %v1694
        %v2203 = vpack.c.b16 %v1697, %v1696
        %v2204 = vpack.c.b16 %v1699, %v1698
        %v2205 = vpack.c.b16 %v1701, %v1700
        %v2206 = vpack.c.b16 %v1703, %v1702
        %v2207 = vpack.c.b16 %v1705, %v1704
        %v2208 = vpack.c.b16 %v1707, %v1706
        %v2209 = vpack.c.b16 %v1709, %v1708
        %v2210 = vpack.c.b16 %v1711, %v1710
        %v2211 = vpack.c.b16 %v1713, %v1712
        %v2212 = vpack.c.b16 %v1715, %v1714
        %v2213 = vpack.c.b16 %v1717, %v1716
        %v2214 = vpack.c.b16 %v1719, %v1718
        %v2215 = vpack.c.b16 %v1721, %v1720
        %v2216 = vpack.c.b16 %v1723, %v1722
        %v2217 = vpack.c.b16 %v1725, %v1724
        %v2218 = vpack.c.b16 %v1727, %v1726
        %v2219 = vpack.c.b16 %v1729, %v1728
        %v2220 = vpack.c.b16 %v1731, %v1730
        %v2221 = vpack.c.b16 %v1733, %v1732
        %v2222 = vpack.c.b16 %v1735, %v1734
        %v2223 = vpack.c.b16 %v1737, %v1736
        %v2224 = vpack.c.b16 %v1739, %v1738
        %v2225 = vpack.c.b16 %v1741, %v1740
        %v2226 = vpack.c.b16 %v1743, %v1742
        %v2227 = vpack.c.b16 %v1745, %v1744
        %v2228 = vpack.c.b16 %v1747, %v1746
        %v2229 = vpack.c.b16 %v1749, %v1748
        %v2230 = vpack.c.b16 %v1751, %v1750
        %v2231 = vpack.c.b16 %v1753, %v1752
        %v2232 = vpack.c.b16 %v1755, %v1754
        %v2233 = vpack.c.b16 %v1757, %v1756
        %v2234 = vpack.c.b16 %v1759, %v1758
        %v2235 = vpack.c.b16 %v1761, %v1760
        %v2236 = vpack.c.b16 %v1763, %v1762
        %v2237 = vpack.c.b16 %v1765, %v1764
        %v2238 = vpack.c.b16 %v1767, %v1766
        %v2239 = vpack.c.b16 %v1769, %v1768
        %v2240 = vpack.c.b16 %v1771, %v1770
        %v2241 = vpack.c.b16 %v1773, %v1772
        %v2242 = vpack.c.b16 %v1775, %v1774
        %v2243 = vpack.c.b16 %v1777, %v1776
        %v2244 = vpack.c.b16 %v1779, %v1778
        %v2245 = vpack.c.b16 %v1781, %v1780
        %v2246 = vpack.c.b16 %v1783, %v1782
        %v2247 = vpack.c.b16 %v1785, %v1784
        %v2248 = vpack.c.b16 %v1787, %v1786
        %v2249 = vpack.c.b16 %v1789, %v1788
        %v2250 = vpack.c.b16 %v1791, %v1790
        %v2251 = vpack.c.b16 %v1793, %v1792
        %v2252 = vpack.c.b16 %v1795, %v1794
        %v2253 = vpack.c.b16 %v1797, %v1796
        %v2254 = vpack.c.b16 %v1799, %v1798
        %v2255 = vpack.c.b16 %v1801, %v1800
        %v2256 = vpack.c.b16 %v1803, %v1802
        %v2257 = vpack.c.b16 %v1805, %v1804
        %v2258 = vpack.c.b16 %v1807, %v1806
        %v2259 = vpack.c.b16 %v1809, %v1808
        %v2260 = vpack.c.b16 %v1811, %v1810
        %v2261 = vpack.c.b16 %v1813, %v1812
        %v2262 = vpack.c.b16 %v1815, %v1814
        %v2263 = vpack.c.b16 %v1817, %v1816
        %v2264 = vpack.c.b16 %v1819, %v1818
        %v2265 = vpack.c.b16 %v1821, %v1820
        %v2266 = vpack.c.b16 %v1823, %v1822
        %v2267 = vpack.c.b16 %v1825, %v1824
        %v2268 = vpack.c.b16 %v1827, %v1826
        %v2269 = vpack.c.b16 %v1829, %v1828
        %v2270 = vpack.c.b16 %v1831, %v1830
        %v2271 = vpack.c.b16 %v1833, %v1832
        %v2272 = vpack.c.b16 %v1835, %v1834
        %v2273 = vpack.c.b16 %v1837, %v1836
        %v2274 = vpack.c.b16 %v1839, %v1838
        %v2275 = vpack.c.b16 %v1841, %v1840
        %v2276 = vpack.c.b16 %v1843, %v1842
        %v2277 = vpack.c.b16 %v1845, %v1844
        %v2278 = vpack.c.b16 %v1847, %v1846
        %v2279 = vpack.c.b16 %v1849, %v1848
        %v2280 = vpack.c.b16 %v1851, %v1850
        %v2281 = vpack.c.b16 %v1853, %v1852
        %v2282 = vpack.c.b16 %v1855, %v1854
        %v2283 = vpack.c.b16 %v1857, %v1856
        %v2284 = vpack.c.b16 %v1859, %v1858
        %v2285 = vpack.c.b16 %v1861, %v1860
        %v2286 = vpack.c.b16 %v1863, %v1862
        %v2287 = vpack.c.b16 %v1865, %v1864
        %v2288 = vpack.c.b16 %v1867, %v1866
        %v2289 = vpack.c.b16 %v1869, %v1868
        %v2290 = vpack.c.b16 %v1871, %v1870
        %v2291 = vpack.c.b16 %v1873, %v1872
        %v2292 = vpack.c.b16 %v1875, %v1874
        %v2293 = vpack.c.b16 %v1877, %v1876
        %v2294 = vpack.c.b16 %v1879, %v1878
        %v2295 = vpack.c.b16 %v1881, %v1880
        %v2296 = vpack.c.b16 %v1883, %v1882
        %v2297 = vpack.c.b16 %v1885, %v1884
        %v2298 = vpack.c.b16 %v1887, %v1886
        %v2299 = vpack.c.b16 %v1889, %v1888
        %v2300 = vpack.c.b16 %v1891, %v1890
        %v2301 = vpack.c.b16 %v1893, %v1892
        %v2302 = vpack.c.b16 %v1895, %v1894
        %v2303 = vpack.c.b16 %v1897, %v1896
        %v2304 = vpack.c.b16 %v1899, %v1898
        %v2305 = vpack.c.b16 %v1901, %v1900
        %v2306 = vpack.c.b16 %v1903, %v1902
        %v2307 = vpack.c.b16 %v1905, %v1904
        %v2308 = vpack.c.b16 %v1907, %v1906
        %v2309 = vpack.c.b16 %v1909, %v1908
        %v2310 = vpack.c.b16 %v1911, %v1910
        %v2311 = vpack.c.b16 %v1913, %v1912
        %v2312 = vpack.c.b16 %v1915, %v1914
        %v2313 = vpack.c.b16 %v1917, %v1916
        %v2314 = vpack.c.b16 %v1919, %v1918
        %v2315 = vpack.c.b16 %v1921, %v1920
        %v2316 = vpack.c.b16 %v1923, %v1922
        %v2317 = vpack.c.b16 %v1925, %v1924
        %v2318 = vpack.c.b16 %v1927, %v1926
        %v2319 = vpack.c.b16 %v1929, %v1928
        %v2320 = vpack.c.b16 %v1931, %v1930
        %v2321 = vpack.c.b16 %v1933, %v1932
        %v2322 = vpack.c.b16 %v1935, %v1934
        %v2323 = vpack.c.b16 %v1937, %v1936
        %v2324 = vpack.c.b16 %v1939, %v1938
        %v2325 = vpack.c.b16 %v1941, %v1940
        %v2326 = vpack.c.b16 %v1943, %v1942
        %v2327 = vpack.c.b16 %v1945, %v1944
        %v2328 = vpack.c.b16 %v1947, %v1946
        %v2329 = vpack.c.b16 %v1949, %v1948
        %v2330 = vpack.c.b16 %v1951, %v1950
        %v2331 = vpack.c.b16 %v1953, %v1952
        %v2332 = vpack.c.b16 %v1955, %v1954
        %v2333 = vpack.c.b16 %v1957, %v1956
        %v2334 = vpack.c.b16 %v1959, %v1958
        %v2335 = vpack.c.b16 %v1961, %v1960
        %v2336 = vpack.c.b16 %v1963, %v1962
        %v2337 = vpack.c.b16 %v1965, %v1964
        %v2338 = vpack.c.b16 %v1967, %v1966
        %v2339 = vpack.c.b16 %v1969, %v1968
        %v2340 = vpack.c.b16 %v1971, %v1970
        %v2341 = vpack.c.b16 %v1973, %v1972
        %v2342 = vpack.c.b16 %v1975, %v1974
        %v2343 = vpack.c.b16 %v1977, %v1976
        %v2344 = vpack.c.b16 %v1979, %v1978
        %v2345 = vpack.c.b16 %v1981, %v1980
        %v2346 = vpack.c.b16 %v1983, %v1982
        %v2347 = vpack.c.b16 %v1985, %v1984
        %v2348 = vpack.c.b16 %v1987, %v1986
        %v2349 = vpack.c.b16 %v1989, %v1988
        %v2350 = vpack.c.b16 %v1991, %v1990
        %v2351 = vpack.c.b16 %v1993, %v1992
        %v2352 = vpack.c.b16 %v1995, %v1994
        %v2353 = vpack.c.b16 %v1997, %v1996
        %v2354 = vpack.c.b16 %v1999, %v1998
        %v2355 = vpack.c.b16 %v2001, %v2000
        %v2356 = vpack.c.b16 %v2003, %v2002
        %v2357 = vpack.c.b16 %v2005, %v2004
        %v2358 = vpack.c.b16 %v2007, %v2006
        %v2359 = vpack.c.b16 %v2009, %v2008
        %v2360 = vpack.c.b16 %v2011, %v2010
        %v2361 = vpack.c.b16 %v2013, %v2012
        %v2362 = vpack.c.b16 %v2015, %v2014
        %v2363 = vpack.c.b16 %v2017, %v2016
        %v2364 = vpack.c.b16 %v2019, %v2018
        %v2365 = vpack.c.b16 %v2021, %v2020
        %v2366 = vpack.c.b16 %v2023, %v2022
        %v2367 = vpack.c.b16 %v2025, %v2024
        %v2368 = vpack.c.b16 %v2027, %v2026
        %v2369 = vpack.c.b16 %v2029, %v2028
        %v2370 = vpack.c.b16 %v2031, %v2030
        %v2371 = vpack.c.b16 %v2033, %v2032
        %v2372 = vpack.c.b16 %v2035, %v2034
        %v2373 = vpack.c.b16 %v2037, %v2036
        %v2374 = vpack.c.b16 %v2039, %v2038
        %v2375 = vpack.c.b16 %v2041, %v2040
        %v2376 = vpack.c.b16 %v2043, %v2042
        %v2377 = vpack.c.b16 %v2045, %v2044
        %v2378 = vpack.c.b16 %v2047, %v2046
        %v2379 = vpack.c.b16 %v2049, %v2048
        %v2380 = vpack.c.b16 %v2051, %v2050
        %v2381 = vpack.c.b16 %v2053, %v2052
        %v2382 = vpack.c.b16 %v2055, %v2054
        %v2383 = vpack.c.b16 %v2057, %v2056
        %v2384 = vpack.c.b16 %v2059, %v2058
        %v2385 = vpack.c.b16 %v2061, %v2060
        %v2386 = vpack.c.b16 %v2063, %v2062
        %v2387 = vpack.c.b16 %v2065, %v2064
        %v2388 = vpack.c.b16 %v2067, %v2066
        %v2389 = vpack.c.b16 %v2069, %v2068
        %v2390 = vpack.c.b16 %v2071, %v2070
        %v2391 = vpack.c.b16 %v2073, %v2072
        %v2392 = vpack.c.b16 %v2075, %v2074
        %v2393 = vpack.c.b16 %v2077, %v2076
        %v2394 = vpack.c.b16 %v2079, %v2078
        %v2395 = vpack.c.b16 %v2081, %v2080
        %v2396 = vpack.c.b16 %v2083, %v2082
        %v2397 = vpack.c.b16 %v2085, %v2084
        %v2398 = vpack.c.b16 %v2087, %v2086
        %v2399 = vpack.c.b16 %v2089, %v2088
        %v2400 = vpack.c.b16 %v2091, %v2090
        %v2401 = vpack.c.b16 %v2093, %v2092
        %v2402 = vpack.c.b16 %v2095, %v2094
        %v2403 = vpack.c.b16 %v2097, %v2096
        %v2404 = vpack.c.b16 %v2099, %v2098
        %v2405 = vpack.c.b16 %v2101, %v2100
        %v2406 = vpack.c.b16 %v2103, %v2102
        %v2407 = vpack.c.b16 %v2105, %v2104
        %v2408 = vpack.c.b16 %v2107, %v2106
        %v2409 = vpack.c.b16 %v2109, %v2108
        %v2410 = vpack.c.b16 %v2111, %v2110
        %v2411 = vpack.c.b16 %v2113, %v2112
        %v2412 = vpack.c.b16 %v2115, %v2114
        %v2413 = vpack.c.b16 %v2117, %v2116
        %v2414 = vpack.c.b16 %v2119, %v2118
        %v2415 = vpack.c.b16 %v2121, %v2120
        %v2416 = vpack.c.b16 %v2123, %v2122
        %v2417 = vpack.c.b16 %v2125, %v2124
        %v2418 = vpack.c.b16 %v2127, %v2126
        %v2419 = vpack.c.b16 %v2129, %v2128
        %v2420 = vpack.c.b16 %v2131, %v2130
        %v2421 = vpack.c.b16 %v2133, %v2132
        %2710 = vmatpush.bf16.msra.mxu0 %v2141
        %2711 = vmatpush.bf16.msra.mxu0 %v2140
        %2712 = vmatpush.bf16.msra.mxu0 %v2139
        %2713 = vmatpush.bf16.msra.mxu0 %v2138
        %2714 = vmatpush.bf16.msra.mxu0 %v2137
        %2715 = vmatpush.bf16.msra.mxu0 %v2136
        %2716 = vmatpush.bf16.msra.mxu0 %v2135
        %2717 = vmatpush.bf16.msra.mxu0 %v2134
        %2718 = vmatmul.bf16.gmra.mxu0 %v902
        %v2719 = vpop.f32.mrf.mxu0
        %v2720 = vadd.f32 0.0, %v2719
        %v2721 = vpop.f32.mrf.mxu0
        %2722 = vdwg.mxu0
        %2723 = vmatpush.bf16.msra.mxu0 %v2149
        %2724 = vmatpush.bf16.msra.mxu0 %v2148
        %2725 = vmatpush.bf16.msra.mxu0 %v2147
        %2726 = vmatpush.bf16.msra.mxu0 %v2146
        %2727 = vmatpush.bf16.msra.mxu0 %v2145
        %2728 = vmatpush.bf16.msra.mxu0 %v2144
        %2729 = vmatpush.bf16.msra.mxu0 %v2143
        %2730 = vmatpush.bf16.msra.mxu0 %v2142
        %2731 = vmatmul.bf16.gmra.mxu0 %v903
        %v2732 = vpop.f32.mrf.mxu0
        %v2733 = vadd.f32 %v2720, %v2732
        %v2734 = vpop.f32.mrf.mxu0
        %2735 = vdwg.mxu0
        %2736 = vmatpush.bf16.msra.mxu0 %v2157
        %2737 = vmatpush.bf16.msra.mxu0 %v2156
        %2738 = vmatpush.bf16.msra.mxu0 %v2155
        %2739 = vmatpush.bf16.msra.mxu0 %v2154
        %2740 = vmatpush.bf16.msra.mxu0 %v2153
        %2741 = vmatpush.bf16.msra.mxu0 %v2152
        %2742 = vmatpush.bf16.msra.mxu0 %v2151
        %2743 = vmatpush.bf16.msra.mxu0 %v2150
        %2744 = vmatmul.bf16.gmra.mxu0 %v904
        %v2745 = vpop.f32.mrf.mxu0
        %v2746 = vadd.f32 %v2733, %v2745
        %v2747 = vpop.f32.mrf.mxu0
        %2748 = vdwg.mxu0
        %2749 = vmatpush.bf16.msra.mxu0 %v2165
        %2750 = vmatpush.bf16.msra.mxu0 %v2164
        %2751 = vmatpush.bf16.msra.mxu0 %v2163
        %2752 = vmatpush.bf16.msra.mxu0 %v2162
        %2753 = vmatpush.bf16.msra.mxu0 %v2161
        %2754 = vmatpush.bf16.msra.mxu0 %v2160
        %2755 = vmatpush.bf16.msra.mxu0 %v2159
        %2756 = vmatpush.bf16.msra.mxu0 %v2158
        %2757 = vmatmul.bf16.gmra.mxu0 %v905
        %v2758 = vpop.f32.mrf.mxu0
        %v2759 = vadd.f32 %v2746, %v2758
        %v2760 = vpop.f32.mrf.mxu0
        %2761 = vdwg.mxu0
        %2762 = vmatpush.bf16.msra.mxu0 %v2173
        %2763 = vmatpush.bf16.msra.mxu0 %v2172
        %2764 = vmatpush.bf16.msra.mxu0 %v2171
        %2765 = vmatpush.bf16.msra.mxu0 %v2170
        %2766 = vmatpush.bf16.msra.mxu0 %v2169
        %2767 = vmatpush.bf16.msra.mxu0 %v2168
        %2768 = vmatpush.bf16.msra.mxu0 %v2167
        %2769 = vmatpush.bf16.msra.mxu0 %v2166
        %2770 = vmatmul.bf16.gmra.mxu0 %v906
        %v2771 = vpop.f32.mrf.mxu0
        %v2772 = vadd.f32 %v2759, %v2771
        %v2773 = vpop.f32.mrf.mxu0
        %2774 = vdwg.mxu0
        %2775 = vmatpush.bf16.msra.mxu0 %v2181
        %2776 = vmatpush.bf16.msra.mxu0 %v2180
        %2777 = vmatpush.bf16.msra.mxu0 %v2179
        %2778 = vmatpush.bf16.msra.mxu0 %v2178
        %2779 = vmatpush.bf16.msra.mxu0 %v2177
        %2780 = vmatpush.bf16.msra.mxu0 %v2176
        %2781 = vmatpush.bf16.msra.mxu0 %v2175
        %2782 = vmatpush.bf16.msra.mxu0 %v2174
        %2783 = vmatmul.bf16.gmra.mxu0 %v907
        %v2784 = vpop.f32.mrf.mxu0
        %v2785 = vadd.f32 %v2772, %v2784
        %v2786 = vpop.f32.mrf.mxu0
        %2787 = vdwg.mxu0
        %2788 = vmatpush.bf16.msra.mxu0 %v2189
        %2789 = vmatpush.bf16.msra.mxu0 %v2188
        %2790 = vmatpush.bf16.msra.mxu0 %v2187
        %2791 = vmatpush.bf16.msra.mxu0 %v2186
        %2792 = vmatpush.bf16.msra.mxu0 %v2185
        %2793 = vmatpush.bf16.msra.mxu0 %v2184
        %2794 = vmatpush.bf16.msra.mxu0 %v2183
        %2795 = vmatpush.bf16.msra.mxu0 %v2182
        %2796 = vmatmul.bf16.gmra.mxu0 %v908
        %v2797 = vpop.f32.mrf.mxu0
        %v2798 = vadd.f32 %v2785, %v2797
        %v2799 = vpop.f32.mrf.mxu0
        %2800 = vdwg.mxu0
        %2801 = vmatpush.bf16.msra.mxu0 %v2197
        %2802 = vmatpush.bf16.msra.mxu0 %v2196
        %2803 = vmatpush.bf16.msra.mxu0 %v2195
        %2804 = vmatpush.bf16.msra.mxu0 %v2194
        %2805 = vmatpush.bf16.msra.mxu0 %v2193
        %2806 = vmatpush.bf16.msra.mxu0 %v2192
        %2807 = vmatpush.bf16.msra.mxu0 %v2191
        %2808 = vmatpush.bf16.msra.mxu0 %v2190
        %2809 = vmatmul.bf16.gmra.mxu0 %v909
        %v2810 = vpop.f32.mrf.mxu0
        %v2811 = vadd.f32 %v2798, %v2810
        %v2812 = vpop.f32.mrf.mxu0
        %2813 = vdwg.mxu0
        %2814 = vmatpush.bf16.msra.mxu0 %v2205
        %2815 = vmatpush.bf16.msra.mxu0 %v2204
        %2816 = vmatpush.bf16.msra.mxu0 %v2203
        %2817 = vmatpush.bf16.msra.mxu0 %v2202
        %2818 = vmatpush.bf16.msra.mxu0 %v2201
        %2819 = vmatpush.bf16.msra.mxu0 %v2200
        %2820 = vmatpush.bf16.msra.mxu0 %v2199
        %2821 = vmatpush.bf16.msra.mxu0 %v2198
        %2822 = vmatmul.bf16.gmra.mxu0 %v912
        %v2823 = vpop.f32.mrf.mxu0
        %v2824 = vadd.f32 %v2811, %v2823
        %v2825 = vpop.f32.mrf.mxu0
        %2826 = vdwg.mxu0
        %2827 = vmatpush.bf16.msra.mxu0 %v2213
        %2828 = vmatpush.bf16.msra.mxu0 %v2212
        %2829 = vmatpush.bf16.msra.mxu0 %v2211
        %2830 = vmatpush.bf16.msra.mxu0 %v2210
        %2831 = vmatpush.bf16.msra.mxu0 %v2209
        %2832 = vmatpush.bf16.msra.mxu0 %v2208
        %2833 = vmatpush.bf16.msra.mxu0 %v2207
        %2834 = vmatpush.bf16.msra.mxu0 %v2206
        %2835 = vmatmul.bf16.gmra.mxu0 %v913
        %v2836 = vpop.f32.mrf.mxu0
        %v2837 = vadd.f32 %v2824, %v2836
        %v2838 = vpop.f32.mrf.mxu0
        %2839 = vdwg.mxu0
        %2840 = vmatpush.bf16.msra.mxu0 %v2221
        %2841 = vmatpush.bf16.msra.mxu0 %v2220
        %2842 = vmatpush.bf16.msra.mxu0 %v2219
        %2843 = vmatpush.bf16.msra.mxu0 %v2218
        %2844 = vmatpush.bf16.msra.mxu0 %v2217
        %2845 = vmatpush.bf16.msra.mxu0 %v2216
        %2846 = vmatpush.bf16.msra.mxu0 %v2215
        %2847 = vmatpush.bf16.msra.mxu0 %v2214
        %2848 = vmatmul.bf16.gmra.mxu0 %v914
        %v2849 = vpop.f32.mrf.mxu0
        %v2850 = vadd.f32 %v2837, %v2849
        %v2851 = vpop.f32.mrf.mxu0
        %2852 = vdwg.mxu0
        %2853 = vmatpush.bf16.msra.mxu0 %v2229
        %2854 = vmatpush.bf16.msra.mxu0 %v2228
        %2855 = vmatpush.bf16.msra.mxu0 %v2227
        %2856 = vmatpush.bf16.msra.mxu0 %v2226
        %2857 = vmatpush.bf16.msra.mxu0 %v2225
        %2858 = vmatpush.bf16.msra.mxu0 %v2224
        %2859 = vmatpush.bf16.msra.mxu0 %v2223
        %2860 = vmatpush.bf16.msra.mxu0 %v2222
        %2861 = vmatmul.bf16.gmra.mxu0 %v915
        %v2862 = vpop.f32.mrf.mxu0
        %v2863 = vadd.f32 %v2850, %v2862
        %v2864 = vpop.f32.mrf.mxu0
        %2865 = vdwg.mxu0
        %2866 = vmatpush.bf16.msra.mxu0 %v2237
        %2867 = vmatpush.bf16.msra.mxu0 %v2236
        %2868 = vmatpush.bf16.msra.mxu0 %v2235
        %2869 = vmatpush.bf16.msra.mxu0 %v2234
        %2870 = vmatpush.bf16.msra.mxu0 %v2233
        %2871 = vmatpush.bf16.msra.mxu0 %v2232
        %2872 = vmatpush.bf16.msra.mxu0 %v2231
        %2873 = vmatpush.bf16.msra.mxu0 %v2230
        %2874 = vmatmul.bf16.gmra.mxu0 %v916
        %v2875 = vpop.f32.mrf.mxu0
        %v2876 = vadd.f32 %v2863, %v2875
        %v2877 = vpop.f32.mrf.mxu0
        %2878 = vdwg.mxu0
        %2879 = vmatpush.bf16.msra.mxu0 %v2245
        %2880 = vmatpush.bf16.msra.mxu0 %v2244
        %2881 = vmatpush.bf16.msra.mxu0 %v2243
        %2882 = vmatpush.bf16.msra.mxu0 %v2242
        %2883 = vmatpush.bf16.msra.mxu0 %v2241
        %2884 = vmatpush.bf16.msra.mxu0 %v2240
        %2885 = vmatpush.bf16.msra.mxu0 %v2239
        %2886 = vmatpush.bf16.msra.mxu0 %v2238
        %2887 = vmatmul.bf16.gmra.mxu0 %v917
        %v2888 = vpop.f32.mrf.mxu0
        %v2889 = vadd.f32 %v2876, %v2888
        %v2890 = vpop.f32.mrf.mxu0
        %2891 = vdwg.mxu0
        %2892 = vmatpush.bf16.msra.mxu0 %v2253
        %2893 = vmatpush.bf16.msra.mxu0 %v2252
        %2894 = vmatpush.bf16.msra.mxu0 %v2251
        %2895 = vmatpush.bf16.msra.mxu0 %v2250
        %2896 = vmatpush.bf16.msra.mxu0 %v2249
        %2897 = vmatpush.bf16.msra.mxu0 %v2248
        %2898 = vmatpush.bf16.msra.mxu0 %v2247
        %2899 = vmatpush.bf16.msra.mxu0 %v2246
        %2900 = vmatmul.bf16.gmra.mxu0 %v918
        %v2901 = vpop.f32.mrf.mxu0
        %v2902 = vadd.f32 %v2889, %v2901
        %v2903 = vpop.f32.mrf.mxu0
        %2904 = vdwg.mxu0
        %2905 = vmatpush.bf16.msra.mxu0 %v2261
        %2906 = vmatpush.bf16.msra.mxu0 %v2260
        %2907 = vmatpush.bf16.msra.mxu0 %v2259
        %2908 = vmatpush.bf16.msra.mxu0 %v2258
        %2909 = vmatpush.bf16.msra.mxu0 %v2257
        %2910 = vmatpush.bf16.msra.mxu0 %v2256
        %2911 = vmatpush.bf16.msra.mxu0 %v2255
        %2912 = vmatpush.bf16.msra.mxu0 %v2254
        %2913 = vmatmul.bf16.gmra.mxu0 %v919
        %v2914 = vpop.f32.mrf.mxu0
        %v2915 = vadd.f32 %v2902, %v2914
        %v2916 = vpop.f32.mrf.mxu0
        %2917 = vdwg.mxu0
        %2918 = vmatpush.bf16.msra.mxu0 %v2269
        %2919 = vmatpush.bf16.msra.mxu0 %v2268
        %2920 = vmatpush.bf16.msra.mxu0 %v2267
        %2921 = vmatpush.bf16.msra.mxu0 %v2266
        %2922 = vmatpush.bf16.msra.mxu0 %v2265
        %2923 = vmatpush.bf16.msra.mxu0 %v2264
        %2924 = vmatpush.bf16.msra.mxu0 %v2263
        %2925 = vmatpush.bf16.msra.mxu0 %v2262
        %2926 = vmatmul.bf16.gmra.mxu0 %v922
        %v2927 = vpop.f32.mrf.mxu0
        %v2928 = vadd.f32 %v2915, %v2927
        %v2929 = vpop.f32.mrf.mxu0
        %2930 = vdwg.mxu0
        %2931 = vmatpush.bf16.msra.mxu0 %v2277
        %2932 = vmatpush.bf16.msra.mxu0 %v2276
        %2933 = vmatpush.bf16.msra.mxu0 %v2275
        %2934 = vmatpush.bf16.msra.mxu0 %v2274
        %2935 = vmatpush.bf16.msra.mxu0 %v2273
        %2936 = vmatpush.bf16.msra.mxu0 %v2272
        %2937 = vmatpush.bf16.msra.mxu0 %v2271
        %2938 = vmatpush.bf16.msra.mxu0 %v2270
        %2939 = vmatmul.bf16.gmra.mxu0 %v923
        %v2940 = vpop.f32.mrf.mxu0
        %v2941 = vadd.f32 %v2928, %v2940
        %v2942 = vpop.f32.mrf.mxu0
        %2943 = vdwg.mxu0
        %2944 = vmatpush.bf16.msra.mxu0 %v2285
        %2945 = vmatpush.bf16.msra.mxu0 %v2284
        %2946 = vmatpush.bf16.msra.mxu0 %v2283
        %2947 = vmatpush.bf16.msra.mxu0 %v2282
        %2948 = vmatpush.bf16.msra.mxu0 %v2281
        %2949 = vmatpush.bf16.msra.mxu0 %v2280
        %2950 = vmatpush.bf16.msra.mxu0 %v2279
        %2951 = vmatpush.bf16.msra.mxu0 %v2278
        %2952 = vmatmul.bf16.gmra.mxu0 %v924
        %v2953 = vpop.f32.mrf.mxu0
        %v2954 = vadd.f32 %v2941, %v2953
        %v2955 = vpop.f32.mrf.mxu0
        %2956 = vdwg.mxu0
        %2957 = vmatpush.bf16.msra.mxu0 %v2293
        %2958 = vmatpush.bf16.msra.mxu0 %v2292
        %2959 = vmatpush.bf16.msra.mxu0 %v2291
        %2960 = vmatpush.bf16.msra.mxu0 %v2290
        %2961 = vmatpush.bf16.msra.mxu0 %v2289
        %2962 = vmatpush.bf16.msra.mxu0 %v2288
        %2963 = vmatpush.bf16.msra.mxu0 %v2287
        %2964 = vmatpush.bf16.msra.mxu0 %v2286
        %2965 = vmatmul.bf16.gmra.mxu0 %v925
        %v2966 = vpop.f32.mrf.mxu0
        %v2967 = vadd.f32 %v2954, %v2966
        %v2968 = vpop.f32.mrf.mxu0
        %2969 = vdwg.mxu0
        %2970 = vmatpush.bf16.msra.mxu0 %v2301
        %2971 = vmatpush.bf16.msra.mxu0 %v2300
        %2972 = vmatpush.bf16.msra.mxu0 %v2299
        %2973 = vmatpush.bf16.msra.mxu0 %v2298
        %2974 = vmatpush.bf16.msra.mxu0 %v2297
        %2975 = vmatpush.bf16.msra.mxu0 %v2296
        %2976 = vmatpush.bf16.msra.mxu0 %v2295
        %2977 = vmatpush.bf16.msra.mxu0 %v2294
        %2978 = vmatmul.bf16.gmra.mxu0 %v926
        %v2979 = vpop.f32.mrf.mxu0
        %v2980 = vadd.f32 %v2967, %v2979
        %v2981 = vpop.f32.mrf.mxu0
        %2982 = vdwg.mxu0
        %2983 = vmatpush.bf16.msra.mxu0 %v2309
        %2984 = vmatpush.bf16.msra.mxu0 %v2308
        %2985 = vmatpush.bf16.msra.mxu0 %v2307
        %2986 = vmatpush.bf16.msra.mxu0 %v2306
        %2987 = vmatpush.bf16.msra.mxu0 %v2305
        %2988 = vmatpush.bf16.msra.mxu0 %v2304
        %2989 = vmatpush.bf16.msra.mxu0 %v2303
        %2990 = vmatpush.bf16.msra.mxu0 %v2302
        %2991 = vmatmul.bf16.gmra.mxu0 %v927
        %v2992 = vpop.f32.mrf.mxu0
        %v2993 = vadd.f32 %v2980, %v2992
        %v2994 = vpop.f32.mrf.mxu0
        %2995 = vdwg.mxu0
        %2996 = vmatpush.bf16.msra.mxu0 %v2317
        %2997 = vmatpush.bf16.msra.mxu0 %v2316
        %2998 = vmatpush.bf16.msra.mxu0 %v2315
        %2999 = vmatpush.bf16.msra.mxu0 %v2314
        %3000 = vmatpush.bf16.msra.mxu0 %v2313
        %3001 = vmatpush.bf16.msra.mxu0 %v2312
        %3002 = vmatpush.bf16.msra.mxu0 %v2311
        %3003 = vmatpush.bf16.msra.mxu0 %v2310
        %3004 = vmatmul.bf16.gmra.mxu0 %v928
        %v3005 = vpop.f32.mrf.mxu0
        %v3006 = vadd.f32 %v2993, %v3005
        %v3007 = vpop.f32.mrf.mxu0
        %3008 = vdwg.mxu0
        %3009 = vmatpush.bf16.msra.mxu0 %v2325
        %3010 = vmatpush.bf16.msra.mxu0 %v2324
        %3011 = vmatpush.bf16.msra.mxu0 %v2323
        %3012 = vmatpush.bf16.msra.mxu0 %v2322
        %3013 = vmatpush.bf16.msra.mxu0 %v2321
        %3014 = vmatpush.bf16.msra.mxu0 %v2320
        %3015 = vmatpush.bf16.msra.mxu0 %v2319
        %3016 = vmatpush.bf16.msra.mxu0 %v2318
        %3017 = vmatmul.bf16.gmra.mxu0 %v929
        %v3018 = vpop.f32.mrf.mxu0
        %v3019 = vadd.f32 %v3006, %v3018
        %v3020 = vpop.f32.mrf.mxu0
        %3021 = vdwg.mxu0
        %3022 = vmatpush.bf16.msra.mxu0 %v2333
        %3023 = vmatpush.bf16.msra.mxu0 %v2332
        %3024 = vmatpush.bf16.msra.mxu0 %v2331
        %3025 = vmatpush.bf16.msra.mxu0 %v2330
        %3026 = vmatpush.bf16.msra.mxu0 %v2329
        %3027 = vmatpush.bf16.msra.mxu0 %v2328
        %3028 = vmatpush.bf16.msra.mxu0 %v2327
        %3029 = vmatpush.bf16.msra.mxu0 %v2326
        %3030 = vmatmul.bf16.gmra.mxu0 %v932
        %v3031 = vpop.f32.mrf.mxu0
        %v3032 = vadd.f32 %v3019, %v3031
        %v3033 = vpop.f32.mrf.mxu0
        %3034 = vdwg.mxu0
        %3035 = vmatpush.bf16.msra.mxu0 %v2341
        %3036 = vmatpush.bf16.msra.mxu0 %v2340
        %3037 = vmatpush.bf16.msra.mxu0 %v2339
        %3038 = vmatpush.bf16.msra.mxu0 %v2338
        %3039 = vmatpush.bf16.msra.mxu0 %v2337
        %3040 = vmatpush.bf16.msra.mxu0 %v2336
        %3041 = vmatpush.bf16.msra.mxu0 %v2335
        %3042 = vmatpush.bf16.msra.mxu0 %v2334
        %3043 = vmatmul.bf16.gmra.mxu0 %v933
        %v3044 = vpop.f32.mrf.mxu0
        %v3045 = vadd.f32 %v3032, %v3044
        %v3046 = vpop.f32.mrf.mxu0
        %3047 = vdwg.mxu0
        %3048 = vmatpush.bf16.msra.mxu0 %v2349
        %3049 = vmatpush.bf16.msra.mxu0 %v2348
        %3050 = vmatpush.bf16.msra.mxu0 %v2347
        %3051 = vmatpush.bf16.msra.mxu0 %v2346
        %3052 = vmatpush.bf16.msra.mxu0 %v2345
        %3053 = vmatpush.bf16.msra.mxu0 %v2344
        %3054 = vmatpush.bf16.msra.mxu0 %v2343
        %3055 = vmatpush.bf16.msra.mxu0 %v2342
        %3056 = vmatmul.bf16.gmra.mxu0 %v934
        %v3057 = vpop.f32.mrf.mxu0
        %v3058 = vadd.f32 %v3045, %v3057
        %v3059 = vpop.f32.mrf.mxu0
        %3060 = vdwg.mxu0
        %3061 = vmatpush.bf16.msra.mxu0 %v2357
        %3062 = vmatpush.bf16.msra.mxu0 %v2356
        %3063 = vmatpush.bf16.msra.mxu0 %v2355
        %3064 = vmatpush.bf16.msra.mxu0 %v2354
        %3065 = vmatpush.bf16.msra.mxu0 %v2353
        %3066 = vmatpush.bf16.msra.mxu0 %v2352
        %3067 = vmatpush.bf16.msra.mxu0 %v2351
        %3068 = vmatpush.bf16.msra.mxu0 %v2350
        %3069 = vmatmul.bf16.gmra.mxu0 %v935
        %v3070 = vpop.f32.mrf.mxu0
        %v3071 = vadd.f32 %v3058, %v3070
        %v3072 = vpop.f32.mrf.mxu0
        %3073 = vdwg.mxu0
        %3074 = vmatpush.bf16.msra.mxu0 %v2365
        %3075 = vmatpush.bf16.msra.mxu0 %v2364
        %3076 = vmatpush.bf16.msra.mxu0 %v2363
        %3077 = vmatpush.bf16.msra.mxu0 %v2362
        %3078 = vmatpush.bf16.msra.mxu0 %v2361
        %3079 = vmatpush.bf16.msra.mxu0 %v2360
        %3080 = vmatpush.bf16.msra.mxu0 %v2359
        %3081 = vmatpush.bf16.msra.mxu0 %v2358
        %3082 = vmatmul.bf16.gmra.mxu0 %v936
        %v3083 = vpop.f32.mrf.mxu0
        %v3084 = vadd.f32 %v3071, %v3083
        %v3085 = vpop.f32.mrf.mxu0
        %3086 = vdwg.mxu0
        %3087 = vmatpush.bf16.msra.mxu0 %v2373
        %3088 = vmatpush.bf16.msra.mxu0 %v2372
        %3089 = vmatpush.bf16.msra.mxu0 %v2371
        %3090 = vmatpush.bf16.msra.mxu0 %v2370
        %3091 = vmatpush.bf16.msra.mxu0 %v2369
        %3092 = vmatpush.bf16.msra.mxu0 %v2368
        %3093 = vmatpush.bf16.msra.mxu0 %v2367
        %3094 = vmatpush.bf16.msra.mxu0 %v2366
        %3095 = vmatmul.bf16.gmra.mxu0 %v937
        %v3096 = vpop.f32.mrf.mxu0
        %v3097 = vadd.f32 %v3084, %v3096
        %v3098 = vpop.f32.mrf.mxu0
        %3099 = vdwg.mxu0
        %3100 = vmatpush.bf16.msra.mxu0 %v2381
        %3101 = vmatpush.bf16.msra.mxu0 %v2380
        %3102 = vmatpush.bf16.msra.mxu0 %v2379
        %3103 = vmatpush.bf16.msra.mxu0 %v2378
        %3104 = vmatpush.bf16.msra.mxu0 %v2377
        %3105 = vmatpush.bf16.msra.mxu0 %v2376
        %3106 = vmatpush.bf16.msra.mxu0 %v2375
        %3107 = vmatpush.bf16.msra.mxu0 %v2374
        %3108 = vmatmul.bf16.gmra.mxu0 %v938
        %v3109 = vpop.f32.mrf.mxu0
        %v3110 = vadd.f32 %v3097, %v3109
        %v3111 = vpop.f32.mrf.mxu0
        %3112 = vdwg.mxu0
        %3113 = vmatpush.bf16.msra.mxu0 %v2389
        %3114 = vmatpush.bf16.msra.mxu0 %v2388
        %3115 = vmatpush.bf16.msra.mxu0 %v2387
        %3116 = vmatpush.bf16.msra.mxu0 %v2386
        %3117 = vmatpush.bf16.msra.mxu0 %v2385
        %3118 = vmatpush.bf16.msra.mxu0 %v2384
        %3119 = vmatpush.bf16.msra.mxu0 %v2383
        %3120 = vmatpush.bf16.msra.mxu0 %v2382
        %3121 = vmatmul.bf16.gmra.mxu0 %v939
        %v3122 = vpop.f32.mrf.mxu0
        %v3123 = vadd.f32 %v3110, %v3122
        %v3124 = vpop.f32.mrf.mxu0
        %3125 = vdwg.mxu0
        %3126 = vmatpush.bf16.msra.mxu0 %v2397
        %3127 = vmatpush.bf16.msra.mxu0 %v2396
        %3128 = vmatpush.bf16.msra.mxu0 %v2395
        %3129 = vmatpush.bf16.msra.mxu0 %v2394
        %3130 = vmatpush.bf16.msra.mxu0 %v2393
        %3131 = vmatpush.bf16.msra.mxu0 %v2392
        %3132 = vmatpush.bf16.msra.mxu0 %v2391
        %3133 = vmatpush.bf16.msra.mxu0 %v2390
        %3134 = vmatmul.bf16.gmra.mxu0 %v942
        %v3135 = vpop.f32.mrf.mxu0
        %v3136 = vadd.f32 %v3123, %v3135
        %v3137 = vpop.f32.mrf.mxu0
        %3138 = vdwg.mxu0
        %3139 = vmatpush.bf16.msra.mxu0 %v2405
        %3140 = vmatpush.bf16.msra.mxu0 %v2404
        %3141 = vmatpush.bf16.msra.mxu0 %v2403
        %3142 = vmatpush.bf16.msra.mxu0 %v2402
        %3143 = vmatpush.bf16.msra.mxu0 %v2401
        %3144 = vmatpush.bf16.msra.mxu0 %v2400
        %3145 = vmatpush.bf16.msra.mxu0 %v2399
        %3146 = vmatpush.bf16.msra.mxu0 %v2398
        %3147 = vmatmul.bf16.gmra.mxu0 %v943
        %v3148 = vpop.f32.mrf.mxu0
        %v3149 = vadd.f32 %v3136, %v3148
        %v3150 = vpop.f32.mrf.mxu0
        %3151 = vdwg.mxu0
        %3152 = vmatpush.bf16.msra.mxu0 %v2413
        %3153 = vmatpush.bf16.msra.mxu0 %v2412
        %3154 = vmatpush.bf16.msra.mxu0 %v2411
        %3155 = vmatpush.bf16.msra.mxu0 %v2410
        %3156 = vmatpush.bf16.msra.mxu0 %v2409
        %3157 = vmatpush.bf16.msra.mxu0 %v2408
        %3158 = vmatpush.bf16.msra.mxu0 %v2407
        %3159 = vmatpush.bf16.msra.mxu0 %v2406
        %3160 = vmatmul.bf16.gmra.mxu0 %v944
        %v3161 = vpop.f32.mrf.mxu0
        %v3162 = vadd.f32 %v3149, %v3161
        %v3163 = vpop.f32.mrf.mxu0
        %3164 = vdwg.mxu0
        %3165 = vmatpush.bf16.msra.mxu0 %v2421
        %3166 = vmatpush.bf16.msra.mxu0 %v2420
        %3167 = vmatpush.bf16.msra.mxu0 %v2419
        %3168 = vmatpush.bf16.msra.mxu0 %v2418
        %3169 = vmatpush.bf16.msra.mxu0 %v2417
        %3170 = vmatpush.bf16.msra.mxu0 %v2416
        %3171 = vmatpush.bf16.msra.mxu0 %v2415
        %3172 = vmatpush.bf16.msra.mxu0 %v2414
        %3173 = vmatmul.bf16.gmra.mxu0 %v945
        %v3174 = vpop.f32.mrf.mxu0
        %v3175 = vadd.f32 %v3162, %v3174
        %v3176 = vpop.f32.mrf.mxu0
        %3177 = vdwg.mxu0
        %v3178 = vadd.f32 %v318, %v3175
        %3179 = vst [vmem:[#allocation2] sm:$0x3] %v3178
        %p3180 = scmp.eq.s32.totalorder %s26, 1
        // Predicated region
        $region57: #{simple_cnn_forward.3} parent=39 // pred_check
          %p3181 = pneg %p3180
        $region58: #{simple_cnn_forward.3} parent=39 // pred_check_branch
          %3183 = sbr.rel (%p3181) target = $region60
        $region59: #{simple_cnn_forward.3} parent=39 // pred_region
          %v3184 = vld [vmem:[#allocation2] sm:$0x3]
          %v3185 = vld [vmem:[#allocation6] sm:$0x1]
          %v3187 = vperm.slane %v3185, 0
          %v3189 = vadd.f32 %v3184, %v3187
          %v3190 = vmax.f32 %v3189, 0.0
          %v3191 = vpack.c.bf16 %v3190, %v3190
          %v3192 = vld [vmem:[%s3] sm:$0xf]
          %v3193 = vld [vmem:[%s3 + $0x4] sm:$0xf]
          %v3194 = vld [vmem:[%s3 + $0x8] sm:$0xf]
          %v3195 = vld [vmem:[%s3 + $0xc] sm:$0xf]
          %v3196 = vld [vmem:[%s3 + $0x10] sm:$0xf]
          %v3197 = vld [vmem:[%s3 + $0x14] sm:$0xf]
          %v3198 = vld [vmem:[%s3 + $0x18] sm:$0xf]
          %v3199 = vld [vmem:[%s3 + $0x1c] sm:$0xf]
          %v3200 = vld [vmem:[%s3 + $0x20] sm:$0xf]
          %v3201 = vld [vmem:[%s3 + $0x24] sm:$0xf]
          %v3202 = vld [vmem:[%s3 + $0x28] sm:$0xf]
          %v3203 = vld [vmem:[%s3 + $0x2c] sm:$0xf]
          %v3204 = vld [vmem:[%s3 + $0x30] sm:$0xf]
          %v3205 = vld [vmem:[%s3 + $0x34] sm:$0xf]
          %v3206 = vld [vmem:[%s3 + $0x38] sm:$0xf]
          %v3207 = vld [vmem:[%s3 + $0x3c] sm:$0xf]
          %v3208 = vld [vmem:[#allocation8] sm:$0x1]
          %v3210 = vperm.slane %v3208, 0
          %v3228 = vunpack.c.l.b16 %v3192
          %v3229 = vunpack.c.l.b16 %v3193
          %v3230 = vunpack.c.l.b16 %v3194
          %v3231 = vunpack.c.l.b16 %v3195
          %v3232 = vunpack.c.l.b16 %v3196
          %v3233 = vunpack.c.l.b16 %v3197
          %v3234 = vunpack.c.l.b16 %v3198
          %v3235 = vunpack.c.l.b16 %v3199
          %v3236 = vunpack.c.l.b16 %v3200
          %v3237 = vunpack.c.l.b16 %v3201
          %v3238 = vunpack.c.l.b16 %v3202
          %v3239 = vunpack.c.l.b16 %v3203
          %v3240 = vunpack.c.l.b16 %v3204
          %v3241 = vunpack.c.l.b16 %v3205
          %v3242 = vunpack.c.l.b16 %v3206
          %v3243 = vunpack.c.l.b16 %v3207
          %v3244 = vpack.c.b16 %v3229, %v3228
          %v3245 = vpack.c.b16 %v3231, %v3230
          %v3246 = vpack.c.b16 %v3233, %v3232
          %v3247 = vpack.c.b16 %v3235, %v3234
          %v3248 = vpack.c.b16 %v3237, %v3236
          %v3249 = vpack.c.b16 %v3239, %v3238
          %v3250 = vpack.c.b16 %v3241, %v3240
          %v3251 = vpack.c.b16 %v3243, %v3242
          %3260 = vmatpush.bf16.msra.mxu0 %v3251
          %3261 = vmatpush.bf16.msra.mxu0 %v3250
          %3262 = vmatpush.bf16.msra.mxu0 %v3249
          %3263 = vmatpush.bf16.msra.mxu0 %v3248
          %3264 = vmatpush.bf16.msra.mxu0 %v3247
          %3265 = vmatpush.bf16.msra.mxu0 %v3246
          %3266 = vmatpush.bf16.msra.mxu0 %v3245
          %3267 = vmatpush.bf16.msra.mxu0 %v3244
          %3268 = vmatmul.bf16.gmra.mxu0 %v3191
          %v3269 = vpop.f32.mrf.mxu0
          %v3270 = vadd.f32 %v3210, %v3269
          %v3271 = vpop.f32.mrf.mxu0
          %3272 = vdwg.mxu0
          %vm3273 = vcmask 74752
          %3274 = vst.msk [vmem:[#allocation9] sm:$0x3] %vm3273, %v3270
        $region60: #{simple_cnn_forward.3} parent=39 // pred_fallthru
          _
        // Predicated region
        $region61: #{simple_cnn_forward.3} parent=39 // pred_check
          %p3275 = pneg %p168
        $region62: #{simple_cnn_forward.3} parent=39 // pred_check_branch
          %3277 = sbr.rel (%p3275) target = $region64
        $region63: #{simple_cnn_forward.3} parent=39 // pred_region
          %3279 = vsyncadd [#allocation5], 0
          %s3280 = smul.addr %s25, 2
          %s3281 = scalar_lea.hbm %s5, %s3280
          %s3283 = sshll.u32 [#allocation9], 4
          %s3284 = int_to_ptr.vmem [resolvable:$true] %s3283
          %s3285 = sshll.u32 %s3281, 4
          %s3286 = int_to_ptr.hbm [resolvable:$true] %s3285
          %3288 = dma.vmem_to_hbm [thread:$0]  %s3284, 32, %s3286, [#allocation5]
        $region64: #{simple_cnn_forward.3} parent=39 // pred_fallthru
          _
        // Predicated region
        $region65: #{simple_cnn_forward.3} parent=39 // pred_check
          %p3289 = pneg %p168
        $region66: #{simple_cnn_forward.3} parent=39 // pred_check_branch
          %3291 = sbr.rel (%p3289) target = $region68
        $region67: #{simple_cnn_forward.3} parent=39 // pred_region
          %3293 = dma.done [#allocation5], 32
        $region68: #{simple_cnn_forward.3} parent=39 // pred_fallthru
          _
      $region40: #{simple_cnn_forward.3} parent=5 // pred_fallthru
        _
      %p3294 = scmp.le.s32.totalorder 2, %s16
      // Predicated region
      $region69: #{simple_cnn_forward.3} parent=5 // pred_check
        %p3295 = pneg %p3294
      $region70: #{simple_cnn_forward.3} parent=5 // pred_check_branch
        %3297 = sbr.rel (%p3295) target = $region72
      $region71: #{simple_cnn_forward.3} parent=5 // pred_region
        %s3298 = ssub.s32 %s16, 2
      $region72: #{simple_cnn_forward.3} parent=5 // pred_fallthru
        _
    $region6: #{simple_cnn_forward.3} parent=1 // loop_footer
      %s20 = sadd.s32 1, %s16
    $region7: #{simple_cnn_forward.3} parent=1 // loop_footer_branch
      %15 = sbr.rel target = $region3
    $region8: #{simple_cnn_forward.3} parent=1 // loop_exit
      _
    %3299 = vsyncpa [#allocation4], 1
    %s3300 = scalar_lea.sflag [#allocation4], 1
    %3301 = vsyncpa %s3300, 1
    %3302 = vsyncpa [#allocation7], 1
    %3303 = vsyncpa [#allocation5], 1
    %s3304 = scalar_lea.sflag [#allocation5], 1
    %3305 = vsyncpa %s3304, 1

// kernel: simple_cnn_forward.2
$region0: #{simple_cnn_forward.2}
  #allocation0 [shape = 'u32[]', space=smem, size = 0x4, offset = 0x4, fixed_abs, tag = 'smem constant byte address 0x4 - core index']
  #allocation1 [shape = 'u32[72,128]{1,0:T(1,128)}', space=vmem, size = 0x9000, scoped, tag = 'internal scratch']
  #allocation2 [shape = 'bf16[2,680,32]{2,1,0:T(8,128)(2,1)}', space=vmem, size = 0x55000, scoped, tag = 'scratch operand']
  #allocation3 [shape = 'f32[624,64]{1,0:T(8,128)}', space=vmem, size = 0x4e000, scoped, tag = 'scratch operand']
  %s0 = inlined_call_operand.vmem [shape: bf16[2,680,16], index: 0, kind: input, shape index: {}]
  %s1 = inlined_call_operand.hbm [shape: bf16[16,32], index: 1, kind: input, shape index: {}]
  %s2 = inlined_call_operand.hbm [shape: f32[1,32], index: 2, kind: input, shape index: {}]
  %s3 = inlined_call_operand.vmem [shape: bf16[288,64], index: 3, kind: input, shape index: {}]
  %s4 = inlined_call_operand.hbm [shape: f32[1,64], index: 4, kind: input, shape index: {}]
  %s5 = inlined_call_operand.vmem [shape: bf16[2,144,64], index: 5, kind: output, shape index: {}]
  %s6 = sld [smem:[#allocation0]]
  $region42: #{simple_cnn_forward.2} parent=0
    _
  %s8 = ssub.s32 1, %s6
  %s9 = scalar_select 0, %s8, %s6
  $region1: #{simple_cnn_forward.2} parent=0
    #allocation4 [shape = 'u8[4096]{0}', space=vmem, size = 0x1000, scoped, tag = 'input window, operand 1, single buffered']
    #allocation5 [shape = 's32[1]{0}', space=sflag, size = 0x4, scoped, tag = 'scoped memory for simple_cnn_forward.2']
    #allocation6 [shape = 'u8[512]{0}', space=vmem, size = 0x400, scoped, tag = 'input window, operand 2, single buffered']
    #allocation7 [shape = 's32[1]{0}', space=sflag, size = 0x4, scoped, tag = 'scoped memory for simple_cnn_forward.2']
    #allocation8 [shape = 'u8[512]{0}', space=vmem, size = 0x400, scoped, tag = 'input window, operand 4, single buffered']
    %10 = vsyncpa [#allocation5], 0
    %11 = vsyncpa [#allocation7], 0
    // Predicated region
    $region2: #{simple_cnn_forward.2} parent=1 // pred_check
      _
    $region3: #{simple_cnn_forward.2} parent=1 // pred_check_branch
      %13 = sbr.rel (0) target = $region5
    $region4: #{simple_cnn_forward.2} parent=1 // pred_region
      _
    $region5: #{simple_cnn_forward.2} parent=1 // pred_fallthru
      _
    // Predicated region
    $region6: #{simple_cnn_forward.2} parent=1 // pred_check
      _
    $region7: #{simple_cnn_forward.2} parent=1 // pred_check_branch
      %15 = sbr.rel (0) target = $region9
    $region8: #{simple_cnn_forward.2} parent=1 // pred_region
      %17 = vsyncadd [#allocation5], 0
      %s18 = sshll.u32 %s1, 4
      %s19 = int_to_ptr.hbm [resolvable:$true] %s18
      %s20 = sshll.u32 [#allocation4], 4
      %s21 = int_to_ptr.vmem [resolvable:$true] %s20
      %26 = dma.hbm_to_vmem [thread:$0]  %s19, 128, %s21, [#allocation5], 64, 64, 4
    $region9: #{simple_cnn_forward.2} parent=1 // pred_fallthru
      _
    // Predicated region
    $region10: #{simple_cnn_forward.2} parent=1 // pred_check
      _
    $region11: #{simple_cnn_forward.2} parent=1 // pred_check_branch
      %28 = sbr.rel (0) target = $region13
    $region12: #{simple_cnn_forward.2} parent=1 // pred_region
      %30 = vsyncadd [#allocation7], 0
      %s32 = sshll.u32 %s2, 4
      %s33 = int_to_ptr.hbm [resolvable:$true] %s32
      %s34 = sshll.u32 [#allocation6], 4
      %s35 = int_to_ptr.vmem [resolvable:$true] %s34
      %37 = dma.hbm_to_vmem [thread:$0]  %s33, 16, %s35, [#allocation7]
    $region13: #{simple_cnn_forward.2} parent=1 // pred_fallthru
      _
    // Predicated region
    $region14: #{simple_cnn_forward.2} parent=1 // pred_check
      _
    $region15: #{simple_cnn_forward.2} parent=1 // pred_check_branch
      %39 = sbr.rel (0) target = $region17
    $region16: #{simple_cnn_forward.2} parent=1 // pred_region
      _
    $region17: #{simple_cnn_forward.2} parent=1 // pred_fallthru
      _
    // Predicated region
    $region18: #{simple_cnn_forward.2} parent=1 // pred_check
      _
    $region19: #{simple_cnn_forward.2} parent=1 // pred_check_branch
      %41 = sbr.rel (0) target = $region21
    $region20: #{simple_cnn_forward.2} parent=1 // pred_region
      %43 = vsyncadd [#allocation7], 0
      %s45 = sshll.u32 %s4, 4
      %s46 = int_to_ptr.hbm [resolvable:$true] %s45
      %s47 = sshll.u32 [#allocation8], 4
      %s48 = int_to_ptr.vmem [resolvable:$true] %s47
      %50 = dma.hbm_to_vmem [thread:$0]  %s46, 16, %s48, [#allocation7]
    $region21: #{simple_cnn_forward.2} parent=1 // pred_fallthru
      _
    // Predicated region
    $region22: #{simple_cnn_forward.2} parent=1 // pred_check
      _
    $region23: #{simple_cnn_forward.2} parent=1 // pred_check_branch
      %52 = sbr.rel (0) target = $region25
    $region24: #{simple_cnn_forward.2} parent=1 // pred_region
      %54 = dma.done [#allocation5], 128
    $region25: #{simple_cnn_forward.2} parent=1 // pred_fallthru
      _
    // Predicated region
    $region26: #{simple_cnn_forward.2} parent=1 // pred_check
      _
    $region27: #{simple_cnn_forward.2} parent=1 // pred_check_branch
      %56 = sbr.rel (0) target = $region29
    $region28: #{simple_cnn_forward.2} parent=1 // pred_region
      %58 = dma.done [#allocation7], 16
    $region29: #{simple_cnn_forward.2} parent=1 // pred_fallthru
      _
    // Predicated region
    $region30: #{simple_cnn_forward.2} parent=1 // pred_check
      _
    $region31: #{simple_cnn_forward.2} parent=1 // pred_check_branch
      %60 = sbr.rel (0) target = $region33
    $region32: #{simple_cnn_forward.2} parent=1 // pred_region
      %62 = dma.done [#allocation7], 16
    $region33: #{simple_cnn_forward.2} parent=1 // pred_fallthru
      _
    %v64 = vld [vmem:[%s0] sm:$0xf]
    %v65 = vld [vmem:[%s0 + $0x4] sm:$0xf]
    %v66 = vld [vmem:[%s0 + $0x8] sm:$0xf]
    %v67 = vld [vmem:[%s0 + $0xc] sm:$0xf]
    %v68 = vld [vmem:[%s0 + $0x10] sm:$0xf]
    %v69 = vld [vmem:[%s0 + $0x14] sm:$0xf]
    %v70 = vld [vmem:[%s0 + $0x18] sm:$0xf]
    %v71 = vld [vmem:[%s0 + $0x1c] sm:$0xf]
    %v72 = vld [vmem:[%s0 + $0x20] sm:$0xf]
    %v73 = vld [vmem:[%s0 + $0x24] sm:$0xf]
    %v74 = vld [vmem:[%s0 + $0x28] sm:$0xf]
    %v75 = vld [vmem:[%s0 + $0x2c] sm:$0xf]
    %v76 = vld [vmem:[%s0 + $0x30] sm:$0xf]
    %v77 = vld [vmem:[%s0 + $0x34] sm:$0xf]
    %v78 = vld [vmem:[%s0 + $0x38] sm:$0xf]
    %v79 = vld [vmem:[%s0 + $0x3c] sm:$0xf]
    %v80 = vld [vmem:[%s0 + $0x40] sm:$0xf]
    %v81 = vld [vmem:[%s0 + $0x44] sm:$0xf]
    %v82 = vld [vmem:[%s0 + $0x48] sm:$0xf]
    %v83 = vld [vmem:[%s0 + $0x4c] sm:$0xf]
    %v84 = vld [vmem:[%s0 + $0x50] sm:$0xf]
    %v85 = vld [vmem:[%s0 + $0x54] sm:$0xf]
    %v86 = vld [vmem:[%s0 + $0x58] sm:$0xf]
    %v87 = vld [vmem:[%s0 + $0x5c] sm:$0xf]
    %v88 = vld [vmem:[%s0 + $0x60] sm:$0xf]
    %v89 = vld [vmem:[%s0 + $0x64] sm:$0xf]
    %v90 = vld [vmem:[%s0 + $0x68] sm:$0xf]
    %v91 = vld [vmem:[%s0 + $0x6c] sm:$0xf]
    %v92 = vld [vmem:[%s0 + $0x70] sm:$0xf]
    %v93 = vld [vmem:[%s0 + $0x74] sm:$0xf]
    %v94 = vld [vmem:[%s0 + $0x78] sm:$0xf]
    %v95 = vld [vmem:[%s0 + $0x7c] sm:$0xf]
    %v96 = vld [vmem:[%s0 + $0x80] sm:$0xf]
    %v97 = vld [vmem:[%s0 + $0x84] sm:$0xf]
    %v98 = vld [vmem:[%s0 + $0x88] sm:$0xf]
    %v99 = vld [vmem:[%s0 + $0x8c] sm:$0xf]
    %v100 = vld [vmem:[%s0 + $0x90] sm:$0xf]
    %v101 = vld [vmem:[%s0 + $0x94] sm:$0xf]
    %v102 = vld [vmem:[%s0 + $0x98] sm:$0xf]
    %v103 = vld [vmem:[%s0 + $0x9c] sm:$0xf]
    %v104 = vld [vmem:[%s0 + $0xa0] sm:$0xf]
    %v105 = vld [vmem:[%s0 + $0xa4] sm:$0xf]
    %v106 = vld [vmem:[%s0 + $0xa8] sm:$0xf]
    %v107 = vld [vmem:[%s0 + $0xac] sm:$0xf]
    %v108 = vld [vmem:[%s0 + $0xb0] sm:$0xf]
    %v109 = vld [vmem:[%s0 + $0xb4] sm:$0xf]
    %v110 = vld [vmem:[%s0 + $0xb8] sm:$0xf]
    %v111 = vld [vmem:[%s0 + $0xbc] sm:$0xf]
    %v112 = vld [vmem:[%s0 + $0xc0] sm:$0xf]
    %v113 = vld [vmem:[%s0 + $0xc4] sm:$0xf]
    %v114 = vld [vmem:[%s0 + $0xc8] sm:$0xf]
    %v115 = vld [vmem:[%s0 + $0xcc] sm:$0xf]
    %v116 = vld [vmem:[%s0 + $0xd0] sm:$0xf]
    %v117 = vld [vmem:[%s0 + $0xd4] sm:$0xf]
    %v118 = vld [vmem:[%s0 + $0xd8] sm:$0xf]
    %v119 = vld [vmem:[%s0 + $0xdc] sm:$0xf]
    %v120 = vld [vmem:[%s0 + $0xe0] sm:$0xf]
    %v121 = vld [vmem:[%s0 + $0xe4] sm:$0xf]
    %v122 = vld [vmem:[%s0 + $0xe8] sm:$0xf]
    %v123 = vld [vmem:[%s0 + $0xec] sm:$0xf]
    %v124 = vld [vmem:[%s0 + $0xf0] sm:$0xf]
    %v125 = vld [vmem:[%s0 + $0xf4] sm:$0xf]
    %v126 = vld [vmem:[%s0 + $0xf8] sm:$0xf]
    %v127 = vld [vmem:[%s0 + $0xfc] sm:$0xf]
    %v128 = vld [vmem:[%s0 + $0x100] sm:$0xf]
    %v129 = vld [vmem:[%s0 + $0x104] sm:$0xf]
    %v130 = vld [vmem:[%s0 + $0x108] sm:$0xf]
    %v131 = vld [vmem:[%s0 + $0x10c] sm:$0xf]
    %v132 = vld [vmem:[%s0 + $0x110] sm:$0xf]
    %v133 = vld [vmem:[%s0 + $0x114] sm:$0xf]
    %v134 = vld [vmem:[%s0 + $0x118] sm:$0xf]
    %v135 = vld [vmem:[%s0 + $0x11c] sm:$0xf]
    %v136 = vld [vmem:[%s0 + $0x120] sm:$0xf]
    %v137 = vld [vmem:[%s0 + $0x124] sm:$0xf]
    %v138 = vld [vmem:[%s0 + $0x128] sm:$0xf]
    %v139 = vld [vmem:[%s0 + $0x12c] sm:$0xf]
    %v140 = vld [vmem:[%s0 + $0x130] sm:$0xf]
    %v141 = vld [vmem:[%s0 + $0x134] sm:$0xf]
    %v142 = vld [vmem:[%s0 + $0x138] sm:$0xf]
    %v143 = vld [vmem:[%s0 + $0x13c] sm:$0xf]
    %v144 = vld [vmem:[%s0 + $0x140] sm:$0xf]
    %v145 = vld [vmem:[%s0 + $0x144] sm:$0xf]
    %v146 = vld [vmem:[%s0 + $0x148] sm:$0xf]
    %v147 = vld [vmem:[%s0 + $0x14c] sm:$0xf]
    %v148 = vld [vmem:[%s0 + $0x150] sm:$0xf]
    %v149 = vld [vmem:[#allocation4] sm:$0xf]
    %v150 = vld [vmem:[#allocation4 + $0x4] sm:$0xf]
    %v151 = vld [vmem:[#allocation6] sm:$0x1]
    %v153 = vperm.slane %v151, 0
    %v240 = vunpack.c.l.b16 %v64
    %v241 = vunpack.c.l.b16 %v65
    %v242 = vunpack.c.l.b16 %v66
    %v243 = vunpack.c.l.b16 %v67
    %v244 = vunpack.c.l.b16 %v68
    %v245 = vunpack.c.l.b16 %v69
    %v246 = vunpack.c.l.b16 %v70
    %v247 = vunpack.c.l.b16 %v71
    %v248 = vunpack.c.l.b16 %v72
    %v249 = vunpack.c.l.b16 %v73
    %v250 = vunpack.c.l.b16 %v74
    %v251 = vunpack.c.l.b16 %v75
    %v252 = vunpack.c.l.b16 %v76
    %v253 = vunpack.c.l.b16 %v77
    %v254 = vunpack.c.l.b16 %v78
    %v255 = vunpack.c.l.b16 %v79
    %v256 = vunpack.c.l.b16 %v80
    %v257 = vunpack.c.l.b16 %v81
    %v258 = vunpack.c.l.b16 %v82
    %v259 = vunpack.c.l.b16 %v83
    %v260 = vunpack.c.l.b16 %v84
    %v261 = vunpack.c.l.b16 %v85
    %v262 = vunpack.c.l.b16 %v86
    %v263 = vunpack.c.l.b16 %v87
    %v264 = vunpack.c.l.b16 %v88
    %v265 = vunpack.c.l.b16 %v89
    %v266 = vunpack.c.l.b16 %v90
    %v267 = vunpack.c.l.b16 %v91
    %v268 = vunpack.c.l.b16 %v92
    %v269 = vunpack.c.l.b16 %v93
    %v270 = vunpack.c.l.b16 %v94
    %v271 = vunpack.c.l.b16 %v95
    %v272 = vunpack.c.l.b16 %v96
    %v273 = vunpack.c.l.b16 %v97
    %v274 = vunpack.c.l.b16 %v98
    %v275 = vunpack.c.l.b16 %v99
    %v276 = vunpack.c.l.b16 %v100
    %v277 = vunpack.c.l.b16 %v101
    %v278 = vunpack.c.l.b16 %v102
    %v279 = vunpack.c.l.b16 %v103
    %v280 = vunpack.c.l.b16 %v104
    %v281 = vunpack.c.l.b16 %v105
    %v282 = vunpack.c.l.b16 %v106
    %v283 = vunpack.c.l.b16 %v107
    %v284 = vunpack.c.l.b16 %v108
    %v285 = vunpack.c.l.b16 %v109
    %v286 = vunpack.c.l.b16 %v110
    %v287 = vunpack.c.l.b16 %v111
    %v288 = vunpack.c.l.b16 %v112
    %v289 = vunpack.c.l.b16 %v113
    %v290 = vunpack.c.l.b16 %v114
    %v291 = vunpack.c.l.b16 %v115
    %v292 = vunpack.c.l.b16 %v116
    %v293 = vunpack.c.l.b16 %v117
    %v294 = vunpack.c.l.b16 %v118
    %v295 = vunpack.c.l.b16 %v119
    %v296 = vunpack.c.l.b16 %v120
    %v297 = vunpack.c.l.b16 %v121
    %v298 = vunpack.c.l.b16 %v122
    %v299 = vunpack.c.l.b16 %v123
    %v300 = vunpack.c.l.b16 %v124
    %v301 = vunpack.c.l.b16 %v125
    %v302 = vunpack.c.l.b16 %v126
    %v303 = vunpack.c.l.b16 %v127
    %v304 = vunpack.c.l.b16 %v128
    %v305 = vunpack.c.l.b16 %v129
    %v306 = vunpack.c.l.b16 %v130
    %v307 = vunpack.c.l.b16 %v131
    %v308 = vunpack.c.l.b16 %v132
    %v309 = vunpack.c.l.b16 %v133
    %v310 = vunpack.c.l.b16 %v134
    %v311 = vunpack.c.l.b16 %v135
    %v312 = vunpack.c.l.b16 %v136
    %v313 = vunpack.c.l.b16 %v137
    %v314 = vunpack.c.l.b16 %v138
    %v315 = vunpack.c.l.b16 %v139
    %v316 = vunpack.c.l.b16 %v140
    %v317 = vunpack.c.l.b16 %v141
    %v318 = vunpack.c.l.b16 %v142
    %v319 = vunpack.c.l.b16 %v143
    %v320 = vunpack.c.l.b16 %v144
    %v321 = vunpack.c.l.b16 %v145
    %v322 = vunpack.c.l.b16 %v146
    %v323 = vunpack.c.l.b16 %v147
    %v324 = vunpack.c.l.b16 %v148
    %v325 = vpack.c.b16 %v241, %v240
    %v326 = vpack.c.b16 %v243, %v242
    %v327 = vpack.c.b16 %v245, %v244
    %v328 = vpack.c.b16 %v247, %v246
    %v329 = vpack.c.b16 %v249, %v248
    %v330 = vpack.c.b16 %v251, %v250
    %v331 = vpack.c.b16 %v253, %v252
    %v332 = vpack.c.b16 %v255, %v254
    %v333 = vpack.c.b16 %v257, %v256
    %v334 = vpack.c.b16 %v259, %v258
    %v335 = vpack.c.b16 %v261, %v260
    %v336 = vpack.c.b16 %v263, %v262
    %v337 = vpack.c.b16 %v265, %v264
    %v338 = vpack.c.b16 %v267, %v266
    %v339 = vpack.c.b16 %v269, %v268
    %v340 = vpack.c.b16 %v271, %v270
    %v341 = vpack.c.b16 %v273, %v272
    %v342 = vpack.c.b16 %v275, %v274
    %v343 = vpack.c.b16 %v277, %v276
    %v344 = vpack.c.b16 %v279, %v278
    %v345 = vpack.c.b16 %v281, %v280
    %v346 = vpack.c.b16 %v283, %v282
    %v347 = vpack.c.b16 %v285, %v284
    %v348 = vpack.c.b16 %v287, %v286
    %v349 = vpack.c.b16 %v289, %v288
    %v350 = vpack.c.b16 %v291, %v290
    %v351 = vpack.c.b16 %v293, %v292
    %v352 = vpack.c.b16 %v295, %v294
    %v353 = vpack.c.b16 %v297, %v296
    %v354 = vpack.c.b16 %v299, %v298
    %v355 = vpack.c.b16 %v301, %v300
    %v356 = vpack.c.b16 %v303, %v302
    %v357 = vpack.c.b16 %v305, %v304
    %v358 = vpack.c.b16 %v307, %v306
    %v359 = vpack.c.b16 %v309, %v308
    %v360 = vpack.c.b16 %v311, %v310
    %v361 = vpack.c.b16 %v313, %v312
    %v362 = vpack.c.b16 %v315, %v314
    %v363 = vpack.c.b16 %v317, %v316
    %v364 = vpack.c.b16 %v319, %v318
    %v365 = vpack.c.b16 %v321, %v320
    %v366 = vpack.c.b16 %v323, %v322
    %v367 = vpack.c.b16 %v324, %v324
    %v370 = vunpack.c.l.b16 %v149
    %v371 = vunpack.c.l.b16 %v150
    %v372 = vpack.c.b16 %v371, %v370
    %vm374 = vcmask 130048
    %v376 = vsel %vm374, %v325, 0
    %v379 = vsel %vm374, %v326, 0
    %v382 = vsel %vm374, %v327, 0
    %v385 = vsel %vm374, %v328, 0
    %v388 = vsel %vm374, %v329, 0
    %v391 = vsel %vm374, %v330, 0
    %v394 = vsel %vm374, %v331, 0
    %v397 = vsel %vm374, %v332, 0
    %v400 = vsel %vm374, %v333, 0
    %v403 = vsel %vm374, %v334, 0
    %v406 = vsel %vm374, %v335, 0
    %v409 = vsel %vm374, %v336, 0
    %v412 = vsel %vm374, %v337, 0
    %v415 = vsel %vm374, %v338, 0
    %v418 = vsel %vm374, %v339, 0
    %v421 = vsel %vm374, %v340, 0
    %v424 = vsel %vm374, %v341, 0
    %v427 = vsel %vm374, %v342, 0
    %v430 = vsel %vm374, %v343, 0
    %v433 = vsel %vm374, %v344, 0
    %v436 = vsel %vm374, %v345, 0
    %v439 = vsel %vm374, %v346, 0
    %v442 = vsel %vm374, %v347, 0
    %v445 = vsel %vm374, %v348, 0
    %v448 = vsel %vm374, %v349, 0
    %v451 = vsel %vm374, %v350, 0
    %v454 = vsel %vm374, %v351, 0
    %v457 = vsel %vm374, %v352, 0
    %v460 = vsel %vm374, %v353, 0
    %v463 = vsel %vm374, %v354, 0
    %v466 = vsel %vm374, %v355, 0
    %v469 = vsel %vm374, %v356, 0
    %v472 = vsel %vm374, %v357, 0
    %v475 = vsel %vm374, %v358, 0
    %v478 = vsel %vm374, %v359, 0
    %v481 = vsel %vm374, %v360, 0
    %v484 = vsel %vm374, %v361, 0
    %v487 = vsel %vm374, %v362, 0
    %v490 = vsel %vm374, %v363, 0
    %v493 = vsel %vm374, %v364, 0
    %v496 = vsel %vm374, %v365, 0
    %v499 = vsel %vm374, %v366, 0
    %v502 = vsel %vm374, %v367, 0
    %504 = vmatpush.bf16.msra.mxu0 0
    %505 = vmatpush.bf16.msra.mxu0 0
    %506 = vmatpush.bf16.msra.mxu0 0
    %507 = vmatpush.bf16.msra.mxu0 0
    %508 = vmatpush.bf16.msra.mxu0 0
    %509 = vmatpush.bf16.msra.mxu0 0
    %510 = vmatpush.bf16.msra.mxu0 0
    %511 = vmatpush.bf16.msra.mxu0 %v372
    %512 = vmatmul.bf16.gmra.mxu0 %v376
    %v513 = vpop.f32.mrf.mxu0
    %v514 = vadd.f32 %v153, %v513
    %v515 = vpop.f32.mrf.mxu0
    %v516 = vadd.f32 %v153, %v515
    %517 = vmatmul.bf16.gmra.mxu0 %v379
    %v518 = vpop.f32.mrf.mxu0
    %v519 = vadd.f32 %v153, %v518
    %v520 = vpop.f32.mrf.mxu0
    %v521 = vadd.f32 %v153, %v520
    %522 = vmatmul.bf16.gmra.mxu0 %v382
    %v523 = vpop.f32.mrf.mxu0
    %v524 = vadd.f32 %v153, %v523
    %v525 = vpop.f32.mrf.mxu0
    %v526 = vadd.f32 %v153, %v525
    %527 = vmatmul.bf16.gmra.mxu0 %v385
    %v528 = vpop.f32.mrf.mxu0
    %v529 = vadd.f32 %v153, %v528
    %v530 = vpop.f32.mrf.mxu0
    %v531 = vadd.f32 %v153, %v530
    %532 = vmatmul.bf16.gmra.mxu0 %v388
    %v533 = vpop.f32.mrf.mxu0
    %v534 = vadd.f32 %v153, %v533
    %v535 = vpop.f32.mrf.mxu0
    %v536 = vadd.f32 %v153, %v535
    %537 = vmatmul.bf16.gmra.mxu0 %v391
    %v538 = vpop.f32.mrf.mxu0
    %v539 = vadd.f32 %v153, %v538
    %v540 = vpop.f32.mrf.mxu0
    %v541 = vadd.f32 %v153, %v540
    %542 = vmatmul.bf16.gmra.mxu0 %v394
    %v543 = vpop.f32.mrf.mxu0
    %v544 = vadd.f32 %v153, %v543
    %v545 = vpop.f32.mrf.mxu0
    %v546 = vadd.f32 %v153, %v545
    %547 = vmatmul.bf16.gmra.mxu0 %v397
    %v548 = vpop.f32.mrf.mxu0
    %v549 = vadd.f32 %v153, %v548
    %v550 = vpop.f32.mrf.mxu0
    %v551 = vadd.f32 %v153, %v550
    %552 = vmatmul.bf16.gmra.mxu0 %v400
    %v553 = vpop.f32.mrf.mxu0
    %v554 = vadd.f32 %v153, %v553
    %v555 = vpop.f32.mrf.mxu0
    %v556 = vadd.f32 %v153, %v555
    %557 = vmatmul.bf16.gmra.mxu0 %v403
    %v558 = vpop.f32.mrf.mxu0
    %v559 = vadd.f32 %v153, %v558
    %v560 = vpop.f32.mrf.mxu0
    %v561 = vadd.f32 %v153, %v560
    %562 = vmatmul.bf16.gmra.mxu0 %v406
    %v563 = vpop.f32.mrf.mxu0
    %v564 = vadd.f32 %v153, %v563
    %v565 = vpop.f32.mrf.mxu0
    %v566 = vadd.f32 %v153, %v565
    %567 = vmatmul.bf16.gmra.mxu0 %v409
    %v568 = vpop.f32.mrf.mxu0
    %v569 = vadd.f32 %v153, %v568
    %v570 = vpop.f32.mrf.mxu0
    %v571 = vadd.f32 %v153, %v570
    %572 = vmatmul.bf16.gmra.mxu0 %v412
    %v573 = vpop.f32.mrf.mxu0
    %v574 = vadd.f32 %v153, %v573
    %v575 = vpop.f32.mrf.mxu0
    %v576 = vadd.f32 %v153, %v575
    %577 = vmatmul.bf16.gmra.mxu0 %v415
    %v578 = vpop.f32.mrf.mxu0
    %v579 = vadd.f32 %v153, %v578
    %v580 = vpop.f32.mrf.mxu0
    %v581 = vadd.f32 %v153, %v580
    %582 = vmatmul.bf16.gmra.mxu0 %v418
    %v583 = vpop.f32.mrf.mxu0
    %v584 = vadd.f32 %v153, %v583
    %v585 = vpop.f32.mrf.mxu0
    %v586 = vadd.f32 %v153, %v585
    %587 = vmatmul.bf16.gmra.mxu0 %v421
    %v588 = vpop.f32.mrf.mxu0
    %v589 = vadd.f32 %v153, %v588
    %v590 = vpop.f32.mrf.mxu0
    %v591 = vadd.f32 %v153, %v590
    %592 = vmatmul.bf16.gmra.mxu0 %v424
    %v593 = vpop.f32.mrf.mxu0
    %v594 = vadd.f32 %v153, %v593
    %v595 = vpop.f32.mrf.mxu0
    %v596 = vadd.f32 %v153, %v595
    %597 = vmatmul.bf16.gmra.mxu0 %v427
    %v598 = vpop.f32.mrf.mxu0
    %v599 = vadd.f32 %v153, %v598
    %v600 = vpop.f32.mrf.mxu0
    %v601 = vadd.f32 %v153, %v600
    %602 = vmatmul.bf16.gmra.mxu0 %v430
    %v603 = vpop.f32.mrf.mxu0
    %v604 = vadd.f32 %v153, %v603
    %v605 = vpop.f32.mrf.mxu0
    %v606 = vadd.f32 %v153, %v605
    %607 = vmatmul.bf16.gmra.mxu0 %v433
    %v608 = vpop.f32.mrf.mxu0
    %v609 = vadd.f32 %v153, %v608
    %v610 = vpop.f32.mrf.mxu0
    %v611 = vadd.f32 %v153, %v610
    %612 = vmatmul.bf16.gmra.mxu0 %v436
    %v613 = vpop.f32.mrf.mxu0
    %v614 = vadd.f32 %v153, %v613
    %v615 = vpop.f32.mrf.mxu0
    %v616 = vadd.f32 %v153, %v615
    %617 = vmatmul.bf16.gmra.mxu0 %v439
    %v618 = vpop.f32.mrf.mxu0
    %v619 = vadd.f32 %v153, %v618
    %v620 = vpop.f32.mrf.mxu0
    %v621 = vadd.f32 %v153, %v620
    %622 = vmatmul.bf16.gmra.mxu0 %v442
    %v623 = vpop.f32.mrf.mxu0
    %v624 = vadd.f32 %v153, %v623
    %v625 = vpop.f32.mrf.mxu0
    %v626 = vadd.f32 %v153, %v625
    %627 = vmatmul.bf16.gmra.mxu0 %v445
    %v628 = vpop.f32.mrf.mxu0
    %v629 = vadd.f32 %v153, %v628
    %v630 = vpop.f32.mrf.mxu0
    %v631 = vadd.f32 %v153, %v630
    %632 = vmatmul.bf16.gmra.mxu0 %v448
    %v633 = vpop.f32.mrf.mxu0
    %v634 = vadd.f32 %v153, %v633
    %v635 = vpop.f32.mrf.mxu0
    %v636 = vadd.f32 %v153, %v635
    %637 = vmatmul.bf16.gmra.mxu0 %v451
    %v638 = vpop.f32.mrf.mxu0
    %v639 = vadd.f32 %v153, %v638
    %v640 = vpop.f32.mrf.mxu0
    %v641 = vadd.f32 %v153, %v640
    %642 = vmatmul.bf16.gmra.mxu0 %v454
    %v643 = vpop.f32.mrf.mxu0
    %v644 = vadd.f32 %v153, %v643
    %v645 = vpop.f32.mrf.mxu0
    %v646 = vadd.f32 %v153, %v645
    %647 = vmatmul.bf16.gmra.mxu0 %v457
    %v648 = vpop.f32.mrf.mxu0
    %v649 = vadd.f32 %v153, %v648
    %v650 = vpop.f32.mrf.mxu0
    %v651 = vadd.f32 %v153, %v650
    %652 = vmatmul.bf16.gmra.mxu0 %v460
    %v653 = vpop.f32.mrf.mxu0
    %v654 = vadd.f32 %v153, %v653
    %v655 = vpop.f32.mrf.mxu0
    %v656 = vadd.f32 %v153, %v655
    %657 = vmatmul.bf16.gmra.mxu0 %v463
    %v658 = vpop.f32.mrf.mxu0
    %v659 = vadd.f32 %v153, %v658
    %v660 = vpop.f32.mrf.mxu0
    %v661 = vadd.f32 %v153, %v660
    %662 = vmatmul.bf16.gmra.mxu0 %v466
    %v663 = vpop.f32.mrf.mxu0
    %v664 = vadd.f32 %v153, %v663
    %v665 = vpop.f32.mrf.mxu0
    %v666 = vadd.f32 %v153, %v665
    %667 = vmatmul.bf16.gmra.mxu0 %v469
    %v668 = vpop.f32.mrf.mxu0
    %v669 = vadd.f32 %v153, %v668
    %v670 = vpop.f32.mrf.mxu0
    %v671 = vadd.f32 %v153, %v670
    %672 = vmatmul.bf16.gmra.mxu0 %v472
    %v673 = vpop.f32.mrf.mxu0
    %v674 = vadd.f32 %v153, %v673
    %v675 = vpop.f32.mrf.mxu0
    %v676 = vadd.f32 %v153, %v675
    %677 = vmatmul.bf16.gmra.mxu0 %v475
    %v678 = vpop.f32.mrf.mxu0
    %v679 = vadd.f32 %v153, %v678
    %v680 = vpop.f32.mrf.mxu0
    %v681 = vadd.f32 %v153, %v680
    %682 = vmatmul.bf16.gmra.mxu0 %v478
    %v683 = vpop.f32.mrf.mxu0
    %v684 = vadd.f32 %v153, %v683
    %v685 = vpop.f32.mrf.mxu0
    %v686 = vadd.f32 %v153, %v685
    %687 = vmatmul.bf16.gmra.mxu0 %v481
    %v688 = vpop.f32.mrf.mxu0
    %v689 = vadd.f32 %v153, %v688
    %v690 = vpop.f32.mrf.mxu0
    %v691 = vadd.f32 %v153, %v690
    %692 = vmatmul.bf16.gmra.mxu0 %v484
    %v693 = vpop.f32.mrf.mxu0
    %v694 = vadd.f32 %v153, %v693
    %v695 = vpop.f32.mrf.mxu0
    %v696 = vadd.f32 %v153, %v695
    %697 = vmatmul.bf16.gmra.mxu0 %v487
    %v698 = vpop.f32.mrf.mxu0
    %v699 = vadd.f32 %v153, %v698
    %v700 = vpop.f32.mrf.mxu0
    %v701 = vadd.f32 %v153, %v700
    %702 = vmatmul.bf16.gmra.mxu0 %v490
    %v703 = vpop.f32.mrf.mxu0
    %v704 = vadd.f32 %v153, %v703
    %v705 = vpop.f32.mrf.mxu0
    %v706 = vadd.f32 %v153, %v705
    %707 = vmatmul.bf16.gmra.mxu0 %v493
    %v708 = vpop.f32.mrf.mxu0
    %v709 = vadd.f32 %v153, %v708
    %v710 = vpop.f32.mrf.mxu0
    %v711 = vadd.f32 %v153, %v710
    %712 = vmatmul.bf16.gmra.mxu0 %v496
    %v713 = vpop.f32.mrf.mxu0
    %v714 = vadd.f32 %v153, %v713
    %v715 = vpop.f32.mrf.mxu0
    %v716 = vadd.f32 %v153, %v715
    %717 = vmatmul.bf16.gmra.mxu0 %v499
    %v718 = vpop.f32.mrf.mxu0
    %v719 = vadd.f32 %v153, %v718
    %v720 = vpop.f32.mrf.mxu0
    %v721 = vadd.f32 %v153, %v720
    %722 = vmatmul.bf16.gmra.mxu0 %v502
    %v723 = vpop.f32.mrf.mxu0
    %v724 = vadd.f32 %v153, %v723
    %v725 = vpop.f32.mrf.mxu0
    %726 = vdwg.mxu0
    %v727 = vmax.f32 %v514, 0.0
    %v728 = vmax.f32 %v516, 0.0
    %v729 = vmax.f32 %v519, 0.0
    %v730 = vmax.f32 %v521, 0.0
    %v731 = vmax.f32 %v524, 0.0
    %v732 = vmax.f32 %v526, 0.0
    %v733 = vmax.f32 %v529, 0.0
    %v734 = vmax.f32 %v531, 0.0
    %v735 = vmax.f32 %v534, 0.0
    %v736 = vmax.f32 %v536, 0.0
    %v737 = vmax.f32 %v539, 0.0
    %v738 = vmax.f32 %v541, 0.0
    %v739 = vmax.f32 %v544, 0.0
    %v740 = vmax.f32 %v546, 0.0
    %v741 = vmax.f32 %v549, 0.0
    %v742 = vmax.f32 %v551, 0.0
    %v743 = vmax.f32 %v554, 0.0
    %v744 = vmax.f32 %v556, 0.0
    %v745 = vmax.f32 %v559, 0.0
    %v746 = vmax.f32 %v561, 0.0
    %v747 = vmax.f32 %v564, 0.0
    %v748 = vmax.f32 %v566, 0.0
    %v749 = vmax.f32 %v569, 0.0
    %v750 = vmax.f32 %v571, 0.0
    %v751 = vmax.f32 %v574, 0.0
    %v752 = vmax.f32 %v576, 0.0
    %v753 = vmax.f32 %v579, 0.0
    %v754 = vmax.f32 %v581, 0.0
    %v755 = vmax.f32 %v584, 0.0
    %v756 = vmax.f32 %v586, 0.0
    %v757 = vmax.f32 %v589, 0.0
    %v758 = vmax.f32 %v591, 0.0
    %v759 = vmax.f32 %v594, 0.0
    %v760 = vmax.f32 %v596, 0.0
    %v761 = vmax.f32 %v599, 0.0
    %v762 = vmax.f32 %v601, 0.0
    %v763 = vmax.f32 %v604, 0.0
    %v764 = vmax.f32 %v606, 0.0
    %v765 = vmax.f32 %v609, 0.0
    %v766 = vmax.f32 %v611, 0.0
    %v767 = vmax.f32 %v614, 0.0
    %v768 = vmax.f32 %v616, 0.0
    %v769 = vmax.f32 %v619, 0.0
    %v770 = vmax.f32 %v621, 0.0
    %v771 = vmax.f32 %v624, 0.0
    %v772 = vmax.f32 %v626, 0.0
    %v773 = vmax.f32 %v629, 0.0
    %v774 = vmax.f32 %v631, 0.0
    %v775 = vmax.f32 %v634, 0.0
    %v776 = vmax.f32 %v636, 0.0
    %v777 = vmax.f32 %v639, 0.0
    %v778 = vmax.f32 %v641, 0.0
    %v779 = vmax.f32 %v644, 0.0
    %v780 = vmax.f32 %v646, 0.0
    %v781 = vmax.f32 %v649, 0.0
    %v782 = vmax.f32 %v651, 0.0
    %v783 = vmax.f32 %v654, 0.0
    %v784 = vmax.f32 %v656, 0.0
    %v785 = vmax.f32 %v659, 0.0
    %v786 = vmax.f32 %v661, 0.0
    %v787 = vmax.f32 %v664, 0.0
    %v788 = vmax.f32 %v666, 0.0
    %v789 = vmax.f32 %v669, 0.0
    %v790 = vmax.f32 %v671, 0.0
    %v791 = vmax.f32 %v674, 0.0
    %v792 = vmax.f32 %v676, 0.0
    %v793 = vmax.f32 %v679, 0.0
    %v794 = vmax.f32 %v681, 0.0
    %v795 = vmax.f32 %v684, 0.0
    %v796 = vmax.f32 %v686, 0.0
    %v797 = vmax.f32 %v689, 0.0
    %v798 = vmax.f32 %v691, 0.0
    %v799 = vmax.f32 %v694, 0.0
    %v800 = vmax.f32 %v696, 0.0
    %v801 = vmax.f32 %v699, 0.0
    %v802 = vmax.f32 %v701, 0.0
    %v803 = vmax.f32 %v704, 0.0
    %v804 = vmax.f32 %v706, 0.0
    %v805 = vmax.f32 %v709, 0.0
    %v806 = vmax.f32 %v711, 0.0
    %v807 = vmax.f32 %v714, 0.0
    %v808 = vmax.f32 %v716, 0.0
    %v809 = vmax.f32 %v719, 0.0
    %v810 = vmax.f32 %v721, 0.0
    %v811 = vmax.f32 %v724, 0.0
    %v812 = vpack.c.bf16 %v727, %v727
    %v813 = vpack.c.bf16 %v728, %v728
    %v814 = vpack.c.bf16 %v729, %v729
    %v815 = vpack.c.bf16 %v730, %v730
    %v816 = vpack.c.bf16 %v731, %v731
    %v817 = vpack.c.bf16 %v732, %v732
    %v818 = vpack.c.bf16 %v733, %v733
    %v819 = vpack.c.bf16 %v734, %v734
    %v820 = vpack.c.bf16 %v735, %v735
    %v821 = vpack.c.bf16 %v736, %v736
    %v822 = vpack.c.bf16 %v737, %v737
    %v823 = vpack.c.bf16 %v738, %v738
    %v824 = vpack.c.bf16 %v739, %v739
    %v825 = vpack.c.bf16 %v740, %v740
    %v826 = vpack.c.bf16 %v741, %v741
    %v827 = vpack.c.bf16 %v742, %v742
    %v828 = vpack.c.bf16 %v743, %v743
    %v829 = vpack.c.bf16 %v744, %v744
    %v830 = vpack.c.bf16 %v745, %v745
    %v831 = vpack.c.bf16 %v746, %v746
    %v832 = vpack.c.bf16 %v747, %v747
    %v833 = vpack.c.bf16 %v748, %v748
    %v834 = vpack.c.bf16 %v749, %v749
    %v835 = vpack.c.bf16 %v750, %v750
    %v836 = vpack.c.bf16 %v751, %v751
    %v837 = vpack.c.bf16 %v752, %v752
    %v838 = vpack.c.bf16 %v753, %v753
    %v839 = vpack.c.bf16 %v754, %v754
    %v840 = vpack.c.bf16 %v755, %v755
    %v841 = vpack.c.bf16 %v756, %v756
    %v842 = vpack.c.bf16 %v757, %v757
    %v843 = vpack.c.bf16 %v758, %v758
    %v844 = vpack.c.bf16 %v759, %v759
    %v845 = vpack.c.bf16 %v760, %v760
    %v846 = vpack.c.bf16 %v761, %v761
    %v847 = vpack.c.bf16 %v762, %v762
    %v848 = vpack.c.bf16 %v763, %v763
    %v849 = vpack.c.bf16 %v764, %v764
    %v850 = vpack.c.bf16 %v765, %v765
    %v851 = vpack.c.bf16 %v766, %v766
    %v852 = vpack.c.bf16 %v767, %v767
    %v853 = vpack.c.bf16 %v768, %v768
    %v854 = vpack.c.bf16 %v769, %v769
    %v855 = vpack.c.bf16 %v770, %v770
    %v856 = vpack.c.bf16 %v771, %v771
    %v857 = vpack.c.bf16 %v772, %v772
    %v858 = vpack.c.bf16 %v773, %v773
    %v859 = vpack.c.bf16 %v774, %v774
    %v860 = vpack.c.bf16 %v775, %v775
    %v861 = vpack.c.bf16 %v776, %v776
    %v862 = vpack.c.bf16 %v777, %v777
    %v863 = vpack.c.bf16 %v778, %v778
    %v864 = vpack.c.bf16 %v779, %v779
    %v865 = vpack.c.bf16 %v780, %v780
    %v866 = vpack.c.bf16 %v781, %v781
    %v867 = vpack.c.bf16 %v782, %v782
    %v868 = vpack.c.bf16 %v783, %v783
    %v869 = vpack.c.bf16 %v784, %v784
    %v870 = vpack.c.bf16 %v785, %v785
    %v871 = vpack.c.bf16 %v786, %v786
    %v872 = vpack.c.bf16 %v787, %v787
    %v873 = vpack.c.bf16 %v788, %v788
    %v874 = vpack.c.bf16 %v789, %v789
    %v875 = vpack.c.bf16 %v790, %v790
    %v876 = vpack.c.bf16 %v791, %v791
    %v877 = vpack.c.bf16 %v792, %v792
    %v878 = vpack.c.bf16 %v793, %v793
    %v879 = vpack.c.bf16 %v794, %v794
    %v880 = vpack.c.bf16 %v795, %v795
    %v881 = vpack.c.bf16 %v796, %v796
    %v882 = vpack.c.bf16 %v797, %v797
    %v883 = vpack.c.bf16 %v798, %v798
    %v884 = vpack.c.bf16 %v799, %v799
    %v885 = vpack.c.bf16 %v800, %v800
    %v886 = vpack.c.bf16 %v801, %v801
    %v887 = vpack.c.bf16 %v802, %v802
    %v888 = vpack.c.bf16 %v803, %v803
    %v889 = vpack.c.bf16 %v804, %v804
    %v890 = vpack.c.bf16 %v805, %v805
    %v891 = vpack.c.bf16 %v806, %v806
    %v892 = vpack.c.bf16 %v807, %v807
    %v893 = vpack.c.bf16 %v808, %v808
    %v894 = vpack.c.bf16 %v809, %v809
    %v895 = vpack.c.bf16 %v810, %v810
    %v896 = vpack.c.bf16 %v811, %v811
    %vm897 = vcmask 257024
    %898 = vst.msk [vmem:[#allocation2] sm:$0xf] %vm897, %v812
    %899 = vst.msk [vmem:[#allocation2 + $0x4] sm:$0xf] %vm897, %v813
    %900 = vst.msk [vmem:[#allocation2 + $0x8] sm:$0xf] %vm897, %v814
    %901 = vst.msk [vmem:[#allocation2 + $0xc] sm:$0xf] %vm897, %v815
    %902 = vst.msk [vmem:[#allocation2 + $0x10] sm:$0xf] %vm897, %v816
    %903 = vst.msk [vmem:[#allocation2 + $0x14] sm:$0xf] %vm897, %v817
    %904 = vst.msk [vmem:[#allocation2 + $0x18] sm:$0xf] %vm897, %v818
    %905 = vst.msk [vmem:[#allocation2 + $0x1c] sm:$0xf] %vm897, %v819
    %906 = vst.msk [vmem:[#allocation2 + $0x20] sm:$0xf] %vm897, %v820
    %907 = vst.msk [vmem:[#allocation2 + $0x24] sm:$0xf] %vm897, %v821
    %908 = vst.msk [vmem:[#allocation2 + $0x28] sm:$0xf] %vm897, %v822
    %909 = vst.msk [vmem:[#allocation2 + $0x2c] sm:$0xf] %vm897, %v823
    %910 = vst.msk [vmem:[#allocation2 + $0x30] sm:$0xf] %vm897, %v824
    %911 = vst.msk [vmem:[#allocation2 + $0x34] sm:$0xf] %vm897, %v825
    %912 = vst.msk [vmem:[#allocation2 + $0x38] sm:$0xf] %vm897, %v826
    %913 = vst.msk [vmem:[#allocation2 + $0x3c] sm:$0xf] %vm897, %v827
    %914 = vst.msk [vmem:[#allocation2 + $0x40] sm:$0xf] %vm897, %v828
    %915 = vst.msk [vmem:[#allocation2 + $0x44] sm:$0xf] %vm897, %v829
    %916 = vst.msk [vmem:[#allocation2 + $0x48] sm:$0xf] %vm897, %v830
    %917 = vst.msk [vmem:[#allocation2 + $0x4c] sm:$0xf] %vm897, %v831
    %918 = vst.msk [vmem:[#allocation2 + $0x50] sm:$0xf] %vm897, %v832
    %919 = vst.msk [vmem:[#allocation2 + $0x54] sm:$0xf] %vm897, %v833
    %920 = vst.msk [vmem:[#allocation2 + $0x58] sm:$0xf] %vm897, %v834
    %921 = vst.msk [vmem:[#allocation2 + $0x5c] sm:$0xf] %vm897, %v835
    %922 = vst.msk [vmem:[#allocation2 + $0x60] sm:$0xf] %vm897, %v836
    %923 = vst.msk [vmem:[#allocation2 + $0x64] sm:$0xf] %vm897, %v837
    %924 = vst.msk [vmem:[#allocation2 + $0x68] sm:$0xf] %vm897, %v838
    %925 = vst.msk [vmem:[#allocation2 + $0x6c] sm:$0xf] %vm897, %v839
    %926 = vst.msk [vmem:[#allocation2 + $0x70] sm:$0xf] %vm897, %v840
    %927 = vst.msk [vmem:[#allocation2 + $0x74] sm:$0xf] %vm897, %v841
    %928 = vst.msk [vmem:[#allocation2 + $0x78] sm:$0xf] %vm897, %v842
    %929 = vst.msk [vmem:[#allocation2 + $0x7c] sm:$0xf] %vm897, %v843
    %930 = vst.msk [vmem:[#allocation2 + $0x80] sm:$0xf] %vm897, %v844
    %931 = vst.msk [vmem:[#allocation2 + $0x84] sm:$0xf] %vm897, %v845
    %932 = vst.msk [vmem:[#allocation2 + $0x88] sm:$0xf] %vm897, %v846
    %933 = vst.msk [vmem:[#allocation2 + $0x8c] sm:$0xf] %vm897, %v847
    %934 = vst.msk [vmem:[#allocation2 + $0x90] sm:$0xf] %vm897, %v848
    %935 = vst.msk [vmem:[#allocation2 + $0x94] sm:$0xf] %vm897, %v849
    %936 = vst.msk [vmem:[#allocation2 + $0x98] sm:$0xf] %vm897, %v850
    %937 = vst.msk [vmem:[#allocation2 + $0x9c] sm:$0xf] %vm897, %v851
    %938 = vst.msk [vmem:[#allocation2 + $0xa0] sm:$0xf] %vm897, %v852
    %939 = vst.msk [vmem:[#allocation2 + $0xa4] sm:$0xf] %vm897, %v853
    %940 = vst.msk [vmem:[#allocation2 + $0xa8] sm:$0xf] %vm897, %v854
    %941 = vst.msk [vmem:[#allocation2 + $0xac] sm:$0xf] %vm897, %v855
    %942 = vst.msk [vmem:[#allocation2 + $0xb0] sm:$0xf] %vm897, %v856
    %943 = vst.msk [vmem:[#allocation2 + $0xb4] sm:$0xf] %vm897, %v857
    %944 = vst.msk [vmem:[#allocation2 + $0xb8] sm:$0xf] %vm897, %v858
    %945 = vst.msk [vmem:[#allocation2 + $0xbc] sm:$0xf] %vm897, %v859
    %946 = vst.msk [vmem:[#allocation2 + $0xc0] sm:$0xf] %vm897, %v860
    %947 = vst.msk [vmem:[#allocation2 + $0xc4] sm:$0xf] %vm897, %v861
    %948 = vst.msk [vmem:[#allocation2 + $0xc8] sm:$0xf] %vm897, %v862
    %949 = vst.msk [vmem:[#allocation2 + $0xcc] sm:$0xf] %vm897, %v863
    %950 = vst.msk [vmem:[#allocation2 + $0xd0] sm:$0xf] %vm897, %v864
    %951 = vst.msk [vmem:[#allocation2 + $0xd4] sm:$0xf] %vm897, %v865
    %952 = vst.msk [vmem:[#allocation2 + $0xd8] sm:$0xf] %vm897, %v866
    %953 = vst.msk [vmem:[#allocation2 + $0xdc] sm:$0xf] %vm897, %v867
    %954 = vst.msk [vmem:[#allocation2 + $0xe0] sm:$0xf] %vm897, %v868
    %955 = vst.msk [vmem:[#allocation2 + $0xe4] sm:$0xf] %vm897, %v869
    %956 = vst.msk [vmem:[#allocation2 + $0xe8] sm:$0xf] %vm897, %v870
    %957 = vst.msk [vmem:[#allocation2 + $0xec] sm:$0xf] %vm897, %v871
    %958 = vst.msk [vmem:[#allocation2 + $0xf0] sm:$0xf] %vm897, %v872
    %959 = vst.msk [vmem:[#allocation2 + $0xf4] sm:$0xf] %vm897, %v873
    %960 = vst.msk [vmem:[#allocation2 + $0xf8] sm:$0xf] %vm897, %v874
    %961 = vst.msk [vmem:[#allocation2 + $0xfc] sm:$0xf] %vm897, %v875
    %962 = vst.msk [vmem:[#allocation2 + $0x100] sm:$0xf] %vm897, %v876
    %963 = vst.msk [vmem:[#allocation2 + $0x104] sm:$0xf] %vm897, %v877
    %964 = vst.msk [vmem:[#allocation2 + $0x108] sm:$0xf] %vm897, %v878
    %965 = vst.msk [vmem:[#allocation2 + $0x10c] sm:$0xf] %vm897, %v879
    %966 = vst.msk [vmem:[#allocation2 + $0x110] sm:$0xf] %vm897, %v880
    %967 = vst.msk [vmem:[#allocation2 + $0x114] sm:$0xf] %vm897, %v881
    %968 = vst.msk [vmem:[#allocation2 + $0x118] sm:$0xf] %vm897, %v882
    %969 = vst.msk [vmem:[#allocation2 + $0x11c] sm:$0xf] %vm897, %v883
    %970 = vst.msk [vmem:[#allocation2 + $0x120] sm:$0xf] %vm897, %v884
    %971 = vst.msk [vmem:[#allocation2 + $0x124] sm:$0xf] %vm897, %v885
    %972 = vst.msk [vmem:[#allocation2 + $0x128] sm:$0xf] %vm897, %v886
    %973 = vst.msk [vmem:[#allocation2 + $0x12c] sm:$0xf] %vm897, %v887
    %974 = vst.msk [vmem:[#allocation2 + $0x130] sm:$0xf] %vm897, %v888
    %975 = vst.msk [vmem:[#allocation2 + $0x134] sm:$0xf] %vm897, %v889
    %976 = vst.msk [vmem:[#allocation2 + $0x138] sm:$0xf] %vm897, %v890
    %977 = vst.msk [vmem:[#allocation2 + $0x13c] sm:$0xf] %vm897, %v891
    %978 = vst.msk [vmem:[#allocation2 + $0x140] sm:$0xf] %vm897, %v892
    %979 = vst.msk [vmem:[#allocation2 + $0x144] sm:$0xf] %vm897, %v893
    %980 = vst.msk [vmem:[#allocation2 + $0x148] sm:$0xf] %vm897, %v894
    %981 = vst.msk [vmem:[#allocation2 + $0x14c] sm:$0xf] %vm897, %v895
    %982 = vst.msk [vmem:[#allocation2 + $0x150] sm:$0xf] %vm897, %v896
    %v983 = vld [vmem:[#allocation2] sm:$0xf]
    %v984 = vld [vmem:[#allocation2 + $0x4] sm:$0xf]
    %v985 = vld [vmem:[#allocation2 + $0x8] sm:$0xf]
    %v986 = vld [vmem:[#allocation2 + $0xc] sm:$0xf]
    %v987 = vld [vmem:[#allocation2 + $0x10] sm:$0xf]
    %v988 = vld [vmem:[#allocation2 + $0x14] sm:$0xf]
    %v989 = vld [vmem:[#allocation2 + $0x18] sm:$0xf]
    %v990 = vld [vmem:[#allocation2 + $0x1c] sm:$0xf]
    %v991 = vld [vmem:[#allocation2 + $0x20] sm:$0xf]
    %v992 = vld [vmem:[#allocation2 + $0x24] sm:$0xf]
    %v993 = vld [vmem:[#allocation2 + $0x28] sm:$0xf]
    %v994 = vld [vmem:[#allocation2 + $0x2c] sm:$0xf]
    %v995 = vld [vmem:[#allocation2 + $0x30] sm:$0xf]
    %v996 = vld [vmem:[#allocation2 + $0x34] sm:$0xf]
    %v997 = vld [vmem:[#allocation2 + $0x38] sm:$0xf]
    %v998 = vld [vmem:[#allocation2 + $0x3c] sm:$0xf]
    %v999 = vld [vmem:[#allocation2 + $0x40] sm:$0xf]
    %v1000 = vld [vmem:[#allocation2 + $0x44] sm:$0xf]
    %v1001 = vld [vmem:[#allocation2 + $0x48] sm:$0xf]
    %v1002 = vld [vmem:[#allocation2 + $0x4c] sm:$0xf]
    %v1003 = vld [vmem:[#allocation2 + $0x50] sm:$0xf]
    %v1004 = vld [vmem:[#allocation2 + $0x54] sm:$0xf]
    %v1005 = vld [vmem:[#allocation2 + $0x58] sm:$0xf]
    %v1006 = vld [vmem:[#allocation2 + $0x5c] sm:$0xf]
    %v1007 = vld [vmem:[#allocation2 + $0x60] sm:$0xf]
    %v1008 = vld [vmem:[#allocation2 + $0x64] sm:$0xf]
    %v1009 = vld [vmem:[#allocation2 + $0x68] sm:$0xf]
    %v1010 = vld [vmem:[#allocation2 + $0x6c] sm:$0xf]
    %v1011 = vld [vmem:[#allocation2 + $0x70] sm:$0xf]
    %v1012 = vld [vmem:[#allocation2 + $0x74] sm:$0xf]
    %v1013 = vld [vmem:[#allocation2 + $0x78] sm:$0xf]
    %v1014 = vld [vmem:[#allocation2 + $0x7c] sm:$0xf]
    %v1015 = vld [vmem:[#allocation2 + $0x80] sm:$0xf]
    %v1016 = vld [vmem:[#allocation2 + $0x84] sm:$0xf]
    %v1017 = vld [vmem:[#allocation2 + $0x88] sm:$0xf]
    %v1018 = vld [vmem:[#allocation2 + $0x8c] sm:$0xf]
    %v1019 = vld [vmem:[#allocation2 + $0x90] sm:$0xf]
    %v1020 = vld [vmem:[#allocation2 + $0x94] sm:$0xf]
    %v1021 = vld [vmem:[#allocation2 + $0x98] sm:$0xf]
    %v1022 = vld [vmem:[#allocation2 + $0x9c] sm:$0xf]
    %v1023 = vld [vmem:[#allocation2 + $0xa0] sm:$0xf]
    %v1024 = vld [vmem:[#allocation2 + $0xa4] sm:$0xf]
    %v1025 = vld [vmem:[#allocation2 + $0xa8] sm:$0xf]
    %v1026 = vld [vmem:[#allocation2 + $0xac] sm:$0xf]
    %v1027 = vld [vmem:[#allocation2 + $0xb0] sm:$0xf]
    %v1028 = vld [vmem:[#allocation2 + $0xb4] sm:$0xf]
    %v1029 = vld [vmem:[#allocation2 + $0xb8] sm:$0xf]
    %v1030 = vld [vmem:[#allocation2 + $0xbc] sm:$0xf]
    %v1031 = vld [vmem:[#allocation2 + $0xc0] sm:$0xf]
    %v1032 = vld [vmem:[#allocation2 + $0xc4] sm:$0xf]
    %v1033 = vld [vmem:[#allocation2 + $0xc8] sm:$0xf]
    %v1034 = vld [vmem:[#allocation2 + $0xcc] sm:$0xf]
    %v1035 = vld [vmem:[#allocation2 + $0xd0] sm:$0xf]
    %v1036 = vld [vmem:[#allocation2 + $0xd4] sm:$0xf]
    %v1037 = vld [vmem:[#allocation2 + $0xd8] sm:$0xf]
    %v1038 = vld [vmem:[#allocation2 + $0xdc] sm:$0xf]
    %v1039 = vld [vmem:[#allocation2 + $0xe0] sm:$0xf]
    %v1040 = vld [vmem:[#allocation2 + $0xe4] sm:$0xf]
    %v1041 = vld [vmem:[#allocation2 + $0xe8] sm:$0xf]
    %v1042 = vld [vmem:[#allocation2 + $0xec] sm:$0xf]
    %v1043 = vld [vmem:[#allocation2 + $0xf0] sm:$0xf]
    %v1044 = vld [vmem:[#allocation2 + $0xf4] sm:$0xf]
    %v1045 = vld [vmem:[#allocation2 + $0xf8] sm:$0xf]
    %v1046 = vld [vmem:[#allocation2 + $0xfc] sm:$0xf]
    %v1047 = vld [vmem:[#allocation2 + $0x100] sm:$0xf]
    %v1048 = vld [vmem:[#allocation2 + $0x104] sm:$0xf]
    %v1049 = vld [vmem:[#allocation2 + $0x108] sm:$0xf]
    %v1050 = vld [vmem:[#allocation2 + $0x10c] sm:$0xf]
    %v1051 = vld [vmem:[#allocation2 + $0x110] sm:$0xf]
    %v1052 = vld [vmem:[#allocation2 + $0x114] sm:$0xf]
    %v1053 = vld [vmem:[#allocation2 + $0x118] sm:$0xf]
    %v1054 = vld [vmem:[#allocation2 + $0x11c] sm:$0xf]
    %v1055 = vld [vmem:[#allocation2 + $0x120] sm:$0xf]
    %v1056 = vld [vmem:[#allocation2 + $0x124] sm:$0xf]
    %v1057 = vld [vmem:[#allocation2 + $0x128] sm:$0xf]
    %v1058 = vld [vmem:[#allocation2 + $0x12c] sm:$0xf]
    %v1059 = vld [vmem:[#allocation2 + $0x130] sm:$0xf]
    %v1060 = vld [vmem:[#allocation2 + $0x134] sm:$0xf]
    %v1061 = vld [vmem:[#allocation2 + $0x138] sm:$0x1]
    %v1062 = vld [vmem:[#allocation2] sm:$0xe]
    %v1063 = vld [vmem:[#allocation2 + $0xc] sm:$0xe]
    %v1064 = vld [vmem:[#allocation2 + $0x138] sm:$0xf]
    %v1065 = vld [vmem:[#allocation2 + $0x13c] sm:$0xf]
    %v1066 = vld [vmem:[#allocation2 + $0x140] sm:$0xf]
    %v1067 = vld [vmem:[#allocation2 + $0x144] sm:$0x1]
    %v1068 = vld [vmem:[#allocation2 + $0x144] sm:$0x3]
    %v1069 = vld [vmem:[#allocation2 + $0xc] sm:$0xc]
    %v1070 = vld [vmem:[#allocation2 + $0x18] sm:$0xc]
    %v1071 = vld [vmem:[#allocation2 + $0x144] sm:$0xf]
    %v1072 = vld [vmem:[#allocation2 + $0x148] sm:$0xf]
    %v1073 = vld [vmem:[#allocation2 + $0x14c] sm:$0xf]
    %v1074 = vld [vmem:[#allocation2 + $0x150] sm:$0x3]
    %v1075 = vld [vmem:[#allocation2 + $0x150] sm:$0x7]
    %v1076 = vld [vmem:[#allocation2 + $0x18] sm:$0x8]
    %v1155 = vunpack.c.l.b16 %v983
    %v1156 = vunpack.c.l.b16 %v984
    %v1157 = vunpack.c.l.b16 %v985
    %v1158 = vunpack.c.l.b16 %v986
    %v1159 = vunpack.c.l.b16 %v987
    %v1160 = vunpack.c.l.b16 %v988
    %v1161 = vunpack.c.l.b16 %v989
    %v1162 = vunpack.c.l.b16 %v990
    %v1163 = vunpack.c.l.b16 %v991
    %v1164 = vunpack.c.l.b16 %v992
    %v1165 = vunpack.c.l.b16 %v993
    %v1166 = vunpack.c.l.b16 %v994
    %v1167 = vunpack.c.l.b16 %v995
    %v1168 = vunpack.c.l.b16 %v996
    %v1169 = vunpack.c.l.b16 %v997
    %v1170 = vunpack.c.l.b16 %v998
    %v1171 = vunpack.c.l.b16 %v999
    %v1172 = vunpack.c.l.b16 %v1000
    %v1173 = vunpack.c.l.b16 %v1001
    %v1174 = vunpack.c.l.b16 %v1002
    %v1175 = vunpack.c.l.b16 %v1003
    %v1176 = vunpack.c.l.b16 %v1004
    %v1177 = vunpack.c.l.b16 %v1005
    %v1178 = vunpack.c.l.b16 %v1006
    %v1179 = vunpack.c.l.b16 %v1007
    %v1180 = vunpack.c.l.b16 %v1008
    %v1181 = vunpack.c.l.b16 %v1009
    %v1182 = vunpack.c.l.b16 %v1010
    %v1183 = vunpack.c.l.b16 %v1011
    %v1184 = vunpack.c.l.b16 %v1012
    %v1185 = vunpack.c.l.b16 %v1013
    %v1186 = vunpack.c.l.b16 %v1014
    %v1187 = vunpack.c.l.b16 %v1015
    %v1188 = vunpack.c.l.b16 %v1016
    %v1189 = vunpack.c.l.b16 %v1017
    %v1190 = vunpack.c.l.b16 %v1018
    %v1191 = vunpack.c.l.b16 %v1019
    %v1192 = vunpack.c.l.b16 %v1020
    %v1193 = vunpack.c.l.b16 %v1021
    %v1194 = vunpack.c.l.b16 %v1022
    %v1195 = vunpack.c.l.b16 %v1023
    %v1196 = vunpack.c.l.b16 %v1024
    %v1197 = vunpack.c.l.b16 %v1025
    %v1198 = vunpack.c.l.b16 %v1026
    %v1199 = vunpack.c.l.b16 %v1027
    %v1200 = vunpack.c.l.b16 %v1028
    %v1201 = vunpack.c.l.b16 %v1029
    %v1202 = vunpack.c.l.b16 %v1030
    %v1203 = vunpack.c.l.b16 %v1031
    %v1204 = vunpack.c.l.b16 %v1032
    %v1205 = vunpack.c.l.b16 %v1033
    %v1206 = vunpack.c.l.b16 %v1034
    %v1207 = vunpack.c.l.b16 %v1035
    %v1208 = vunpack.c.l.b16 %v1036
    %v1209 = vunpack.c.l.b16 %v1037
    %v1210 = vunpack.c.l.b16 %v1038
    %v1211 = vunpack.c.l.b16 %v1039
    %v1212 = vunpack.c.l.b16 %v1040
    %v1213 = vunpack.c.l.b16 %v1041
    %v1214 = vunpack.c.l.b16 %v1042
    %v1215 = vunpack.c.l.b16 %v1043
    %v1216 = vunpack.c.l.b16 %v1044
    %v1217 = vunpack.c.l.b16 %v1045
    %v1218 = vunpack.c.l.b16 %v1046
    %v1219 = vunpack.c.l.b16 %v1047
    %v1220 = vunpack.c.l.b16 %v1048
    %v1221 = vunpack.c.l.b16 %v1049
    %v1222 = vunpack.c.l.b16 %v1050
    %v1223 = vunpack.c.l.b16 %v1051
    %v1224 = vunpack.c.l.b16 %v1052
    %v1225 = vunpack.c.l.b16 %v1053
    %v1226 = vunpack.c.l.b16 %v1054
    %v1227 = vunpack.c.l.b16 %v1055
    %v1228 = vunpack.c.l.b16 %v1056
    %v1229 = vunpack.c.l.b16 %v1057
    %v1230 = vunpack.c.l.b16 %v1058
    %v1231 = vunpack.c.l.b16 %v1059
    %v1232 = vunpack.c.l.b16 %v1060
    %v1233 = vpack.c.b16 %v1156, %v1155
    %v1234 = vpack.c.b16 %v1158, %v1157
    %v1235 = vpack.c.b16 %v1160, %v1159
    %v1236 = vpack.c.b16 %v1162, %v1161
    %v1237 = vpack.c.b16 %v1164, %v1163
    %v1238 = vpack.c.b16 %v1166, %v1165
    %v1239 = vpack.c.b16 %v1168, %v1167
    %v1240 = vpack.c.b16 %v1170, %v1169
    %v1241 = vpack.c.b16 %v1172, %v1171
    %v1242 = vpack.c.b16 %v1174, %v1173
    %v1243 = vpack.c.b16 %v1176, %v1175
    %v1244 = vpack.c.b16 %v1178, %v1177
    %v1245 = vpack.c.b16 %v1180, %v1179
    %v1246 = vpack.c.b16 %v1182, %v1181
    %v1247 = vpack.c.b16 %v1184, %v1183
    %v1248 = vpack.c.b16 %v1186, %v1185
    %v1249 = vpack.c.b16 %v1188, %v1187
    %v1250 = vpack.c.b16 %v1190, %v1189
    %v1251 = vpack.c.b16 %v1192, %v1191
    %v1252 = vpack.c.b16 %v1194, %v1193
    %v1253 = vpack.c.b16 %v1196, %v1195
    %v1254 = vpack.c.b16 %v1198, %v1197
    %v1255 = vpack.c.b16 %v1200, %v1199
    %v1256 = vpack.c.b16 %v1202, %v1201
    %v1257 = vpack.c.b16 %v1204, %v1203
    %v1258 = vpack.c.b16 %v1206, %v1205
    %v1259 = vpack.c.b16 %v1208, %v1207
    %v1260 = vpack.c.b16 %v1210, %v1209
    %v1261 = vpack.c.b16 %v1212, %v1211
    %v1262 = vpack.c.b16 %v1214, %v1213
    %v1263 = vpack.c.b16 %v1216, %v1215
    %v1264 = vpack.c.b16 %v1218, %v1217
    %v1265 = vpack.c.b16 %v1220, %v1219
    %v1266 = vpack.c.b16 %v1222, %v1221
    %v1267 = vpack.c.b16 %v1224, %v1223
    %v1268 = vpack.c.b16 %v1226, %v1225
    %v1269 = vpack.c.b16 %v1228, %v1227
    %v1270 = vpack.c.b16 %v1230, %v1229
    %v1271 = vpack.c.b16 %v1232, %v1231
    %v1273 = vunpack.c.l.b16 %v1061
    %v1274 = vpack.c.b16 %v1273, %v1273
    %vm1275 = vsmask.f32 7424
    %v1277 = vshrl.u32 %v1233, 16
    %v1279 = vshll.u32 %v1233, 16
    %v1281 = vrot.slane %v1279, 1
    %v1282 = vor.u32 %v1277, %v1281
    %v1284 = vshll.u32 %v1234, 16
    %v1286 = vrot.slane %v1284, 1
    %v1287 = vsel %vm1275, %v1282, %v1286
    %v1288 = vshrl.u32 %v1234, 16
    %v1290 = vor.u32 %v1288, %v1286
    %v1292 = vshll.u32 %v1235, 16
    %v1294 = vrot.slane %v1292, 1
    %v1295 = vsel %vm1275, %v1290, %v1294
    %v1296 = vshrl.u32 %v1235, 16
    %v1298 = vor.u32 %v1296, %v1294
    %v1300 = vshll.u32 %v1236, 16
    %v1302 = vrot.slane %v1300, 1
    %v1303 = vsel %vm1275, %v1298, %v1302
    %v1304 = vshrl.u32 %v1236, 16
    %v1306 = vor.u32 %v1304, %v1302
    %v1308 = vshll.u32 %v1237, 16
    %v1310 = vrot.slane %v1308, 1
    %v1311 = vsel %vm1275, %v1306, %v1310
    %v1312 = vshrl.u32 %v1237, 16
    %v1314 = vor.u32 %v1312, %v1310
    %v1316 = vshll.u32 %v1238, 16
    %v1318 = vrot.slane %v1316, 1
    %v1319 = vsel %vm1275, %v1314, %v1318
    %v1320 = vshrl.u32 %v1238, 16
    %v1322 = vor.u32 %v1320, %v1318
    %v1324 = vshll.u32 %v1239, 16
    %v1326 = vrot.slane %v1324, 1
    %v1327 = vsel %vm1275, %v1322, %v1326
    %v1328 = vshrl.u32 %v1239, 16
    %v1330 = vor.u32 %v1328, %v1326
    %v1332 = vshll.u32 %v1240, 16
    %v1334 = vrot.slane %v1332, 1
    %v1335 = vsel %vm1275, %v1330, %v1334
    %v1336 = vshrl.u32 %v1240, 16
    %v1338 = vor.u32 %v1336, %v1334
    %v1340 = vshll.u32 %v1241, 16
    %v1342 = vrot.slane %v1340, 1
    %v1343 = vsel %vm1275, %v1338, %v1342
    %v1344 = vshrl.u32 %v1241, 16
    %v1346 = vor.u32 %v1344, %v1342
    %v1348 = vshll.u32 %v1242, 16
    %v1350 = vrot.slane %v1348, 1
    %v1351 = vsel %vm1275, %v1346, %v1350
    %v1352 = vshrl.u32 %v1242, 16
    %v1354 = vor.u32 %v1352, %v1350
    %v1356 = vshll.u32 %v1243, 16
    %v1358 = vrot.slane %v1356, 1
    %v1359 = vsel %vm1275, %v1354, %v1358
    %v1360 = vshrl.u32 %v1243, 16
    %v1362 = vor.u32 %v1360, %v1358
    %v1364 = vshll.u32 %v1244, 16
    %v1366 = vrot.slane %v1364, 1
    %v1367 = vsel %vm1275, %v1362, %v1366
    %v1368 = vshrl.u32 %v1244, 16
    %v1370 = vor.u32 %v1368, %v1366
    %v1372 = vshll.u32 %v1245, 16
    %v1374 = vrot.slane %v1372, 1
    %v1375 = vsel %vm1275, %v1370, %v1374
    %v1376 = vshrl.u32 %v1245, 16
    %v1378 = vor.u32 %v1376, %v1374
    %v1380 = vshll.u32 %v1246, 16
    %v1382 = vrot.slane %v1380, 1
    %v1383 = vsel %vm1275, %v1378, %v1382
    %v1384 = vshrl.u32 %v1246, 16
    %v1386 = vor.u32 %v1384, %v1382
    %v1388 = vshll.u32 %v1247, 16
    %v1390 = vrot.slane %v1388, 1
    %v1391 = vsel %vm1275, %v1386, %v1390
    %v1392 = vshrl.u32 %v1247, 16
    %v1394 = vor.u32 %v1392, %v1390
    %v1396 = vshll.u32 %v1248, 16
    %v1398 = vrot.slane %v1396, 1
    %v1399 = vsel %vm1275, %v1394, %v1398
    %v1400 = vshrl.u32 %v1248, 16
    %v1402 = vor.u32 %v1400, %v1398
    %v1404 = vshll.u32 %v1249, 16
    %v1406 = vrot.slane %v1404, 1
    %v1407 = vsel %vm1275, %v1402, %v1406
    %v1408 = vshrl.u32 %v1249, 16
    %v1410 = vor.u32 %v1408, %v1406
    %v1412 = vshll.u32 %v1250, 16
    %v1414 = vrot.slane %v1412, 1
    %v1415 = vsel %vm1275, %v1410, %v1414
    %v1416 = vshrl.u32 %v1250, 16
    %v1418 = vor.u32 %v1416, %v1414
    %v1420 = vshll.u32 %v1251, 16
    %v1422 = vrot.slane %v1420, 1
    %v1423 = vsel %vm1275, %v1418, %v1422
    %v1424 = vshrl.u32 %v1251, 16
    %v1426 = vor.u32 %v1424, %v1422
    %v1428 = vshll.u32 %v1252, 16
    %v1430 = vrot.slane %v1428, 1
    %v1431 = vsel %vm1275, %v1426, %v1430
    %v1432 = vshrl.u32 %v1252, 16
    %v1434 = vor.u32 %v1432, %v1430
    %v1436 = vshll.u32 %v1253, 16
    %v1438 = vrot.slane %v1436, 1
    %v1439 = vsel %vm1275, %v1434, %v1438
    %v1440 = vshrl.u32 %v1253, 16
    %v1442 = vor.u32 %v1440, %v1438
    %v1444 = vshll.u32 %v1254, 16
    %v1446 = vrot.slane %v1444, 1
    %v1447 = vsel %vm1275, %v1442, %v1446
    %v1448 = vshrl.u32 %v1254, 16
    %v1450 = vor.u32 %v1448, %v1446
    %v1452 = vshll.u32 %v1255, 16
    %v1454 = vrot.slane %v1452, 1
    %v1455 = vsel %vm1275, %v1450, %v1454
    %v1456 = vshrl.u32 %v1255, 16
    %v1458 = vor.u32 %v1456, %v1454
    %v1460 = vshll.u32 %v1256, 16
    %v1462 = vrot.slane %v1460, 1
    %v1463 = vsel %vm1275, %v1458, %v1462
    %v1464 = vshrl.u32 %v1256, 16
    %v1466 = vor.u32 %v1464, %v1462
    %v1468 = vshll.u32 %v1257, 16
    %v1470 = vrot.slane %v1468, 1
    %v1471 = vsel %vm1275, %v1466, %v1470
    %v1472 = vshrl.u32 %v1257, 16
    %v1474 = vor.u32 %v1472, %v1470
    %v1476 = vshll.u32 %v1258, 16
    %v1478 = vrot.slane %v1476, 1
    %v1479 = vsel %vm1275, %v1474, %v1478
    %v1480 = vshrl.u32 %v1258, 16
    %v1482 = vor.u32 %v1480, %v1478
    %v1484 = vshll.u32 %v1259, 16
    %v1486 = vrot.slane %v1484, 1
    %v1487 = vsel %vm1275, %v1482, %v1486
    %v1488 = vshrl.u32 %v1259, 16
    %v1490 = vor.u32 %v1488, %v1486
    %v1492 = vshll.u32 %v1260, 16
    %v1494 = vrot.slane %v1492, 1
    %v1495 = vsel %vm1275, %v1490, %v1494
    %v1496 = vshrl.u32 %v1260, 16
    %v1498 = vor.u32 %v1496, %v1494
    %v1500 = vshll.u32 %v1261, 16
    %v1502 = vrot.slane %v1500, 1
    %v1503 = vsel %vm1275, %v1498, %v1502
    %v1504 = vshrl.u32 %v1261, 16
    %v1506 = vor.u32 %v1504, %v1502
    %v1508 = vshll.u32 %v1262, 16
    %v1510 = vrot.slane %v1508, 1
    %v1511 = vsel %vm1275, %v1506, %v1510
    %v1512 = vshrl.u32 %v1262, 16
    %v1514 = vor.u32 %v1512, %v1510
    %v1516 = vshll.u32 %v1263, 16
    %v1518 = vrot.slane %v1516, 1
    %v1519 = vsel %vm1275, %v1514, %v1518
    %v1520 = vshrl.u32 %v1263, 16
    %v1522 = vor.u32 %v1520, %v1518
    %v1524 = vshll.u32 %v1264, 16
    %v1526 = vrot.slane %v1524, 1
    %v1527 = vsel %vm1275, %v1522, %v1526
    %v1528 = vshrl.u32 %v1264, 16
    %v1530 = vor.u32 %v1528, %v1526
    %v1532 = vshll.u32 %v1265, 16
    %v1534 = vrot.slane %v1532, 1
    %v1535 = vsel %vm1275, %v1530, %v1534
    %v1536 = vshrl.u32 %v1265, 16
    %v1538 = vor.u32 %v1536, %v1534
    %v1540 = vshll.u32 %v1266, 16
    %v1542 = vrot.slane %v1540, 1
    %v1543 = vsel %vm1275, %v1538, %v1542
    %v1544 = vshrl.u32 %v1266, 16
    %v1546 = vor.u32 %v1544, %v1542
    %v1548 = vshll.u32 %v1267, 16
    %v1550 = vrot.slane %v1548, 1
    %v1551 = vsel %vm1275, %v1546, %v1550
    %v1552 = vshrl.u32 %v1267, 16
    %v1554 = vor.u32 %v1552, %v1550
    %v1556 = vshll.u32 %v1268, 16
    %v1558 = vrot.slane %v1556, 1
    %v1559 = vsel %vm1275, %v1554, %v1558
    %v1560 = vshrl.u32 %v1268, 16
    %v1562 = vor.u32 %v1560, %v1558
    %v1564 = vshll.u32 %v1269, 16
    %v1566 = vrot.slane %v1564, 1
    %v1567 = vsel %vm1275, %v1562, %v1566
    %v1568 = vshrl.u32 %v1269, 16
    %v1570 = vor.u32 %v1568, %v1566
    %v1572 = vshll.u32 %v1270, 16
    %v1574 = vrot.slane %v1572, 1
    %v1575 = vsel %vm1275, %v1570, %v1574
    %v1576 = vshrl.u32 %v1270, 16
    %v1578 = vor.u32 %v1576, %v1574
    %v1580 = vshll.u32 %v1271, 16
    %v1582 = vrot.slane %v1580, 1
    %v1583 = vsel %vm1275, %v1578, %v1582
    %v1584 = vshrl.u32 %v1271, 16
    %v1586 = vor.u32 %v1584, %v1582
    %v1588 = vshll.u32 %v1274, 16
    %v1590 = vrot.slane %v1588, 1
    %v1591 = vsel %vm1275, %v1586, %v1590
    %1592 = vrot.lane.b32.xlu0 %v1287, 32
    %v1593 = vpop.permute.xlu0 %1592
    %1594 = vrot.lane.b32.xlu0 %v1295, 32
    %v1595 = vpop.permute.xlu0 %1594
    %1596 = vrot.lane.b32.xlu0 %v1303, 32
    %v1597 = vpop.permute.xlu0 %1596
    %1598 = vrot.lane.b32.xlu0 %v1311, 32
    %v1599 = vpop.permute.xlu0 %1598
    %1600 = vrot.lane.b32.xlu0 %v1319, 32
    %v1601 = vpop.permute.xlu0 %1600
    %1602 = vrot.lane.b32.xlu0 %v1327, 32
    %v1603 = vpop.permute.xlu0 %1602
    %1604 = vrot.lane.b32.xlu0 %v1335, 32
    %v1605 = vpop.permute.xlu0 %1604
    %1606 = vrot.lane.b32.xlu0 %v1343, 32
    %v1607 = vpop.permute.xlu0 %1606
    %1608 = vrot.lane.b32.xlu0 %v1351, 32
    %v1609 = vpop.permute.xlu0 %1608
    %1610 = vrot.lane.b32.xlu0 %v1359, 32
    %v1611 = vpop.permute.xlu0 %1610
    %1612 = vrot.lane.b32.xlu0 %v1367, 32
    %v1613 = vpop.permute.xlu0 %1612
    %1614 = vrot.lane.b32.xlu0 %v1375, 32
    %v1615 = vpop.permute.xlu0 %1614
    %1616 = vrot.lane.b32.xlu0 %v1383, 32
    %v1617 = vpop.permute.xlu0 %1616
    %1618 = vrot.lane.b32.xlu0 %v1391, 32
    %v1619 = vpop.permute.xlu0 %1618
    %1620 = vrot.lane.b32.xlu0 %v1399, 32
    %v1621 = vpop.permute.xlu0 %1620
    %1622 = vrot.lane.b32.xlu0 %v1407, 32
    %v1623 = vpop.permute.xlu0 %1622
    %1624 = vrot.lane.b32.xlu0 %v1415, 32
    %v1625 = vpop.permute.xlu0 %1624
    %1626 = vrot.lane.b32.xlu0 %v1423, 32
    %v1627 = vpop.permute.xlu0 %1626
    %1628 = vrot.lane.b32.xlu0 %v1431, 32
    %v1629 = vpop.permute.xlu0 %1628
    %1630 = vrot.lane.b32.xlu0 %v1439, 32
    %v1631 = vpop.permute.xlu0 %1630
    %1632 = vrot.lane.b32.xlu0 %v1447, 32
    %v1633 = vpop.permute.xlu0 %1632
    %1634 = vrot.lane.b32.xlu0 %v1455, 32
    %v1635 = vpop.permute.xlu0 %1634
    %1636 = vrot.lane.b32.xlu0 %v1463, 32
    %v1637 = vpop.permute.xlu0 %1636
    %1638 = vrot.lane.b32.xlu0 %v1471, 32
    %v1639 = vpop.permute.xlu0 %1638
    %1640 = vrot.lane.b32.xlu0 %v1479, 32
    %v1641 = vpop.permute.xlu0 %1640
    %1642 = vrot.lane.b32.xlu0 %v1487, 32
    %v1643 = vpop.permute.xlu0 %1642
    %1644 = vrot.lane.b32.xlu0 %v1495, 32
    %v1645 = vpop.permute.xlu0 %1644
    %1646 = vrot.lane.b32.xlu0 %v1503, 32
    %v1647 = vpop.permute.xlu0 %1646
    %1648 = vrot.lane.b32.xlu0 %v1511, 32
    %v1649 = vpop.permute.xlu0 %1648
    %1650 = vrot.lane.b32.xlu0 %v1519, 32
    %v1651 = vpop.permute.xlu0 %1650
    %1652 = vrot.lane.b32.xlu0 %v1527, 32
    %v1653 = vpop.permute.xlu0 %1652
    %1654 = vrot.lane.b32.xlu0 %v1535, 32
    %v1655 = vpop.permute.xlu0 %1654
    %1656 = vrot.lane.b32.xlu0 %v1543, 32
    %v1657 = vpop.permute.xlu0 %1656
    %1658 = vrot.lane.b32.xlu0 %v1551, 32
    %v1659 = vpop.permute.xlu0 %1658
    %1660 = vrot.lane.b32.xlu0 %v1559, 32
    %v1661 = vpop.permute.xlu0 %1660
    %1662 = vrot.lane.b32.xlu0 %v1567, 32
    %v1663 = vpop.permute.xlu0 %1662
    %1664 = vrot.lane.b32.xlu0 %v1575, 32
    %v1665 = vpop.permute.xlu0 %1664
    %1666 = vrot.lane.b32.xlu0 %v1583, 32
    %v1667 = vpop.permute.xlu0 %1666
    %1668 = vrot.lane.b32.xlu0 %v1591, 32
    %v1669 = vpop.permute.xlu0 %1668
    %v1671 = vunpack.c.l.b16 %v1062
    %v1672 = vpack.c.b16 %v1156, %v1671
    %vm1673 = vcmask 1046528
    %v1674 = vrot.slane %v1672, 1
    %v1675 = vrot.slane %v1234, 1
    %v1676 = vsel %vm1673, %v1674, %v1675
    %v1677 = vrot.slane %v1235, 1
    %v1678 = vsel %vm1673, %v1675, %v1677
    %v1679 = vrot.slane %v1236, 1
    %v1680 = vsel %vm1673, %v1677, %v1679
    %v1681 = vrot.slane %v1237, 1
    %v1682 = vsel %vm1673, %v1679, %v1681
    %v1683 = vrot.slane %v1238, 1
    %v1684 = vsel %vm1673, %v1681, %v1683
    %v1685 = vrot.slane %v1239, 1
    %v1686 = vsel %vm1673, %v1683, %v1685
    %v1687 = vrot.slane %v1240, 1
    %v1688 = vsel %vm1673, %v1685, %v1687
    %v1689 = vrot.slane %v1241, 1
    %v1690 = vsel %vm1673, %v1687, %v1689
    %v1691 = vrot.slane %v1242, 1
    %v1692 = vsel %vm1673, %v1689, %v1691
    %v1693 = vrot.slane %v1243, 1
    %v1694 = vsel %vm1673, %v1691, %v1693
    %v1695 = vrot.slane %v1244, 1
    %v1696 = vsel %vm1673, %v1693, %v1695
    %v1697 = vrot.slane %v1245, 1
    %v1698 = vsel %vm1673, %v1695, %v1697
    %v1699 = vrot.slane %v1246, 1
    %v1700 = vsel %vm1673, %v1697, %v1699
    %v1701 = vrot.slane %v1247, 1
    %v1702 = vsel %vm1673, %v1699, %v1701
    %v1703 = vrot.slane %v1248, 1
    %v1704 = vsel %vm1673, %v1701, %v1703
    %v1705 = vrot.slane %v1249, 1
    %v1706 = vsel %vm1673, %v1703, %v1705
    %v1707 = vrot.slane %v1250, 1
    %v1708 = vsel %vm1673, %v1705, %v1707
    %v1709 = vrot.slane %v1251, 1
    %v1710 = vsel %vm1673, %v1707, %v1709
    %v1711 = vrot.slane %v1252, 1
    %v1712 = vsel %vm1673, %v1709, %v1711
    %v1713 = vrot.slane %v1253, 1
    %v1714 = vsel %vm1673, %v1711, %v1713
    %v1715 = vrot.slane %v1254, 1
    %v1716 = vsel %vm1673, %v1713, %v1715
    %v1717 = vrot.slane %v1255, 1
    %v1718 = vsel %vm1673, %v1715, %v1717
    %v1719 = vrot.slane %v1256, 1
    %v1720 = vsel %vm1673, %v1717, %v1719
    %v1721 = vrot.slane %v1257, 1
    %v1722 = vsel %vm1673, %v1719, %v1721
    %v1723 = vrot.slane %v1258, 1
    %v1724 = vsel %vm1673, %v1721, %v1723
    %v1725 = vrot.slane %v1259, 1
    %v1726 = vsel %vm1673, %v1723, %v1725
    %v1727 = vrot.slane %v1260, 1
    %v1728 = vsel %vm1673, %v1725, %v1727
    %v1729 = vrot.slane %v1261, 1
    %v1730 = vsel %vm1673, %v1727, %v1729
    %v1731 = vrot.slane %v1262, 1
    %v1732 = vsel %vm1673, %v1729, %v1731
    %v1733 = vrot.slane %v1263, 1
    %v1734 = vsel %vm1673, %v1731, %v1733
    %v1735 = vrot.slane %v1264, 1
    %v1736 = vsel %vm1673, %v1733, %v1735
    %v1737 = vrot.slane %v1265, 1
    %v1738 = vsel %vm1673, %v1735, %v1737
    %v1739 = vrot.slane %v1266, 1
    %v1740 = vsel %vm1673, %v1737, %v1739
    %v1741 = vrot.slane %v1267, 1
    %v1742 = vsel %vm1673, %v1739, %v1741
    %v1743 = vrot.slane %v1268, 1
    %v1744 = vsel %vm1673, %v1741, %v1743
    %v1745 = vrot.slane %v1269, 1
    %v1746 = vsel %vm1673, %v1743, %v1745
    %v1747 = vrot.slane %v1270, 1
    %v1748 = vsel %vm1673, %v1745, %v1747
    %v1749 = vrot.slane %v1271, 1
    %v1750 = vsel %vm1673, %v1747, %v1749
    %v1751 = vrot.slane %v1274, 1
    %v1752 = vsel %vm1673, %v1749, %v1751
    %1753 = vrot.lane.b32.xlu0 %v1676, 64
    %v1754 = vpop.permute.xlu0 %1753
    %1755 = vrot.lane.b32.xlu0 %v1678, 64
    %v1756 = vpop.permute.xlu0 %1755
    %1757 = vrot.lane.b32.xlu0 %v1680, 64
    %v1758 = vpop.permute.xlu0 %1757
    %1759 = vrot.lane.b32.xlu0 %v1682, 64
    %v1760 = vpop.permute.xlu0 %1759
    %1761 = vrot.lane.b32.xlu0 %v1684, 64
    %v1762 = vpop.permute.xlu0 %1761
    %1763 = vrot.lane.b32.xlu0 %v1686, 64
    %v1764 = vpop.permute.xlu0 %1763
    %1765 = vrot.lane.b32.xlu0 %v1688, 64
    %v1766 = vpop.permute.xlu0 %1765
    %1767 = vrot.lane.b32.xlu0 %v1690, 64
    %v1768 = vpop.permute.xlu0 %1767
    %1769 = vrot.lane.b32.xlu0 %v1692, 64
    %v1770 = vpop.permute.xlu0 %1769
    %1771 = vrot.lane.b32.xlu0 %v1694, 64
    %v1772 = vpop.permute.xlu0 %1771
    %1773 = vrot.lane.b32.xlu0 %v1696, 64
    %v1774 = vpop.permute.xlu0 %1773
    %1775 = vrot.lane.b32.xlu0 %v1698, 64
    %v1776 = vpop.permute.xlu0 %1775
    %1777 = vrot.lane.b32.xlu0 %v1700, 64
    %v1778 = vpop.permute.xlu0 %1777
    %1779 = vrot.lane.b32.xlu0 %v1702, 64
    %v1780 = vpop.permute.xlu0 %1779
    %1781 = vrot.lane.b32.xlu0 %v1704, 64
    %v1782 = vpop.permute.xlu0 %1781
    %1783 = vrot.lane.b32.xlu0 %v1706, 64
    %v1784 = vpop.permute.xlu0 %1783
    %1785 = vrot.lane.b32.xlu0 %v1708, 64
    %v1786 = vpop.permute.xlu0 %1785
    %1787 = vrot.lane.b32.xlu0 %v1710, 64
    %v1788 = vpop.permute.xlu0 %1787
    %1789 = vrot.lane.b32.xlu0 %v1712, 64
    %v1790 = vpop.permute.xlu0 %1789
    %1791 = vrot.lane.b32.xlu0 %v1714, 64
    %v1792 = vpop.permute.xlu0 %1791
    %1793 = vrot.lane.b32.xlu0 %v1716, 64
    %v1794 = vpop.permute.xlu0 %1793
    %1795 = vrot.lane.b32.xlu0 %v1718, 64
    %v1796 = vpop.permute.xlu0 %1795
    %1797 = vrot.lane.b32.xlu0 %v1720, 64
    %v1798 = vpop.permute.xlu0 %1797
    %1799 = vrot.lane.b32.xlu0 %v1722, 64
    %v1800 = vpop.permute.xlu0 %1799
    %1801 = vrot.lane.b32.xlu0 %v1724, 64
    %v1802 = vpop.permute.xlu0 %1801
    %1803 = vrot.lane.b32.xlu0 %v1726, 64
    %v1804 = vpop.permute.xlu0 %1803
    %1805 = vrot.lane.b32.xlu0 %v1728, 64
    %v1806 = vpop.permute.xlu0 %1805
    %1807 = vrot.lane.b32.xlu0 %v1730, 64
    %v1808 = vpop.permute.xlu0 %1807
    %1809 = vrot.lane.b32.xlu0 %v1732, 64
    %v1810 = vpop.permute.xlu0 %1809
    %1811 = vrot.lane.b32.xlu0 %v1734, 64
    %v1812 = vpop.permute.xlu0 %1811
    %1813 = vrot.lane.b32.xlu0 %v1736, 64
    %v1814 = vpop.permute.xlu0 %1813
    %1815 = vrot.lane.b32.xlu0 %v1738, 64
    %v1816 = vpop.permute.xlu0 %1815
    %1817 = vrot.lane.b32.xlu0 %v1740, 64
    %v1818 = vpop.permute.xlu0 %1817
    %1819 = vrot.lane.b32.xlu0 %v1742, 64
    %v1820 = vpop.permute.xlu0 %1819
    %1821 = vrot.lane.b32.xlu0 %v1744, 64
    %v1822 = vpop.permute.xlu0 %1821
    %1823 = vrot.lane.b32.xlu0 %v1746, 64
    %v1824 = vpop.permute.xlu0 %1823
    %1825 = vrot.lane.b32.xlu0 %v1748, 64
    %v1826 = vpop.permute.xlu0 %1825
    %1827 = vrot.lane.b32.xlu0 %v1750, 64
    %v1828 = vpop.permute.xlu0 %1827
    %1829 = vrot.lane.b32.xlu0 %v1752, 64
    %v1830 = vpop.permute.xlu0 %1829
    %v1836 = vunpack.c.l.b16 %v1063
    %v1837 = vunpack.c.l.b16 %v1064
    %v1838 = vunpack.c.l.b16 %v1065
    %v1839 = vunpack.c.l.b16 %v1066
    %v1840 = vunpack.c.l.b16 %v1067
    %v1841 = vpack.c.b16 %v1159, %v1836
    %v1842 = vpack.c.b16 %v1161, %v1160
    %v1843 = vpack.c.b16 %v1163, %v1162
    %v1844 = vpack.c.b16 %v1165, %v1164
    %v1845 = vpack.c.b16 %v1167, %v1166
    %v1846 = vpack.c.b16 %v1169, %v1168
    %v1847 = vpack.c.b16 %v1171, %v1170
    %v1848 = vpack.c.b16 %v1173, %v1172
    %v1849 = vpack.c.b16 %v1175, %v1174
    %v1850 = vpack.c.b16 %v1177, %v1176
    %v1851 = vpack.c.b16 %v1179, %v1178
    %v1852 = vpack.c.b16 %v1181, %v1180
    %v1853 = vpack.c.b16 %v1183, %v1182
    %v1854 = vpack.c.b16 %v1185, %v1184
    %v1855 = vpack.c.b16 %v1187, %v1186
    %v1856 = vpack.c.b16 %v1189, %v1188
    %v1857 = vpack.c.b16 %v1191, %v1190
    %v1858 = vpack.c.b16 %v1193, %v1192
    %v1859 = vpack.c.b16 %v1195, %v1194
    %v1860 = vpack.c.b16 %v1197, %v1196
    %v1861 = vpack.c.b16 %v1199, %v1198
    %v1862 = vpack.c.b16 %v1201, %v1200
    %v1863 = vpack.c.b16 %v1203, %v1202
    %v1864 = vpack.c.b16 %v1205, %v1204
    %v1865 = vpack.c.b16 %v1207, %v1206
    %v1866 = vpack.c.b16 %v1209, %v1208
    %v1867 = vpack.c.b16 %v1211, %v1210
    %v1868 = vpack.c.b16 %v1213, %v1212
    %v1869 = vpack.c.b16 %v1215, %v1214
    %v1870 = vpack.c.b16 %v1217, %v1216
    %v1871 = vpack.c.b16 %v1219, %v1218
    %v1872 = vpack.c.b16 %v1221, %v1220
    %v1873 = vpack.c.b16 %v1223, %v1222
    %v1874 = vpack.c.b16 %v1225, %v1224
    %v1875 = vpack.c.b16 %v1227, %v1226
    %v1876 = vpack.c.b16 %v1229, %v1228
    %v1877 = vpack.c.b16 %v1231, %v1230
    %v1878 = vpack.c.b16 %v1837, %v1232
    %v1879 = vpack.c.b16 %v1839, %v1838
    %v1880 = vpack.c.b16 %v1840, %v1840
    %v1881 = vrot.slane %v1841, 1
    %v1882 = vrot.slane %v1842, 1
    %v1883 = vsel %vm1673, %v1881, %v1882
    %v1884 = vrot.slane %v1843, 1
    %v1885 = vsel %vm1673, %v1882, %v1884
    %v1886 = vrot.slane %v1844, 1
    %v1887 = vsel %vm1673, %v1884, %v1886
    %v1888 = vrot.slane %v1845, 1
    %v1889 = vsel %vm1673, %v1886, %v1888
    %v1890 = vrot.slane %v1846, 1
    %v1891 = vsel %vm1673, %v1888, %v1890
    %v1892 = vrot.slane %v1847, 1
    %v1893 = vsel %vm1673, %v1890, %v1892
    %v1894 = vrot.slane %v1848, 1
    %v1895 = vsel %vm1673, %v1892, %v1894
    %v1896 = vrot.slane %v1849, 1
    %v1897 = vsel %vm1673, %v1894, %v1896
    %v1898 = vrot.slane %v1850, 1
    %v1899 = vsel %vm1673, %v1896, %v1898
    %v1900 = vrot.slane %v1851, 1
    %v1901 = vsel %vm1673, %v1898, %v1900
    %v1902 = vrot.slane %v1852, 1
    %v1903 = vsel %vm1673, %v1900, %v1902
    %v1904 = vrot.slane %v1853, 1
    %v1905 = vsel %vm1673, %v1902, %v1904
    %v1906 = vrot.slane %v1854, 1
    %v1907 = vsel %vm1673, %v1904, %v1906
    %v1908 = vrot.slane %v1855, 1
    %v1909 = vsel %vm1673, %v1906, %v1908
    %v1910 = vrot.slane %v1856, 1
    %v1911 = vsel %vm1673, %v1908, %v1910
    %v1912 = vrot.slane %v1857, 1
    %v1913 = vsel %vm1673, %v1910, %v1912
    %v1914 = vrot.slane %v1858, 1
    %v1915 = vsel %vm1673, %v1912, %v1914
    %v1916 = vrot.slane %v1859, 1
    %v1917 = vsel %vm1673, %v1914, %v1916
    %v1918 = vrot.slane %v1860, 1
    %v1919 = vsel %vm1673, %v1916, %v1918
    %v1920 = vrot.slane %v1861, 1
    %v1921 = vsel %vm1673, %v1918, %v1920
    %v1922 = vrot.slane %v1862, 1
    %v1923 = vsel %vm1673, %v1920, %v1922
    %v1924 = vrot.slane %v1863, 1
    %v1925 = vsel %vm1673, %v1922, %v1924
    %v1926 = vrot.slane %v1864, 1
    %v1927 = vsel %vm1673, %v1924, %v1926
    %v1928 = vrot.slane %v1865, 1
    %v1929 = vsel %vm1673, %v1926, %v1928
    %v1930 = vrot.slane %v1866, 1
    %v1931 = vsel %vm1673, %v1928, %v1930
    %v1932 = vrot.slane %v1867, 1
    %v1933 = vsel %vm1673, %v1930, %v1932
    %v1934 = vrot.slane %v1868, 1
    %v1935 = vsel %vm1673, %v1932, %v1934
    %v1936 = vrot.slane %v1869, 1
    %v1937 = vsel %vm1673, %v1934, %v1936
    %v1938 = vrot.slane %v1870, 1
    %v1939 = vsel %vm1673, %v1936, %v1938
    %v1940 = vrot.slane %v1871, 1
    %v1941 = vsel %vm1673, %v1938, %v1940
    %v1942 = vrot.slane %v1872, 1
    %v1943 = vsel %vm1673, %v1940, %v1942
    %v1944 = vrot.slane %v1873, 1
    %v1945 = vsel %vm1673, %v1942, %v1944
    %v1946 = vrot.slane %v1874, 1
    %v1947 = vsel %vm1673, %v1944, %v1946
    %v1948 = vrot.slane %v1875, 1
    %v1949 = vsel %vm1673, %v1946, %v1948
    %v1950 = vrot.slane %v1876, 1
    %v1951 = vsel %vm1673, %v1948, %v1950
    %v1952 = vrot.slane %v1877, 1
    %v1953 = vsel %vm1673, %v1950, %v1952
    %v1954 = vrot.slane %v1878, 1
    %v1955 = vsel %vm1673, %v1952, %v1954
    %v1956 = vrot.slane %v1879, 1
    %v1957 = vsel %vm1673, %v1954, %v1956
    %v1958 = vrot.slane %v1880, 1
    %v1959 = vsel %vm1673, %v1956, %v1958
    %1960 = vrot.lane.b32.xlu0 %v1883, 96
    %v1961 = vpop.permute.xlu0 %1960
    %1962 = vrot.lane.b32.xlu0 %v1885, 96
    %v1963 = vpop.permute.xlu0 %1962
    %1964 = vrot.lane.b32.xlu0 %v1887, 96
    %v1965 = vpop.permute.xlu0 %1964
    %1966 = vrot.lane.b32.xlu0 %v1889, 96
    %v1967 = vpop.permute.xlu0 %1966
    %1968 = vrot.lane.b32.xlu0 %v1891, 96
    %v1969 = vpop.permute.xlu0 %1968
    %1970 = vrot.lane.b32.xlu0 %v1893, 96
    %v1971 = vpop.permute.xlu0 %1970
    %1972 = vrot.lane.b32.xlu0 %v1895, 96
    %v1973 = vpop.permute.xlu0 %1972
    %1974 = vrot.lane.b32.xlu0 %v1897, 96
    %v1975 = vpop.permute.xlu0 %1974
    %1976 = vrot.lane.b32.xlu0 %v1899, 96
    %v1977 = vpop.permute.xlu0 %1976
    %1978 = vrot.lane.b32.xlu0 %v1901, 96
    %v1979 = vpop.permute.xlu0 %1978
    %1980 = vrot.lane.b32.xlu0 %v1903, 96
    %v1981 = vpop.permute.xlu0 %1980
    %1982 = vrot.lane.b32.xlu0 %v1905, 96
    %v1983 = vpop.permute.xlu0 %1982
    %1984 = vrot.lane.b32.xlu0 %v1907, 96
    %v1985 = vpop.permute.xlu0 %1984
    %1986 = vrot.lane.b32.xlu0 %v1909, 96
    %v1987 = vpop.permute.xlu0 %1986
    %1988 = vrot.lane.b32.xlu0 %v1911, 96
    %v1989 = vpop.permute.xlu0 %1988
    %1990 = vrot.lane.b32.xlu0 %v1913, 96
    %v1991 = vpop.permute.xlu0 %1990
    %1992 = vrot.lane.b32.xlu0 %v1915, 96
    %v1993 = vpop.permute.xlu0 %1992
    %1994 = vrot.lane.b32.xlu0 %v1917, 96
    %v1995 = vpop.permute.xlu0 %1994
    %1996 = vrot.lane.b32.xlu0 %v1919, 96
    %v1997 = vpop.permute.xlu0 %1996
    %1998 = vrot.lane.b32.xlu0 %v1921, 96
    %v1999 = vpop.permute.xlu0 %1998
    %2000 = vrot.lane.b32.xlu0 %v1923, 96
    %v2001 = vpop.permute.xlu0 %2000
    %2002 = vrot.lane.b32.xlu0 %v1925, 96
    %v2003 = vpop.permute.xlu0 %2002
    %2004 = vrot.lane.b32.xlu0 %v1927, 96
    %v2005 = vpop.permute.xlu0 %2004
    %2006 = vrot.lane.b32.xlu0 %v1929, 96
    %v2007 = vpop.permute.xlu0 %2006
    %2008 = vrot.lane.b32.xlu0 %v1931, 96
    %v2009 = vpop.permute.xlu0 %2008
    %2010 = vrot.lane.b32.xlu0 %v1933, 96
    %v2011 = vpop.permute.xlu0 %2010
    %2012 = vrot.lane.b32.xlu0 %v1935, 96
    %v2013 = vpop.permute.xlu0 %2012
    %2014 = vrot.lane.b32.xlu0 %v1937, 96
    %v2015 = vpop.permute.xlu0 %2014
    %2016 = vrot.lane.b32.xlu0 %v1939, 96
    %v2017 = vpop.permute.xlu0 %2016
    %2018 = vrot.lane.b32.xlu0 %v1941, 96
    %v2019 = vpop.permute.xlu0 %2018
    %2020 = vrot.lane.b32.xlu0 %v1943, 96
    %v2021 = vpop.permute.xlu0 %2020
    %2022 = vrot.lane.b32.xlu0 %v1945, 96
    %v2023 = vpop.permute.xlu0 %2022
    %2024 = vrot.lane.b32.xlu0 %v1947, 96
    %v2025 = vpop.permute.xlu0 %2024
    %2026 = vrot.lane.b32.xlu0 %v1949, 96
    %v2027 = vpop.permute.xlu0 %2026
    %2028 = vrot.lane.b32.xlu0 %v1951, 96
    %v2029 = vpop.permute.xlu0 %2028
    %2030 = vrot.lane.b32.xlu0 %v1953, 96
    %v2031 = vpop.permute.xlu0 %2030
    %2032 = vrot.lane.b32.xlu0 %v1955, 96
    %v2033 = vpop.permute.xlu0 %2032
    %2034 = vrot.lane.b32.xlu0 %v1957, 96
    %v2035 = vpop.permute.xlu0 %2034
    %2036 = vrot.lane.b32.xlu0 %v1959, 96
    %v2037 = vpop.permute.xlu0 %2036
    %v2039 = vunpack.c.l.b16 %v1068
    %v2040 = vpack.c.b16 %v2039, %v2039
    %vm2041 = vsmask.f32 6400
    %v2043 = vshrl.u32 %v1841, 16
    %v2045 = vrot.slane %v2043, 1
    %v2046 = vshll.u32 %v1841, 16
    %v2048 = vrot.slane %v2046, 2
    %v2049 = vor.u32 %v2045, %v2048
    %v2051 = vshrl.u32 %v1842, 16
    %v2053 = vrot.slane %v2051, 1
    %v2054 = vshll.u32 %v1842, 16
    %v2056 = vrot.slane %v2054, 2
    %v2057 = vor.u32 %v2053, %v2056
    %v2058 = vsel %vm2041, %v2049, %v2057
    %v2060 = vshrl.u32 %v1843, 16
    %v2062 = vrot.slane %v2060, 1
    %v2063 = vshll.u32 %v1843, 16
    %v2065 = vrot.slane %v2063, 2
    %v2066 = vor.u32 %v2062, %v2065
    %v2067 = vsel %vm2041, %v2057, %v2066
    %v2069 = vshrl.u32 %v1844, 16
    %v2071 = vrot.slane %v2069, 1
    %v2072 = vshll.u32 %v1844, 16
    %v2074 = vrot.slane %v2072, 2
    %v2075 = vor.u32 %v2071, %v2074
    %v2076 = vsel %vm2041, %v2066, %v2075
    %v2078 = vshrl.u32 %v1845, 16
    %v2080 = vrot.slane %v2078, 1
    %v2081 = vshll.u32 %v1845, 16
    %v2083 = vrot.slane %v2081, 2
    %v2084 = vor.u32 %v2080, %v2083
    %v2085 = vsel %vm2041, %v2075, %v2084
    %v2087 = vshrl.u32 %v1846, 16
    %v2089 = vrot.slane %v2087, 1
    %v2090 = vshll.u32 %v1846, 16
    %v2092 = vrot.slane %v2090, 2
    %v2093 = vor.u32 %v2089, %v2092
    %v2094 = vsel %vm2041, %v2084, %v2093
    %v2096 = vshrl.u32 %v1847, 16
    %v2098 = vrot.slane %v2096, 1
    %v2099 = vshll.u32 %v1847, 16
    %v2101 = vrot.slane %v2099, 2
    %v2102 = vor.u32 %v2098, %v2101
    %v2103 = vsel %vm2041, %v2093, %v2102
    %v2105 = vshrl.u32 %v1848, 16
    %v2107 = vrot.slane %v2105, 1
    %v2108 = vshll.u32 %v1848, 16
    %v2110 = vrot.slane %v2108, 2
    %v2111 = vor.u32 %v2107, %v2110
    %v2112 = vsel %vm2041, %v2102, %v2111
    %v2114 = vshrl.u32 %v1849, 16
    %v2116 = vrot.slane %v2114, 1
    %v2117 = vshll.u32 %v1849, 16
    %v2119 = vrot.slane %v2117, 2
    %v2120 = vor.u32 %v2116, %v2119
    %v2121 = vsel %vm2041, %v2111, %v2120
    %v2123 = vshrl.u32 %v1850, 16
    %v2125 = vrot.slane %v2123, 1
    %v2126 = vshll.u32 %v1850, 16
    %v2128 = vrot.slane %v2126, 2
    %v2129 = vor.u32 %v2125, %v2128
    %v2130 = vsel %vm2041, %v2120, %v2129
    %v2132 = vshrl.u32 %v1851, 16
    %v2134 = vrot.slane %v2132, 1
    %v2135 = vshll.u32 %v1851, 16
    %v2137 = vrot.slane %v2135, 2
    %v2138 = vor.u32 %v2134, %v2137
    %v2139 = vsel %vm2041, %v2129, %v2138
    %v2141 = vshrl.u32 %v1852, 16
    %v2143 = vrot.slane %v2141, 1
    %v2144 = vshll.u32 %v1852, 16
    %v2146 = vrot.slane %v2144, 2
    %v2147 = vor.u32 %v2143, %v2146
    %v2148 = vsel %vm2041, %v2138, %v2147
    %v2150 = vshrl.u32 %v1853, 16
    %v2152 = vrot.slane %v2150, 1
    %v2153 = vshll.u32 %v1853, 16
    %v2155 = vrot.slane %v2153, 2
    %v2156 = vor.u32 %v2152, %v2155
    %v2157 = vsel %vm2041, %v2147, %v2156
    %v2159 = vshrl.u32 %v1854, 16
    %v2161 = vrot.slane %v2159, 1
    %v2162 = vshll.u32 %v1854, 16
    %v2164 = vrot.slane %v2162, 2
    %v2165 = vor.u32 %v2161, %v2164
    %v2166 = vsel %vm2041, %v2156, %v2165
    %v2168 = vshrl.u32 %v1855, 16
    %v2170 = vrot.slane %v2168, 1
    %v2171 = vshll.u32 %v1855, 16
    %v2173 = vrot.slane %v2171, 2
    %v2174 = vor.u32 %v2170, %v2173
    %v2175 = vsel %vm2041, %v2165, %v2174
    %v2177 = vshrl.u32 %v1856, 16
    %v2179 = vrot.slane %v2177, 1
    %v2180 = vshll.u32 %v1856, 16
    %v2182 = vrot.slane %v2180, 2
    %v2183 = vor.u32 %v2179, %v2182
    %v2184 = vsel %vm2041, %v2174, %v2183
    %v2186 = vshrl.u32 %v1857, 16
    %v2188 = vrot.slane %v2186, 1
    %v2189 = vshll.u32 %v1857, 16
    %v2191 = vrot.slane %v2189, 2
    %v2192 = vor.u32 %v2188, %v2191
    %v2193 = vsel %vm2041, %v2183, %v2192
    %v2195 = vshrl.u32 %v1858, 16
    %v2197 = vrot.slane %v2195, 1
    %v2198 = vshll.u32 %v1858, 16
    %v2200 = vrot.slane %v2198, 2
    %v2201 = vor.u32 %v2197, %v2200
    %v2202 = vsel %vm2041, %v2192, %v2201
    %v2204 = vshrl.u32 %v1859, 16
    %v2206 = vrot.slane %v2204, 1
    %v2207 = vshll.u32 %v1859, 16
    %v2209 = vrot.slane %v2207, 2
    %v2210 = vor.u32 %v2206, %v2209
    %v2211 = vsel %vm2041, %v2201, %v2210
    %v2213 = vshrl.u32 %v1860, 16
    %v2215 = vrot.slane %v2213, 1
    %v2216 = vshll.u32 %v1860, 16
    %v2218 = vrot.slane %v2216, 2
    %v2219 = vor.u32 %v2215, %v2218
    %v2220 = vsel %vm2041, %v2210, %v2219
    %v2222 = vshrl.u32 %v1861, 16
    %v2224 = vrot.slane %v2222, 1
    %v2225 = vshll.u32 %v1861, 16
    %v2227 = vrot.slane %v2225, 2
    %v2228 = vor.u32 %v2224, %v2227
    %v2229 = vsel %vm2041, %v2219, %v2228
    %v2231 = vshrl.u32 %v1862, 16
    %v2233 = vrot.slane %v2231, 1
    %v2234 = vshll.u32 %v1862, 16
    %v2236 = vrot.slane %v2234, 2
    %v2237 = vor.u32 %v2233, %v2236
    %v2238 = vsel %vm2041, %v2228, %v2237
    %v2240 = vshrl.u32 %v1863, 16
    %v2242 = vrot.slane %v2240, 1
    %v2243 = vshll.u32 %v1863, 16
    %v2245 = vrot.slane %v2243, 2
    %v2246 = vor.u32 %v2242, %v2245
    %v2247 = vsel %vm2041, %v2237, %v2246
    %v2249 = vshrl.u32 %v1864, 16
    %v2251 = vrot.slane %v2249, 1
    %v2252 = vshll.u32 %v1864, 16
    %v2254 = vrot.slane %v2252, 2
    %v2255 = vor.u32 %v2251, %v2254
    %v2256 = vsel %vm2041, %v2246, %v2255
    %v2258 = vshrl.u32 %v1865, 16
    %v2260 = vrot.slane %v2258, 1
    %v2261 = vshll.u32 %v1865, 16
    %v2263 = vrot.slane %v2261, 2
    %v2264 = vor.u32 %v2260, %v2263
    %v2265 = vsel %vm2041, %v2255, %v2264
    %v2267 = vshrl.u32 %v1866, 16
    %v2269 = vrot.slane %v2267, 1
    %v2270 = vshll.u32 %v1866, 16
    %v2272 = vrot.slane %v2270, 2
    %v2273 = vor.u32 %v2269, %v2272
    %v2274 = vsel %vm2041, %v2264, %v2273
    %v2276 = vshrl.u32 %v1867, 16
    %v2278 = vrot.slane %v2276, 1
    %v2279 = vshll.u32 %v1867, 16
    %v2281 = vrot.slane %v2279, 2
    %v2282 = vor.u32 %v2278, %v2281
    %v2283 = vsel %vm2041, %v2273, %v2282
    %v2285 = vshrl.u32 %v1868, 16
    %v2287 = vrot.slane %v2285, 1
    %v2288 = vshll.u32 %v1868, 16
    %v2290 = vrot.slane %v2288, 2
    %v2291 = vor.u32 %v2287, %v2290
    %v2292 = vsel %vm2041, %v2282, %v2291
    %v2294 = vshrl.u32 %v1869, 16
    %v2296 = vrot.slane %v2294, 1
    %v2297 = vshll.u32 %v1869, 16
    %v2299 = vrot.slane %v2297, 2
    %v2300 = vor.u32 %v2296, %v2299
    %v2301 = vsel %vm2041, %v2291, %v2300
    %v2303 = vshrl.u32 %v1870, 16
    %v2305 = vrot.slane %v2303, 1
    %v2306 = vshll.u32 %v1870, 16
    %v2308 = vrot.slane %v2306, 2
    %v2309 = vor.u32 %v2305, %v2308
    %v2310 = vsel %vm2041, %v2300, %v2309
    %v2312 = vshrl.u32 %v1871, 16
    %v2314 = vrot.slane %v2312, 1
    %v2315 = vshll.u32 %v1871, 16
    %v2317 = vrot.slane %v2315, 2
    %v2318 = vor.u32 %v2314, %v2317
    %v2319 = vsel %vm2041, %v2309, %v2318
    %v2321 = vshrl.u32 %v1872, 16
    %v2323 = vrot.slane %v2321, 1
    %v2324 = vshll.u32 %v1872, 16
    %v2326 = vrot.slane %v2324, 2
    %v2327 = vor.u32 %v2323, %v2326
    %v2328 = vsel %vm2041, %v2318, %v2327
    %v2330 = vshrl.u32 %v1873, 16
    %v2332 = vrot.slane %v2330, 1
    %v2333 = vshll.u32 %v1873, 16
    %v2335 = vrot.slane %v2333, 2
    %v2336 = vor.u32 %v2332, %v2335
    %v2337 = vsel %vm2041, %v2327, %v2336
    %v2339 = vshrl.u32 %v1874, 16
    %v2341 = vrot.slane %v2339, 1
    %v2342 = vshll.u32 %v1874, 16
    %v2344 = vrot.slane %v2342, 2
    %v2345 = vor.u32 %v2341, %v2344
    %v2346 = vsel %vm2041, %v2336, %v2345
    %v2348 = vshrl.u32 %v1875, 16
    %v2350 = vrot.slane %v2348, 1
    %v2351 = vshll.u32 %v1875, 16
    %v2353 = vrot.slane %v2351, 2
    %v2354 = vor.u32 %v2350, %v2353
    %v2355 = vsel %vm2041, %v2345, %v2354
    %v2357 = vshrl.u32 %v1876, 16
    %v2359 = vrot.slane %v2357, 1
    %v2360 = vshll.u32 %v1876, 16
    %v2362 = vrot.slane %v2360, 2
    %v2363 = vor.u32 %v2359, %v2362
    %v2364 = vsel %vm2041, %v2354, %v2363
    %v2366 = vshrl.u32 %v1877, 16
    %v2368 = vrot.slane %v2366, 1
    %v2369 = vshll.u32 %v1877, 16
    %v2371 = vrot.slane %v2369, 2
    %v2372 = vor.u32 %v2368, %v2371
    %v2373 = vsel %vm2041, %v2363, %v2372
    %v2375 = vshrl.u32 %v1878, 16
    %v2377 = vrot.slane %v2375, 1
    %v2378 = vshll.u32 %v1878, 16
    %v2380 = vrot.slane %v2378, 2
    %v2381 = vor.u32 %v2377, %v2380
    %v2382 = vsel %vm2041, %v2372, %v2381
    %v2384 = vshrl.u32 %v1879, 16
    %v2386 = vrot.slane %v2384, 1
    %v2387 = vshll.u32 %v1879, 16
    %v2389 = vrot.slane %v2387, 2
    %v2390 = vor.u32 %v2386, %v2389
    %v2391 = vsel %vm2041, %v2381, %v2390
    %v2393 = vshrl.u32 %v2040, 16
    %v2395 = vrot.slane %v2393, 1
    %v2396 = vshll.u32 %v2040, 16
    %v2398 = vrot.slane %v2396, 2
    %v2399 = vor.u32 %v2395, %v2398
    %v2400 = vsel %vm2041, %v2390, %v2399
    %v2402 = vunpack.c.l.b16 %v1069
    %v2403 = vpack.c.b16 %v1159, %v2402
    %vm2404 = vcmask 1045504
    %v2405 = vrot.slane %v2403, 2
    %v2406 = vrot.slane %v1842, 2
    %v2407 = vsel %vm2404, %v2405, %v2406
    %v2408 = vrot.slane %v1843, 2
    %v2409 = vsel %vm2404, %v2406, %v2408
    %v2410 = vrot.slane %v1844, 2
    %v2411 = vsel %vm2404, %v2408, %v2410
    %v2412 = vrot.slane %v1845, 2
    %v2413 = vsel %vm2404, %v2410, %v2412
    %v2414 = vrot.slane %v1846, 2
    %v2415 = vsel %vm2404, %v2412, %v2414
    %v2416 = vrot.slane %v1847, 2
    %v2417 = vsel %vm2404, %v2414, %v2416
    %v2418 = vrot.slane %v1848, 2
    %v2419 = vsel %vm2404, %v2416, %v2418
    %v2420 = vrot.slane %v1849, 2
    %v2421 = vsel %vm2404, %v2418, %v2420
    %v2422 = vrot.slane %v1850, 2
    %v2423 = vsel %vm2404, %v2420, %v2422
    %v2424 = vrot.slane %v1851, 2
    %v2425 = vsel %vm2404, %v2422, %v2424
    %v2426 = vrot.slane %v1852, 2
    %v2427 = vsel %vm2404, %v2424, %v2426
    %v2428 = vrot.slane %v1853, 2
    %v2429 = vsel %vm2404, %v2426, %v2428
    %v2430 = vrot.slane %v1854, 2
    %v2431 = vsel %vm2404, %v2428, %v2430
    %v2432 = vrot.slane %v1855, 2
    %v2433 = vsel %vm2404, %v2430, %v2432
    %v2434 = vrot.slane %v1856, 2
    %v2435 = vsel %vm2404, %v2432, %v2434
    %v2436 = vrot.slane %v1857, 2
    %v2437 = vsel %vm2404, %v2434, %v2436
    %v2438 = vrot.slane %v1858, 2
    %v2439 = vsel %vm2404, %v2436, %v2438
    %v2440 = vrot.slane %v1859, 2
    %v2441 = vsel %vm2404, %v2438, %v2440
    %v2442 = vrot.slane %v1860, 2
    %v2443 = vsel %vm2404, %v2440, %v2442
    %v2444 = vrot.slane %v1861, 2
    %v2445 = vsel %vm2404, %v2442, %v2444
    %v2446 = vrot.slane %v1862, 2
    %v2447 = vsel %vm2404, %v2444, %v2446
    %v2448 = vrot.slane %v1863, 2
    %v2449 = vsel %vm2404, %v2446, %v2448
    %v2450 = vrot.slane %v1864, 2
    %v2451 = vsel %vm2404, %v2448, %v2450
    %v2452 = vrot.slane %v1865, 2
    %v2453 = vsel %vm2404, %v2450, %v2452
    %v2454 = vrot.slane %v1866, 2
    %v2455 = vsel %vm2404, %v2452, %v2454
    %v2456 = vrot.slane %v1867, 2
    %v2457 = vsel %vm2404, %v2454, %v2456
    %v2458 = vrot.slane %v1868, 2
    %v2459 = vsel %vm2404, %v2456, %v2458
    %v2460 = vrot.slane %v1869, 2
    %v2461 = vsel %vm2404, %v2458, %v2460
    %v2462 = vrot.slane %v1870, 2
    %v2463 = vsel %vm2404, %v2460, %v2462
    %v2464 = vrot.slane %v1871, 2
    %v2465 = vsel %vm2404, %v2462, %v2464
    %v2466 = vrot.slane %v1872, 2
    %v2467 = vsel %vm2404, %v2464, %v2466
    %v2468 = vrot.slane %v1873, 2
    %v2469 = vsel %vm2404, %v2466, %v2468
    %v2470 = vrot.slane %v1874, 2
    %v2471 = vsel %vm2404, %v2468, %v2470
    %v2472 = vrot.slane %v1875, 2
    %v2473 = vsel %vm2404, %v2470, %v2472
    %v2474 = vrot.slane %v1876, 2
    %v2475 = vsel %vm2404, %v2472, %v2474
    %v2476 = vrot.slane %v1877, 2
    %v2477 = vsel %vm2404, %v2474, %v2476
    %v2478 = vrot.slane %v1878, 2
    %v2479 = vsel %vm2404, %v2476, %v2478
    %v2480 = vrot.slane %v1879, 2
    %v2481 = vsel %vm2404, %v2478, %v2480
    %v2482 = vrot.slane %v2040, 2
    %v2483 = vsel %vm2404, %v2480, %v2482
    %2484 = vrot.lane.b32.xlu0 %v2407, 32
    %v2485 = vpop.permute.xlu0 %2484
    %2486 = vrot.lane.b32.xlu0 %v2409, 32
    %v2487 = vpop.permute.xlu0 %2486
    %2488 = vrot.lane.b32.xlu0 %v2411, 32
    %v2489 = vpop.permute.xlu0 %2488
    %2490 = vrot.lane.b32.xlu0 %v2413, 32
    %v2491 = vpop.permute.xlu0 %2490
    %2492 = vrot.lane.b32.xlu0 %v2415, 32
    %v2493 = vpop.permute.xlu0 %2492
    %2494 = vrot.lane.b32.xlu0 %v2417, 32
    %v2495 = vpop.permute.xlu0 %2494
    %2496 = vrot.lane.b32.xlu0 %v2419, 32
    %v2497 = vpop.permute.xlu0 %2496
    %2498 = vrot.lane.b32.xlu0 %v2421, 32
    %v2499 = vpop.permute.xlu0 %2498
    %2500 = vrot.lane.b32.xlu0 %v2423, 32
    %v2501 = vpop.permute.xlu0 %2500
    %2502 = vrot.lane.b32.xlu0 %v2425, 32
    %v2503 = vpop.permute.xlu0 %2502
    %2504 = vrot.lane.b32.xlu0 %v2427, 32
    %v2505 = vpop.permute.xlu0 %2504
    %2506 = vrot.lane.b32.xlu0 %v2429, 32
    %v2507 = vpop.permute.xlu0 %2506
    %2508 = vrot.lane.b32.xlu0 %v2431, 32
    %v2509 = vpop.permute.xlu0 %2508
    %2510 = vrot.lane.b32.xlu0 %v2433, 32
    %v2511 = vpop.permute.xlu0 %2510
    %2512 = vrot.lane.b32.xlu0 %v2435, 32
    %v2513 = vpop.permute.xlu0 %2512
    %2514 = vrot.lane.b32.xlu0 %v2437, 32
    %v2515 = vpop.permute.xlu0 %2514
    %2516 = vrot.lane.b32.xlu0 %v2439, 32
    %v2517 = vpop.permute.xlu0 %2516
    %2518 = vrot.lane.b32.xlu0 %v2441, 32
    %v2519 = vpop.permute.xlu0 %2518
    %2520 = vrot.lane.b32.xlu0 %v2443, 32
    %v2521 = vpop.permute.xlu0 %2520
    %2522 = vrot.lane.b32.xlu0 %v2445, 32
    %v2523 = vpop.permute.xlu0 %2522
    %2524 = vrot.lane.b32.xlu0 %v2447, 32
    %v2525 = vpop.permute.xlu0 %2524
    %2526 = vrot.lane.b32.xlu0 %v2449, 32
    %v2527 = vpop.permute.xlu0 %2526
    %2528 = vrot.lane.b32.xlu0 %v2451, 32
    %v2529 = vpop.permute.xlu0 %2528
    %2530 = vrot.lane.b32.xlu0 %v2453, 32
    %v2531 = vpop.permute.xlu0 %2530
    %2532 = vrot.lane.b32.xlu0 %v2455, 32
    %v2533 = vpop.permute.xlu0 %2532
    %2534 = vrot.lane.b32.xlu0 %v2457, 32
    %v2535 = vpop.permute.xlu0 %2534
    %2536 = vrot.lane.b32.xlu0 %v2459, 32
    %v2537 = vpop.permute.xlu0 %2536
    %2538 = vrot.lane.b32.xlu0 %v2461, 32
    %v2539 = vpop.permute.xlu0 %2538
    %2540 = vrot.lane.b32.xlu0 %v2463, 32
    %v2541 = vpop.permute.xlu0 %2540
    %2542 = vrot.lane.b32.xlu0 %v2465, 32
    %v2543 = vpop.permute.xlu0 %2542
    %2544 = vrot.lane.b32.xlu0 %v2467, 32
    %v2545 = vpop.permute.xlu0 %2544
    %2546 = vrot.lane.b32.xlu0 %v2469, 32
    %v2547 = vpop.permute.xlu0 %2546
    %2548 = vrot.lane.b32.xlu0 %v2471, 32
    %v2549 = vpop.permute.xlu0 %2548
    %2550 = vrot.lane.b32.xlu0 %v2473, 32
    %v2551 = vpop.permute.xlu0 %2550
    %2552 = vrot.lane.b32.xlu0 %v2475, 32
    %v2553 = vpop.permute.xlu0 %2552
    %2554 = vrot.lane.b32.xlu0 %v2477, 32
    %v2555 = vpop.permute.xlu0 %2554
    %2556 = vrot.lane.b32.xlu0 %v2479, 32
    %v2557 = vpop.permute.xlu0 %2556
    %2558 = vrot.lane.b32.xlu0 %v2481, 32
    %v2559 = vpop.permute.xlu0 %2558
    %2560 = vrot.lane.b32.xlu0 %v2483, 32
    %v2561 = vpop.permute.xlu0 %2560
    %v2567 = vunpack.c.l.b16 %v1070
    %v2568 = vunpack.c.l.b16 %v1071
    %v2569 = vunpack.c.l.b16 %v1072
    %v2570 = vunpack.c.l.b16 %v1073
    %v2571 = vunpack.c.l.b16 %v1074
    %v2572 = vpack.c.b16 %v1162, %v2567
    %v2573 = vpack.c.b16 %v1838, %v1837
    %v2574 = vpack.c.b16 %v2568, %v1839
    %v2575 = vpack.c.b16 %v2570, %v2569
    %v2576 = vpack.c.b16 %v2571, %v2571
    %v2577 = vrot.slane %v2572, 2
    %v2578 = vrot.slane %v1237, 2
    %v2579 = vsel %vm2404, %v2577, %v2578
    %v2580 = vrot.slane %v1238, 2
    %v2581 = vsel %vm2404, %v2578, %v2580
    %v2582 = vrot.slane %v1239, 2
    %v2583 = vsel %vm2404, %v2580, %v2582
    %v2584 = vrot.slane %v1240, 2
    %v2585 = vsel %vm2404, %v2582, %v2584
    %v2586 = vrot.slane %v1241, 2
    %v2587 = vsel %vm2404, %v2584, %v2586
    %v2588 = vrot.slane %v1242, 2
    %v2589 = vsel %vm2404, %v2586, %v2588
    %v2590 = vrot.slane %v1243, 2
    %v2591 = vsel %vm2404, %v2588, %v2590
    %v2592 = vrot.slane %v1244, 2
    %v2593 = vsel %vm2404, %v2590, %v2592
    %v2594 = vrot.slane %v1245, 2
    %v2595 = vsel %vm2404, %v2592, %v2594
    %v2596 = vrot.slane %v1246, 2
    %v2597 = vsel %vm2404, %v2594, %v2596
    %v2598 = vrot.slane %v1247, 2
    %v2599 = vsel %vm2404, %v2596, %v2598
    %v2600 = vrot.slane %v1248, 2
    %v2601 = vsel %vm2404, %v2598, %v2600
    %v2602 = vrot.slane %v1249, 2
    %v2603 = vsel %vm2404, %v2600, %v2602
    %v2604 = vrot.slane %v1250, 2
    %v2605 = vsel %vm2404, %v2602, %v2604
    %v2606 = vrot.slane %v1251, 2
    %v2607 = vsel %vm2404, %v2604, %v2606
    %v2608 = vrot.slane %v1252, 2
    %v2609 = vsel %vm2404, %v2606, %v2608
    %v2610 = vrot.slane %v1253, 2
    %v2611 = vsel %vm2404, %v2608, %v2610
    %v2612 = vrot.slane %v1254, 2
    %v2613 = vsel %vm2404, %v2610, %v2612
    %v2614 = vrot.slane %v1255, 2
    %v2615 = vsel %vm2404, %v2612, %v2614
    %v2616 = vrot.slane %v1256, 2
    %v2617 = vsel %vm2404, %v2614, %v2616
    %v2618 = vrot.slane %v1257, 2
    %v2619 = vsel %vm2404, %v2616, %v2618
    %v2620 = vrot.slane %v1258, 2
    %v2621 = vsel %vm2404, %v2618, %v2620
    %v2622 = vrot.slane %v1259, 2
    %v2623 = vsel %vm2404, %v2620, %v2622
    %v2624 = vrot.slane %v1260, 2
    %v2625 = vsel %vm2404, %v2622, %v2624
    %v2626 = vrot.slane %v1261, 2
    %v2627 = vsel %vm2404, %v2624, %v2626
    %v2628 = vrot.slane %v1262, 2
    %v2629 = vsel %vm2404, %v2626, %v2628
    %v2630 = vrot.slane %v1263, 2
    %v2631 = vsel %vm2404, %v2628, %v2630
    %v2632 = vrot.slane %v1264, 2
    %v2633 = vsel %vm2404, %v2630, %v2632
    %v2634 = vrot.slane %v1265, 2
    %v2635 = vsel %vm2404, %v2632, %v2634
    %v2636 = vrot.slane %v1266, 2
    %v2637 = vsel %vm2404, %v2634, %v2636
    %v2638 = vrot.slane %v1267, 2
    %v2639 = vsel %vm2404, %v2636, %v2638
    %v2640 = vrot.slane %v1268, 2
    %v2641 = vsel %vm2404, %v2638, %v2640
    %v2642 = vrot.slane %v1269, 2
    %v2643 = vsel %vm2404, %v2640, %v2642
    %v2644 = vrot.slane %v1270, 2
    %v2645 = vsel %vm2404, %v2642, %v2644
    %v2646 = vrot.slane %v1271, 2
    %v2647 = vsel %vm2404, %v2644, %v2646
    %v2648 = vrot.slane %v2573, 2
    %v2649 = vsel %vm2404, %v2646, %v2648
    %v2650 = vrot.slane %v2574, 2
    %v2651 = vsel %vm2404, %v2648, %v2650
    %v2652 = vrot.slane %v2575, 2
    %v2653 = vsel %vm2404, %v2650, %v2652
    %v2654 = vrot.slane %v2576, 2
    %v2655 = vsel %vm2404, %v2652, %v2654
    %2656 = vrot.lane.b32.xlu0 %v2579, 64
    %v2657 = vpop.permute.xlu0 %2656
    %2658 = vrot.lane.b32.xlu0 %v2581, 64
    %v2659 = vpop.permute.xlu0 %2658
    %2660 = vrot.lane.b32.xlu0 %v2583, 64
    %v2661 = vpop.permute.xlu0 %2660
    %2662 = vrot.lane.b32.xlu0 %v2585, 64
    %v2663 = vpop.permute.xlu0 %2662
    %2664 = vrot.lane.b32.xlu0 %v2587, 64
    %v2665 = vpop.permute.xlu0 %2664
    %2666 = vrot.lane.b32.xlu0 %v2589, 64
    %v2667 = vpop.permute.xlu0 %2666
    %2668 = vrot.lane.b32.xlu0 %v2591, 64
    %v2669 = vpop.permute.xlu0 %2668
    %2670 = vrot.lane.b32.xlu0 %v2593, 64
    %v2671 = vpop.permute.xlu0 %2670
    %2672 = vrot.lane.b32.xlu0 %v2595, 64
    %v2673 = vpop.permute.xlu0 %2672
    %2674 = vrot.lane.b32.xlu0 %v2597, 64
    %v2675 = vpop.permute.xlu0 %2674
    %2676 = vrot.lane.b32.xlu0 %v2599, 64
    %v2677 = vpop.permute.xlu0 %2676
    %2678 = vrot.lane.b32.xlu0 %v2601, 64
    %v2679 = vpop.permute.xlu0 %2678
    %2680 = vrot.lane.b32.xlu0 %v2603, 64
    %v2681 = vpop.permute.xlu0 %2680
    %2682 = vrot.lane.b32.xlu0 %v2605, 64
    %v2683 = vpop.permute.xlu0 %2682
    %2684 = vrot.lane.b32.xlu0 %v2607, 64
    %v2685 = vpop.permute.xlu0 %2684
    %2686 = vrot.lane.b32.xlu0 %v2609, 64
    %v2687 = vpop.permute.xlu0 %2686
    %2688 = vrot.lane.b32.xlu0 %v2611, 64
    %v2689 = vpop.permute.xlu0 %2688
    %2690 = vrot.lane.b32.xlu0 %v2613, 64
    %v2691 = vpop.permute.xlu0 %2690
    %2692 = vrot.lane.b32.xlu0 %v2615, 64
    %v2693 = vpop.permute.xlu0 %2692
    %2694 = vrot.lane.b32.xlu0 %v2617, 64
    %v2695 = vpop.permute.xlu0 %2694
    %2696 = vrot.lane.b32.xlu0 %v2619, 64
    %v2697 = vpop.permute.xlu0 %2696
    %2698 = vrot.lane.b32.xlu0 %v2621, 64
    %v2699 = vpop.permute.xlu0 %2698
    %2700 = vrot.lane.b32.xlu0 %v2623, 64
    %v2701 = vpop.permute.xlu0 %2700
    %2702 = vrot.lane.b32.xlu0 %v2625, 64
    %v2703 = vpop.permute.xlu0 %2702
    %2704 = vrot.lane.b32.xlu0 %v2627, 64
    %v2705 = vpop.permute.xlu0 %2704
    %2706 = vrot.lane.b32.xlu0 %v2629, 64
    %v2707 = vpop.permute.xlu0 %2706
    %2708 = vrot.lane.b32.xlu0 %v2631, 64
    %v2709 = vpop.permute.xlu0 %2708
    %2710 = vrot.lane.b32.xlu0 %v2633, 64
    %v2711 = vpop.permute.xlu0 %2710
    %2712 = vrot.lane.b32.xlu0 %v2635, 64
    %v2713 = vpop.permute.xlu0 %2712
    %2714 = vrot.lane.b32.xlu0 %v2637, 64
    %v2715 = vpop.permute.xlu0 %2714
    %2716 = vrot.lane.b32.xlu0 %v2639, 64
    %v2717 = vpop.permute.xlu0 %2716
    %2718 = vrot.lane.b32.xlu0 %v2641, 64
    %v2719 = vpop.permute.xlu0 %2718
    %2720 = vrot.lane.b32.xlu0 %v2643, 64
    %v2721 = vpop.permute.xlu0 %2720
    %2722 = vrot.lane.b32.xlu0 %v2645, 64
    %v2723 = vpop.permute.xlu0 %2722
    %2724 = vrot.lane.b32.xlu0 %v2647, 64
    %v2725 = vpop.permute.xlu0 %2724
    %2726 = vrot.lane.b32.xlu0 %v2649, 64
    %v2727 = vpop.permute.xlu0 %2726
    %2728 = vrot.lane.b32.xlu0 %v2651, 64
    %v2729 = vpop.permute.xlu0 %2728
    %2730 = vrot.lane.b32.xlu0 %v2653, 64
    %v2731 = vpop.permute.xlu0 %2730
    %2732 = vrot.lane.b32.xlu0 %v2655, 64
    %v2733 = vpop.permute.xlu0 %2732
    %v2735 = vunpack.c.l.b16 %v1075
    %v2736 = vpack.c.b16 %v2735, %v2735
    %vm2737 = vsmask.f32 5376
    %v2739 = vshrl.u32 %v2572, 16
    %v2741 = vrot.slane %v2739, 2
    %v2742 = vshll.u32 %v2572, 16
    %v2744 = vrot.slane %v2742, 3
    %v2745 = vor.u32 %v2741, %v2744
    %v2746 = vrot.slane %v1312, 2
    %v2747 = vrot.slane %v1308, 3
    %v2748 = vor.u32 %v2746, %v2747
    %v2749 = vsel %vm2737, %v2745, %v2748
    %v2750 = vrot.slane %v1320, 2
    %v2751 = vrot.slane %v1316, 3
    %v2752 = vor.u32 %v2750, %v2751
    %v2753 = vsel %vm2737, %v2748, %v2752
    %v2754 = vrot.slane %v1328, 2
    %v2755 = vrot.slane %v1324, 3
    %v2756 = vor.u32 %v2754, %v2755
    %v2757 = vsel %vm2737, %v2752, %v2756
    %v2758 = vrot.slane %v1336, 2
    %v2759 = vrot.slane %v1332, 3
    %v2760 = vor.u32 %v2758, %v2759
    %v2761 = vsel %vm2737, %v2756, %v2760
    %v2762 = vrot.slane %v1344, 2
    %v2763 = vrot.slane %v1340, 3
    %v2764 = vor.u32 %v2762, %v2763
    %v2765 = vsel %vm2737, %v2760, %v2764
    %v2766 = vrot.slane %v1352, 2
    %v2767 = vrot.slane %v1348, 3
    %v2768 = vor.u32 %v2766, %v2767
    %v2769 = vsel %vm2737, %v2764, %v2768
    %v2770 = vrot.slane %v1360, 2
    %v2771 = vrot.slane %v1356, 3
    %v2772 = vor.u32 %v2770, %v2771
    %v2773 = vsel %vm2737, %v2768, %v2772
    %v2774 = vrot.slane %v1368, 2
    %v2775 = vrot.slane %v1364, 3
    %v2776 = vor.u32 %v2774, %v2775
    %v2777 = vsel %vm2737, %v2772, %v2776
    %v2778 = vrot.slane %v1376, 2
    %v2779 = vrot.slane %v1372, 3
    %v2780 = vor.u32 %v2778, %v2779
    %v2781 = vsel %vm2737, %v2776, %v2780
    %v2782 = vrot.slane %v1384, 2
    %v2783 = vrot.slane %v1380, 3
    %v2784 = vor.u32 %v2782, %v2783
    %v2785 = vsel %vm2737, %v2780, %v2784
    %v2786 = vrot.slane %v1392, 2
    %v2787 = vrot.slane %v1388, 3
    %v2788 = vor.u32 %v2786, %v2787
    %v2789 = vsel %vm2737, %v2784, %v2788
    %v2790 = vrot.slane %v1400, 2
    %v2791 = vrot.slane %v1396, 3
    %v2792 = vor.u32 %v2790, %v2791
    %v2793 = vsel %vm2737, %v2788, %v2792
    %v2794 = vrot.slane %v1408, 2
    %v2795 = vrot.slane %v1404, 3
    %v2796 = vor.u32 %v2794, %v2795
    %v2797 = vsel %vm2737, %v2792, %v2796
    %v2798 = vrot.slane %v1416, 2
    %v2799 = vrot.slane %v1412, 3
    %v2800 = vor.u32 %v2798, %v2799
    %v2801 = vsel %vm2737, %v2796, %v2800
    %v2802 = vrot.slane %v1424, 2
    %v2803 = vrot.slane %v1420, 3
    %v2804 = vor.u32 %v2802, %v2803
    %v2805 = vsel %vm2737, %v2800, %v2804
    %v2806 = vrot.slane %v1432, 2
    %v2807 = vrot.slane %v1428, 3
    %v2808 = vor.u32 %v2806, %v2807
    %v2809 = vsel %vm2737, %v2804, %v2808
    %v2810 = vrot.slane %v1440, 2
    %v2811 = vrot.slane %v1436, 3
    %v2812 = vor.u32 %v2810, %v2811
    %v2813 = vsel %vm2737, %v2808, %v2812
    %v2814 = vrot.slane %v1448, 2
    %v2815 = vrot.slane %v1444, 3
    %v2816 = vor.u32 %v2814, %v2815
    %v2817 = vsel %vm2737, %v2812, %v2816
    %v2818 = vrot.slane %v1456, 2
    %v2819 = vrot.slane %v1452, 3
    %v2820 = vor.u32 %v2818, %v2819
    %v2821 = vsel %vm2737, %v2816, %v2820
    %v2822 = vrot.slane %v1464, 2
    %v2823 = vrot.slane %v1460, 3
    %v2824 = vor.u32 %v2822, %v2823
    %v2825 = vsel %vm2737, %v2820, %v2824
    %v2826 = vrot.slane %v1472, 2
    %v2827 = vrot.slane %v1468, 3
    %v2828 = vor.u32 %v2826, %v2827
    %v2829 = vsel %vm2737, %v2824, %v2828
    %v2830 = vrot.slane %v1480, 2
    %v2831 = vrot.slane %v1476, 3
    %v2832 = vor.u32 %v2830, %v2831
    %v2833 = vsel %vm2737, %v2828, %v2832
    %v2834 = vrot.slane %v1488, 2
    %v2835 = vrot.slane %v1484, 3
    %v2836 = vor.u32 %v2834, %v2835
    %v2837 = vsel %vm2737, %v2832, %v2836
    %v2838 = vrot.slane %v1496, 2
    %v2839 = vrot.slane %v1492, 3
    %v2840 = vor.u32 %v2838, %v2839
    %v2841 = vsel %vm2737, %v2836, %v2840
    %v2842 = vrot.slane %v1504, 2
    %v2843 = vrot.slane %v1500, 3
    %v2844 = vor.u32 %v2842, %v2843
    %v2845 = vsel %vm2737, %v2840, %v2844
    %v2846 = vrot.slane %v1512, 2
    %v2847 = vrot.slane %v1508, 3
    %v2848 = vor.u32 %v2846, %v2847
    %v2849 = vsel %vm2737, %v2844, %v2848
    %v2850 = vrot.slane %v1520, 2
    %v2851 = vrot.slane %v1516, 3
    %v2852 = vor.u32 %v2850, %v2851
    %v2853 = vsel %vm2737, %v2848, %v2852
    %v2854 = vrot.slane %v1528, 2
    %v2855 = vrot.slane %v1524, 3
    %v2856 = vor.u32 %v2854, %v2855
    %v2857 = vsel %vm2737, %v2852, %v2856
    %v2858 = vrot.slane %v1536, 2
    %v2859 = vrot.slane %v1532, 3
    %v2860 = vor.u32 %v2858, %v2859
    %v2861 = vsel %vm2737, %v2856, %v2860
    %v2862 = vrot.slane %v1544, 2
    %v2863 = vrot.slane %v1540, 3
    %v2864 = vor.u32 %v2862, %v2863
    %v2865 = vsel %vm2737, %v2860, %v2864
    %v2866 = vrot.slane %v1552, 2
    %v2867 = vrot.slane %v1548, 3
    %v2868 = vor.u32 %v2866, %v2867
    %v2869 = vsel %vm2737, %v2864, %v2868
    %v2870 = vrot.slane %v1560, 2
    %v2871 = vrot.slane %v1556, 3
    %v2872 = vor.u32 %v2870, %v2871
    %v2873 = vsel %vm2737, %v2868, %v2872
    %v2874 = vrot.slane %v1568, 2
    %v2875 = vrot.slane %v1564, 3
    %v2876 = vor.u32 %v2874, %v2875
    %v2877 = vsel %vm2737, %v2872, %v2876
    %v2878 = vrot.slane %v1576, 2
    %v2879 = vrot.slane %v1572, 3
    %v2880 = vor.u32 %v2878, %v2879
    %v2881 = vsel %vm2737, %v2876, %v2880
    %v2882 = vrot.slane %v1584, 2
    %v2883 = vrot.slane %v1580, 3
    %v2884 = vor.u32 %v2882, %v2883
    %v2885 = vsel %vm2737, %v2880, %v2884
    %v2887 = vshrl.u32 %v2573, 16
    %v2889 = vrot.slane %v2887, 2
    %v2890 = vshll.u32 %v2573, 16
    %v2892 = vrot.slane %v2890, 3
    %v2893 = vor.u32 %v2889, %v2892
    %v2894 = vsel %vm2737, %v2884, %v2893
    %v2896 = vshrl.u32 %v2574, 16
    %v2898 = vrot.slane %v2896, 2
    %v2899 = vshll.u32 %v2574, 16
    %v2901 = vrot.slane %v2899, 3
    %v2902 = vor.u32 %v2898, %v2901
    %v2903 = vsel %vm2737, %v2893, %v2902
    %v2905 = vshrl.u32 %v2575, 16
    %v2907 = vrot.slane %v2905, 2
    %v2908 = vshll.u32 %v2575, 16
    %v2910 = vrot.slane %v2908, 3
    %v2911 = vor.u32 %v2907, %v2910
    %v2912 = vsel %vm2737, %v2902, %v2911
    %v2914 = vshrl.u32 %v2736, 16
    %v2916 = vrot.slane %v2914, 2
    %v2917 = vshll.u32 %v2736, 16
    %v2919 = vrot.slane %v2917, 3
    %v2920 = vor.u32 %v2916, %v2919
    %v2921 = vsel %vm2737, %v2911, %v2920
    %2922 = vrot.lane.b32.xlu0 %v2749, 96
    %v2923 = vpop.permute.xlu0 %2922
    %2924 = vrot.lane.b32.xlu0 %v2753, 96
    %v2925 = vpop.permute.xlu0 %2924
    %2926 = vrot.lane.b32.xlu0 %v2757, 96
    %v2927 = vpop.permute.xlu0 %2926
    %2928 = vrot.lane.b32.xlu0 %v2761, 96
    %v2929 = vpop.permute.xlu0 %2928
    %2930 = vrot.lane.b32.xlu0 %v2765, 96
    %v2931 = vpop.permute.xlu0 %2930
    %2932 = vrot.lane.b32.xlu0 %v2769, 96
    %v2933 = vpop.permute.xlu0 %2932
    %2934 = vrot.lane.b32.xlu0 %v2773, 96
    %v2935 = vpop.permute.xlu0 %2934
    %2936 = vrot.lane.b32.xlu0 %v2777, 96
    %v2937 = vpop.permute.xlu0 %2936
    %2938 = vrot.lane.b32.xlu0 %v2781, 96
    %v2939 = vpop.permute.xlu0 %2938
    %2940 = vrot.lane.b32.xlu0 %v2785, 96
    %v2941 = vpop.permute.xlu0 %2940
    %2942 = vrot.lane.b32.xlu0 %v2789, 96
    %v2943 = vpop.permute.xlu0 %2942
    %2944 = vrot.lane.b32.xlu0 %v2793, 96
    %v2945 = vpop.permute.xlu0 %2944
    %2946 = vrot.lane.b32.xlu0 %v2797, 96
    %v2947 = vpop.permute.xlu0 %2946
    %2948 = vrot.lane.b32.xlu0 %v2801, 96
    %v2949 = vpop.permute.xlu0 %2948
    %2950 = vrot.lane.b32.xlu0 %v2805, 96
    %v2951 = vpop.permute.xlu0 %2950
    %2952 = vrot.lane.b32.xlu0 %v2809, 96
    %v2953 = vpop.permute.xlu0 %2952
    %2954 = vrot.lane.b32.xlu0 %v2813, 96
    %v2955 = vpop.permute.xlu0 %2954
    %2956 = vrot.lane.b32.xlu0 %v2817, 96
    %v2957 = vpop.permute.xlu0 %2956
    %2958 = vrot.lane.b32.xlu0 %v2821, 96
    %v2959 = vpop.permute.xlu0 %2958
    %2960 = vrot.lane.b32.xlu0 %v2825, 96
    %v2961 = vpop.permute.xlu0 %2960
    %2962 = vrot.lane.b32.xlu0 %v2829, 96
    %v2963 = vpop.permute.xlu0 %2962
    %2964 = vrot.lane.b32.xlu0 %v2833, 96
    %v2965 = vpop.permute.xlu0 %2964
    %2966 = vrot.lane.b32.xlu0 %v2837, 96
    %v2967 = vpop.permute.xlu0 %2966
    %2968 = vrot.lane.b32.xlu0 %v2841, 96
    %v2969 = vpop.permute.xlu0 %2968
    %2970 = vrot.lane.b32.xlu0 %v2845, 96
    %v2971 = vpop.permute.xlu0 %2970
    %2972 = vrot.lane.b32.xlu0 %v2849, 96
    %v2973 = vpop.permute.xlu0 %2972
    %2974 = vrot.lane.b32.xlu0 %v2853, 96
    %v2975 = vpop.permute.xlu0 %2974
    %2976 = vrot.lane.b32.xlu0 %v2857, 96
    %v2977 = vpop.permute.xlu0 %2976
    %2978 = vrot.lane.b32.xlu0 %v2861, 96
    %v2979 = vpop.permute.xlu0 %2978
    %2980 = vrot.lane.b32.xlu0 %v2865, 96
    %v2981 = vpop.permute.xlu0 %2980
    %2982 = vrot.lane.b32.xlu0 %v2869, 96
    %v2983 = vpop.permute.xlu0 %2982
    %2984 = vrot.lane.b32.xlu0 %v2873, 96
    %v2985 = vpop.permute.xlu0 %2984
    %2986 = vrot.lane.b32.xlu0 %v2877, 96
    %v2987 = vpop.permute.xlu0 %2986
    %2988 = vrot.lane.b32.xlu0 %v2881, 96
    %v2989 = vpop.permute.xlu0 %2988
    %2990 = vrot.lane.b32.xlu0 %v2885, 96
    %v2991 = vpop.permute.xlu0 %2990
    %2992 = vrot.lane.b32.xlu0 %v2894, 96
    %v2993 = vpop.permute.xlu0 %2992
    %2994 = vrot.lane.b32.xlu0 %v2903, 96
    %v2995 = vpop.permute.xlu0 %2994
    %2996 = vrot.lane.b32.xlu0 %v2912, 96
    %v2997 = vpop.permute.xlu0 %2996
    %2998 = vrot.lane.b32.xlu0 %v2921, 96
    %v2999 = vpop.permute.xlu0 %2998
    %v3001 = vunpack.c.l.b16 %v1076
    %v3002 = vpack.c.b16 %v1162, %v3001
    %vm3003 = vcmask 1044480
    %v3004 = vrot.slane %v3002, 3
    %v3005 = vrot.slane %v1237, 3
    %v3006 = vsel %vm3003, %v3004, %v3005
    %v3007 = vrot.slane %v1238, 3
    %v3008 = vsel %vm3003, %v3005, %v3007
    %v3009 = vrot.slane %v1239, 3
    %v3010 = vsel %vm3003, %v3007, %v3009
    %v3011 = vrot.slane %v1240, 3
    %v3012 = vsel %vm3003, %v3009, %v3011
    %v3013 = vrot.slane %v1241, 3
    %v3014 = vsel %vm3003, %v3011, %v3013
    %v3015 = vrot.slane %v1242, 3
    %v3016 = vsel %vm3003, %v3013, %v3015
    %v3017 = vrot.slane %v1243, 3
    %v3018 = vsel %vm3003, %v3015, %v3017
    %v3019 = vrot.slane %v1244, 3
    %v3020 = vsel %vm3003, %v3017, %v3019
    %v3021 = vrot.slane %v1245, 3
    %v3022 = vsel %vm3003, %v3019, %v3021
    %v3023 = vrot.slane %v1246, 3
    %v3024 = vsel %vm3003, %v3021, %v3023
    %v3025 = vrot.slane %v1247, 3
    %v3026 = vsel %vm3003, %v3023, %v3025
    %v3027 = vrot.slane %v1248, 3
    %v3028 = vsel %vm3003, %v3025, %v3027
    %v3029 = vrot.slane %v1249, 3
    %v3030 = vsel %vm3003, %v3027, %v3029
    %v3031 = vrot.slane %v1250, 3
    %v3032 = vsel %vm3003, %v3029, %v3031
    %v3033 = vrot.slane %v1251, 3
    %v3034 = vsel %vm3003, %v3031, %v3033
    %v3035 = vrot.slane %v1252, 3
    %v3036 = vsel %vm3003, %v3033, %v3035
    %v3037 = vrot.slane %v1253, 3
    %v3038 = vsel %vm3003, %v3035, %v3037
    %v3039 = vrot.slane %v1254, 3
    %v3040 = vsel %vm3003, %v3037, %v3039
    %v3041 = vrot.slane %v1255, 3
    %v3042 = vsel %vm3003, %v3039, %v3041
    %v3043 = vrot.slane %v1256, 3
    %v3044 = vsel %vm3003, %v3041, %v3043
    %v3045 = vrot.slane %v1257, 3
    %v3046 = vsel %vm3003, %v3043, %v3045
    %v3047 = vrot.slane %v1258, 3
    %v3048 = vsel %vm3003, %v3045, %v3047
    %v3049 = vrot.slane %v1259, 3
    %v3050 = vsel %vm3003, %v3047, %v3049
    %v3051 = vrot.slane %v1260, 3
    %v3052 = vsel %vm3003, %v3049, %v3051
    %v3053 = vrot.slane %v1261, 3
    %v3054 = vsel %vm3003, %v3051, %v3053
    %v3055 = vrot.slane %v1262, 3
    %v3056 = vsel %vm3003, %v3053, %v3055
    %v3057 = vrot.slane %v1263, 3
    %v3058 = vsel %vm3003, %v3055, %v3057
    %v3059 = vrot.slane %v1264, 3
    %v3060 = vsel %vm3003, %v3057, %v3059
    %v3061 = vrot.slane %v1265, 3
    %v3062 = vsel %vm3003, %v3059, %v3061
    %v3063 = vrot.slane %v1266, 3
    %v3064 = vsel %vm3003, %v3061, %v3063
    %v3065 = vrot.slane %v1267, 3
    %v3066 = vsel %vm3003, %v3063, %v3065
    %v3067 = vrot.slane %v1268, 3
    %v3068 = vsel %vm3003, %v3065, %v3067
    %v3069 = vrot.slane %v1269, 3
    %v3070 = vsel %vm3003, %v3067, %v3069
    %v3071 = vrot.slane %v1270, 3
    %v3072 = vsel %vm3003, %v3069, %v3071
    %v3073 = vrot.slane %v1271, 3
    %v3074 = vsel %vm3003, %v3071, %v3073
    %v3075 = vrot.slane %v2573, 3
    %v3076 = vsel %vm3003, %v3073, %v3075
    %v3077 = vrot.slane %v2574, 3
    %v3078 = vsel %vm3003, %v3075, %v3077
    %v3079 = vrot.slane %v2575, 3
    %v3080 = vsel %vm3003, %v3077, %v3079
    %v3081 = vrot.slane %v2736, 3
    %v3082 = vsel %vm3003, %v3079, %v3081
    %vm3083 = vcmask 261120
    %v3085 = vsel %vm3083, %v1233, %v1593
    %v3087 = vsel %vm3083, %v1234, %v1595
    %v3089 = vsel %vm3083, %v1235, %v1597
    %v3091 = vsel %vm3083, %v1236, %v1599
    %v3093 = vsel %vm3083, %v1237, %v1601
    %v3095 = vsel %vm3083, %v1238, %v1603
    %v3097 = vsel %vm3083, %v1239, %v1605
    %v3099 = vsel %vm3083, %v1240, %v1607
    %v3101 = vsel %vm3083, %v1241, %v1609
    %v3103 = vsel %vm3083, %v1242, %v1611
    %v3105 = vsel %vm3083, %v1243, %v1613
    %v3107 = vsel %vm3083, %v1244, %v1615
    %v3109 = vsel %vm3083, %v1245, %v1617
    %v3111 = vsel %vm3083, %v1246, %v1619
    %v3113 = vsel %vm3083, %v1247, %v1621
    %v3115 = vsel %vm3083, %v1248, %v1623
    %v3117 = vsel %vm3083, %v1249, %v1625
    %v3119 = vsel %vm3083, %v1250, %v1627
    %v3121 = vsel %vm3083, %v1251, %v1629
    %v3123 = vsel %vm3083, %v1252, %v1631
    %v3125 = vsel %vm3083, %v1253, %v1633
    %v3127 = vsel %vm3083, %v1254, %v1635
    %v3129 = vsel %vm3083, %v1255, %v1637
    %v3131 = vsel %vm3083, %v1256, %v1639
    %v3133 = vsel %vm3083, %v1257, %v1641
    %v3135 = vsel %vm3083, %v1258, %v1643
    %v3137 = vsel %vm3083, %v1259, %v1645
    %v3139 = vsel %vm3083, %v1260, %v1647
    %v3141 = vsel %vm3083, %v1261, %v1649
    %v3143 = vsel %vm3083, %v1262, %v1651
    %v3145 = vsel %vm3083, %v1263, %v1653
    %v3147 = vsel %vm3083, %v1264, %v1655
    %v3149 = vsel %vm3083, %v1265, %v1657
    %v3151 = vsel %vm3083, %v1266, %v1659
    %v3153 = vsel %vm3083, %v1267, %v1661
    %v3155 = vsel %vm3083, %v1268, %v1663
    %v3157 = vsel %vm3083, %v1269, %v1665
    %v3159 = vsel %vm3083, %v1270, %v1667
    %v3161 = vsel %vm3083, %v1271, %v1669
    %vm3162 = vcmask 523264
    %v3164 = vsel %vm3162, %v3085, %v1754
    %v3166 = vsel %vm3162, %v3087, %v1756
    %v3168 = vsel %vm3162, %v3089, %v1758
    %v3170 = vsel %vm3162, %v3091, %v1760
    %v3172 = vsel %vm3162, %v3093, %v1762
    %v3174 = vsel %vm3162, %v3095, %v1764
    %v3176 = vsel %vm3162, %v3097, %v1766
    %v3178 = vsel %vm3162, %v3099, %v1768
    %v3180 = vsel %vm3162, %v3101, %v1770
    %v3182 = vsel %vm3162, %v3103, %v1772
    %v3184 = vsel %vm3162, %v3105, %v1774
    %v3186 = vsel %vm3162, %v3107, %v1776
    %v3188 = vsel %vm3162, %v3109, %v1778
    %v3190 = vsel %vm3162, %v3111, %v1780
    %v3192 = vsel %vm3162, %v3113, %v1782
    %v3194 = vsel %vm3162, %v3115, %v1784
    %v3196 = vsel %vm3162, %v3117, %v1786
    %v3198 = vsel %vm3162, %v3119, %v1788
    %v3200 = vsel %vm3162, %v3121, %v1790
    %v3202 = vsel %vm3162, %v3123, %v1792
    %v3204 = vsel %vm3162, %v3125, %v1794
    %v3206 = vsel %vm3162, %v3127, %v1796
    %v3208 = vsel %vm3162, %v3129, %v1798
    %v3210 = vsel %vm3162, %v3131, %v1800
    %v3212 = vsel %vm3162, %v3133, %v1802
    %v3214 = vsel %vm3162, %v3135, %v1804
    %v3216 = vsel %vm3162, %v3137, %v1806
    %v3218 = vsel %vm3162, %v3139, %v1808
    %v3220 = vsel %vm3162, %v3141, %v1810
    %v3222 = vsel %vm3162, %v3143, %v1812
    %v3224 = vsel %vm3162, %v3145, %v1814
    %v3226 = vsel %vm3162, %v3147, %v1816
    %v3228 = vsel %vm3162, %v3149, %v1818
    %v3230 = vsel %vm3162, %v3151, %v1820
    %v3232 = vsel %vm3162, %v3153, %v1822
    %v3234 = vsel %vm3162, %v3155, %v1824
    %v3236 = vsel %vm3162, %v3157, %v1826
    %v3238 = vsel %vm3162, %v3159, %v1828
    %v3240 = vsel %vm3162, %v3161, %v1830
    %vm3241 = vcmask 785408
    %v3243 = vsel %vm3241, %v3164, %v1961
    %v3246 = vsel %vm3241, %v3166, %v1963
    %v3249 = vsel %vm3241, %v3168, %v1965
    %v3252 = vsel %vm3241, %v3170, %v1967
    %v3255 = vsel %vm3241, %v3172, %v1969
    %v3258 = vsel %vm3241, %v3174, %v1971
    %v3261 = vsel %vm3241, %v3176, %v1973
    %v3264 = vsel %vm3241, %v3178, %v1975
    %v3267 = vsel %vm3241, %v3180, %v1977
    %v3270 = vsel %vm3241, %v3182, %v1979
    %v3273 = vsel %vm3241, %v3184, %v1981
    %v3276 = vsel %vm3241, %v3186, %v1983
    %v3279 = vsel %vm3241, %v3188, %v1985
    %v3282 = vsel %vm3241, %v3190, %v1987
    %v3285 = vsel %vm3241, %v3192, %v1989
    %v3288 = vsel %vm3241, %v3194, %v1991
    %v3291 = vsel %vm3241, %v3196, %v1993
    %v3294 = vsel %vm3241, %v3198, %v1995
    %v3297 = vsel %vm3241, %v3200, %v1997
    %v3300 = vsel %vm3241, %v3202, %v1999
    %v3303 = vsel %vm3241, %v3204, %v2001
    %v3306 = vsel %vm3241, %v3206, %v2003
    %v3309 = vsel %vm3241, %v3208, %v2005
    %v3312 = vsel %vm3241, %v3210, %v2007
    %v3315 = vsel %vm3241, %v3212, %v2009
    %v3318 = vsel %vm3241, %v3214, %v2011
    %v3321 = vsel %vm3241, %v3216, %v2013
    %v3324 = vsel %vm3241, %v3218, %v2015
    %v3327 = vsel %vm3241, %v3220, %v2017
    %v3330 = vsel %vm3241, %v3222, %v2019
    %v3333 = vsel %vm3241, %v3224, %v2021
    %v3336 = vsel %vm3241, %v3226, %v2023
    %v3339 = vsel %vm3241, %v3228, %v2025
    %v3342 = vsel %vm3241, %v3230, %v2027
    %v3345 = vsel %vm3241, %v3232, %v2029
    %v3348 = vsel %vm3241, %v3234, %v2031
    %v3351 = vsel %vm3241, %v3236, %v2033
    %v3354 = vsel %vm3241, %v3238, %v2035
    %v3357 = vsel %vm3241, %v3240, %v2037
    %v3361 = vsel %vm3083, %v2058, %v2485
    %v3364 = vsel %vm3083, %v2067, %v2487
    %v3367 = vsel %vm3083, %v2076, %v2489
    %v3370 = vsel %vm3083, %v2085, %v2491
    %v3373 = vsel %vm3083, %v2094, %v2493
    %v3376 = vsel %vm3083, %v2103, %v2495
    %v3379 = vsel %vm3083, %v2112, %v2497
    %v3382 = vsel %vm3083, %v2121, %v2499
    %v3385 = vsel %vm3083, %v2130, %v2501
    %v3388 = vsel %vm3083, %v2139, %v2503
    %v3391 = vsel %vm3083, %v2148, %v2505
    %v3394 = vsel %vm3083, %v2157, %v2507
    %v3397 = vsel %vm3083, %v2166, %v2509
    %v3400 = vsel %vm3083, %v2175, %v2511
    %v3403 = vsel %vm3083, %v2184, %v2513
    %v3406 = vsel %vm3083, %v2193, %v2515
    %v3409 = vsel %vm3083, %v2202, %v2517
    %v3412 = vsel %vm3083, %v2211, %v2519
    %v3415 = vsel %vm3083, %v2220, %v2521
    %v3418 = vsel %vm3083, %v2229, %v2523
    %v3421 = vsel %vm3083, %v2238, %v2525
    %v3424 = vsel %vm3083, %v2247, %v2527
    %v3427 = vsel %vm3083, %v2256, %v2529
    %v3430 = vsel %vm3083, %v2265, %v2531
    %v3433 = vsel %vm3083, %v2274, %v2533
    %v3436 = vsel %vm3083, %v2283, %v2535
    %v3439 = vsel %vm3083, %v2292, %v2537
    %v3442 = vsel %vm3083, %v2301, %v2539
    %v3445 = vsel %vm3083, %v2310, %v2541
    %v3448 = vsel %vm3083, %v2319, %v2543
    %v3451 = vsel %vm3083, %v2328, %v2545
    %v3454 = vsel %vm3083, %v2337, %v2547
    %v3457 = vsel %vm3083, %v2346, %v2549
    %v3460 = vsel %vm3083, %v2355, %v2551
    %v3463 = vsel %vm3083, %v2364, %v2553
    %v3466 = vsel %vm3083, %v2373, %v2555
    %v3469 = vsel %vm3083, %v2382, %v2557
    %v3472 = vsel %vm3083, %v2391, %v2559
    %v3475 = vsel %vm3083, %v2400, %v2561
    %v3477 = vsel %vm3162, %v3361, %v2657
    %v3479 = vsel %vm3162, %v3364, %v2659
    %v3481 = vsel %vm3162, %v3367, %v2661
    %v3483 = vsel %vm3162, %v3370, %v2663
    %v3485 = vsel %vm3162, %v3373, %v2665
    %v3487 = vsel %vm3162, %v3376, %v2667
    %v3489 = vsel %vm3162, %v3379, %v2669
    %v3491 = vsel %vm3162, %v3382, %v2671
    %v3493 = vsel %vm3162, %v3385, %v2673
    %v3495 = vsel %vm3162, %v3388, %v2675
    %v3497 = vsel %vm3162, %v3391, %v2677
    %v3499 = vsel %vm3162, %v3394, %v2679
    %v3501 = vsel %vm3162, %v3397, %v2681
    %v3503 = vsel %vm3162, %v3400, %v2683
    %v3505 = vsel %vm3162, %v3403, %v2685
    %v3507 = vsel %vm3162, %v3406, %v2687
    %v3509 = vsel %vm3162, %v3409, %v2689
    %v3511 = vsel %vm3162, %v3412, %v2691
    %v3513 = vsel %vm3162, %v3415, %v2693
    %v3515 = vsel %vm3162, %v3418, %v2695
    %v3517 = vsel %vm3162, %v3421, %v2697
    %v3519 = vsel %vm3162, %v3424, %v2699
    %v3521 = vsel %vm3162, %v3427, %v2701
    %v3523 = vsel %vm3162, %v3430, %v2703
    %v3525 = vsel %vm3162, %v3433, %v2705
    %v3527 = vsel %vm3162, %v3436, %v2707
    %v3529 = vsel %vm3162, %v3439, %v2709
    %v3531 = vsel %vm3162, %v3442, %v2711
    %v3533 = vsel %vm3162, %v3445, %v2713
    %v3535 = vsel %vm3162, %v3448, %v2715
    %v3537 = vsel %vm3162, %v3451, %v2717
    %v3539 = vsel %vm3162, %v3454, %v2719
    %v3541 = vsel %vm3162, %v3457, %v2721
    %v3543 = vsel %vm3162, %v3460, %v2723
    %v3545 = vsel %vm3162, %v3463, %v2725
    %v3547 = vsel %vm3162, %v3466, %v2727
    %v3549 = vsel %vm3162, %v3469, %v2729
    %v3551 = vsel %vm3162, %v3472, %v2731
    %v3553 = vsel %vm3162, %v3475, %v2733
    %v3555 = vsel %vm3241, %v3477, %v2923
    %v3558 = vsel %vm3241, %v3479, %v2925
    %v3561 = vsel %vm3241, %v3481, %v2927
    %v3564 = vsel %vm3241, %v3483, %v2929
    %v3567 = vsel %vm3241, %v3485, %v2931
    %v3570 = vsel %vm3241, %v3487, %v2933
    %v3573 = vsel %vm3241, %v3489, %v2935
    %v3576 = vsel %vm3241, %v3491, %v2937
    %v3579 = vsel %vm3241, %v3493, %v2939
    %v3582 = vsel %vm3241, %v3495, %v2941
    %v3585 = vsel %vm3241, %v3497, %v2943
    %v3588 = vsel %vm3241, %v3499, %v2945
    %v3591 = vsel %vm3241, %v3501, %v2947
    %v3594 = vsel %vm3241, %v3503, %v2949
    %v3597 = vsel %vm3241, %v3505, %v2951
    %v3600 = vsel %vm3241, %v3507, %v2953
    %v3603 = vsel %vm3241, %v3509, %v2955
    %v3606 = vsel %vm3241, %v3511, %v2957
    %v3609 = vsel %vm3241, %v3513, %v2959
    %v3612 = vsel %vm3241, %v3515, %v2961
    %v3615 = vsel %vm3241, %v3517, %v2963
    %v3618 = vsel %vm3241, %v3519, %v2965
    %v3621 = vsel %vm3241, %v3521, %v2967
    %v3624 = vsel %vm3241, %v3523, %v2969
    %v3627 = vsel %vm3241, %v3525, %v2971
    %v3630 = vsel %vm3241, %v3527, %v2973
    %v3633 = vsel %vm3241, %v3529, %v2975
    %v3636 = vsel %vm3241, %v3531, %v2977
    %v3639 = vsel %vm3241, %v3533, %v2979
    %v3642 = vsel %vm3241, %v3535, %v2981
    %v3645 = vsel %vm3241, %v3537, %v2983
    %v3648 = vsel %vm3241, %v3539, %v2985
    %v3651 = vsel %vm3241, %v3541, %v2987
    %v3654 = vsel %vm3241, %v3543, %v2989
    %v3657 = vsel %vm3241, %v3545, %v2991
    %v3660 = vsel %vm3241, %v3547, %v2993
    %v3663 = vsel %vm3241, %v3549, %v2995
    %v3666 = vsel %vm3241, %v3551, %v2997
    %v3669 = vsel %vm3241, %v3553, %v2999
    %v3671 = vld [vmem:[%s3] sm:$0xf]
    %v3672 = vld [vmem:[%s3 + $0x4] sm:$0xf]
    %v3673 = vld [vmem:[%s3 + $0x8] sm:$0xf]
    %v3674 = vld [vmem:[%s3 + $0xc] sm:$0xf]
    %v3675 = vld [vmem:[%s3 + $0x10] sm:$0xf]
    %v3676 = vld [vmem:[%s3 + $0x14] sm:$0xf]
    %v3677 = vld [vmem:[%s3 + $0x18] sm:$0xf]
    %v3678 = vld [vmem:[%s3 + $0x1c] sm:$0xf]
    %v3679 = vld [vmem:[%s3 + $0x20] sm:$0xf]
    %v3680 = vld [vmem:[%s3 + $0x24] sm:$0xf]
    %v3681 = vld [vmem:[%s3 + $0x28] sm:$0xf]
    %v3682 = vld [vmem:[%s3 + $0x2c] sm:$0xf]
    %v3683 = vld [vmem:[%s3 + $0x30] sm:$0xf]
    %v3684 = vld [vmem:[%s3 + $0x34] sm:$0xf]
    %v3685 = vld [vmem:[%s3 + $0x38] sm:$0xf]
    %v3686 = vld [vmem:[%s3 + $0x3c] sm:$0xf]
    %v3687 = vld [vmem:[%s3 + $0x40] sm:$0xf]
    %v3688 = vld [vmem:[%s3 + $0x44] sm:$0xf]
    %v3689 = vld [vmem:[%s3 + $0x48] sm:$0xf]
    %v3690 = vld [vmem:[%s3 + $0x4c] sm:$0xf]
    %v3691 = vld [vmem:[%s3 + $0x50] sm:$0xf]
    %v3692 = vld [vmem:[%s3 + $0x54] sm:$0xf]
    %v3693 = vld [vmem:[%s3 + $0x58] sm:$0xf]
    %v3694 = vld [vmem:[%s3 + $0x5c] sm:$0xf]
    %v3695 = vld [vmem:[%s3 + $0x60] sm:$0xf]
    %v3696 = vld [vmem:[%s3 + $0x64] sm:$0xf]
    %v3697 = vld [vmem:[%s3 + $0x68] sm:$0xf]
    %v3698 = vld [vmem:[%s3 + $0x6c] sm:$0xf]
    %v3699 = vld [vmem:[%s3 + $0x70] sm:$0xf]
    %v3700 = vld [vmem:[%s3 + $0x74] sm:$0xf]
    %v3701 = vld [vmem:[%s3 + $0x78] sm:$0xf]
    %v3702 = vld [vmem:[%s3 + $0x7c] sm:$0xf]
    %v3703 = vld [vmem:[%s3 + $0x80] sm:$0xf]
    %v3704 = vld [vmem:[%s3 + $0x84] sm:$0xf]
    %v3705 = vld [vmem:[%s3 + $0x88] sm:$0xf]
    %v3706 = vld [vmem:[%s3 + $0x8c] sm:$0xf]
    %v3707 = vld [vmem:[#allocation8] sm:$0x1]
    %v3709 = vperm.slane %v3707, 0
    %v3747 = vunpack.c.l.b16 %v3671
    %v3748 = vunpack.c.l.b16 %v3672
    %v3749 = vunpack.c.l.b16 %v3673
    %v3750 = vunpack.c.l.b16 %v3674
    %v3751 = vunpack.c.l.b16 %v3675
    %v3752 = vunpack.c.l.b16 %v3676
    %v3753 = vunpack.c.l.b16 %v3677
    %v3754 = vunpack.c.l.b16 %v3678
    %v3755 = vunpack.c.l.b16 %v3679
    %v3756 = vunpack.c.l.b16 %v3680
    %v3757 = vunpack.c.l.b16 %v3681
    %v3758 = vunpack.c.l.b16 %v3682
    %v3759 = vunpack.c.l.b16 %v3683
    %v3760 = vunpack.c.l.b16 %v3684
    %v3761 = vunpack.c.l.b16 %v3685
    %v3762 = vunpack.c.l.b16 %v3686
    %v3763 = vunpack.c.l.b16 %v3687
    %v3764 = vunpack.c.l.b16 %v3688
    %v3765 = vunpack.c.l.b16 %v3689
    %v3766 = vunpack.c.l.b16 %v3690
    %v3767 = vunpack.c.l.b16 %v3691
    %v3768 = vunpack.c.l.b16 %v3692
    %v3769 = vunpack.c.l.b16 %v3693
    %v3770 = vunpack.c.l.b16 %v3694
    %v3771 = vunpack.c.l.b16 %v3695
    %v3772 = vunpack.c.l.b16 %v3696
    %v3773 = vunpack.c.l.b16 %v3697
    %v3774 = vunpack.c.l.b16 %v3698
    %v3775 = vunpack.c.l.b16 %v3699
    %v3776 = vunpack.c.l.b16 %v3700
    %v3777 = vunpack.c.l.b16 %v3701
    %v3778 = vunpack.c.l.b16 %v3702
    %v3779 = vunpack.c.l.b16 %v3703
    %v3780 = vunpack.c.l.b16 %v3704
    %v3781 = vunpack.c.l.b16 %v3705
    %v3782 = vunpack.c.l.b16 %v3706
    %v3783 = vpack.c.b16 %v3748, %v3747
    %v3784 = vpack.c.b16 %v3750, %v3749
    %v3785 = vpack.c.b16 %v3752, %v3751
    %v3786 = vpack.c.b16 %v3754, %v3753
    %v3787 = vpack.c.b16 %v3756, %v3755
    %v3788 = vpack.c.b16 %v3758, %v3757
    %v3789 = vpack.c.b16 %v3760, %v3759
    %v3790 = vpack.c.b16 %v3762, %v3761
    %v3791 = vpack.c.b16 %v3764, %v3763
    %v3792 = vpack.c.b16 %v3766, %v3765
    %v3793 = vpack.c.b16 %v3768, %v3767
    %v3794 = vpack.c.b16 %v3770, %v3769
    %v3795 = vpack.c.b16 %v3772, %v3771
    %v3796 = vpack.c.b16 %v3774, %v3773
    %v3797 = vpack.c.b16 %v3776, %v3775
    %v3798 = vpack.c.b16 %v3778, %v3777
    %v3799 = vpack.c.b16 %v3780, %v3779
    %v3800 = vpack.c.b16 %v3782, %v3781
    %v3820 = vsel %vm3083, %v3006, 0
    %v3823 = vsel %vm3083, %v3008, 0
    %v3826 = vsel %vm3083, %v3010, 0
    %v3829 = vsel %vm3083, %v3012, 0
    %v3832 = vsel %vm3083, %v3014, 0
    %v3835 = vsel %vm3083, %v3016, 0
    %v3838 = vsel %vm3083, %v3018, 0
    %v3841 = vsel %vm3083, %v3020, 0
    %v3844 = vsel %vm3083, %v3022, 0
    %v3847 = vsel %vm3083, %v3024, 0
    %v3850 = vsel %vm3083, %v3026, 0
    %v3853 = vsel %vm3083, %v3028, 0
    %v3856 = vsel %vm3083, %v3030, 0
    %v3859 = vsel %vm3083, %v3032, 0
    %v3862 = vsel %vm3083, %v3034, 0
    %v3865 = vsel %vm3083, %v3036, 0
    %v3868 = vsel %vm3083, %v3038, 0
    %v3871 = vsel %vm3083, %v3040, 0
    %v3874 = vsel %vm3083, %v3042, 0
    %v3877 = vsel %vm3083, %v3044, 0
    %v3880 = vsel %vm3083, %v3046, 0
    %v3883 = vsel %vm3083, %v3048, 0
    %v3886 = vsel %vm3083, %v3050, 0
    %v3889 = vsel %vm3083, %v3052, 0
    %v3892 = vsel %vm3083, %v3054, 0
    %v3895 = vsel %vm3083, %v3056, 0
    %v3898 = vsel %vm3083, %v3058, 0
    %v3901 = vsel %vm3083, %v3060, 0
    %v3904 = vsel %vm3083, %v3062, 0
    %v3907 = vsel %vm3083, %v3064, 0
    %v3910 = vsel %vm3083, %v3066, 0
    %v3913 = vsel %vm3083, %v3068, 0
    %v3916 = vsel %vm3083, %v3070, 0
    %v3919 = vsel %vm3083, %v3072, 0
    %v3922 = vsel %vm3083, %v3074, 0
    %v3925 = vsel %vm3083, %v3076, 0
    %v3928 = vsel %vm3083, %v3078, 0
    %v3931 = vsel %vm3083, %v3080, 0
    %v3934 = vsel %vm3083, %v3082, 0
    %3936 = vmatpush.bf16.msra.mxu0 %v3790
    %3937 = vmatpush.bf16.msra.mxu0 %v3789
    %3938 = vmatpush.bf16.msra.mxu0 %v3788
    %3939 = vmatpush.bf16.msra.mxu0 %v3787
    %3940 = vmatpush.bf16.msra.mxu0 %v3786
    %3941 = vmatpush.bf16.msra.mxu0 %v3785
    %3942 = vmatpush.bf16.msra.mxu0 %v3784
    %3943 = vmatpush.bf16.msra.mxu0 %v3783
    %3944 = vmatmul.bf16.gmra.mxu0 %v3243
    %v3945 = vpop.f32.mrf.mxu0
    %v3946 = vadd.f32 %v3709, %v3945
    %v3947 = vpop.f32.mrf.mxu0
    %v3948 = vadd.f32 %v3709, %v3947
    %3949 = vmatmul.bf16.gmra.mxu0 %v3246
    %v3950 = vpop.f32.mrf.mxu0
    %v3951 = vadd.f32 %v3709, %v3950
    %v3952 = vpop.f32.mrf.mxu0
    %v3953 = vadd.f32 %v3709, %v3952
    %3954 = vmatmul.bf16.gmra.mxu0 %v3249
    %v3955 = vpop.f32.mrf.mxu0
    %v3956 = vadd.f32 %v3709, %v3955
    %v3957 = vpop.f32.mrf.mxu0
    %v3958 = vadd.f32 %v3709, %v3957
    %3959 = vmatmul.bf16.gmra.mxu0 %v3252
    %v3960 = vpop.f32.mrf.mxu0
    %v3961 = vadd.f32 %v3709, %v3960
    %v3962 = vpop.f32.mrf.mxu0
    %v3963 = vadd.f32 %v3709, %v3962
    %3964 = vmatmul.bf16.gmra.mxu0 %v3255
    %v3965 = vpop.f32.mrf.mxu0
    %v3966 = vadd.f32 %v3709, %v3965
    %v3967 = vpop.f32.mrf.mxu0
    %v3968 = vadd.f32 %v3709, %v3967
    %3969 = vmatmul.bf16.gmra.mxu0 %v3258
    %v3970 = vpop.f32.mrf.mxu0
    %v3971 = vadd.f32 %v3709, %v3970
    %v3972 = vpop.f32.mrf.mxu0
    %v3973 = vadd.f32 %v3709, %v3972
    %3974 = vmatmul.bf16.gmra.mxu0 %v3261
    %v3975 = vpop.f32.mrf.mxu0
    %v3976 = vadd.f32 %v3709, %v3975
    %v3977 = vpop.f32.mrf.mxu0
    %v3978 = vadd.f32 %v3709, %v3977
    %3979 = vmatmul.bf16.gmra.mxu0 %v3264
    %v3980 = vpop.f32.mrf.mxu0
    %v3981 = vadd.f32 %v3709, %v3980
    %v3982 = vpop.f32.mrf.mxu0
    %v3983 = vadd.f32 %v3709, %v3982
    %3984 = vmatmul.bf16.gmra.mxu0 %v3267
    %v3985 = vpop.f32.mrf.mxu0
    %v3986 = vadd.f32 %v3709, %v3985
    %v3987 = vpop.f32.mrf.mxu0
    %v3988 = vadd.f32 %v3709, %v3987
    %3989 = vmatmul.bf16.gmra.mxu0 %v3270
    %v3990 = vpop.f32.mrf.mxu0
    %v3991 = vadd.f32 %v3709, %v3990
    %v3992 = vpop.f32.mrf.mxu0
    %v3993 = vadd.f32 %v3709, %v3992
    %3994 = vmatmul.bf16.gmra.mxu0 %v3273
    %v3995 = vpop.f32.mrf.mxu0
    %v3996 = vadd.f32 %v3709, %v3995
    %v3997 = vpop.f32.mrf.mxu0
    %v3998 = vadd.f32 %v3709, %v3997
    %3999 = vmatmul.bf16.gmra.mxu0 %v3276
    %v4000 = vpop.f32.mrf.mxu0
    %v4001 = vadd.f32 %v3709, %v4000
    %v4002 = vpop.f32.mrf.mxu0
    %v4003 = vadd.f32 %v3709, %v4002
    %4004 = vmatmul.bf16.gmra.mxu0 %v3279
    %v4005 = vpop.f32.mrf.mxu0
    %v4006 = vadd.f32 %v3709, %v4005
    %v4007 = vpop.f32.mrf.mxu0
    %v4008 = vadd.f32 %v3709, %v4007
    %4009 = vmatmul.bf16.gmra.mxu0 %v3282
    %v4010 = vpop.f32.mrf.mxu0
    %v4011 = vadd.f32 %v3709, %v4010
    %v4012 = vpop.f32.mrf.mxu0
    %v4013 = vadd.f32 %v3709, %v4012
    %4014 = vmatmul.bf16.gmra.mxu0 %v3285
    %v4015 = vpop.f32.mrf.mxu0
    %v4016 = vadd.f32 %v3709, %v4015
    %v4017 = vpop.f32.mrf.mxu0
    %v4018 = vadd.f32 %v3709, %v4017
    %4019 = vmatmul.bf16.gmra.mxu0 %v3288
    %v4020 = vpop.f32.mrf.mxu0
    %v4021 = vadd.f32 %v3709, %v4020
    %v4022 = vpop.f32.mrf.mxu0
    %v4023 = vadd.f32 %v3709, %v4022
    %4024 = vmatmul.bf16.gmra.mxu0 %v3291
    %v4025 = vpop.f32.mrf.mxu0
    %v4026 = vadd.f32 %v3709, %v4025
    %v4027 = vpop.f32.mrf.mxu0
    %v4028 = vadd.f32 %v3709, %v4027
    %4029 = vmatmul.bf16.gmra.mxu0 %v3294
    %v4030 = vpop.f32.mrf.mxu0
    %v4031 = vadd.f32 %v3709, %v4030
    %v4032 = vpop.f32.mrf.mxu0
    %v4033 = vadd.f32 %v3709, %v4032
    %4034 = vmatmul.bf16.gmra.mxu0 %v3297
    %v4035 = vpop.f32.mrf.mxu0
    %v4036 = vadd.f32 %v3709, %v4035
    %v4037 = vpop.f32.mrf.mxu0
    %v4038 = vadd.f32 %v3709, %v4037
    %4039 = vmatmul.bf16.gmra.mxu0 %v3300
    %v4040 = vpop.f32.mrf.mxu0
    %v4041 = vadd.f32 %v3709, %v4040
    %v4042 = vpop.f32.mrf.mxu0
    %v4043 = vadd.f32 %v3709, %v4042
    %4044 = vmatmul.bf16.gmra.mxu0 %v3303
    %v4045 = vpop.f32.mrf.mxu0
    %v4046 = vadd.f32 %v3709, %v4045
    %v4047 = vpop.f32.mrf.mxu0
    %v4048 = vadd.f32 %v3709, %v4047
    %4049 = vmatmul.bf16.gmra.mxu0 %v3306
    %v4050 = vpop.f32.mrf.mxu0
    %v4051 = vadd.f32 %v3709, %v4050
    %v4052 = vpop.f32.mrf.mxu0
    %v4053 = vadd.f32 %v3709, %v4052
    %4054 = vmatmul.bf16.gmra.mxu0 %v3309
    %v4055 = vpop.f32.mrf.mxu0
    %v4056 = vadd.f32 %v3709, %v4055
    %v4057 = vpop.f32.mrf.mxu0
    %v4058 = vadd.f32 %v3709, %v4057
    %4059 = vmatmul.bf16.gmra.mxu0 %v3312
    %v4060 = vpop.f32.mrf.mxu0
    %v4061 = vadd.f32 %v3709, %v4060
    %v4062 = vpop.f32.mrf.mxu0
    %v4063 = vadd.f32 %v3709, %v4062
    %4064 = vmatmul.bf16.gmra.mxu0 %v3315
    %v4065 = vpop.f32.mrf.mxu0
    %v4066 = vadd.f32 %v3709, %v4065
    %v4067 = vpop.f32.mrf.mxu0
    %v4068 = vadd.f32 %v3709, %v4067
    %4069 = vmatmul.bf16.gmra.mxu0 %v3318
    %v4070 = vpop.f32.mrf.mxu0
    %v4071 = vadd.f32 %v3709, %v4070
    %v4072 = vpop.f32.mrf.mxu0
    %v4073 = vadd.f32 %v3709, %v4072
    %4074 = vmatmul.bf16.gmra.mxu0 %v3321
    %v4075 = vpop.f32.mrf.mxu0
    %v4076 = vadd.f32 %v3709, %v4075
    %v4077 = vpop.f32.mrf.mxu0
    %v4078 = vadd.f32 %v3709, %v4077
    %4079 = vmatmul.bf16.gmra.mxu0 %v3324
    %v4080 = vpop.f32.mrf.mxu0
    %v4081 = vadd.f32 %v3709, %v4080
    %v4082 = vpop.f32.mrf.mxu0
    %v4083 = vadd.f32 %v3709, %v4082
    %4084 = vmatmul.bf16.gmra.mxu0 %v3327
    %v4085 = vpop.f32.mrf.mxu0
    %v4086 = vadd.f32 %v3709, %v4085
    %v4087 = vpop.f32.mrf.mxu0
    %v4088 = vadd.f32 %v3709, %v4087
    %4089 = vmatmul.bf16.gmra.mxu0 %v3330
    %v4090 = vpop.f32.mrf.mxu0
    %v4091 = vadd.f32 %v3709, %v4090
    %v4092 = vpop.f32.mrf.mxu0
    %v4093 = vadd.f32 %v3709, %v4092
    %4094 = vmatmul.bf16.gmra.mxu0 %v3333
    %v4095 = vpop.f32.mrf.mxu0
    %v4096 = vadd.f32 %v3709, %v4095
    %v4097 = vpop.f32.mrf.mxu0
    %v4098 = vadd.f32 %v3709, %v4097
    %4099 = vmatmul.bf16.gmra.mxu0 %v3336
    %v4100 = vpop.f32.mrf.mxu0
    %v4101 = vadd.f32 %v3709, %v4100
    %v4102 = vpop.f32.mrf.mxu0
    %v4103 = vadd.f32 %v3709, %v4102
    %4104 = vmatmul.bf16.gmra.mxu0 %v3339
    %v4105 = vpop.f32.mrf.mxu0
    %v4106 = vadd.f32 %v3709, %v4105
    %v4107 = vpop.f32.mrf.mxu0
    %v4108 = vadd.f32 %v3709, %v4107
    %4109 = vmatmul.bf16.gmra.mxu0 %v3342
    %v4110 = vpop.f32.mrf.mxu0
    %v4111 = vadd.f32 %v3709, %v4110
    %v4112 = vpop.f32.mrf.mxu0
    %v4113 = vadd.f32 %v3709, %v4112
    %4114 = vmatmul.bf16.gmra.mxu0 %v3345
    %v4115 = vpop.f32.mrf.mxu0
    %v4116 = vadd.f32 %v3709, %v4115
    %v4117 = vpop.f32.mrf.mxu0
    %v4118 = vadd.f32 %v3709, %v4117
    %4119 = vmatmul.bf16.gmra.mxu0 %v3348
    %v4120 = vpop.f32.mrf.mxu0
    %v4121 = vadd.f32 %v3709, %v4120
    %v4122 = vpop.f32.mrf.mxu0
    %v4123 = vadd.f32 %v3709, %v4122
    %4124 = vmatmul.bf16.gmra.mxu0 %v3351
    %v4125 = vpop.f32.mrf.mxu0
    %v4126 = vadd.f32 %v3709, %v4125
    %v4127 = vpop.f32.mrf.mxu0
    %v4128 = vadd.f32 %v3709, %v4127
    %4129 = vmatmul.bf16.gmra.mxu0 %v3354
    %v4130 = vpop.f32.mrf.mxu0
    %v4131 = vadd.f32 %v3709, %v4130
    %v4132 = vpop.f32.mrf.mxu0
    %v4133 = vadd.f32 %v3709, %v4132
    %4134 = vmatmul.bf16.gmra.mxu0 %v3357
    %v4135 = vpop.f32.mrf.mxu0
    %v4136 = vadd.f32 %v3709, %v4135
    %v4137 = vpop.f32.mrf.mxu0
    %v4138 = vadd.f32 %v3709, %v4137
    %4139 = vdwg.mxu0
    %4140 = vmatpush.bf16.msra.mxu0 %v3798
    %4141 = vmatpush.bf16.msra.mxu0 %v3797
    %4142 = vmatpush.bf16.msra.mxu0 %v3796
    %4143 = vmatpush.bf16.msra.mxu0 %v3795
    %4144 = vmatpush.bf16.msra.mxu0 %v3794
    %4145 = vmatpush.bf16.msra.mxu0 %v3793
    %4146 = vmatpush.bf16.msra.mxu0 %v3792
    %4147 = vmatpush.bf16.msra.mxu0 %v3791
    %4148 = vmatmul.bf16.gmra.mxu0 %v3555
    %v4149 = vpop.f32.mrf.mxu0
    %v4150 = vadd.f32 %v3946, %v4149
    %v4151 = vpop.f32.mrf.mxu0
    %v4152 = vadd.f32 %v3948, %v4151
    %4153 = vmatmul.bf16.gmra.mxu0 %v3558
    %v4154 = vpop.f32.mrf.mxu0
    %v4155 = vadd.f32 %v3951, %v4154
    %v4156 = vpop.f32.mrf.mxu0
    %v4157 = vadd.f32 %v3953, %v4156
    %4158 = vmatmul.bf16.gmra.mxu0 %v3561
    %v4159 = vpop.f32.mrf.mxu0
    %v4160 = vadd.f32 %v3956, %v4159
    %v4161 = vpop.f32.mrf.mxu0
    %v4162 = vadd.f32 %v3958, %v4161
    %4163 = vmatmul.bf16.gmra.mxu0 %v3564
    %v4164 = vpop.f32.mrf.mxu0
    %v4165 = vadd.f32 %v3961, %v4164
    %v4166 = vpop.f32.mrf.mxu0
    %v4167 = vadd.f32 %v3963, %v4166
    %4168 = vmatmul.bf16.gmra.mxu0 %v3567
    %v4169 = vpop.f32.mrf.mxu0
    %v4170 = vadd.f32 %v3966, %v4169
    %v4171 = vpop.f32.mrf.mxu0
    %v4172 = vadd.f32 %v3968, %v4171
    %4173 = vmatmul.bf16.gmra.mxu0 %v3570
    %v4174 = vpop.f32.mrf.mxu0
    %v4175 = vadd.f32 %v3971, %v4174
    %v4176 = vpop.f32.mrf.mxu0
    %v4177 = vadd.f32 %v3973, %v4176
    %4178 = vmatmul.bf16.gmra.mxu0 %v3573
    %v4179 = vpop.f32.mrf.mxu0
    %v4180 = vadd.f32 %v3976, %v4179
    %v4181 = vpop.f32.mrf.mxu0
    %v4182 = vadd.f32 %v3978, %v4181
    %4183 = vmatmul.bf16.gmra.mxu0 %v3576
    %v4184 = vpop.f32.mrf.mxu0
    %v4185 = vadd.f32 %v3981, %v4184
    %v4186 = vpop.f32.mrf.mxu0
    %v4187 = vadd.f32 %v3983, %v4186
    %4188 = vmatmul.bf16.gmra.mxu0 %v3579
    %v4189 = vpop.f32.mrf.mxu0
    %v4190 = vadd.f32 %v3986, %v4189
    %v4191 = vpop.f32.mrf.mxu0
    %v4192 = vadd.f32 %v3988, %v4191
    %4193 = vmatmul.bf16.gmra.mxu0 %v3582
    %v4194 = vpop.f32.mrf.mxu0
    %v4195 = vadd.f32 %v3991, %v4194
    %v4196 = vpop.f32.mrf.mxu0
    %v4197 = vadd.f32 %v3993, %v4196
    %4198 = vmatmul.bf16.gmra.mxu0 %v3585
    %v4199 = vpop.f32.mrf.mxu0
    %v4200 = vadd.f32 %v3996, %v4199
    %v4201 = vpop.f32.mrf.mxu0
    %v4202 = vadd.f32 %v3998, %v4201
    %4203 = vmatmul.bf16.gmra.mxu0 %v3588
    %v4204 = vpop.f32.mrf.mxu0
    %v4205 = vadd.f32 %v4001, %v4204
    %v4206 = vpop.f32.mrf.mxu0
    %v4207 = vadd.f32 %v4003, %v4206
    %4208 = vmatmul.bf16.gmra.mxu0 %v3591
    %v4209 = vpop.f32.mrf.mxu0
    %v4210 = vadd.f32 %v4006, %v4209
    %v4211 = vpop.f32.mrf.mxu0
    %v4212 = vadd.f32 %v4008, %v4211
    %4213 = vmatmul.bf16.gmra.mxu0 %v3594
    %v4214 = vpop.f32.mrf.mxu0
    %v4215 = vadd.f32 %v4011, %v4214
    %v4216 = vpop.f32.mrf.mxu0
    %v4217 = vadd.f32 %v4013, %v4216
    %4218 = vmatmul.bf16.gmra.mxu0 %v3597
    %v4219 = vpop.f32.mrf.mxu0
    %v4220 = vadd.f32 %v4016, %v4219
    %v4221 = vpop.f32.mrf.mxu0
    %v4222 = vadd.f32 %v4018, %v4221
    %4223 = vmatmul.bf16.gmra.mxu0 %v3600
    %v4224 = vpop.f32.mrf.mxu0
    %v4225 = vadd.f32 %v4021, %v4224
    %v4226 = vpop.f32.mrf.mxu0
    %v4227 = vadd.f32 %v4023, %v4226
    %4228 = vmatmul.bf16.gmra.mxu0 %v3603
    %v4229 = vpop.f32.mrf.mxu0
    %v4230 = vadd.f32 %v4026, %v4229
    %v4231 = vpop.f32.mrf.mxu0
    %v4232 = vadd.f32 %v4028, %v4231
    %4233 = vmatmul.bf16.gmra.mxu0 %v3606
    %v4234 = vpop.f32.mrf.mxu0
    %v4235 = vadd.f32 %v4031, %v4234
    %v4236 = vpop.f32.mrf.mxu0
    %v4237 = vadd.f32 %v4033, %v4236
    %4238 = vmatmul.bf16.gmra.mxu0 %v3609
    %v4239 = vpop.f32.mrf.mxu0
    %v4240 = vadd.f32 %v4036, %v4239
    %v4241 = vpop.f32.mrf.mxu0
    %v4242 = vadd.f32 %v4038, %v4241
    %4243 = vmatmul.bf16.gmra.mxu0 %v3612
    %v4244 = vpop.f32.mrf.mxu0
    %v4245 = vadd.f32 %v4041, %v4244
    %v4246 = vpop.f32.mrf.mxu0
    %v4247 = vadd.f32 %v4043, %v4246
    %4248 = vmatmul.bf16.gmra.mxu0 %v3615
    %v4249 = vpop.f32.mrf.mxu0
    %v4250 = vadd.f32 %v4046, %v4249
    %v4251 = vpop.f32.mrf.mxu0
    %v4252 = vadd.f32 %v4048, %v4251
    %4253 = vmatmul.bf16.gmra.mxu0 %v3618
    %v4254 = vpop.f32.mrf.mxu0
    %v4255 = vadd.f32 %v4051, %v4254
    %v4256 = vpop.f32.mrf.mxu0
    %v4257 = vadd.f32 %v4053, %v4256
    %4258 = vmatmul.bf16.gmra.mxu0 %v3621
    %v4259 = vpop.f32.mrf.mxu0
    %v4260 = vadd.f32 %v4056, %v4259
    %v4261 = vpop.f32.mrf.mxu0
    %v4262 = vadd.f32 %v4058, %v4261
    %4263 = vmatmul.bf16.gmra.mxu0 %v3624
    %v4264 = vpop.f32.mrf.mxu0
    %v4265 = vadd.f32 %v4061, %v4264
    %v4266 = vpop.f32.mrf.mxu0
    %v4267 = vadd.f32 %v4063, %v4266
    %4268 = vmatmul.bf16.gmra.mxu0 %v3627
    %v4269 = vpop.f32.mrf.mxu0
    %v4270 = vadd.f32 %v4066, %v4269
    %v4271 = vpop.f32.mrf.mxu0
    %v4272 = vadd.f32 %v4068, %v4271
    %4273 = vmatmul.bf16.gmra.mxu0 %v3630
    %v4274 = vpop.f32.mrf.mxu0
    %v4275 = vadd.f32 %v4071, %v4274
    %v4276 = vpop.f32.mrf.mxu0
    %v4277 = vadd.f32 %v4073, %v4276
    %4278 = vmatmul.bf16.gmra.mxu0 %v3633
    %v4279 = vpop.f32.mrf.mxu0
    %v4280 = vadd.f32 %v4076, %v4279
    %v4281 = vpop.f32.mrf.mxu0
    %v4282 = vadd.f32 %v4078, %v4281
    %4283 = vmatmul.bf16.gmra.mxu0 %v3636
    %v4284 = vpop.f32.mrf.mxu0
    %v4285 = vadd.f32 %v4081, %v4284
    %v4286 = vpop.f32.mrf.mxu0
    %v4287 = vadd.f32 %v4083, %v4286
    %4288 = vmatmul.bf16.gmra.mxu0 %v3639
    %v4289 = vpop.f32.mrf.mxu0
    %v4290 = vadd.f32 %v4086, %v4289
    %v4291 = vpop.f32.mrf.mxu0
    %v4292 = vadd.f32 %v4088, %v4291
    %4293 = vmatmul.bf16.gmra.mxu0 %v3642
    %v4294 = vpop.f32.mrf.mxu0
    %v4295 = vadd.f32 %v4091, %v4294
    %v4296 = vpop.f32.mrf.mxu0
    %v4297 = vadd.f32 %v4093, %v4296
    %4298 = vmatmul.bf16.gmra.mxu0 %v3645
    %v4299 = vpop.f32.mrf.mxu0
    %v4300 = vadd.f32 %v4096, %v4299
    %v4301 = vpop.f32.mrf.mxu0
    %v4302 = vadd.f32 %v4098, %v4301
    %4303 = vmatmul.bf16.gmra.mxu0 %v3648
    %v4304 = vpop.f32.mrf.mxu0
    %v4305 = vadd.f32 %v4101, %v4304
    %v4306 = vpop.f32.mrf.mxu0
    %v4307 = vadd.f32 %v4103, %v4306
    %4308 = vmatmul.bf16.gmra.mxu0 %v3651
    %v4309 = vpop.f32.mrf.mxu0
    %v4310 = vadd.f32 %v4106, %v4309
    %v4311 = vpop.f32.mrf.mxu0
    %v4312 = vadd.f32 %v4108, %v4311
    %4313 = vmatmul.bf16.gmra.mxu0 %v3654
    %v4314 = vpop.f32.mrf.mxu0
    %v4315 = vadd.f32 %v4111, %v4314
    %v4316 = vpop.f32.mrf.mxu0
    %v4317 = vadd.f32 %v4113, %v4316
    %4318 = vmatmul.bf16.gmra.mxu0 %v3657
    %v4319 = vpop.f32.mrf.mxu0
    %v4320 = vadd.f32 %v4116, %v4319
    %v4321 = vpop.f32.mrf.mxu0
    %v4322 = vadd.f32 %v4118, %v4321
    %4323 = vmatmul.bf16.gmra.mxu0 %v3660
    %v4324 = vpop.f32.mrf.mxu0
    %v4325 = vadd.f32 %v4121, %v4324
    %v4326 = vpop.f32.mrf.mxu0
    %v4327 = vadd.f32 %v4123, %v4326
    %4328 = vmatmul.bf16.gmra.mxu0 %v3663
    %v4329 = vpop.f32.mrf.mxu0
    %v4330 = vadd.f32 %v4126, %v4329
    %v4331 = vpop.f32.mrf.mxu0
    %v4332 = vadd.f32 %v4128, %v4331
    %4333 = vmatmul.bf16.gmra.mxu0 %v3666
    %v4334 = vpop.f32.mrf.mxu0
    %v4335 = vadd.f32 %v4131, %v4334
    %v4336 = vpop.f32.mrf.mxu0
    %v4337 = vadd.f32 %v4133, %v4336
    %4338 = vmatmul.bf16.gmra.mxu0 %v3669
    %v4339 = vpop.f32.mrf.mxu0
    %v4340 = vadd.f32 %v4136, %v4339
    %v4341 = vpop.f32.mrf.mxu0
    %v4342 = vadd.f32 %v4138, %v4341
    %4343 = vdwg.mxu0
    %4344 = vmatpush.bf16.msra.mxu0 0
    %4345 = vmatpush.bf16.msra.mxu0 0
    %4346 = vmatpush.bf16.msra.mxu0 0
    %4347 = vmatpush.bf16.msra.mxu0 0
    %4348 = vmatpush.bf16.msra.mxu0 0
    %4349 = vmatpush.bf16.msra.mxu0 0
    %4350 = vmatpush.bf16.msra.mxu0 %v3800
    %4351 = vmatpush.bf16.msra.mxu0 %v3799
    %4352 = vmatmul.bf16.gmra.mxu0 %v3820
    %v4353 = vpop.f32.mrf.mxu0
    %v4354 = vadd.f32 %v4150, %v4353
    %v4355 = vpop.f32.mrf.mxu0
    %v4356 = vadd.f32 %v4152, %v4355
    %4357 = vmatmul.bf16.gmra.mxu0 %v3823
    %v4358 = vpop.f32.mrf.mxu0
    %v4359 = vadd.f32 %v4155, %v4358
    %v4360 = vpop.f32.mrf.mxu0
    %v4361 = vadd.f32 %v4157, %v4360
    %4362 = vmatmul.bf16.gmra.mxu0 %v3826
    %v4363 = vpop.f32.mrf.mxu0
    %v4364 = vadd.f32 %v4160, %v4363
    %v4365 = vpop.f32.mrf.mxu0
    %v4366 = vadd.f32 %v4162, %v4365
    %4367 = vmatmul.bf16.gmra.mxu0 %v3829
    %v4368 = vpop.f32.mrf.mxu0
    %v4369 = vadd.f32 %v4165, %v4368
    %v4370 = vpop.f32.mrf.mxu0
    %v4371 = vadd.f32 %v4167, %v4370
    %4372 = vmatmul.bf16.gmra.mxu0 %v3832
    %v4373 = vpop.f32.mrf.mxu0
    %v4374 = vadd.f32 %v4170, %v4373
    %v4375 = vpop.f32.mrf.mxu0
    %v4376 = vadd.f32 %v4172, %v4375
    %4377 = vmatmul.bf16.gmra.mxu0 %v3835
    %v4378 = vpop.f32.mrf.mxu0
    %v4379 = vadd.f32 %v4175, %v4378
    %v4380 = vpop.f32.mrf.mxu0
    %v4381 = vadd.f32 %v4177, %v4380
    %4382 = vmatmul.bf16.gmra.mxu0 %v3838
    %v4383 = vpop.f32.mrf.mxu0
    %v4384 = vadd.f32 %v4180, %v4383
    %v4385 = vpop.f32.mrf.mxu0
    %v4386 = vadd.f32 %v4182, %v4385
    %4387 = vmatmul.bf16.gmra.mxu0 %v3841
    %v4388 = vpop.f32.mrf.mxu0
    %v4389 = vadd.f32 %v4185, %v4388
    %v4390 = vpop.f32.mrf.mxu0
    %v4391 = vadd.f32 %v4187, %v4390
    %4392 = vmatmul.bf16.gmra.mxu0 %v3844
    %v4393 = vpop.f32.mrf.mxu0
    %v4394 = vadd.f32 %v4190, %v4393
    %v4395 = vpop.f32.mrf.mxu0
    %v4396 = vadd.f32 %v4192, %v4395
    %4397 = vmatmul.bf16.gmra.mxu0 %v3847
    %v4398 = vpop.f32.mrf.mxu0
    %v4399 = vadd.f32 %v4195, %v4398
    %v4400 = vpop.f32.mrf.mxu0
    %v4401 = vadd.f32 %v4197, %v4400
    %4402 = vmatmul.bf16.gmra.mxu0 %v3850
    %v4403 = vpop.f32.mrf.mxu0
    %v4404 = vadd.f32 %v4200, %v4403
    %v4405 = vpop.f32.mrf.mxu0
    %v4406 = vadd.f32 %v4202, %v4405
    %4407 = vmatmul.bf16.gmra.mxu0 %v3853
    %v4408 = vpop.f32.mrf.mxu0
    %v4409 = vadd.f32 %v4205, %v4408
    %v4410 = vpop.f32.mrf.mxu0
    %v4411 = vadd.f32 %v4207, %v4410
    %4412 = vmatmul.bf16.gmra.mxu0 %v3856
    %v4413 = vpop.f32.mrf.mxu0
    %v4414 = vadd.f32 %v4210, %v4413
    %v4415 = vpop.f32.mrf.mxu0
    %v4416 = vadd.f32 %v4212, %v4415
    %4417 = vmatmul.bf16.gmra.mxu0 %v3859
    %v4418 = vpop.f32.mrf.mxu0
    %v4419 = vadd.f32 %v4215, %v4418
    %v4420 = vpop.f32.mrf.mxu0
    %v4421 = vadd.f32 %v4217, %v4420
    %4422 = vmatmul.bf16.gmra.mxu0 %v3862
    %v4423 = vpop.f32.mrf.mxu0
    %v4424 = vadd.f32 %v4220, %v4423
    %v4425 = vpop.f32.mrf.mxu0
    %v4426 = vadd.f32 %v4222, %v4425
    %4427 = vmatmul.bf16.gmra.mxu0 %v3865
    %v4428 = vpop.f32.mrf.mxu0
    %v4429 = vadd.f32 %v4225, %v4428
    %v4430 = vpop.f32.mrf.mxu0
    %v4431 = vadd.f32 %v4227, %v4430
    %4432 = vmatmul.bf16.gmra.mxu0 %v3868
    %v4433 = vpop.f32.mrf.mxu0
    %v4434 = vadd.f32 %v4230, %v4433
    %v4435 = vpop.f32.mrf.mxu0
    %v4436 = vadd.f32 %v4232, %v4435
    %4437 = vmatmul.bf16.gmra.mxu0 %v3871
    %v4438 = vpop.f32.mrf.mxu0
    %v4439 = vadd.f32 %v4235, %v4438
    %v4440 = vpop.f32.mrf.mxu0
    %v4441 = vadd.f32 %v4237, %v4440
    %4442 = vmatmul.bf16.gmra.mxu0 %v3874
    %v4443 = vpop.f32.mrf.mxu0
    %v4444 = vadd.f32 %v4240, %v4443
    %v4445 = vpop.f32.mrf.mxu0
    %v4446 = vadd.f32 %v4242, %v4445
    %4447 = vmatmul.bf16.gmra.mxu0 %v3877
    %v4448 = vpop.f32.mrf.mxu0
    %v4449 = vadd.f32 %v4245, %v4448
    %v4450 = vpop.f32.mrf.mxu0
    %v4451 = vadd.f32 %v4247, %v4450
    %4452 = vmatmul.bf16.gmra.mxu0 %v3880
    %v4453 = vpop.f32.mrf.mxu0
    %v4454 = vadd.f32 %v4250, %v4453
    %v4455 = vpop.f32.mrf.mxu0
    %v4456 = vadd.f32 %v4252, %v4455
    %4457 = vmatmul.bf16.gmra.mxu0 %v3883
    %v4458 = vpop.f32.mrf.mxu0
    %v4459 = vadd.f32 %v4255, %v4458
    %v4460 = vpop.f32.mrf.mxu0
    %v4461 = vadd.f32 %v4257, %v4460
    %4462 = vmatmul.bf16.gmra.mxu0 %v3886
    %v4463 = vpop.f32.mrf.mxu0
    %v4464 = vadd.f32 %v4260, %v4463
    %v4465 = vpop.f32.mrf.mxu0
    %v4466 = vadd.f32 %v4262, %v4465
    %4467 = vmatmul.bf16.gmra.mxu0 %v3889
    %v4468 = vpop.f32.mrf.mxu0
    %v4469 = vadd.f32 %v4265, %v4468
    %v4470 = vpop.f32.mrf.mxu0
    %v4471 = vadd.f32 %v4267, %v4470
    %4472 = vmatmul.bf16.gmra.mxu0 %v3892
    %v4473 = vpop.f32.mrf.mxu0
    %v4474 = vadd.f32 %v4270, %v4473
    %v4475 = vpop.f32.mrf.mxu0
    %v4476 = vadd.f32 %v4272, %v4475
    %4477 = vmatmul.bf16.gmra.mxu0 %v3895
    %v4478 = vpop.f32.mrf.mxu0
    %v4479 = vadd.f32 %v4275, %v4478
    %v4480 = vpop.f32.mrf.mxu0
    %v4481 = vadd.f32 %v4277, %v4480
    %4482 = vmatmul.bf16.gmra.mxu0 %v3898
    %v4483 = vpop.f32.mrf.mxu0
    %v4484 = vadd.f32 %v4280, %v4483
    %v4485 = vpop.f32.mrf.mxu0
    %v4486 = vadd.f32 %v4282, %v4485
    %4487 = vmatmul.bf16.gmra.mxu0 %v3901
    %v4488 = vpop.f32.mrf.mxu0
    %v4489 = vadd.f32 %v4285, %v4488
    %v4490 = vpop.f32.mrf.mxu0
    %v4491 = vadd.f32 %v4287, %v4490
    %4492 = vmatmul.bf16.gmra.mxu0 %v3904
    %v4493 = vpop.f32.mrf.mxu0
    %v4494 = vadd.f32 %v4290, %v4493
    %v4495 = vpop.f32.mrf.mxu0
    %v4496 = vadd.f32 %v4292, %v4495
    %4497 = vmatmul.bf16.gmra.mxu0 %v3907
    %v4498 = vpop.f32.mrf.mxu0
    %v4499 = vadd.f32 %v4295, %v4498
    %v4500 = vpop.f32.mrf.mxu0
    %v4501 = vadd.f32 %v4297, %v4500
    %4502 = vmatmul.bf16.gmra.mxu0 %v3910
    %v4503 = vpop.f32.mrf.mxu0
    %v4504 = vadd.f32 %v4300, %v4503
    %v4505 = vpop.f32.mrf.mxu0
    %v4506 = vadd.f32 %v4302, %v4505
    %4507 = vmatmul.bf16.gmra.mxu0 %v3913
    %v4508 = vpop.f32.mrf.mxu0
    %v4509 = vadd.f32 %v4305, %v4508
    %v4510 = vpop.f32.mrf.mxu0
    %v4511 = vadd.f32 %v4307, %v4510
    %4512 = vmatmul.bf16.gmra.mxu0 %v3916
    %v4513 = vpop.f32.mrf.mxu0
    %v4514 = vadd.f32 %v4310, %v4513
    %v4515 = vpop.f32.mrf.mxu0
    %v4516 = vadd.f32 %v4312, %v4515
    %4517 = vmatmul.bf16.gmra.mxu0 %v3919
    %v4518 = vpop.f32.mrf.mxu0
    %v4519 = vadd.f32 %v4315, %v4518
    %v4520 = vpop.f32.mrf.mxu0
    %v4521 = vadd.f32 %v4317, %v4520
    %4522 = vmatmul.bf16.gmra.mxu0 %v3922
    %v4523 = vpop.f32.mrf.mxu0
    %v4524 = vadd.f32 %v4320, %v4523
    %v4525 = vpop.f32.mrf.mxu0
    %v4526 = vadd.f32 %v4322, %v4525
    %4527 = vmatmul.bf16.gmra.mxu0 %v3925
    %v4528 = vpop.f32.mrf.mxu0
    %v4529 = vadd.f32 %v4325, %v4528
    %v4530 = vpop.f32.mrf.mxu0
    %v4531 = vadd.f32 %v4327, %v4530
    %4532 = vmatmul.bf16.gmra.mxu0 %v3928
    %v4533 = vpop.f32.mrf.mxu0
    %v4534 = vadd.f32 %v4330, %v4533
    %v4535 = vpop.f32.mrf.mxu0
    %v4536 = vadd.f32 %v4332, %v4535
    %4537 = vmatmul.bf16.gmra.mxu0 %v3931
    %v4538 = vpop.f32.mrf.mxu0
    %v4539 = vadd.f32 %v4335, %v4538
    %v4540 = vpop.f32.mrf.mxu0
    %v4541 = vadd.f32 %v4337, %v4540
    %4542 = vmatmul.bf16.gmra.mxu0 %v3934
    %v4543 = vpop.f32.mrf.mxu0
    %v4544 = vadd.f32 %v4340, %v4543
    %v4545 = vpop.f32.mrf.mxu0
    %v4546 = vadd.f32 %v4342, %v4545
    %4547 = vdwg.mxu0
    %v4548 = vmax.f32 %v4354, 0.0
    %v4549 = vmax.f32 %v4356, 0.0
    %v4550 = vmax.f32 %v4359, 0.0
    %v4551 = vmax.f32 %v4361, 0.0
    %v4552 = vmax.f32 %v4364, 0.0
    %v4553 = vmax.f32 %v4366, 0.0
    %v4554 = vmax.f32 %v4369, 0.0
    %v4555 = vmax.f32 %v4371, 0.0
    %v4556 = vmax.f32 %v4374, 0.0
    %v4557 = vmax.f32 %v4376, 0.0
    %v4558 = vmax.f32 %v4379, 0.0
    %v4559 = vmax.f32 %v4381, 0.0
    %v4560 = vmax.f32 %v4384, 0.0
    %v4561 = vmax.f32 %v4386, 0.0
    %v4562 = vmax.f32 %v4389, 0.0
    %v4563 = vmax.f32 %v4391, 0.0
    %v4564 = vmax.f32 %v4394, 0.0
    %v4565 = vmax.f32 %v4396, 0.0
    %v4566 = vmax.f32 %v4399, 0.0
    %v4567 = vmax.f32 %v4401, 0.0
    %v4568 = vmax.f32 %v4404, 0.0
    %v4569 = vmax.f32 %v4406, 0.0
    %v4570 = vmax.f32 %v4409, 0.0
    %v4571 = vmax.f32 %v4411, 0.0
    %v4572 = vmax.f32 %v4414, 0.0
    %v4573 = vmax.f32 %v4416, 0.0
    %v4574 = vmax.f32 %v4419, 0.0
    %v4575 = vmax.f32 %v4421, 0.0
    %v4576 = vmax.f32 %v4424, 0.0
    %v4577 = vmax.f32 %v4426, 0.0
    %v4578 = vmax.f32 %v4429, 0.0
    %v4579 = vmax.f32 %v4431, 0.0
    %v4580 = vmax.f32 %v4434, 0.0
    %v4581 = vmax.f32 %v4436, 0.0
    %v4582 = vmax.f32 %v4439, 0.0
    %v4583 = vmax.f32 %v4441, 0.0
    %v4584 = vmax.f32 %v4444, 0.0
    %v4585 = vmax.f32 %v4446, 0.0
    %v4586 = vmax.f32 %v4449, 0.0
    %v4587 = vmax.f32 %v4451, 0.0
    %v4588 = vmax.f32 %v4454, 0.0
    %v4589 = vmax.f32 %v4456, 0.0
    %v4590 = vmax.f32 %v4459, 0.0
    %v4591 = vmax.f32 %v4461, 0.0
    %v4592 = vmax.f32 %v4464, 0.0
    %v4593 = vmax.f32 %v4466, 0.0
    %v4594 = vmax.f32 %v4469, 0.0
    %v4595 = vmax.f32 %v4471, 0.0
    %v4596 = vmax.f32 %v4474, 0.0
    %v4597 = vmax.f32 %v4476, 0.0
    %v4598 = vmax.f32 %v4479, 0.0
    %v4599 = vmax.f32 %v4481, 0.0
    %v4600 = vmax.f32 %v4484, 0.0
    %v4601 = vmax.f32 %v4486, 0.0
    %v4602 = vmax.f32 %v4489, 0.0
    %v4603 = vmax.f32 %v4491, 0.0
    %v4604 = vmax.f32 %v4494, 0.0
    %v4605 = vmax.f32 %v4496, 0.0
    %v4606 = vmax.f32 %v4499, 0.0
    %v4607 = vmax.f32 %v4501, 0.0
    %v4608 = vmax.f32 %v4504, 0.0
    %v4609 = vmax.f32 %v4506, 0.0
    %v4610 = vmax.f32 %v4509, 0.0
    %v4611 = vmax.f32 %v4511, 0.0
    %v4612 = vmax.f32 %v4514, 0.0
    %v4613 = vmax.f32 %v4516, 0.0
    %v4614 = vmax.f32 %v4519, 0.0
    %v4615 = vmax.f32 %v4521, 0.0
    %v4616 = vmax.f32 %v4524, 0.0
    %v4617 = vmax.f32 %v4526, 0.0
    %v4618 = vmax.f32 %v4529, 0.0
    %v4619 = vmax.f32 %v4531, 0.0
    %v4620 = vmax.f32 %v4534, 0.0
    %v4621 = vmax.f32 %v4536, 0.0
    %v4622 = vmax.f32 %v4539, 0.0
    %v4623 = vmax.f32 %v4541, 0.0
    %v4624 = vmax.f32 %v4544, 0.0
    %v4625 = vmax.f32 %v4546, 0.0
    %4626 = vst.msk [vmem:[#allocation3] sm:$0xff] %vm3162, %v4548
    %4627 = vst.msk [vmem:[#allocation3 + $0x8] sm:$0xff] %vm3162, %v4549
    %4628 = vst.msk [vmem:[#allocation3 + $0x10] sm:$0xff] %vm3162, %v4550
    %4629 = vst.msk [vmem:[#allocation3 + $0x18] sm:$0xff] %vm3162, %v4551
    %4630 = vst.msk [vmem:[#allocation3 + $0x20] sm:$0xff] %vm3162, %v4552
    %4631 = vst.msk [vmem:[#allocation3 + $0x28] sm:$0xff] %vm3162, %v4553
    %4632 = vst.msk [vmem:[#allocation3 + $0x30] sm:$0xff] %vm3162, %v4554
    %4633 = vst.msk [vmem:[#allocation3 + $0x38] sm:$0xff] %vm3162, %v4555
    %4634 = vst.msk [vmem:[#allocation3 + $0x40] sm:$0xff] %vm3162, %v4556
    %4635 = vst.msk [vmem:[#allocation3 + $0x48] sm:$0xff] %vm3162, %v4557
    %4636 = vst.msk [vmem:[#allocation3 + $0x50] sm:$0xff] %vm3162, %v4558
    %4637 = vst.msk [vmem:[#allocation3 + $0x58] sm:$0xff] %vm3162, %v4559
    %4638 = vst.msk [vmem:[#allocation3 + $0x60] sm:$0xff] %vm3162, %v4560
    %4639 = vst.msk [vmem:[#allocation3 + $0x68] sm:$0xff] %vm3162, %v4561
    %4640 = vst.msk [vmem:[#allocation3 + $0x70] sm:$0xff] %vm3162, %v4562
    %4641 = vst.msk [vmem:[#allocation3 + $0x78] sm:$0xff] %vm3162, %v4563
    %4642 = vst.msk [vmem:[#allocation3 + $0x80] sm:$0xff] %vm3162, %v4564
    %4643 = vst.msk [vmem:[#allocation3 + $0x88] sm:$0xff] %vm3162, %v4565
    %4644 = vst.msk [vmem:[#allocation3 + $0x90] sm:$0xff] %vm3162, %v4566
    %4645 = vst.msk [vmem:[#allocation3 + $0x98] sm:$0xff] %vm3162, %v4567
    %4646 = vst.msk [vmem:[#allocation3 + $0xa0] sm:$0xff] %vm3162, %v4568
    %4647 = vst.msk [vmem:[#allocation3 + $0xa8] sm:$0xff] %vm3162, %v4569
    %4648 = vst.msk [vmem:[#allocation3 + $0xb0] sm:$0xff] %vm3162, %v4570
    %4649 = vst.msk [vmem:[#allocation3 + $0xb8] sm:$0xff] %vm3162, %v4571
    %4650 = vst.msk [vmem:[#allocation3 + $0xc0] sm:$0xff] %vm3162, %v4572
    %4651 = vst.msk [vmem:[#allocation3 + $0xc8] sm:$0xff] %vm3162, %v4573
    %4652 = vst.msk [vmem:[#allocation3 + $0xd0] sm:$0xff] %vm3162, %v4574
    %4653 = vst.msk [vmem:[#allocation3 + $0xd8] sm:$0xff] %vm3162, %v4575
    %4654 = vst.msk [vmem:[#allocation3 + $0xe0] sm:$0xff] %vm3162, %v4576
    %4655 = vst.msk [vmem:[#allocation3 + $0xe8] sm:$0xff] %vm3162, %v4577
    %4656 = vst.msk [vmem:[#allocation3 + $0xf0] sm:$0xff] %vm3162, %v4578
    %4657 = vst.msk [vmem:[#allocation3 + $0xf8] sm:$0xff] %vm3162, %v4579
    %4658 = vst.msk [vmem:[#allocation3 + $0x100] sm:$0xff] %vm3162, %v4580
    %4659 = vst.msk [vmem:[#allocation3 + $0x108] sm:$0xff] %vm3162, %v4581
    %4660 = vst.msk [vmem:[#allocation3 + $0x110] sm:$0xff] %vm3162, %v4582
    %4661 = vst.msk [vmem:[#allocation3 + $0x118] sm:$0xff] %vm3162, %v4583
    %4662 = vst.msk [vmem:[#allocation3 + $0x120] sm:$0xff] %vm3162, %v4584
    %4663 = vst.msk [vmem:[#allocation3 + $0x128] sm:$0xff] %vm3162, %v4585
    %4664 = vst.msk [vmem:[#allocation3 + $0x130] sm:$0xff] %vm3162, %v4586
    %4665 = vst.msk [vmem:[#allocation3 + $0x138] sm:$0xff] %vm3162, %v4587
    %4666 = vst.msk [vmem:[#allocation3 + $0x140] sm:$0xff] %vm3162, %v4588
    %4667 = vst.msk [vmem:[#allocation3 + $0x148] sm:$0xff] %vm3162, %v4589
    %4668 = vst.msk [vmem:[#allocation3 + $0x150] sm:$0xff] %vm3162, %v4590
    %4669 = vst.msk [vmem:[#allocation3 + $0x158] sm:$0xff] %vm3162, %v4591
    %4670 = vst.msk [vmem:[#allocation3 + $0x160] sm:$0xff] %vm3162, %v4592
    %4671 = vst.msk [vmem:[#allocation3 + $0x168] sm:$0xff] %vm3162, %v4593
    %4672 = vst.msk [vmem:[#allocation3 + $0x170] sm:$0xff] %vm3162, %v4594
    %4673 = vst.msk [vmem:[#allocation3 + $0x178] sm:$0xff] %vm3162, %v4595
    %4674 = vst.msk [vmem:[#allocation3 + $0x180] sm:$0xff] %vm3162, %v4596
    %4675 = vst.msk [vmem:[#allocation3 + $0x188] sm:$0xff] %vm3162, %v4597
    %4676 = vst.msk [vmem:[#allocation3 + $0x190] sm:$0xff] %vm3162, %v4598
    %4677 = vst.msk [vmem:[#allocation3 + $0x198] sm:$0xff] %vm3162, %v4599
    %4678 = vst.msk [vmem:[#allocation3 + $0x1a0] sm:$0xff] %vm3162, %v4600
    %4679 = vst.msk [vmem:[#allocation3 + $0x1a8] sm:$0xff] %vm3162, %v4601
    %4680 = vst.msk [vmem:[#allocation3 + $0x1b0] sm:$0xff] %vm3162, %v4602
    %4681 = vst.msk [vmem:[#allocation3 + $0x1b8] sm:$0xff] %vm3162, %v4603
    %4682 = vst.msk [vmem:[#allocation3 + $0x1c0] sm:$0xff] %vm3162, %v4604
    %4683 = vst.msk [vmem:[#allocation3 + $0x1c8] sm:$0xff] %vm3162, %v4605
    %4684 = vst.msk [vmem:[#allocation3 + $0x1d0] sm:$0xff] %vm3162, %v4606
    %4685 = vst.msk [vmem:[#allocation3 + $0x1d8] sm:$0xff] %vm3162, %v4607
    %4686 = vst.msk [vmem:[#allocation3 + $0x1e0] sm:$0xff] %vm3162, %v4608
    %4687 = vst.msk [vmem:[#allocation3 + $0x1e8] sm:$0xff] %vm3162, %v4609
    %4688 = vst.msk [vmem:[#allocation3 + $0x1f0] sm:$0xff] %vm3162, %v4610
    %4689 = vst.msk [vmem:[#allocation3 + $0x1f8] sm:$0xff] %vm3162, %v4611
    %4690 = vst.msk [vmem:[#allocation3 + $0x200] sm:$0xff] %vm3162, %v4612
    %4691 = vst.msk [vmem:[#allocation3 + $0x208] sm:$0xff] %vm3162, %v4613
    %4692 = vst.msk [vmem:[#allocation3 + $0x210] sm:$0xff] %vm3162, %v4614
    %4693 = vst.msk [vmem:[#allocation3 + $0x218] sm:$0xff] %vm3162, %v4615
    %4694 = vst.msk [vmem:[#allocation3 + $0x220] sm:$0xff] %vm3162, %v4616
    %4695 = vst.msk [vmem:[#allocation3 + $0x228] sm:$0xff] %vm3162, %v4617
    %4696 = vst.msk [vmem:[#allocation3 + $0x230] sm:$0xff] %vm3162, %v4618
    %4697 = vst.msk [vmem:[#allocation3 + $0x238] sm:$0xff] %vm3162, %v4619
    %4698 = vst.msk [vmem:[#allocation3 + $0x240] sm:$0xff] %vm3162, %v4620
    %4699 = vst.msk [vmem:[#allocation3 + $0x248] sm:$0xff] %vm3162, %v4621
    %4700 = vst.msk [vmem:[#allocation3 + $0x250] sm:$0xff] %vm3162, %v4622
    %4701 = vst.msk [vmem:[#allocation3 + $0x258] sm:$0xff] %vm3162, %v4623
    %4702 = vst.msk [vmem:[#allocation3 + $0x260] sm:$0xff] %vm3162, %v4624
    %4703 = vst.msk [vmem:[#allocation3 + $0x268] sm:$0xff] %vm3162, %v4625
    %v4704 = vld [vmem:[#allocation3] ss:$2 sm:$0xff]
    %s4705 = scalar_lea.vmem [#allocation3], 16
    %v4706 = vld [vmem:[%s4705] ss:$2 sm:$0xf]
    %s4707 = scalar_lea.vmem [#allocation3], 1
    %v4708 = vld [vmem:[%s4707] ss:$2 sm:$0xff]
    %s4709 = scalar_lea.vmem [#allocation3], 17
    %v4710 = vld [vmem:[%s4709] ss:$2 sm:$0xf]
    %s4711 = scalar_lea.vmem [#allocation3], 26
    %v4712 = vld [vmem:[%s4711] ss:$2 sm:$0xff]
    %s4713 = scalar_lea.vmem [#allocation3], 42
    %v4714 = vld [vmem:[%s4713] ss:$2 sm:$0xf]
    %s4715 = scalar_lea.vmem [#allocation3], 27
    %v4716 = vld [vmem:[%s4715] ss:$2 sm:$0xff]
    %s4717 = scalar_lea.vmem [#allocation3], 43
    %v4718 = vld [vmem:[%s4717] ss:$2 sm:$0xf]
    %v4719 = vmax.f32 %v4704, %v4708
    %v4720 = vmax.f32 %v4706, %v4710
    %v4721 = vmax.f32 %v4712, %v4716
    %v4722 = vmax.f32 %v4714, %v4718
    %v4723 = vmax.f32 %v4719, %v4721
    %v4724 = vmax.f32 %v4720, %v4722
    %s4725 = scalar_lea.vmem [#allocation3], 52
    %v4726 = vld [vmem:[%s4725] ss:$2 sm:$0xff]
    %s4727 = scalar_lea.vmem [#allocation3], 68
    %v4728 = vld [vmem:[%s4727] ss:$2 sm:$0xf]
    %s4729 = scalar_lea.vmem [#allocation3], 53
    %v4730 = vld [vmem:[%s4729] ss:$2 sm:$0xff]
    %s4731 = scalar_lea.vmem [#allocation3], 69
    %v4732 = vld [vmem:[%s4731] ss:$2 sm:$0xf]
    %s4733 = scalar_lea.vmem [#allocation3], 78
    %v4734 = vld [vmem:[%s4733] ss:$2 sm:$0xff]
    %s4735 = scalar_lea.vmem [#allocation3], 94
    %v4736 = vld [vmem:[%s4735] ss:$2 sm:$0xf]
    %s4737 = scalar_lea.vmem [#allocation3], 79
    %v4738 = vld [vmem:[%s4737] ss:$2 sm:$0xff]
    %s4739 = scalar_lea.vmem [#allocation3], 95
    %v4740 = vld [vmem:[%s4739] ss:$2 sm:$0xf]
    %v4741 = vmax.f32 %v4726, %v4730
    %v4742 = vmax.f32 %v4728, %v4732
    %v4743 = vmax.f32 %v4734, %v4738
    %v4744 = vmax.f32 %v4736, %v4740
    %v4745 = vmax.f32 %v4741, %v4743
    %v4746 = vmax.f32 %v4742, %v4744
    %s4747 = scalar_lea.vmem [#allocation3], 104
    %v4748 = vld [vmem:[%s4747] ss:$2 sm:$0xff]
    %s4749 = scalar_lea.vmem [#allocation3], 120
    %v4750 = vld [vmem:[%s4749] ss:$2 sm:$0xf]
    %s4751 = scalar_lea.vmem [#allocation3], 105
    %v4752 = vld [vmem:[%s4751] ss:$2 sm:$0xff]
    %s4753 = scalar_lea.vmem [#allocation3], 121
    %v4754 = vld [vmem:[%s4753] ss:$2 sm:$0xf]
    %s4755 = scalar_lea.vmem [#allocation3], 130
    %v4756 = vld [vmem:[%s4755] ss:$2 sm:$0xff]
    %s4757 = scalar_lea.vmem [#allocation3], 146
    %v4758 = vld [vmem:[%s4757] ss:$2 sm:$0xf]
    %s4759 = scalar_lea.vmem [#allocation3], 131
    %v4760 = vld [vmem:[%s4759] ss:$2 sm:$0xff]
    %s4761 = scalar_lea.vmem [#allocation3], 147
    %v4762 = vld [vmem:[%s4761] ss:$2 sm:$0xf]
    %v4763 = vmax.f32 %v4748, %v4752
    %v4764 = vmax.f32 %v4750, %v4754
    %v4765 = vmax.f32 %v4756, %v4760
    %v4766 = vmax.f32 %v4758, %v4762
    %v4767 = vmax.f32 %v4763, %v4765
    %v4768 = vmax.f32 %v4764, %v4766
    %s4769 = scalar_lea.vmem [#allocation3], 156
    %v4770 = vld [vmem:[%s4769] ss:$2 sm:$0xff]
    %s4771 = scalar_lea.vmem [#allocation3], 172
    %v4772 = vld [vmem:[%s4771] ss:$2 sm:$0xf]
    %s4773 = scalar_lea.vmem [#allocation3], 157
    %v4774 = vld [vmem:[%s4773] ss:$2 sm:$0xff]
    %s4775 = scalar_lea.vmem [#allocation3], 173
    %v4776 = vld [vmem:[%s4775] ss:$2 sm:$0xf]
    %s4777 = scalar_lea.vmem [#allocation3], 182
    %v4778 = vld [vmem:[%s4777] ss:$2 sm:$0xff]
    %s4779 = scalar_lea.vmem [#allocation3], 198
    %v4780 = vld [vmem:[%s4779] ss:$2 sm:$0xf]
    %s4781 = scalar_lea.vmem [#allocation3], 183
    %v4782 = vld [vmem:[%s4781] ss:$2 sm:$0xff]
    %s4783 = scalar_lea.vmem [#allocation3], 199
    %v4784 = vld [vmem:[%s4783] ss:$2 sm:$0xf]
    %v4785 = vmax.f32 %v4770, %v4774
    %v4786 = vmax.f32 %v4772, %v4776
    %v4787 = vmax.f32 %v4778, %v4782
    %v4788 = vmax.f32 %v4780, %v4784
    %v4789 = vmax.f32 %v4785, %v4787
    %v4790 = vmax.f32 %v4786, %v4788
    %s4791 = scalar_lea.vmem [#allocation3], 208
    %v4792 = vld [vmem:[%s4791] ss:$2 sm:$0xff]
    %s4793 = scalar_lea.vmem [#allocation3], 224
    %v4794 = vld [vmem:[%s4793] ss:$2 sm:$0xf]
    %s4795 = scalar_lea.vmem [#allocation3], 209
    %v4796 = vld [vmem:[%s4795] ss:$2 sm:$0xff]
    %s4797 = scalar_lea.vmem [#allocation3], 225
    %v4798 = vld [vmem:[%s4797] ss:$2 sm:$0xf]
    %s4799 = scalar_lea.vmem [#allocation3], 234
    %v4800 = vld [vmem:[%s4799] ss:$2 sm:$0xff]
    %s4801 = scalar_lea.vmem [#allocation3], 250
    %v4802 = vld [vmem:[%s4801] ss:$2 sm:$0xf]
    %s4803 = scalar_lea.vmem [#allocation3], 235
    %v4804 = vld [vmem:[%s4803] ss:$2 sm:$0xff]
    %s4805 = scalar_lea.vmem [#allocation3], 251
    %v4806 = vld [vmem:[%s4805] ss:$2 sm:$0xf]
    %v4807 = vmax.f32 %v4792, %v4796
    %v4808 = vmax.f32 %v4794, %v4798
    %v4809 = vmax.f32 %v4800, %v4804
    %v4810 = vmax.f32 %v4802, %v4806
    %v4811 = vmax.f32 %v4807, %v4809
    %v4812 = vmax.f32 %v4808, %v4810
    %s4813 = scalar_lea.vmem [#allocation3], 260
    %v4814 = vld [vmem:[%s4813] ss:$2 sm:$0xff]
    %s4815 = scalar_lea.vmem [#allocation3], 276
    %v4816 = vld [vmem:[%s4815] ss:$2 sm:$0xf]
    %s4817 = scalar_lea.vmem [#allocation3], 261
    %v4818 = vld [vmem:[%s4817] ss:$2 sm:$0xff]
    %s4819 = scalar_lea.vmem [#allocation3], 277
    %v4820 = vld [vmem:[%s4819] ss:$2 sm:$0xf]
    %s4821 = scalar_lea.vmem [#allocation3], 286
    %v4822 = vld [vmem:[%s4821] ss:$2 sm:$0xff]
    %s4823 = scalar_lea.vmem [#allocation3], 302
    %v4824 = vld [vmem:[%s4823] ss:$2 sm:$0xf]
    %s4825 = scalar_lea.vmem [#allocation3], 287
    %v4826 = vld [vmem:[%s4825] ss:$2 sm:$0xff]
    %s4827 = scalar_lea.vmem [#allocation3], 303
    %v4828 = vld [vmem:[%s4827] ss:$2 sm:$0xf]
    %v4829 = vmax.f32 %v4814, %v4818
    %v4830 = vmax.f32 %v4816, %v4820
    %v4831 = vmax.f32 %v4822, %v4826
    %v4832 = vmax.f32 %v4824, %v4828
    %v4833 = vmax.f32 %v4829, %v4831
    %v4834 = vmax.f32 %v4830, %v4832
    %s4835 = scalar_lea.vmem [#allocation3], 312
    %v4836 = vld [vmem:[%s4835] ss:$2 sm:$0xff]
    %s4837 = scalar_lea.vmem [#allocation3], 328
    %v4838 = vld [vmem:[%s4837] ss:$2 sm:$0xf]
    %s4839 = scalar_lea.vmem [#allocation3], 313
    %v4840 = vld [vmem:[%s4839] ss:$2 sm:$0xff]
    %s4841 = scalar_lea.vmem [#allocation3], 329
    %v4842 = vld [vmem:[%s4841] ss:$2 sm:$0xf]
    %s4843 = scalar_lea.vmem [#allocation3], 338
    %v4844 = vld [vmem:[%s4843] ss:$2 sm:$0xff]
    %s4845 = scalar_lea.vmem [#allocation3], 354
    %v4846 = vld [vmem:[%s4845] ss:$2 sm:$0xf]
    %s4847 = scalar_lea.vmem [#allocation3], 339
    %v4848 = vld [vmem:[%s4847] ss:$2 sm:$0xff]
    %s4849 = scalar_lea.vmem [#allocation3], 355
    %v4850 = vld [vmem:[%s4849] ss:$2 sm:$0xf]
    %v4851 = vmax.f32 %v4836, %v4840
    %v4852 = vmax.f32 %v4838, %v4842
    %v4853 = vmax.f32 %v4844, %v4848
    %v4854 = vmax.f32 %v4846, %v4850
    %v4855 = vmax.f32 %v4851, %v4853
    %v4856 = vmax.f32 %v4852, %v4854
    %s4857 = scalar_lea.vmem [#allocation3], 364
    %v4858 = vld [vmem:[%s4857] ss:$2 sm:$0xff]
    %s4859 = scalar_lea.vmem [#allocation3], 380
    %v4860 = vld [vmem:[%s4859] ss:$2 sm:$0xf]
    %s4861 = scalar_lea.vmem [#allocation3], 365
    %v4862 = vld [vmem:[%s4861] ss:$2 sm:$0xff]
    %s4863 = scalar_lea.vmem [#allocation3], 381
    %v4864 = vld [vmem:[%s4863] ss:$2 sm:$0xf]
    %s4865 = scalar_lea.vmem [#allocation3], 390
    %v4866 = vld [vmem:[%s4865] ss:$2 sm:$0xff]
    %s4867 = scalar_lea.vmem [#allocation3], 406
    %v4868 = vld [vmem:[%s4867] ss:$2 sm:$0xf]
    %s4869 = scalar_lea.vmem [#allocation3], 391
    %v4870 = vld [vmem:[%s4869] ss:$2 sm:$0xff]
    %s4871 = scalar_lea.vmem [#allocation3], 407
    %v4872 = vld [vmem:[%s4871] ss:$2 sm:$0xf]
    %v4873 = vmax.f32 %v4858, %v4862
    %v4874 = vmax.f32 %v4860, %v4864
    %v4875 = vmax.f32 %v4866, %v4870
    %v4876 = vmax.f32 %v4868, %v4872
    %v4877 = vmax.f32 %v4873, %v4875
    %v4878 = vmax.f32 %v4874, %v4876
    %s4879 = scalar_lea.vmem [#allocation3], 416
    %v4880 = vld [vmem:[%s4879] ss:$2 sm:$0xff]
    %s4881 = scalar_lea.vmem [#allocation3], 432
    %v4882 = vld [vmem:[%s4881] ss:$2 sm:$0xf]
    %s4883 = scalar_lea.vmem [#allocation3], 417
    %v4884 = vld [vmem:[%s4883] ss:$2 sm:$0xff]
    %s4885 = scalar_lea.vmem [#allocation3], 433
    %v4886 = vld [vmem:[%s4885] ss:$2 sm:$0xf]
    %s4887 = scalar_lea.vmem [#allocation3], 442
    %v4888 = vld [vmem:[%s4887] ss:$2 sm:$0xff]
    %s4889 = scalar_lea.vmem [#allocation3], 458
    %v4890 = vld [vmem:[%s4889] ss:$2 sm:$0xf]
    %s4891 = scalar_lea.vmem [#allocation3], 443
    %v4892 = vld [vmem:[%s4891] ss:$2 sm:$0xff]
    %s4893 = scalar_lea.vmem [#allocation3], 459
    %v4894 = vld [vmem:[%s4893] ss:$2 sm:$0xf]
    %v4895 = vmax.f32 %v4880, %v4884
    %v4896 = vmax.f32 %v4882, %v4886
    %v4897 = vmax.f32 %v4888, %v4892
    %v4898 = vmax.f32 %v4890, %v4894
    %v4899 = vmax.f32 %v4895, %v4897
    %v4900 = vmax.f32 %v4896, %v4898
    %s4901 = scalar_lea.vmem [#allocation3], 468
    %v4902 = vld [vmem:[%s4901] ss:$2 sm:$0xff]
    %s4903 = scalar_lea.vmem [#allocation3], 484
    %v4904 = vld [vmem:[%s4903] ss:$2 sm:$0xf]
    %s4905 = scalar_lea.vmem [#allocation3], 469
    %v4906 = vld [vmem:[%s4905] ss:$2 sm:$0xff]
    %s4907 = scalar_lea.vmem [#allocation3], 485
    %v4908 = vld [vmem:[%s4907] ss:$2 sm:$0xf]
    %s4909 = scalar_lea.vmem [#allocation3], 494
    %v4910 = vld [vmem:[%s4909] ss:$2 sm:$0xff]
    %s4911 = scalar_lea.vmem [#allocation3], 510
    %v4912 = vld [vmem:[%s4911] ss:$2 sm:$0xf]
    %s4913 = scalar_lea.vmem [#allocation3], 495
    %v4914 = vld [vmem:[%s4913] ss:$2 sm:$0xff]
    %s4915 = scalar_lea.vmem [#allocation3], 511
    %v4916 = vld [vmem:[%s4915] ss:$2 sm:$0xf]
    %v4917 = vmax.f32 %v4902, %v4906
    %v4918 = vmax.f32 %v4904, %v4908
    %v4919 = vmax.f32 %v4910, %v4914
    %v4920 = vmax.f32 %v4912, %v4916
    %v4921 = vmax.f32 %v4917, %v4919
    %v4922 = vmax.f32 %v4918, %v4920
    %s4923 = scalar_lea.vmem [#allocation3], 520
    %v4924 = vld [vmem:[%s4923] ss:$2 sm:$0xff]
    %s4925 = scalar_lea.vmem [#allocation3], 536
    %v4926 = vld [vmem:[%s4925] ss:$2 sm:$0xf]
    %s4927 = scalar_lea.vmem [#allocation3], 521
    %v4928 = vld [vmem:[%s4927] ss:$2 sm:$0xff]
    %s4929 = scalar_lea.vmem [#allocation3], 537
    %v4930 = vld [vmem:[%s4929] ss:$2 sm:$0xf]
    %s4931 = scalar_lea.vmem [#allocation3], 546
    %v4932 = vld [vmem:[%s4931] ss:$2 sm:$0xff]
    %s4933 = scalar_lea.vmem [#allocation3], 562
    %v4934 = vld [vmem:[%s4933] ss:$2 sm:$0xf]
    %s4935 = scalar_lea.vmem [#allocation3], 547
    %v4936 = vld [vmem:[%s4935] ss:$2 sm:$0xff]
    %s4937 = scalar_lea.vmem [#allocation3], 563
    %v4938 = vld [vmem:[%s4937] ss:$2 sm:$0xf]
    %v4939 = vmax.f32 %v4924, %v4928
    %v4940 = vmax.f32 %v4926, %v4930
    %v4941 = vmax.f32 %v4932, %v4936
    %v4942 = vmax.f32 %v4934, %v4938
    %v4943 = vmax.f32 %v4939, %v4941
    %v4944 = vmax.f32 %v4940, %v4942
    %s4945 = scalar_lea.vmem [#allocation3], 572
    %v4946 = vld [vmem:[%s4945] ss:$2 sm:$0xff]
    %s4947 = scalar_lea.vmem [#allocation3], 588
    %v4948 = vld [vmem:[%s4947] ss:$2 sm:$0xf]
    %s4949 = scalar_lea.vmem [#allocation3], 573
    %v4950 = vld [vmem:[%s4949] ss:$2 sm:$0xff]
    %s4951 = scalar_lea.vmem [#allocation3], 589
    %v4952 = vld [vmem:[%s4951] ss:$2 sm:$0xf]
    %s4953 = scalar_lea.vmem [#allocation3], 598
    %v4954 = vld [vmem:[%s4953] ss:$2 sm:$0xff]
    %s4955 = scalar_lea.vmem [#allocation3], 614
    %v4956 = vld [vmem:[%s4955] ss:$2 sm:$0xf]
    %s4957 = scalar_lea.vmem [#allocation3], 599
    %v4958 = vld [vmem:[%s4957] ss:$2 sm:$0xff]
    %s4959 = scalar_lea.vmem [#allocation3], 615
    %v4960 = vld [vmem:[%s4959] ss:$2 sm:$0xf]
    %v4961 = vmax.f32 %v4946, %v4950
    %v4962 = vmax.f32 %v4948, %v4952
    %v4963 = vmax.f32 %v4954, %v4958
    %v4964 = vmax.f32 %v4956, %v4960
    %v4965 = vmax.f32 %v4961, %v4963
    %v4966 = vmax.f32 %v4962, %v4964
    %vm4969 = vcmask 1043456
    %v4970 = vrot.slane %v4745, 4
    %v4971 = vrot.slane %v4746, 4
    %v4972 = vsel %vm4969, %v4970, %v4971
    %v4977 = vrot.slane %v4789, 4
    %v4978 = vrot.slane %v4790, 4
    %v4979 = vsel %vm4969, %v4977, %v4978
    %v4984 = vrot.slane %v4833, 4
    %v4985 = vrot.slane %v4834, 4
    %v4986 = vsel %vm4969, %v4984, %v4985
    %v4991 = vrot.slane %v4877, 4
    %v4992 = vrot.slane %v4878, 4
    %v4993 = vsel %vm4969, %v4991, %v4992
    %v4998 = vrot.slane %v4921, 4
    %v4999 = vrot.slane %v4922, 4
    %v5000 = vsel %vm4969, %v4998, %v4999
    %v5005 = vrot.slane %v4965, 4
    %v5006 = vrot.slane %v4966, 4
    %v5007 = vsel %vm4969, %v5005, %v5006
    %v5010 = vsel %vm4969, %v4724, %v4970
    %v5011 = vsel %vm4969, %v4768, %v4977
    %v5012 = vsel %vm4969, %v4812, %v4984
    %v5013 = vsel %vm4969, %v4856, %v4991
    %v5014 = vsel %vm4969, %v4900, %v4998
    %v5015 = vsel %vm4969, %v4944, %v5005
    %v5016 = vpack.c.bf16 %v4723, %v4723
    %v5017 = vpack.c.bf16 %v5010, %v5010
    %v5018 = vpack.c.bf16 %v4972, %v4972
    %v5019 = vpack.c.bf16 %v4767, %v4767
    %v5020 = vpack.c.bf16 %v5011, %v5011
    %v5021 = vpack.c.bf16 %v4979, %v4979
    %v5022 = vpack.c.bf16 %v4811, %v4811
    %v5023 = vpack.c.bf16 %v5012, %v5012
    %v5024 = vpack.c.bf16 %v4986, %v4986
    %v5025 = vpack.c.bf16 %v4855, %v4855
    %v5026 = vpack.c.bf16 %v5013, %v5013
    %v5027 = vpack.c.bf16 %v4993, %v4993
    %v5028 = vpack.c.bf16 %v4899, %v4899
    %v5029 = vpack.c.bf16 %v5014, %v5014
    %v5030 = vpack.c.bf16 %v5000, %v5000
    %v5031 = vpack.c.bf16 %v4943, %v4943
    %v5032 = vpack.c.bf16 %v5015, %v5015
    %v5033 = vpack.c.bf16 %v5007, %v5007
    %vm5034 = vcmask 519168
    %5035 = vst.msk [vmem:[%s5] sm:$0xf] %vm5034, %v5016
    %5036 = vst.msk [vmem:[%s5 + $0x4] sm:$0xf] %vm5034, %v5017
    %5037 = vst.msk [vmem:[%s5 + $0x8] sm:$0xf] %vm5034, %v5018
    %5038 = vst.msk [vmem:[%s5 + $0xc] sm:$0xf] %vm5034, %v5019
    %5039 = vst.msk [vmem:[%s5 + $0x10] sm:$0xf] %vm5034, %v5020
    %5040 = vst.msk [vmem:[%s5 + $0x14] sm:$0xf] %vm5034, %v5021
    %5041 = vst.msk [vmem:[%s5 + $0x18] sm:$0xf] %vm5034, %v5022
    %5042 = vst.msk [vmem:[%s5 + $0x1c] sm:$0xf] %vm5034, %v5023
    %5043 = vst.msk [vmem:[%s5 + $0x20] sm:$0xf] %vm5034, %v5024
    %5044 = vst.msk [vmem:[%s5 + $0x24] sm:$0xf] %vm5034, %v5025
    %5045 = vst.msk [vmem:[%s5 + $0x28] sm:$0xf] %vm5034, %v5026
    %5046 = vst.msk [vmem:[%s5 + $0x2c] sm:$0xf] %vm5034, %v5027
    %5047 = vst.msk [vmem:[%s5 + $0x30] sm:$0xf] %vm5034, %v5028
    %5048 = vst.msk [vmem:[%s5 + $0x34] sm:$0xf] %vm5034, %v5029
    %5049 = vst.msk [vmem:[%s5 + $0x38] sm:$0xf] %vm5034, %v5030
    %5050 = vst.msk [vmem:[%s5 + $0x3c] sm:$0xf] %vm5034, %v5031
    %5051 = vst.msk [vmem:[%s5 + $0x40] sm:$0xf] %vm5034, %v5032
    %5052 = vst.msk [vmem:[%s5 + $0x44] sm:$0xf] %vm5034, %v5033
    %s5053 = scalar_lea.vmem %s0, 340
    %v5054 = vld [vmem:[%s5053] sm:$0xf]
    %v5055 = vld [vmem:[%s5053 + $0x4] sm:$0xf]
    %v5056 = vld [vmem:[%s5053 + $0x8] sm:$0xf]
    %v5057 = vld [vmem:[%s5053 + $0xc] sm:$0xf]
    %v5058 = vld [vmem:[%s5053 + $0x10] sm:$0xf]
    %v5059 = vld [vmem:[%s5053 + $0x14] sm:$0xf]
    %v5060 = vld [vmem:[%s5053 + $0x18] sm:$0xf]
    %v5061 = vld [vmem:[%s5053 + $0x1c] sm:$0xf]
    %v5062 = vld [vmem:[%s5053 + $0x20] sm:$0xf]
    %v5063 = vld [vmem:[%s5053 + $0x24] sm:$0xf]
    %v5064 = vld [vmem:[%s5053 + $0x28] sm:$0xf]
    %v5065 = vld [vmem:[%s5053 + $0x2c] sm:$0xf]
    %v5066 = vld [vmem:[%s5053 + $0x30] sm:$0xf]
    %v5067 = vld [vmem:[%s5053 + $0x34] sm:$0xf]
    %v5068 = vld [vmem:[%s5053 + $0x38] sm:$0xf]
    %v5069 = vld [vmem:[%s5053 + $0x3c] sm:$0xf]
    %v5070 = vld [vmem:[%s5053 + $0x40] sm:$0xf]
    %v5071 = vld [vmem:[%s5053 + $0x44] sm:$0xf]
    %v5072 = vld [vmem:[%s5053 + $0x48] sm:$0xf]
    %v5073 = vld [vmem:[%s5053 + $0x4c] sm:$0xf]
    %v5074 = vld [vmem:[%s5053 + $0x50] sm:$0xf]
    %v5075 = vld [vmem:[%s5053 + $0x54] sm:$0xf]
    %v5076 = vld [vmem:[%s5053 + $0x58] sm:$0xf]
    %v5077 = vld [vmem:[%s5053 + $0x5c] sm:$0xf]
    %v5078 = vld [vmem:[%s5053 + $0x60] sm:$0xf]
    %v5079 = vld [vmem:[%s5053 + $0x64] sm:$0xf]
    %v5080 = vld [vmem:[%s5053 + $0x68] sm:$0xf]
    %v5081 = vld [vmem:[%s5053 + $0x6c] sm:$0xf]
    %v5082 = vld [vmem:[%s5053 + $0x70] sm:$0xf]
    %v5083 = vld [vmem:[%s5053 + $0x74] sm:$0xf]
    %v5084 = vld [vmem:[%s5053 + $0x78] sm:$0xf]
    %v5085 = vld [vmem:[%s5053 + $0x7c] sm:$0xf]
    %v5086 = vld [vmem:[%s5053 + $0x80] sm:$0xf]
    %v5087 = vld [vmem:[%s5053 + $0x84] sm:$0xf]
    %v5088 = vld [vmem:[%s5053 + $0x88] sm:$0xf]
    %v5089 = vld [vmem:[%s5053 + $0x8c] sm:$0xf]
    %v5090 = vld [vmem:[%s5053 + $0x90] sm:$0xf]
    %v5091 = vld [vmem:[%s5053 + $0x94] sm:$0xf]
    %v5092 = vld [vmem:[%s5053 + $0x98] sm:$0xf]
    %v5093 = vld [vmem:[%s5053 + $0x9c] sm:$0xf]
    %v5094 = vld [vmem:[%s5053 + $0xa0] sm:$0xf]
    %v5095 = vld [vmem:[%s5053 + $0xa4] sm:$0xf]
    %v5096 = vld [vmem:[%s5053 + $0xa8] sm:$0xf]
    %v5097 = vld [vmem:[%s5053 + $0xac] sm:$0xf]
    %v5098 = vld [vmem:[%s5053 + $0xb0] sm:$0xf]
    %v5099 = vld [vmem:[%s5053 + $0xb4] sm:$0xf]
    %v5100 = vld [vmem:[%s5053 + $0xb8] sm:$0xf]
    %v5101 = vld [vmem:[%s5053 + $0xbc] sm:$0xf]
    %v5102 = vld [vmem:[%s5053 + $0xc0] sm:$0xf]
    %v5103 = vld [vmem:[%s5053 + $0xc4] sm:$0xf]
    %v5104 = vld [vmem:[%s5053 + $0xc8] sm:$0xf]
    %v5105 = vld [vmem:[%s5053 + $0xcc] sm:$0xf]
    %v5106 = vld [vmem:[%s5053 + $0xd0] sm:$0xf]
    %v5107 = vld [vmem:[%s5053 + $0xd4] sm:$0xf]
    %v5108 = vld [vmem:[%s5053 + $0xd8] sm:$0xf]
    %v5109 = vld [vmem:[%s5053 + $0xdc] sm:$0xf]
    %v5110 = vld [vmem:[%s5053 + $0xe0] sm:$0xf]
    %v5111 = vld [vmem:[%s5053 + $0xe4] sm:$0xf]
    %v5112 = vld [vmem:[%s5053 + $0xe8] sm:$0xf]
    %v5113 = vld [vmem:[%s5053 + $0xec] sm:$0xf]
    %v5114 = vld [vmem:[%s5053 + $0xf0] sm:$0xf]
    %v5115 = vld [vmem:[%s5053 + $0xf4] sm:$0xf]
    %v5116 = vld [vmem:[%s5053 + $0xf8] sm:$0xf]
    %v5117 = vld [vmem:[%s5053 + $0xfc] sm:$0xf]
    %v5118 = vld [vmem:[%s5053 + $0x100] sm:$0xf]
    %v5119 = vld [vmem:[%s5053 + $0x104] sm:$0xf]
    %v5120 = vld [vmem:[%s5053 + $0x108] sm:$0xf]
    %v5121 = vld [vmem:[%s5053 + $0x10c] sm:$0xf]
    %v5122 = vld [vmem:[%s5053 + $0x110] sm:$0xf]
    %v5123 = vld [vmem:[%s5053 + $0x114] sm:$0xf]
    %v5124 = vld [vmem:[%s5053 + $0x118] sm:$0xf]
    %v5125 = vld [vmem:[%s5053 + $0x11c] sm:$0xf]
    %v5126 = vld [vmem:[%s5053 + $0x120] sm:$0xf]
    %v5127 = vld [vmem:[%s5053 + $0x124] sm:$0xf]
    %v5128 = vld [vmem:[%s5053 + $0x128] sm:$0xf]
    %v5129 = vld [vmem:[%s5053 + $0x12c] sm:$0xf]
    %v5130 = vld [vmem:[%s5053 + $0x130] sm:$0xf]
    %v5131 = vld [vmem:[%s5053 + $0x134] sm:$0xf]
    %v5132 = vld [vmem:[%s5053 + $0x138] sm:$0xf]
    %v5133 = vld [vmem:[%s5053 + $0x13c] sm:$0xf]
    %v5134 = vld [vmem:[%s5053 + $0x140] sm:$0xf]
    %v5135 = vld [vmem:[%s5053 + $0x144] sm:$0xf]
    %v5136 = vld [vmem:[%s5053 + $0x148] sm:$0xf]
    %v5137 = vld [vmem:[%s5053 + $0x14c] sm:$0xf]
    %v5138 = vld [vmem:[%s5053 + $0x150] sm:$0xf]
    %v5139 = vld [vmem:[#allocation4] sm:$0xf]
    %v5140 = vld [vmem:[#allocation4 + $0x4] sm:$0xf]
    %v5141 = vld [vmem:[#allocation6] sm:$0x1]
    %v5143 = vperm.slane %v5141, 0
    %v5230 = vunpack.c.l.b16 %v5054
    %v5231 = vunpack.c.l.b16 %v5055
    %v5232 = vunpack.c.l.b16 %v5056
    %v5233 = vunpack.c.l.b16 %v5057
    %v5234 = vunpack.c.l.b16 %v5058
    %v5235 = vunpack.c.l.b16 %v5059
    %v5236 = vunpack.c.l.b16 %v5060
    %v5237 = vunpack.c.l.b16 %v5061
    %v5238 = vunpack.c.l.b16 %v5062
    %v5239 = vunpack.c.l.b16 %v5063
    %v5240 = vunpack.c.l.b16 %v5064
    %v5241 = vunpack.c.l.b16 %v5065
    %v5242 = vunpack.c.l.b16 %v5066
    %v5243 = vunpack.c.l.b16 %v5067
    %v5244 = vunpack.c.l.b16 %v5068
    %v5245 = vunpack.c.l.b16 %v5069
    %v5246 = vunpack.c.l.b16 %v5070
    %v5247 = vunpack.c.l.b16 %v5071
    %v5248 = vunpack.c.l.b16 %v5072
    %v5249 = vunpack.c.l.b16 %v5073
    %v5250 = vunpack.c.l.b16 %v5074
    %v5251 = vunpack.c.l.b16 %v5075
    %v5252 = vunpack.c.l.b16 %v5076
    %v5253 = vunpack.c.l.b16 %v5077
    %v5254 = vunpack.c.l.b16 %v5078
    %v5255 = vunpack.c.l.b16 %v5079
    %v5256 = vunpack.c.l.b16 %v5080
    %v5257 = vunpack.c.l.b16 %v5081
    %v5258 = vunpack.c.l.b16 %v5082
    %v5259 = vunpack.c.l.b16 %v5083
    %v5260 = vunpack.c.l.b16 %v5084
    %v5261 = vunpack.c.l.b16 %v5085
    %v5262 = vunpack.c.l.b16 %v5086
    %v5263 = vunpack.c.l.b16 %v5087
    %v5264 = vunpack.c.l.b16 %v5088
    %v5265 = vunpack.c.l.b16 %v5089
    %v5266 = vunpack.c.l.b16 %v5090
    %v5267 = vunpack.c.l.b16 %v5091
    %v5268 = vunpack.c.l.b16 %v5092
    %v5269 = vunpack.c.l.b16 %v5093
    %v5270 = vunpack.c.l.b16 %v5094
    %v5271 = vunpack.c.l.b16 %v5095
    %v5272 = vunpack.c.l.b16 %v5096
    %v5273 = vunpack.c.l.b16 %v5097
    %v5274 = vunpack.c.l.b16 %v5098
    %v5275 = vunpack.c.l.b16 %v5099
    %v5276 = vunpack.c.l.b16 %v5100
    %v5277 = vunpack.c.l.b16 %v5101
    %v5278 = vunpack.c.l.b16 %v5102
    %v5279 = vunpack.c.l.b16 %v5103
    %v5280 = vunpack.c.l.b16 %v5104
    %v5281 = vunpack.c.l.b16 %v5105
    %v5282 = vunpack.c.l.b16 %v5106
    %v5283 = vunpack.c.l.b16 %v5107
    %v5284 = vunpack.c.l.b16 %v5108
    %v5285 = vunpack.c.l.b16 %v5109
    %v5286 = vunpack.c.l.b16 %v5110
    %v5287 = vunpack.c.l.b16 %v5111
    %v5288 = vunpack.c.l.b16 %v5112
    %v5289 = vunpack.c.l.b16 %v5113
    %v5290 = vunpack.c.l.b16 %v5114
    %v5291 = vunpack.c.l.b16 %v5115
    %v5292 = vunpack.c.l.b16 %v5116
    %v5293 = vunpack.c.l.b16 %v5117
    %v5294 = vunpack.c.l.b16 %v5118
    %v5295 = vunpack.c.l.b16 %v5119
    %v5296 = vunpack.c.l.b16 %v5120
    %v5297 = vunpack.c.l.b16 %v5121
    %v5298 = vunpack.c.l.b16 %v5122
    %v5299 = vunpack.c.l.b16 %v5123
    %v5300 = vunpack.c.l.b16 %v5124
    %v5301 = vunpack.c.l.b16 %v5125
    %v5302 = vunpack.c.l.b16 %v5126
    %v5303 = vunpack.c.l.b16 %v5127
    %v5304 = vunpack.c.l.b16 %v5128
    %v5305 = vunpack.c.l.b16 %v5129
    %v5306 = vunpack.c.l.b16 %v5130
    %v5307 = vunpack.c.l.b16 %v5131
    %v5308 = vunpack.c.l.b16 %v5132
    %v5309 = vunpack.c.l.b16 %v5133
    %v5310 = vunpack.c.l.b16 %v5134
    %v5311 = vunpack.c.l.b16 %v5135
    %v5312 = vunpack.c.l.b16 %v5136
    %v5313 = vunpack.c.l.b16 %v5137
    %v5314 = vunpack.c.l.b16 %v5138
    %v5315 = vpack.c.b16 %v5231, %v5230
    %v5316 = vpack.c.b16 %v5233, %v5232
    %v5317 = vpack.c.b16 %v5235, %v5234
    %v5318 = vpack.c.b16 %v5237, %v5236
    %v5319 = vpack.c.b16 %v5239, %v5238
    %v5320 = vpack.c.b16 %v5241, %v5240
    %v5321 = vpack.c.b16 %v5243, %v5242
    %v5322 = vpack.c.b16 %v5245, %v5244
    %v5323 = vpack.c.b16 %v5247, %v5246
    %v5324 = vpack.c.b16 %v5249, %v5248
    %v5325 = vpack.c.b16 %v5251, %v5250
    %v5326 = vpack.c.b16 %v5253, %v5252
    %v5327 = vpack.c.b16 %v5255, %v5254
    %v5328 = vpack.c.b16 %v5257, %v5256
    %v5329 = vpack.c.b16 %v5259, %v5258
    %v5330 = vpack.c.b16 %v5261, %v5260
    %v5331 = vpack.c.b16 %v5263, %v5262
    %v5332 = vpack.c.b16 %v5265, %v5264
    %v5333 = vpack.c.b16 %v5267, %v5266
    %v5334 = vpack.c.b16 %v5269, %v5268
    %v5335 = vpack.c.b16 %v5271, %v5270
    %v5336 = vpack.c.b16 %v5273, %v5272
    %v5337 = vpack.c.b16 %v5275, %v5274
    %v5338 = vpack.c.b16 %v5277, %v5276
    %v5339 = vpack.c.b16 %v5279, %v5278
    %v5340 = vpack.c.b16 %v5281, %v5280
    %v5341 = vpack.c.b16 %v5283, %v5282
    %v5342 = vpack.c.b16 %v5285, %v5284
    %v5343 = vpack.c.b16 %v5287, %v5286
    %v5344 = vpack.c.b16 %v5289, %v5288
    %v5345 = vpack.c.b16 %v5291, %v5290
    %v5346 = vpack.c.b16 %v5293, %v5292
    %v5347 = vpack.c.b16 %v5295, %v5294
    %v5348 = vpack.c.b16 %v5297, %v5296
    %v5349 = vpack.c.b16 %v5299, %v5298
    %v5350 = vpack.c.b16 %v5301, %v5300
    %v5351 = vpack.c.b16 %v5303, %v5302
    %v5352 = vpack.c.b16 %v5305, %v5304
    %v5353 = vpack.c.b16 %v5307, %v5306
    %v5354 = vpack.c.b16 %v5309, %v5308
    %v5355 = vpack.c.b16 %v5311, %v5310
    %v5356 = vpack.c.b16 %v5313, %v5312
    %v5357 = vpack.c.b16 %v5314, %v5314
    %v5360 = vunpack.c.l.b16 %v5139
    %v5361 = vunpack.c.l.b16 %v5140
    %v5362 = vpack.c.b16 %v5361, %v5360
    %v5365 = vsel %vm374, %v5315, 0
    %v5368 = vsel %vm374, %v5316, 0
    %v5371 = vsel %vm374, %v5317, 0
    %v5374 = vsel %vm374, %v5318, 0
    %v5377 = vsel %vm374, %v5319, 0
    %v5380 = vsel %vm374, %v5320, 0
    %v5383 = vsel %vm374, %v5321, 0
    %v5386 = vsel %vm374, %v5322, 0
    %v5389 = vsel %vm374, %v5323, 0
    %v5392 = vsel %vm374, %v5324, 0
    %v5395 = vsel %vm374, %v5325, 0
    %v5398 = vsel %vm374, %v5326, 0
    %v5401 = vsel %vm374, %v5327, 0
    %v5404 = vsel %vm374, %v5328, 0
    %v5407 = vsel %vm374, %v5329, 0
    %v5410 = vsel %vm374, %v5330, 0
    %v5413 = vsel %vm374, %v5331, 0
    %v5416 = vsel %vm374, %v5332, 0
    %v5419 = vsel %vm374, %v5333, 0
    %v5422 = vsel %vm374, %v5334, 0
    %v5425 = vsel %vm374, %v5335, 0
    %v5428 = vsel %vm374, %v5336, 0
    %v5431 = vsel %vm374, %v5337, 0
    %v5434 = vsel %vm374, %v5338, 0
    %v5437 = vsel %vm374, %v5339, 0
    %v5440 = vsel %vm374, %v5340, 0
    %v5443 = vsel %vm374, %v5341, 0
    %v5446 = vsel %vm374, %v5342, 0
    %v5449 = vsel %vm374, %v5343, 0
    %v5452 = vsel %vm374, %v5344, 0
    %v5455 = vsel %vm374, %v5345, 0
    %v5458 = vsel %vm374, %v5346, 0
    %v5461 = vsel %vm374, %v5347, 0
    %v5464 = vsel %vm374, %v5348, 0
    %v5467 = vsel %vm374, %v5349, 0
    %v5470 = vsel %vm374, %v5350, 0
    %v5473 = vsel %vm374, %v5351, 0
    %v5476 = vsel %vm374, %v5352, 0
    %v5479 = vsel %vm374, %v5353, 0
    %v5482 = vsel %vm374, %v5354, 0
    %v5485 = vsel %vm374, %v5355, 0
    %v5488 = vsel %vm374, %v5356, 0
    %v5491 = vsel %vm374, %v5357, 0
    %5493 = vmatpush.bf16.msra.mxu0 0
    %5494 = vmatpush.bf16.msra.mxu0 0
    %5495 = vmatpush.bf16.msra.mxu0 0
    %5496 = vmatpush.bf16.msra.mxu0 0
    %5497 = vmatpush.bf16.msra.mxu0 0
    %5498 = vmatpush.bf16.msra.mxu0 0
    %5499 = vmatpush.bf16.msra.mxu0 0
    %5500 = vmatpush.bf16.msra.mxu0 %v5362
    %5501 = vmatmul.bf16.gmra.mxu0 %v5365
    %v5502 = vpop.f32.mrf.mxu0
    %v5503 = vadd.f32 %v5143, %v5502
    %v5504 = vpop.f32.mrf.mxu0
    %v5505 = vadd.f32 %v5143, %v5504
    %5506 = vmatmul.bf16.gmra.mxu0 %v5368
    %v5507 = vpop.f32.mrf.mxu0
    %v5508 = vadd.f32 %v5143, %v5507
    %v5509 = vpop.f32.mrf.mxu0
    %v5510 = vadd.f32 %v5143, %v5509
    %5511 = vmatmul.bf16.gmra.mxu0 %v5371
    %v5512 = vpop.f32.mrf.mxu0
    %v5513 = vadd.f32 %v5143, %v5512
    %v5514 = vpop.f32.mrf.mxu0
    %v5515 = vadd.f32 %v5143, %v5514
    %5516 = vmatmul.bf16.gmra.mxu0 %v5374
    %v5517 = vpop.f32.mrf.mxu0
    %v5518 = vadd.f32 %v5143, %v5517
    %v5519 = vpop.f32.mrf.mxu0
    %v5520 = vadd.f32 %v5143, %v5519
    %5521 = vmatmul.bf16.gmra.mxu0 %v5377
    %v5522 = vpop.f32.mrf.mxu0
    %v5523 = vadd.f32 %v5143, %v5522
    %v5524 = vpop.f32.mrf.mxu0
    %v5525 = vadd.f32 %v5143, %v5524
    %5526 = vmatmul.bf16.gmra.mxu0 %v5380
    %v5527 = vpop.f32.mrf.mxu0
    %v5528 = vadd.f32 %v5143, %v5527
    %v5529 = vpop.f32.mrf.mxu0
    %v5530 = vadd.f32 %v5143, %v5529
    %5531 = vmatmul.bf16.gmra.mxu0 %v5383
    %v5532 = vpop.f32.mrf.mxu0
    %v5533 = vadd.f32 %v5143, %v5532
    %v5534 = vpop.f32.mrf.mxu0
    %v5535 = vadd.f32 %v5143, %v5534
    %5536 = vmatmul.bf16.gmra.mxu0 %v5386
    %v5537 = vpop.f32.mrf.mxu0
    %v5538 = vadd.f32 %v5143, %v5537
    %v5539 = vpop.f32.mrf.mxu0
    %v5540 = vadd.f32 %v5143, %v5539
    %5541 = vmatmul.bf16.gmra.mxu0 %v5389
    %v5542 = vpop.f32.mrf.mxu0
    %v5543 = vadd.f32 %v5143, %v5542
    %v5544 = vpop.f32.mrf.mxu0
    %v5545 = vadd.f32 %v5143, %v5544
    %5546 = vmatmul.bf16.gmra.mxu0 %v5392
    %v5547 = vpop.f32.mrf.mxu0
    %v5548 = vadd.f32 %v5143, %v5547
    %v5549 = vpop.f32.mrf.mxu0
    %v5550 = vadd.f32 %v5143, %v5549
    %5551 = vmatmul.bf16.gmra.mxu0 %v5395
    %v5552 = vpop.f32.mrf.mxu0
    %v5553 = vadd.f32 %v5143, %v5552
    %v5554 = vpop.f32.mrf.mxu0
    %v5555 = vadd.f32 %v5143, %v5554
    %5556 = vmatmul.bf16.gmra.mxu0 %v5398
    %v5557 = vpop.f32.mrf.mxu0
    %v5558 = vadd.f32 %v5143, %v5557
    %v5559 = vpop.f32.mrf.mxu0
    %v5560 = vadd.f32 %v5143, %v5559
    %5561 = vmatmul.bf16.gmra.mxu0 %v5401
    %v5562 = vpop.f32.mrf.mxu0
    %v5563 = vadd.f32 %v5143, %v5562
    %v5564 = vpop.f32.mrf.mxu0
    %v5565 = vadd.f32 %v5143, %v5564
    %5566 = vmatmul.bf16.gmra.mxu0 %v5404
    %v5567 = vpop.f32.mrf.mxu0
    %v5568 = vadd.f32 %v5143, %v5567
    %v5569 = vpop.f32.mrf.mxu0
    %v5570 = vadd.f32 %v5143, %v5569
    %5571 = vmatmul.bf16.gmra.mxu0 %v5407
    %v5572 = vpop.f32.mrf.mxu0
    %v5573 = vadd.f32 %v5143, %v5572
    %v5574 = vpop.f32.mrf.mxu0
    %v5575 = vadd.f32 %v5143, %v5574
    %5576 = vmatmul.bf16.gmra.mxu0 %v5410
    %v5577 = vpop.f32.mrf.mxu0
    %v5578 = vadd.f32 %v5143, %v5577
    %v5579 = vpop.f32.mrf.mxu0
    %v5580 = vadd.f32 %v5143, %v5579
    %5581 = vmatmul.bf16.gmra.mxu0 %v5413
    %v5582 = vpop.f32.mrf.mxu0
    %v5583 = vadd.f32 %v5143, %v5582
    %v5584 = vpop.f32.mrf.mxu0
    %v5585 = vadd.f32 %v5143, %v5584
    %5586 = vmatmul.bf16.gmra.mxu0 %v5416
    %v5587 = vpop.f32.mrf.mxu0
    %v5588 = vadd.f32 %v5143, %v5587
    %v5589 = vpop.f32.mrf.mxu0
    %v5590 = vadd.f32 %v5143, %v5589
    %5591 = vmatmul.bf16.gmra.mxu0 %v5419
    %v5592 = vpop.f32.mrf.mxu0
    %v5593 = vadd.f32 %v5143, %v5592
    %v5594 = vpop.f32.mrf.mxu0
    %v5595 = vadd.f32 %v5143, %v5594
    %5596 = vmatmul.bf16.gmra.mxu0 %v5422
    %v5597 = vpop.f32.mrf.mxu0
    %v5598 = vadd.f32 %v5143, %v5597
    %v5599 = vpop.f32.mrf.mxu0
    %v5600 = vadd.f32 %v5143, %v5599
    %5601 = vmatmul.bf16.gmra.mxu0 %v5425
    %v5602 = vpop.f32.mrf.mxu0
    %v5603 = vadd.f32 %v5143, %v5602
    %v5604 = vpop.f32.mrf.mxu0
    %v5605 = vadd.f32 %v5143, %v5604
    %5606 = vmatmul.bf16.gmra.mxu0 %v5428
    %v5607 = vpop.f32.mrf.mxu0
    %v5608 = vadd.f32 %v5143, %v5607
    %v5609 = vpop.f32.mrf.mxu0
    %v5610 = vadd.f32 %v5143, %v5609
    %5611 = vmatmul.bf16.gmra.mxu0 %v5431
    %v5612 = vpop.f32.mrf.mxu0
    %v5613 = vadd.f32 %v5143, %v5612
    %v5614 = vpop.f32.mrf.mxu0
    %v5615 = vadd.f32 %v5143, %v5614
    %5616 = vmatmul.bf16.gmra.mxu0 %v5434
    %v5617 = vpop.f32.mrf.mxu0
    %v5618 = vadd.f32 %v5143, %v5617
    %v5619 = vpop.f32.mrf.mxu0
    %v5620 = vadd.f32 %v5143, %v5619
    %5621 = vmatmul.bf16.gmra.mxu0 %v5437
    %v5622 = vpop.f32.mrf.mxu0
    %v5623 = vadd.f32 %v5143, %v5622
    %v5624 = vpop.f32.mrf.mxu0
    %v5625 = vadd.f32 %v5143, %v5624
    %5626 = vmatmul.bf16.gmra.mxu0 %v5440
    %v5627 = vpop.f32.mrf.mxu0
    %v5628 = vadd.f32 %v5143, %v5627
    %v5629 = vpop.f32.mrf.mxu0
    %v5630 = vadd.f32 %v5143, %v5629
    %5631 = vmatmul.bf16.gmra.mxu0 %v5443
    %v5632 = vpop.f32.mrf.mxu0
    %v5633 = vadd.f32 %v5143, %v5632
    %v5634 = vpop.f32.mrf.mxu0
    %v5635 = vadd.f32 %v5143, %v5634
    %5636 = vmatmul.bf16.gmra.mxu0 %v5446
    %v5637 = vpop.f32.mrf.mxu0
    %v5638 = vadd.f32 %v5143, %v5637
    %v5639 = vpop.f32.mrf.mxu0
    %v5640 = vadd.f32 %v5143, %v5639
    %5641 = vmatmul.bf16.gmra.mxu0 %v5449
    %v5642 = vpop.f32.mrf.mxu0
    %v5643 = vadd.f32 %v5143, %v5642
    %v5644 = vpop.f32.mrf.mxu0
    %v5645 = vadd.f32 %v5143, %v5644
    %5646 = vmatmul.bf16.gmra.mxu0 %v5452
    %v5647 = vpop.f32.mrf.mxu0
    %v5648 = vadd.f32 %v5143, %v5647
    %v5649 = vpop.f32.mrf.mxu0
    %v5650 = vadd.f32 %v5143, %v5649
    %5651 = vmatmul.bf16.gmra.mxu0 %v5455
    %v5652 = vpop.f32.mrf.mxu0
    %v5653 = vadd.f32 %v5143, %v5652
    %v5654 = vpop.f32.mrf.mxu0
    %v5655 = vadd.f32 %v5143, %v5654
    %5656 = vmatmul.bf16.gmra.mxu0 %v5458
    %v5657 = vpop.f32.mrf.mxu0
    %v5658 = vadd.f32 %v5143, %v5657
    %v5659 = vpop.f32.mrf.mxu0
    %v5660 = vadd.f32 %v5143, %v5659
    %5661 = vmatmul.bf16.gmra.mxu0 %v5461
    %v5662 = vpop.f32.mrf.mxu0
    %v5663 = vadd.f32 %v5143, %v5662
    %v5664 = vpop.f32.mrf.mxu0
    %v5665 = vadd.f32 %v5143, %v5664
    %5666 = vmatmul.bf16.gmra.mxu0 %v5464
    %v5667 = vpop.f32.mrf.mxu0
    %v5668 = vadd.f32 %v5143, %v5667
    %v5669 = vpop.f32.mrf.mxu0
    %v5670 = vadd.f32 %v5143, %v5669
    %5671 = vmatmul.bf16.gmra.mxu0 %v5467
    %v5672 = vpop.f32.mrf.mxu0
    %v5673 = vadd.f32 %v5143, %v5672
    %v5674 = vpop.f32.mrf.mxu0
    %v5675 = vadd.f32 %v5143, %v5674
    %5676 = vmatmul.bf16.gmra.mxu0 %v5470
    %v5677 = vpop.f32.mrf.mxu0
    %v5678 = vadd.f32 %v5143, %v5677
    %v5679 = vpop.f32.mrf.mxu0
    %v5680 = vadd.f32 %v5143, %v5679
    %5681 = vmatmul.bf16.gmra.mxu0 %v5473
    %v5682 = vpop.f32.mrf.mxu0
    %v5683 = vadd.f32 %v5143, %v5682
    %v5684 = vpop.f32.mrf.mxu0
    %v5685 = vadd.f32 %v5143, %v5684
    %5686 = vmatmul.bf16.gmra.mxu0 %v5476
    %v5687 = vpop.f32.mrf.mxu0
    %v5688 = vadd.f32 %v5143, %v5687
    %v5689 = vpop.f32.mrf.mxu0
    %v5690 = vadd.f32 %v5143, %v5689
    %5691 = vmatmul.bf16.gmra.mxu0 %v5479
    %v5692 = vpop.f32.mrf.mxu0
    %v5693 = vadd.f32 %v5143, %v5692
    %v5694 = vpop.f32.mrf.mxu0
    %v5695 = vadd.f32 %v5143, %v5694
    %5696 = vmatmul.bf16.gmra.mxu0 %v5482
    %v5697 = vpop.f32.mrf.mxu0
    %v5698 = vadd.f32 %v5143, %v5697
    %v5699 = vpop.f32.mrf.mxu0
    %v5700 = vadd.f32 %v5143, %v5699
    %5701 = vmatmul.bf16.gmra.mxu0 %v5485
    %v5702 = vpop.f32.mrf.mxu0
    %v5703 = vadd.f32 %v5143, %v5702
    %v5704 = vpop.f32.mrf.mxu0
    %v5705 = vadd.f32 %v5143, %v5704
    %5706 = vmatmul.bf16.gmra.mxu0 %v5488
    %v5707 = vpop.f32.mrf.mxu0
    %v5708 = vadd.f32 %v5143, %v5707
    %v5709 = vpop.f32.mrf.mxu0
    %v5710 = vadd.f32 %v5143, %v5709
    %5711 = vmatmul.bf16.gmra.mxu0 %v5491
    %v5712 = vpop.f32.mrf.mxu0
    %v5713 = vadd.f32 %v5143, %v5712
    %v5714 = vpop.f32.mrf.mxu0
    %5715 = vdwg.mxu0
    %v5716 = vmax.f32 %v5503, 0.0
    %v5717 = vmax.f32 %v5505, 0.0
    %v5718 = vmax.f32 %v5508, 0.0
    %v5719 = vmax.f32 %v5510, 0.0
    %v5720 = vmax.f32 %v5513, 0.0
    %v5721 = vmax.f32 %v5515, 0.0
    %v5722 = vmax.f32 %v5518, 0.0
    %v5723 = vmax.f32 %v5520, 0.0
    %v5724 = vmax.f32 %v5523, 0.0
    %v5725 = vmax.f32 %v5525, 0.0
    %v5726 = vmax.f32 %v5528, 0.0
    %v5727 = vmax.f32 %v5530, 0.0
    %v5728 = vmax.f32 %v5533, 0.0
    %v5729 = vmax.f32 %v5535, 0.0
    %v5730 = vmax.f32 %v5538, 0.0
    %v5731 = vmax.f32 %v5540, 0.0
    %v5732 = vmax.f32 %v5543, 0.0
    %v5733 = vmax.f32 %v5545, 0.0
    %v5734 = vmax.f32 %v5548, 0.0
    %v5735 = vmax.f32 %v5550, 0.0
    %v5736 = vmax.f32 %v5553, 0.0
    %v5737 = vmax.f32 %v5555, 0.0
    %v5738 = vmax.f32 %v5558, 0.0
    %v5739 = vmax.f32 %v5560, 0.0
    %v5740 = vmax.f32 %v5563, 0.0
    %v5741 = vmax.f32 %v5565, 0.0
    %v5742 = vmax.f32 %v5568, 0.0
    %v5743 = vmax.f32 %v5570, 0.0
    %v5744 = vmax.f32 %v5573, 0.0
    %v5745 = vmax.f32 %v5575, 0.0
    %v5746 = vmax.f32 %v5578, 0.0
    %v5747 = vmax.f32 %v5580, 0.0
    %v5748 = vmax.f32 %v5583, 0.0
    %v5749 = vmax.f32 %v5585, 0.0
    %v5750 = vmax.f32 %v5588, 0.0
    %v5751 = vmax.f32 %v5590, 0.0
    %v5752 = vmax.f32 %v5593, 0.0
    %v5753 = vmax.f32 %v5595, 0.0
    %v5754 = vmax.f32 %v5598, 0.0
    %v5755 = vmax.f32 %v5600, 0.0
    %v5756 = vmax.f32 %v5603, 0.0
    %v5757 = vmax.f32 %v5605, 0.0
    %v5758 = vmax.f32 %v5608, 0.0
    %v5759 = vmax.f32 %v5610, 0.0
    %v5760 = vmax.f32 %v5613, 0.0
    %v5761 = vmax.f32 %v5615, 0.0
    %v5762 = vmax.f32 %v5618, 0.0
    %v5763 = vmax.f32 %v5620, 0.0
    %v5764 = vmax.f32 %v5623, 0.0
    %v5765 = vmax.f32 %v5625, 0.0
    %v5766 = vmax.f32 %v5628, 0.0
    %v5767 = vmax.f32 %v5630, 0.0
    %v5768 = vmax.f32 %v5633, 0.0
    %v5769 = vmax.f32 %v5635, 0.0
    %v5770 = vmax.f32 %v5638, 0.0
    %v5771 = vmax.f32 %v5640, 0.0
    %v5772 = vmax.f32 %v5643, 0.0
    %v5773 = vmax.f32 %v5645, 0.0
    %v5774 = vmax.f32 %v5648, 0.0
    %v5775 = vmax.f32 %v5650, 0.0
    %v5776 = vmax.f32 %v5653, 0.0
    %v5777 = vmax.f32 %v5655, 0.0
    %v5778 = vmax.f32 %v5658, 0.0
    %v5779 = vmax.f32 %v5660, 0.0
    %v5780 = vmax.f32 %v5663, 0.0
    %v5781 = vmax.f32 %v5665, 0.0
    %v5782 = vmax.f32 %v5668, 0.0
    %v5783 = vmax.f32 %v5670, 0.0
    %v5784 = vmax.f32 %v5673, 0.0
    %v5785 = vmax.f32 %v5675, 0.0
    %v5786 = vmax.f32 %v5678, 0.0
    %v5787 = vmax.f32 %v5680, 0.0
    %v5788 = vmax.f32 %v5683, 0.0
    %v5789 = vmax.f32 %v5685, 0.0
    %v5790 = vmax.f32 %v5688, 0.0
    %v5791 = vmax.f32 %v5690, 0.0
    %v5792 = vmax.f32 %v5693, 0.0
    %v5793 = vmax.f32 %v5695, 0.0
    %v5794 = vmax.f32 %v5698, 0.0
    %v5795 = vmax.f32 %v5700, 0.0
    %v5796 = vmax.f32 %v5703, 0.0
    %v5797 = vmax.f32 %v5705, 0.0
    %v5798 = vmax.f32 %v5708, 0.0
    %v5799 = vmax.f32 %v5710, 0.0
    %v5800 = vmax.f32 %v5713, 0.0
    %v5801 = vpack.c.bf16 %v5716, %v5716
    %v5802 = vpack.c.bf16 %v5717, %v5717
    %v5803 = vpack.c.bf16 %v5718, %v5718
    %v5804 = vpack.c.bf16 %v5719, %v5719
    %v5805 = vpack.c.bf16 %v5720, %v5720
    %v5806 = vpack.c.bf16 %v5721, %v5721
    %v5807 = vpack.c.bf16 %v5722, %v5722
    %v5808 = vpack.c.bf16 %v5723, %v5723
    %v5809 = vpack.c.bf16 %v5724, %v5724
    %v5810 = vpack.c.bf16 %v5725, %v5725
    %v5811 = vpack.c.bf16 %v5726, %v5726
    %v5812 = vpack.c.bf16 %v5727, %v5727
    %v5813 = vpack.c.bf16 %v5728, %v5728
    %v5814 = vpack.c.bf16 %v5729, %v5729
    %v5815 = vpack.c.bf16 %v5730, %v5730
    %v5816 = vpack.c.bf16 %v5731, %v5731
    %v5817 = vpack.c.bf16 %v5732, %v5732
    %v5818 = vpack.c.bf16 %v5733, %v5733
    %v5819 = vpack.c.bf16 %v5734, %v5734
    %v5820 = vpack.c.bf16 %v5735, %v5735
    %v5821 = vpack.c.bf16 %v5736, %v5736
    %v5822 = vpack.c.bf16 %v5737, %v5737
    %v5823 = vpack.c.bf16 %v5738, %v5738
    %v5824 = vpack.c.bf16 %v5739, %v5739
    %v5825 = vpack.c.bf16 %v5740, %v5740
    %v5826 = vpack.c.bf16 %v5741, %v5741
    %v5827 = vpack.c.bf16 %v5742, %v5742
    %v5828 = vpack.c.bf16 %v5743, %v5743
    %v5829 = vpack.c.bf16 %v5744, %v5744
    %v5830 = vpack.c.bf16 %v5745, %v5745
    %v5831 = vpack.c.bf16 %v5746, %v5746
    %v5832 = vpack.c.bf16 %v5747, %v5747
    %v5833 = vpack.c.bf16 %v5748, %v5748
    %v5834 = vpack.c.bf16 %v5749, %v5749
    %v5835 = vpack.c.bf16 %v5750, %v5750
    %v5836 = vpack.c.bf16 %v5751, %v5751
    %v5837 = vpack.c.bf16 %v5752, %v5752
    %v5838 = vpack.c.bf16 %v5753, %v5753
    %v5839 = vpack.c.bf16 %v5754, %v5754
    %v5840 = vpack.c.bf16 %v5755, %v5755
    %v5841 = vpack.c.bf16 %v5756, %v5756
    %v5842 = vpack.c.bf16 %v5757, %v5757
    %v5843 = vpack.c.bf16 %v5758, %v5758
    %v5844 = vpack.c.bf16 %v5759, %v5759
    %v5845 = vpack.c.bf16 %v5760, %v5760
    %v5846 = vpack.c.bf16 %v5761, %v5761
    %v5847 = vpack.c.bf16 %v5762, %v5762
    %v5848 = vpack.c.bf16 %v5763, %v5763
    %v5849 = vpack.c.bf16 %v5764, %v5764
    %v5850 = vpack.c.bf16 %v5765, %v5765
    %v5851 = vpack.c.bf16 %v5766, %v5766
    %v5852 = vpack.c.bf16 %v5767, %v5767
    %v5853 = vpack.c.bf16 %v5768, %v5768
    %v5854 = vpack.c.bf16 %v5769, %v5769
    %v5855 = vpack.c.bf16 %v5770, %v5770
    %v5856 = vpack.c.bf16 %v5771, %v5771
    %v5857 = vpack.c.bf16 %v5772, %v5772
    %v5858 = vpack.c.bf16 %v5773, %v5773
    %v5859 = vpack.c.bf16 %v5774, %v5774
    %v5860 = vpack.c.bf16 %v5775, %v5775
    %v5861 = vpack.c.bf16 %v5776, %v5776
    %v5862 = vpack.c.bf16 %v5777, %v5777
    %v5863 = vpack.c.bf16 %v5778, %v5778
    %v5864 = vpack.c.bf16 %v5779, %v5779
    %v5865 = vpack.c.bf16 %v5780, %v5780
    %v5866 = vpack.c.bf16 %v5781, %v5781
    %v5867 = vpack.c.bf16 %v5782, %v5782
    %v5868 = vpack.c.bf16 %v5783, %v5783
    %v5869 = vpack.c.bf16 %v5784, %v5784
    %v5870 = vpack.c.bf16 %v5785, %v5785
    %v5871 = vpack.c.bf16 %v5786, %v5786
    %v5872 = vpack.c.bf16 %v5787, %v5787
    %v5873 = vpack.c.bf16 %v5788, %v5788
    %v5874 = vpack.c.bf16 %v5789, %v5789
    %v5875 = vpack.c.bf16 %v5790, %v5790
    %v5876 = vpack.c.bf16 %v5791, %v5791
    %v5877 = vpack.c.bf16 %v5792, %v5792
    %v5878 = vpack.c.bf16 %v5793, %v5793
    %v5879 = vpack.c.bf16 %v5794, %v5794
    %v5880 = vpack.c.bf16 %v5795, %v5795
    %v5881 = vpack.c.bf16 %v5796, %v5796
    %v5882 = vpack.c.bf16 %v5797, %v5797
    %v5883 = vpack.c.bf16 %v5798, %v5798
    %v5884 = vpack.c.bf16 %v5799, %v5799
    %v5885 = vpack.c.bf16 %v5800, %v5800
    %s5886 = scalar_lea.vmem [#allocation2], 340
    %5887 = vst.msk [vmem:[%s5886] sm:$0xf] %vm897, %v5801
    %5888 = vst.msk [vmem:[%s5886 + $0x4] sm:$0xf] %vm897, %v5802
    %5889 = vst.msk [vmem:[%s5886 + $0x8] sm:$0xf] %vm897, %v5803
    %5890 = vst.msk [vmem:[%s5886 + $0xc] sm:$0xf] %vm897, %v5804
    %5891 = vst.msk [vmem:[%s5886 + $0x10] sm:$0xf] %vm897, %v5805
    %5892 = vst.msk [vmem:[%s5886 + $0x14] sm:$0xf] %vm897, %v5806
    %5893 = vst.msk [vmem:[%s5886 + $0x18] sm:$0xf] %vm897, %v5807
    %5894 = vst.msk [vmem:[%s5886 + $0x1c] sm:$0xf] %vm897, %v5808
    %5895 = vst.msk [vmem:[%s5886 + $0x20] sm:$0xf] %vm897, %v5809
    %5896 = vst.msk [vmem:[%s5886 + $0x24] sm:$0xf] %vm897, %v5810
    %5897 = vst.msk [vmem:[%s5886 + $0x28] sm:$0xf] %vm897, %v5811
    %5898 = vst.msk [vmem:[%s5886 + $0x2c] sm:$0xf] %vm897, %v5812
    %5899 = vst.msk [vmem:[%s5886 + $0x30] sm:$0xf] %vm897, %v5813
    %5900 = vst.msk [vmem:[%s5886 + $0x34] sm:$0xf] %vm897, %v5814
    %5901 = vst.msk [vmem:[%s5886 + $0x38] sm:$0xf] %vm897, %v5815
    %5902 = vst.msk [vmem:[%s5886 + $0x3c] sm:$0xf] %vm897, %v5816
    %5903 = vst.msk [vmem:[%s5886 + $0x40] sm:$0xf] %vm897, %v5817
    %5904 = vst.msk [vmem:[%s5886 + $0x44] sm:$0xf] %vm897, %v5818
    %5905 = vst.msk [vmem:[%s5886 + $0x48] sm:$0xf] %vm897, %v5819
    %5906 = vst.msk [vmem:[%s5886 + $0x4c] sm:$0xf] %vm897, %v5820
    %5907 = vst.msk [vmem:[%s5886 + $0x50] sm:$0xf] %vm897, %v5821
    %5908 = vst.msk [vmem:[%s5886 + $0x54] sm:$0xf] %vm897, %v5822
    %5909 = vst.msk [vmem:[%s5886 + $0x58] sm:$0xf] %vm897, %v5823
    %5910 = vst.msk [vmem:[%s5886 + $0x5c] sm:$0xf] %vm897, %v5824
    %5911 = vst.msk [vmem:[%s5886 + $0x60] sm:$0xf] %vm897, %v5825
    %5912 = vst.msk [vmem:[%s5886 + $0x64] sm:$0xf] %vm897, %v5826
    %5913 = vst.msk [vmem:[%s5886 + $0x68] sm:$0xf] %vm897, %v5827
    %5914 = vst.msk [vmem:[%s5886 + $0x6c] sm:$0xf] %vm897, %v5828
    %5915 = vst.msk [vmem:[%s5886 + $0x70] sm:$0xf] %vm897, %v5829
    %5916 = vst.msk [vmem:[%s5886 + $0x74] sm:$0xf] %vm897, %v5830
    %5917 = vst.msk [vmem:[%s5886 + $0x78] sm:$0xf] %vm897, %v5831
    %5918 = vst.msk [vmem:[%s5886 + $0x7c] sm:$0xf] %vm897, %v5832
    %5919 = vst.msk [vmem:[%s5886 + $0x80] sm:$0xf] %vm897, %v5833
    %5920 = vst.msk [vmem:[%s5886 + $0x84] sm:$0xf] %vm897, %v5834
    %5921 = vst.msk [vmem:[%s5886 + $0x88] sm:$0xf] %vm897, %v5835
    %5922 = vst.msk [vmem:[%s5886 + $0x8c] sm:$0xf] %vm897, %v5836
    %5923 = vst.msk [vmem:[%s5886 + $0x90] sm:$0xf] %vm897, %v5837
    %5924 = vst.msk [vmem:[%s5886 + $0x94] sm:$0xf] %vm897, %v5838
    %5925 = vst.msk [vmem:[%s5886 + $0x98] sm:$0xf] %vm897, %v5839
    %5926 = vst.msk [vmem:[%s5886 + $0x9c] sm:$0xf] %vm897, %v5840
    %5927 = vst.msk [vmem:[%s5886 + $0xa0] sm:$0xf] %vm897, %v5841
    %5928 = vst.msk [vmem:[%s5886 + $0xa4] sm:$0xf] %vm897, %v5842
    %5929 = vst.msk [vmem:[%s5886 + $0xa8] sm:$0xf] %vm897, %v5843
    %5930 = vst.msk [vmem:[%s5886 + $0xac] sm:$0xf] %vm897, %v5844
    %5931 = vst.msk [vmem:[%s5886 + $0xb0] sm:$0xf] %vm897, %v5845
    %5932 = vst.msk [vmem:[%s5886 + $0xb4] sm:$0xf] %vm897, %v5846
    %5933 = vst.msk [vmem:[%s5886 + $0xb8] sm:$0xf] %vm897, %v5847
    %5934 = vst.msk [vmem:[%s5886 + $0xbc] sm:$0xf] %vm897, %v5848
    %5935 = vst.msk [vmem:[%s5886 + $0xc0] sm:$0xf] %vm897, %v5849
    %5936 = vst.msk [vmem:[%s5886 + $0xc4] sm:$0xf] %vm897, %v5850
    %5937 = vst.msk [vmem:[%s5886 + $0xc8] sm:$0xf] %vm897, %v5851
    %5938 = vst.msk [vmem:[%s5886 + $0xcc] sm:$0xf] %vm897, %v5852
    %5939 = vst.msk [vmem:[%s5886 + $0xd0] sm:$0xf] %vm897, %v5853
    %5940 = vst.msk [vmem:[%s5886 + $0xd4] sm:$0xf] %vm897, %v5854
    %5941 = vst.msk [vmem:[%s5886 + $0xd8] sm:$0xf] %vm897, %v5855
    %5942 = vst.msk [vmem:[%s5886 + $0xdc] sm:$0xf] %vm897, %v5856
    %5943 = vst.msk [vmem:[%s5886 + $0xe0] sm:$0xf] %vm897, %v5857
    %5944 = vst.msk [vmem:[%s5886 + $0xe4] sm:$0xf] %vm897, %v5858
    %5945 = vst.msk [vmem:[%s5886 + $0xe8] sm:$0xf] %vm897, %v5859
    %5946 = vst.msk [vmem:[%s5886 + $0xec] sm:$0xf] %vm897, %v5860
    %5947 = vst.msk [vmem:[%s5886 + $0xf0] sm:$0xf] %vm897, %v5861
    %5948 = vst.msk [vmem:[%s5886 + $0xf4] sm:$0xf] %vm897, %v5862
    %5949 = vst.msk [vmem:[%s5886 + $0xf8] sm:$0xf] %vm897, %v5863
    %5950 = vst.msk [vmem:[%s5886 + $0xfc] sm:$0xf] %vm897, %v5864
    %5951 = vst.msk [vmem:[%s5886 + $0x100] sm:$0xf] %vm897, %v5865
    %5952 = vst.msk [vmem:[%s5886 + $0x104] sm:$0xf] %vm897, %v5866
    %5953 = vst.msk [vmem:[%s5886 + $0x108] sm:$0xf] %vm897, %v5867
    %5954 = vst.msk [vmem:[%s5886 + $0x10c] sm:$0xf] %vm897, %v5868
    %5955 = vst.msk [vmem:[%s5886 + $0x110] sm:$0xf] %vm897, %v5869
    %5956 = vst.msk [vmem:[%s5886 + $0x114] sm:$0xf] %vm897, %v5870
    %5957 = vst.msk [vmem:[%s5886 + $0x118] sm:$0xf] %vm897, %v5871
    %5958 = vst.msk [vmem:[%s5886 + $0x11c] sm:$0xf] %vm897, %v5872
    %5959 = vst.msk [vmem:[%s5886 + $0x120] sm:$0xf] %vm897, %v5873
    %5960 = vst.msk [vmem:[%s5886 + $0x124] sm:$0xf] %vm897, %v5874
    %5961 = vst.msk [vmem:[%s5886 + $0x128] sm:$0xf] %vm897, %v5875
    %5962 = vst.msk [vmem:[%s5886 + $0x12c] sm:$0xf] %vm897, %v5876
    %5963 = vst.msk [vmem:[%s5886 + $0x130] sm:$0xf] %vm897, %v5877
    %5964 = vst.msk [vmem:[%s5886 + $0x134] sm:$0xf] %vm897, %v5878
    %5965 = vst.msk [vmem:[%s5886 + $0x138] sm:$0xf] %vm897, %v5879
    %5966 = vst.msk [vmem:[%s5886 + $0x13c] sm:$0xf] %vm897, %v5880
    %5967 = vst.msk [vmem:[%s5886 + $0x140] sm:$0xf] %vm897, %v5881
    %5968 = vst.msk [vmem:[%s5886 + $0x144] sm:$0xf] %vm897, %v5882
    %5969 = vst.msk [vmem:[%s5886 + $0x148] sm:$0xf] %vm897, %v5883
    %5970 = vst.msk [vmem:[%s5886 + $0x14c] sm:$0xf] %vm897, %v5884
    %5971 = vst.msk [vmem:[%s5886 + $0x150] sm:$0xf] %vm897, %v5885
    %v5972 = vld [vmem:[%s5886] sm:$0xf]
    %v5973 = vld [vmem:[%s5886 + $0x4] sm:$0xf]
    %v5974 = vld [vmem:[%s5886 + $0x8] sm:$0xf]
    %v5975 = vld [vmem:[%s5886 + $0xc] sm:$0xf]
    %v5976 = vld [vmem:[%s5886 + $0x10] sm:$0xf]
    %v5977 = vld [vmem:[%s5886 + $0x14] sm:$0xf]
    %v5978 = vld [vmem:[%s5886 + $0x18] sm:$0xf]
    %v5979 = vld [vmem:[%s5886 + $0x1c] sm:$0xf]
    %v5980 = vld [vmem:[%s5886 + $0x20] sm:$0xf]
    %v5981 = vld [vmem:[%s5886 + $0x24] sm:$0xf]
    %v5982 = vld [vmem:[%s5886 + $0x28] sm:$0xf]
    %v5983 = vld [vmem:[%s5886 + $0x2c] sm:$0xf]
    %v5984 = vld [vmem:[%s5886 + $0x30] sm:$0xf]
    %v5985 = vld [vmem:[%s5886 + $0x34] sm:$0xf]
    %v5986 = vld [vmem:[%s5886 + $0x38] sm:$0xf]
    %v5987 = vld [vmem:[%s5886 + $0x3c] sm:$0xf]
    %v5988 = vld [vmem:[%s5886 + $0x40] sm:$0xf]
    %v5989 = vld [vmem:[%s5886 + $0x44] sm:$0xf]
    %v5990 = vld [vmem:[%s5886 + $0x48] sm:$0xf]
    %v5991 = vld [vmem:[%s5886 + $0x4c] sm:$0xf]
    %v5992 = vld [vmem:[%s5886 + $0x50] sm:$0xf]
    %v5993 = vld [vmem:[%s5886 + $0x54] sm:$0xf]
    %v5994 = vld [vmem:[%s5886 + $0x58] sm:$0xf]
    %v5995 = vld [vmem:[%s5886 + $0x5c] sm:$0xf]
    %v5996 = vld [vmem:[%s5886 + $0x60] sm:$0xf]
    %v5997 = vld [vmem:[%s5886 + $0x64] sm:$0xf]
    %v5998 = vld [vmem:[%s5886 + $0x68] sm:$0xf]
    %v5999 = vld [vmem:[%s5886 + $0x6c] sm:$0xf]
    %v6000 = vld [vmem:[%s5886 + $0x70] sm:$0xf]
    %v6001 = vld [vmem:[%s5886 + $0x74] sm:$0xf]
    %v6002 = vld [vmem:[%s5886 + $0x78] sm:$0xf]
    %v6003 = vld [vmem:[%s5886 + $0x7c] sm:$0xf]
    %v6004 = vld [vmem:[%s5886 + $0x80] sm:$0xf]
    %v6005 = vld [vmem:[%s5886 + $0x84] sm:$0xf]
    %v6006 = vld [vmem:[%s5886 + $0x88] sm:$0xf]
    %v6007 = vld [vmem:[%s5886 + $0x8c] sm:$0xf]
    %v6008 = vld [vmem:[%s5886 + $0x90] sm:$0xf]
    %v6009 = vld [vmem:[%s5886 + $0x94] sm:$0xf]
    %v6010 = vld [vmem:[%s5886 + $0x98] sm:$0xf]
    %v6011 = vld [vmem:[%s5886 + $0x9c] sm:$0xf]
    %v6012 = vld [vmem:[%s5886 + $0xa0] sm:$0xf]
    %v6013 = vld [vmem:[%s5886 + $0xa4] sm:$0xf]
    %v6014 = vld [vmem:[%s5886 + $0xa8] sm:$0xf]
    %v6015 = vld [vmem:[%s5886 + $0xac] sm:$0xf]
    %v6016 = vld [vmem:[%s5886 + $0xb0] sm:$0xf]
    %v6017 = vld [vmem:[%s5886 + $0xb4] sm:$0xf]
    %v6018 = vld [vmem:[%s5886 + $0xb8] sm:$0xf]
    %v6019 = vld [vmem:[%s5886 + $0xbc] sm:$0xf]
    %v6020 = vld [vmem:[%s5886 + $0xc0] sm:$0xf]
    %v6021 = vld [vmem:[%s5886 + $0xc4] sm:$0xf]
    %v6022 = vld [vmem:[%s5886 + $0xc8] sm:$0xf]
    %v6023 = vld [vmem:[%s5886 + $0xcc] sm:$0xf]
    %v6024 = vld [vmem:[%s5886 + $0xd0] sm:$0xf]
    %v6025 = vld [vmem:[%s5886 + $0xd4] sm:$0xf]
    %v6026 = vld [vmem:[%s5886 + $0xd8] sm:$0xf]
    %v6027 = vld [vmem:[%s5886 + $0xdc] sm:$0xf]
    %v6028 = vld [vmem:[%s5886 + $0xe0] sm:$0xf]
    %v6029 = vld [vmem:[%s5886 + $0xe4] sm:$0xf]
    %v6030 = vld [vmem:[%s5886 + $0xe8] sm:$0xf]
    %v6031 = vld [vmem:[%s5886 + $0xec] sm:$0xf]
    %v6032 = vld [vmem:[%s5886 + $0xf0] sm:$0xf]
    %v6033 = vld [vmem:[%s5886 + $0xf4] sm:$0xf]
    %v6034 = vld [vmem:[%s5886 + $0xf8] sm:$0xf]
    %v6035 = vld [vmem:[%s5886 + $0xfc] sm:$0xf]
    %v6036 = vld [vmem:[%s5886 + $0x100] sm:$0xf]
    %v6037 = vld [vmem:[%s5886 + $0x104] sm:$0xf]
    %v6038 = vld [vmem:[%s5886 + $0x108] sm:$0xf]
    %v6039 = vld [vmem:[%s5886 + $0x10c] sm:$0xf]
    %v6040 = vld [vmem:[%s5886 + $0x110] sm:$0xf]
    %v6041 = vld [vmem:[%s5886 + $0x114] sm:$0xf]
    %v6042 = vld [vmem:[%s5886 + $0x118] sm:$0xf]
    %v6043 = vld [vmem:[%s5886 + $0x11c] sm:$0xf]
    %v6044 = vld [vmem:[%s5886 + $0x120] sm:$0xf]
    %v6045 = vld [vmem:[%s5886 + $0x124] sm:$0xf]
    %v6046 = vld [vmem:[%s5886 + $0x128] sm:$0xf]
    %v6047 = vld [vmem:[%s5886 + $0x12c] sm:$0xf]
    %v6048 = vld [vmem:[%s5886 + $0x130] sm:$0xf]
    %v6049 = vld [vmem:[%s5886 + $0x134] sm:$0xf]
    %v6050 = vld [vmem:[%s5886 + $0x138] sm:$0x1]
    %v6051 = vld [vmem:[%s5886] sm:$0xe]
    %v6052 = vld [vmem:[%s5886 + $0xc] sm:$0xe]
    %v6053 = vld [vmem:[%s5886 + $0x138] sm:$0xf]
    %v6054 = vld [vmem:[%s5886 + $0x13c] sm:$0xf]
    %v6055 = vld [vmem:[%s5886 + $0x140] sm:$0xf]
    %v6056 = vld [vmem:[%s5886 + $0x144] sm:$0x1]
    %v6057 = vld [vmem:[%s5886 + $0x144] sm:$0x3]
    %v6058 = vld [vmem:[%s5886 + $0xc] sm:$0xc]
    %v6059 = vld [vmem:[%s5886 + $0x18] sm:$0xc]
    %v6060 = vld [vmem:[%s5886 + $0x144] sm:$0xf]
    %v6061 = vld [vmem:[%s5886 + $0x148] sm:$0xf]
    %v6062 = vld [vmem:[%s5886 + $0x14c] sm:$0xf]
    %v6063 = vld [vmem:[%s5886 + $0x150] sm:$0x3]
    %v6064 = vld [vmem:[%s5886 + $0x150] sm:$0x7]
    %v6065 = vld [vmem:[%s5886 + $0x18] sm:$0x8]
    %v6144 = vunpack.c.l.b16 %v5972
    %v6145 = vunpack.c.l.b16 %v5973
    %v6146 = vunpack.c.l.b16 %v5974
    %v6147 = vunpack.c.l.b16 %v5975
    %v6148 = vunpack.c.l.b16 %v5976
    %v6149 = vunpack.c.l.b16 %v5977
    %v6150 = vunpack.c.l.b16 %v5978
    %v6151 = vunpack.c.l.b16 %v5979
    %v6152 = vunpack.c.l.b16 %v5980
    %v6153 = vunpack.c.l.b16 %v5981
    %v6154 = vunpack.c.l.b16 %v5982
    %v6155 = vunpack.c.l.b16 %v5983
    %v6156 = vunpack.c.l.b16 %v5984
    %v6157 = vunpack.c.l.b16 %v5985
    %v6158 = vunpack.c.l.b16 %v5986
    %v6159 = vunpack.c.l.b16 %v5987
    %v6160 = vunpack.c.l.b16 %v5988
    %v6161 = vunpack.c.l.b16 %v5989
    %v6162 = vunpack.c.l.b16 %v5990
    %v6163 = vunpack.c.l.b16 %v5991
    %v6164 = vunpack.c.l.b16 %v5992
    %v6165 = vunpack.c.l.b16 %v5993
    %v6166 = vunpack.c.l.b16 %v5994
    %v6167 = vunpack.c.l.b16 %v5995
    %v6168 = vunpack.c.l.b16 %v5996
    %v6169 = vunpack.c.l.b16 %v5997
    %v6170 = vunpack.c.l.b16 %v5998
    %v6171 = vunpack.c.l.b16 %v5999
    %v6172 = vunpack.c.l.b16 %v6000
    %v6173 = vunpack.c.l.b16 %v6001
    %v6174 = vunpack.c.l.b16 %v6002
    %v6175 = vunpack.c.l.b16 %v6003
    %v6176 = vunpack.c.l.b16 %v6004
    %v6177 = vunpack.c.l.b16 %v6005
    %v6178 = vunpack.c.l.b16 %v6006
    %v6179 = vunpack.c.l.b16 %v6007
    %v6180 = vunpack.c.l.b16 %v6008
    %v6181 = vunpack.c.l.b16 %v6009
    %v6182 = vunpack.c.l.b16 %v6010
    %v6183 = vunpack.c.l.b16 %v6011
    %v6184 = vunpack.c.l.b16 %v6012
    %v6185 = vunpack.c.l.b16 %v6013
    %v6186 = vunpack.c.l.b16 %v6014
    %v6187 = vunpack.c.l.b16 %v6015
    %v6188 = vunpack.c.l.b16 %v6016
    %v6189 = vunpack.c.l.b16 %v6017
    %v6190 = vunpack.c.l.b16 %v6018
    %v6191 = vunpack.c.l.b16 %v6019
    %v6192 = vunpack.c.l.b16 %v6020
    %v6193 = vunpack.c.l.b16 %v6021
    %v6194 = vunpack.c.l.b16 %v6022
    %v6195 = vunpack.c.l.b16 %v6023
    %v6196 = vunpack.c.l.b16 %v6024
    %v6197 = vunpack.c.l.b16 %v6025
    %v6198 = vunpack.c.l.b16 %v6026
    %v6199 = vunpack.c.l.b16 %v6027
    %v6200 = vunpack.c.l.b16 %v6028
    %v6201 = vunpack.c.l.b16 %v6029
    %v6202 = vunpack.c.l.b16 %v6030
    %v6203 = vunpack.c.l.b16 %v6031
    %v6204 = vunpack.c.l.b16 %v6032
    %v6205 = vunpack.c.l.b16 %v6033
    %v6206 = vunpack.c.l.b16 %v6034
    %v6207 = vunpack.c.l.b16 %v6035
    %v6208 = vunpack.c.l.b16 %v6036
    %v6209 = vunpack.c.l.b16 %v6037
    %v6210 = vunpack.c.l.b16 %v6038
    %v6211 = vunpack.c.l.b16 %v6039
    %v6212 = vunpack.c.l.b16 %v6040
    %v6213 = vunpack.c.l.b16 %v6041
    %v6214 = vunpack.c.l.b16 %v6042
    %v6215 = vunpack.c.l.b16 %v6043
    %v6216 = vunpack.c.l.b16 %v6044
    %v6217 = vunpack.c.l.b16 %v6045
    %v6218 = vunpack.c.l.b16 %v6046
    %v6219 = vunpack.c.l.b16 %v6047
    %v6220 = vunpack.c.l.b16 %v6048
    %v6221 = vunpack.c.l.b16 %v6049
    %v6222 = vpack.c.b16 %v6145, %v6144
    %v6223 = vpack.c.b16 %v6147, %v6146
    %v6224 = vpack.c.b16 %v6149, %v6148
    %v6225 = vpack.c.b16 %v6151, %v6150
    %v6226 = vpack.c.b16 %v6153, %v6152
    %v6227 = vpack.c.b16 %v6155, %v6154
    %v6228 = vpack.c.b16 %v6157, %v6156
    %v6229 = vpack.c.b16 %v6159, %v6158
    %v6230 = vpack.c.b16 %v6161, %v6160
    %v6231 = vpack.c.b16 %v6163, %v6162
    %v6232 = vpack.c.b16 %v6165, %v6164
    %v6233 = vpack.c.b16 %v6167, %v6166
    %v6234 = vpack.c.b16 %v6169, %v6168
    %v6235 = vpack.c.b16 %v6171, %v6170
    %v6236 = vpack.c.b16 %v6173, %v6172
    %v6237 = vpack.c.b16 %v6175, %v6174
    %v6238 = vpack.c.b16 %v6177, %v6176
    %v6239 = vpack.c.b16 %v6179, %v6178
    %v6240 = vpack.c.b16 %v6181, %v6180
    %v6241 = vpack.c.b16 %v6183, %v6182
    %v6242 = vpack.c.b16 %v6185, %v6184
    %v6243 = vpack.c.b16 %v6187, %v6186
    %v6244 = vpack.c.b16 %v6189, %v6188
    %v6245 = vpack.c.b16 %v6191, %v6190
    %v6246 = vpack.c.b16 %v6193, %v6192
    %v6247 = vpack.c.b16 %v6195, %v6194
    %v6248 = vpack.c.b16 %v6197, %v6196
    %v6249 = vpack.c.b16 %v6199, %v6198
    %v6250 = vpack.c.b16 %v6201, %v6200
    %v6251 = vpack.c.b16 %v6203, %v6202
    %v6252 = vpack.c.b16 %v6205, %v6204
    %v6253 = vpack.c.b16 %v6207, %v6206
    %v6254 = vpack.c.b16 %v6209, %v6208
    %v6255 = vpack.c.b16 %v6211, %v6210
    %v6256 = vpack.c.b16 %v6213, %v6212
    %v6257 = vpack.c.b16 %v6215, %v6214
    %v6258 = vpack.c.b16 %v6217, %v6216
    %v6259 = vpack.c.b16 %v6219, %v6218
    %v6260 = vpack.c.b16 %v6221, %v6220
    %v6262 = vunpack.c.l.b16 %v6050
    %v6263 = vpack.c.b16 %v6262, %v6262
    %v6265 = vshrl.u32 %v6222, 16
    %v6267 = vshll.u32 %v6222, 16
    %v6269 = vrot.slane %v6267, 1
    %v6270 = vor.u32 %v6265, %v6269
    %v6272 = vshll.u32 %v6223, 16
    %v6274 = vrot.slane %v6272, 1
    %v6275 = vsel %vm1275, %v6270, %v6274
    %v6276 = vshrl.u32 %v6223, 16
    %v6278 = vor.u32 %v6276, %v6274
    %v6280 = vshll.u32 %v6224, 16
    %v6282 = vrot.slane %v6280, 1
    %v6283 = vsel %vm1275, %v6278, %v6282
    %v6284 = vshrl.u32 %v6224, 16
    %v6286 = vor.u32 %v6284, %v6282
    %v6288 = vshll.u32 %v6225, 16
    %v6290 = vrot.slane %v6288, 1
    %v6291 = vsel %vm1275, %v6286, %v6290
    %v6292 = vshrl.u32 %v6225, 16
    %v6294 = vor.u32 %v6292, %v6290
    %v6296 = vshll.u32 %v6226, 16
    %v6298 = vrot.slane %v6296, 1
    %v6299 = vsel %vm1275, %v6294, %v6298
    %v6300 = vshrl.u32 %v6226, 16
    %v6302 = vor.u32 %v6300, %v6298
    %v6304 = vshll.u32 %v6227, 16
    %v6306 = vrot.slane %v6304, 1
    %v6307 = vsel %vm1275, %v6302, %v6306
    %v6308 = vshrl.u32 %v6227, 16
    %v6310 = vor.u32 %v6308, %v6306
    %v6312 = vshll.u32 %v6228, 16
    %v6314 = vrot.slane %v6312, 1
    %v6315 = vsel %vm1275, %v6310, %v6314
    %v6316 = vshrl.u32 %v6228, 16
    %v6318 = vor.u32 %v6316, %v6314
    %v6320 = vshll.u32 %v6229, 16
    %v6322 = vrot.slane %v6320, 1
    %v6323 = vsel %vm1275, %v6318, %v6322
    %v6324 = vshrl.u32 %v6229, 16
    %v6326 = vor.u32 %v6324, %v6322
    %v6328 = vshll.u32 %v6230, 16
    %v6330 = vrot.slane %v6328, 1
    %v6331 = vsel %vm1275, %v6326, %v6330
    %v6332 = vshrl.u32 %v6230, 16
    %v6334 = vor.u32 %v6332, %v6330
    %v6336 = vshll.u32 %v6231, 16
    %v6338 = vrot.slane %v6336, 1
    %v6339 = vsel %vm1275, %v6334, %v6338
    %v6340 = vshrl.u32 %v6231, 16
    %v6342 = vor.u32 %v6340, %v6338
    %v6344 = vshll.u32 %v6232, 16
    %v6346 = vrot.slane %v6344, 1
    %v6347 = vsel %vm1275, %v6342, %v6346
    %v6348 = vshrl.u32 %v6232, 16
    %v6350 = vor.u32 %v6348, %v6346
    %v6352 = vshll.u32 %v6233, 16
    %v6354 = vrot.slane %v6352, 1
    %v6355 = vsel %vm1275, %v6350, %v6354
    %v6356 = vshrl.u32 %v6233, 16
    %v6358 = vor.u32 %v6356, %v6354
    %v6360 = vshll.u32 %v6234, 16
    %v6362 = vrot.slane %v6360, 1
    %v6363 = vsel %vm1275, %v6358, %v6362
    %v6364 = vshrl.u32 %v6234, 16
    %v6366 = vor.u32 %v6364, %v6362
    %v6368 = vshll.u32 %v6235, 16
    %v6370 = vrot.slane %v6368, 1
    %v6371 = vsel %vm1275, %v6366, %v6370
    %v6372 = vshrl.u32 %v6235, 16
    %v6374 = vor.u32 %v6372, %v6370
    %v6376 = vshll.u32 %v6236, 16
    %v6378 = vrot.slane %v6376, 1
    %v6379 = vsel %vm1275, %v6374, %v6378
    %v6380 = vshrl.u32 %v6236, 16
    %v6382 = vor.u32 %v6380, %v6378
    %v6384 = vshll.u32 %v6237, 16
    %v6386 = vrot.slane %v6384, 1
    %v6387 = vsel %vm1275, %v6382, %v6386
    %v6388 = vshrl.u32 %v6237, 16
    %v6390 = vor.u32 %v6388, %v6386
    %v6392 = vshll.u32 %v6238, 16
    %v6394 = vrot.slane %v6392, 1
    %v6395 = vsel %vm1275, %v6390, %v6394
    %v6396 = vshrl.u32 %v6238, 16
    %v6398 = vor.u32 %v6396, %v6394
    %v6400 = vshll.u32 %v6239, 16
    %v6402 = vrot.slane %v6400, 1
    %v6403 = vsel %vm1275, %v6398, %v6402
    %v6404 = vshrl.u32 %v6239, 16
    %v6406 = vor.u32 %v6404, %v6402
    %v6408 = vshll.u32 %v6240, 16
    %v6410 = vrot.slane %v6408, 1
    %v6411 = vsel %vm1275, %v6406, %v6410
    %v6412 = vshrl.u32 %v6240, 16
    %v6414 = vor.u32 %v6412, %v6410
    %v6416 = vshll.u32 %v6241, 16
    %v6418 = vrot.slane %v6416, 1
    %v6419 = vsel %vm1275, %v6414, %v6418
    %v6420 = vshrl.u32 %v6241, 16
    %v6422 = vor.u32 %v6420, %v6418
    %v6424 = vshll.u32 %v6242, 16
    %v6426 = vrot.slane %v6424, 1
    %v6427 = vsel %vm1275, %v6422, %v6426
    %v6428 = vshrl.u32 %v6242, 16
    %v6430 = vor.u32 %v6428, %v6426
    %v6432 = vshll.u32 %v6243, 16
    %v6434 = vrot.slane %v6432, 1
    %v6435 = vsel %vm1275, %v6430, %v6434
    %v6436 = vshrl.u32 %v6243, 16
    %v6438 = vor.u32 %v6436, %v6434
    %v6440 = vshll.u32 %v6244, 16
    %v6442 = vrot.slane %v6440, 1
    %v6443 = vsel %vm1275, %v6438, %v6442
    %v6444 = vshrl.u32 %v6244, 16
    %v6446 = vor.u32 %v6444, %v6442
    %v6448 = vshll.u32 %v6245, 16
    %v6450 = vrot.slane %v6448, 1
    %v6451 = vsel %vm1275, %v6446, %v6450
    %v6452 = vshrl.u32 %v6245, 16
    %v6454 = vor.u32 %v6452, %v6450
    %v6456 = vshll.u32 %v6246, 16
    %v6458 = vrot.slane %v6456, 1
    %v6459 = vsel %vm1275, %v6454, %v6458
    %v6460 = vshrl.u32 %v6246, 16
    %v6462 = vor.u32 %v6460, %v6458
    %v6464 = vshll.u32 %v6247, 16
    %v6466 = vrot.slane %v6464, 1
    %v6467 = vsel %vm1275, %v6462, %v6466
    %v6468 = vshrl.u32 %v6247, 16
    %v6470 = vor.u32 %v6468, %v6466
    %v6472 = vshll.u32 %v6248, 16
    %v6474 = vrot.slane %v6472, 1
    %v6475 = vsel %vm1275, %v6470, %v6474
    %v6476 = vshrl.u32 %v6248, 16
    %v6478 = vor.u32 %v6476, %v6474
    %v6480 = vshll.u32 %v6249, 16
    %v6482 = vrot.slane %v6480, 1
    %v6483 = vsel %vm1275, %v6478, %v6482
    %v6484 = vshrl.u32 %v6249, 16
    %v6486 = vor.u32 %v6484, %v6482
    %v6488 = vshll.u32 %v6250, 16
    %v6490 = vrot.slane %v6488, 1
    %v6491 = vsel %vm1275, %v6486, %v6490
    %v6492 = vshrl.u32 %v6250, 16
    %v6494 = vor.u32 %v6492, %v6490
    %v6496 = vshll.u32 %v6251, 16
    %v6498 = vrot.slane %v6496, 1
    %v6499 = vsel %vm1275, %v6494, %v6498
    %v6500 = vshrl.u32 %v6251, 16
    %v6502 = vor.u32 %v6500, %v6498
    %v6504 = vshll.u32 %v6252, 16
    %v6506 = vrot.slane %v6504, 1
    %v6507 = vsel %vm1275, %v6502, %v6506
    %v6508 = vshrl.u32 %v6252, 16
    %v6510 = vor.u32 %v6508, %v6506
    %v6512 = vshll.u32 %v6253, 16
    %v6514 = vrot.slane %v6512, 1
    %v6515 = vsel %vm1275, %v6510, %v6514
    %v6516 = vshrl.u32 %v6253, 16
    %v6518 = vor.u32 %v6516, %v6514
    %v6520 = vshll.u32 %v6254, 16
    %v6522 = vrot.slane %v6520, 1
    %v6523 = vsel %vm1275, %v6518, %v6522
    %v6524 = vshrl.u32 %v6254, 16
    %v6526 = vor.u32 %v6524, %v6522
    %v6528 = vshll.u32 %v6255, 16
    %v6530 = vrot.slane %v6528, 1
    %v6531 = vsel %vm1275, %v6526, %v6530
    %v6532 = vshrl.u32 %v6255, 16
    %v6534 = vor.u32 %v6532, %v6530
    %v6536 = vshll.u32 %v6256, 16
    %v6538 = vrot.slane %v6536, 1
    %v6539 = vsel %vm1275, %v6534, %v6538
    %v6540 = vshrl.u32 %v6256, 16
    %v6542 = vor.u32 %v6540, %v6538
    %v6544 = vshll.u32 %v6257, 16
    %v6546 = vrot.slane %v6544, 1
    %v6547 = vsel %vm1275, %v6542, %v6546
    %v6548 = vshrl.u32 %v6257, 16
    %v6550 = vor.u32 %v6548, %v6546
    %v6552 = vshll.u32 %v6258, 16
    %v6554 = vrot.slane %v6552, 1
    %v6555 = vsel %vm1275, %v6550, %v6554
    %v6556 = vshrl.u32 %v6258, 16
    %v6558 = vor.u32 %v6556, %v6554
    %v6560 = vshll.u32 %v6259, 16
    %v6562 = vrot.slane %v6560, 1
    %v6563 = vsel %vm1275, %v6558, %v6562
    %v6564 = vshrl.u32 %v6259, 16
    %v6566 = vor.u32 %v6564, %v6562
    %v6568 = vshll.u32 %v6260, 16
    %v6570 = vrot.slane %v6568, 1
    %v6571 = vsel %vm1275, %v6566, %v6570
    %v6572 = vshrl.u32 %v6260, 16
    %v6574 = vor.u32 %v6572, %v6570
    %v6576 = vshll.u32 %v6263, 16
    %v6578 = vrot.slane %v6576, 1
    %v6579 = vsel %vm1275, %v6574, %v6578
    %6580 = vrot.lane.b32.xlu0 %v6275, 32
    %v6581 = vpop.permute.xlu0 %6580
    %6582 = vrot.lane.b32.xlu0 %v6283, 32
    %v6583 = vpop.permute.xlu0 %6582
    %6584 = vrot.lane.b32.xlu0 %v6291, 32
    %v6585 = vpop.permute.xlu0 %6584
    %6586 = vrot.lane.b32.xlu0 %v6299, 32
    %v6587 = vpop.permute.xlu0 %6586
    %6588 = vrot.lane.b32.xlu0 %v6307, 32
    %v6589 = vpop.permute.xlu0 %6588
    %6590 = vrot.lane.b32.xlu0 %v6315, 32
    %v6591 = vpop.permute.xlu0 %6590
    %6592 = vrot.lane.b32.xlu0 %v6323, 32
    %v6593 = vpop.permute.xlu0 %6592
    %6594 = vrot.lane.b32.xlu0 %v6331, 32
    %v6595 = vpop.permute.xlu0 %6594
    %6596 = vrot.lane.b32.xlu0 %v6339, 32
    %v6597 = vpop.permute.xlu0 %6596
    %6598 = vrot.lane.b32.xlu0 %v6347, 32
    %v6599 = vpop.permute.xlu0 %6598
    %6600 = vrot.lane.b32.xlu0 %v6355, 32
    %v6601 = vpop.permute.xlu0 %6600
    %6602 = vrot.lane.b32.xlu0 %v6363, 32
    %v6603 = vpop.permute.xlu0 %6602
    %6604 = vrot.lane.b32.xlu0 %v6371, 32
    %v6605 = vpop.permute.xlu0 %6604
    %6606 = vrot.lane.b32.xlu0 %v6379, 32
    %v6607 = vpop.permute.xlu0 %6606
    %6608 = vrot.lane.b32.xlu0 %v6387, 32
    %v6609 = vpop.permute.xlu0 %6608
    %6610 = vrot.lane.b32.xlu0 %v6395, 32
    %v6611 = vpop.permute.xlu0 %6610
    %6612 = vrot.lane.b32.xlu0 %v6403, 32
    %v6613 = vpop.permute.xlu0 %6612
    %6614 = vrot.lane.b32.xlu0 %v6411, 32
    %v6615 = vpop.permute.xlu0 %6614
    %6616 = vrot.lane.b32.xlu0 %v6419, 32
    %v6617 = vpop.permute.xlu0 %6616
    %6618 = vrot.lane.b32.xlu0 %v6427, 32
    %v6619 = vpop.permute.xlu0 %6618
    %6620 = vrot.lane.b32.xlu0 %v6435, 32
    %v6621 = vpop.permute.xlu0 %6620
    %6622 = vrot.lane.b32.xlu0 %v6443, 32
    %v6623 = vpop.permute.xlu0 %6622
    %6624 = vrot.lane.b32.xlu0 %v6451, 32
    %v6625 = vpop.permute.xlu0 %6624
    %6626 = vrot.lane.b32.xlu0 %v6459, 32
    %v6627 = vpop.permute.xlu0 %6626
    %6628 = vrot.lane.b32.xlu0 %v6467, 32
    %v6629 = vpop.permute.xlu0 %6628
    %6630 = vrot.lane.b32.xlu0 %v6475, 32
    %v6631 = vpop.permute.xlu0 %6630
    %6632 = vrot.lane.b32.xlu0 %v6483, 32
    %v6633 = vpop.permute.xlu0 %6632
    %6634 = vrot.lane.b32.xlu0 %v6491, 32
    %v6635 = vpop.permute.xlu0 %6634
    %6636 = vrot.lane.b32.xlu0 %v6499, 32
    %v6637 = vpop.permute.xlu0 %6636
    %6638 = vrot.lane.b32.xlu0 %v6507, 32
    %v6639 = vpop.permute.xlu0 %6638
    %6640 = vrot.lane.b32.xlu0 %v6515, 32
    %v6641 = vpop.permute.xlu0 %6640
    %6642 = vrot.lane.b32.xlu0 %v6523, 32
    %v6643 = vpop.permute.xlu0 %6642
    %6644 = vrot.lane.b32.xlu0 %v6531, 32
    %v6645 = vpop.permute.xlu0 %6644
    %6646 = vrot.lane.b32.xlu0 %v6539, 32
    %v6647 = vpop.permute.xlu0 %6646
    %6648 = vrot.lane.b32.xlu0 %v6547, 32
    %v6649 = vpop.permute.xlu0 %6648
    %6650 = vrot.lane.b32.xlu0 %v6555, 32
    %v6651 = vpop.permute.xlu0 %6650
    %6652 = vrot.lane.b32.xlu0 %v6563, 32
    %v6653 = vpop.permute.xlu0 %6652
    %6654 = vrot.lane.b32.xlu0 %v6571, 32
    %v6655 = vpop.permute.xlu0 %6654
    %6656 = vrot.lane.b32.xlu0 %v6579, 32
    %v6657 = vpop.permute.xlu0 %6656
    %v6659 = vunpack.c.l.b16 %v6051
    %v6660 = vpack.c.b16 %v6145, %v6659
    %v6661 = vrot.slane %v6660, 1
    %v6662 = vrot.slane %v6223, 1
    %v6663 = vsel %vm1673, %v6661, %v6662
    %v6664 = vrot.slane %v6224, 1
    %v6665 = vsel %vm1673, %v6662, %v6664
    %v6666 = vrot.slane %v6225, 1
    %v6667 = vsel %vm1673, %v6664, %v6666
    %v6668 = vrot.slane %v6226, 1
    %v6669 = vsel %vm1673, %v6666, %v6668
    %v6670 = vrot.slane %v6227, 1
    %v6671 = vsel %vm1673, %v6668, %v6670
    %v6672 = vrot.slane %v6228, 1
    %v6673 = vsel %vm1673, %v6670, %v6672
    %v6674 = vrot.slane %v6229, 1
    %v6675 = vsel %vm1673, %v6672, %v6674
    %v6676 = vrot.slane %v6230, 1
    %v6677 = vsel %vm1673, %v6674, %v6676
    %v6678 = vrot.slane %v6231, 1
    %v6679 = vsel %vm1673, %v6676, %v6678
    %v6680 = vrot.slane %v6232, 1
    %v6681 = vsel %vm1673, %v6678, %v6680
    %v6682 = vrot.slane %v6233, 1
    %v6683 = vsel %vm1673, %v6680, %v6682
    %v6684 = vrot.slane %v6234, 1
    %v6685 = vsel %vm1673, %v6682, %v6684
    %v6686 = vrot.slane %v6235, 1
    %v6687 = vsel %vm1673, %v6684, %v6686
    %v6688 = vrot.slane %v6236, 1
    %v6689 = vsel %vm1673, %v6686, %v6688
    %v6690 = vrot.slane %v6237, 1
    %v6691 = vsel %vm1673, %v6688, %v6690
    %v6692 = vrot.slane %v6238, 1
    %v6693 = vsel %vm1673, %v6690, %v6692
    %v6694 = vrot.slane %v6239, 1
    %v6695 = vsel %vm1673, %v6692, %v6694
    %v6696 = vrot.slane %v6240, 1
    %v6697 = vsel %vm1673, %v6694, %v6696
    %v6698 = vrot.slane %v6241, 1
    %v6699 = vsel %vm1673, %v6696, %v6698
    %v6700 = vrot.slane %v6242, 1
    %v6701 = vsel %vm1673, %v6698, %v6700
    %v6702 = vrot.slane %v6243, 1
    %v6703 = vsel %vm1673, %v6700, %v6702
    %v6704 = vrot.slane %v6244, 1
    %v6705 = vsel %vm1673, %v6702, %v6704
    %v6706 = vrot.slane %v6245, 1
    %v6707 = vsel %vm1673, %v6704, %v6706
    %v6708 = vrot.slane %v6246, 1
    %v6709 = vsel %vm1673, %v6706, %v6708
    %v6710 = vrot.slane %v6247, 1
    %v6711 = vsel %vm1673, %v6708, %v6710
    %v6712 = vrot.slane %v6248, 1
    %v6713 = vsel %vm1673, %v6710, %v6712
    %v6714 = vrot.slane %v6249, 1
    %v6715 = vsel %vm1673, %v6712, %v6714
    %v6716 = vrot.slane %v6250, 1
    %v6717 = vsel %vm1673, %v6714, %v6716
    %v6718 = vrot.slane %v6251, 1
    %v6719 = vsel %vm1673, %v6716, %v6718
    %v6720 = vrot.slane %v6252, 1
    %v6721 = vsel %vm1673, %v6718, %v6720
    %v6722 = vrot.slane %v6253, 1
    %v6723 = vsel %vm1673, %v6720, %v6722
    %v6724 = vrot.slane %v6254, 1
    %v6725 = vsel %vm1673, %v6722, %v6724
    %v6726 = vrot.slane %v6255, 1
    %v6727 = vsel %vm1673, %v6724, %v6726
    %v6728 = vrot.slane %v6256, 1
    %v6729 = vsel %vm1673, %v6726, %v6728
    %v6730 = vrot.slane %v6257, 1
    %v6731 = vsel %vm1673, %v6728, %v6730
    %v6732 = vrot.slane %v6258, 1
    %v6733 = vsel %vm1673, %v6730, %v6732
    %v6734 = vrot.slane %v6259, 1
    %v6735 = vsel %vm1673, %v6732, %v6734
    %v6736 = vrot.slane %v6260, 1
    %v6737 = vsel %vm1673, %v6734, %v6736
    %v6738 = vrot.slane %v6263, 1
    %v6739 = vsel %vm1673, %v6736, %v6738
    %6740 = vrot.lane.b32.xlu0 %v6663, 64
    %v6741 = vpop.permute.xlu0 %6740
    %6742 = vrot.lane.b32.xlu0 %v6665, 64
    %v6743 = vpop.permute.xlu0 %6742
    %6744 = vrot.lane.b32.xlu0 %v6667, 64
    %v6745 = vpop.permute.xlu0 %6744
    %6746 = vrot.lane.b32.xlu0 %v6669, 64
    %v6747 = vpop.permute.xlu0 %6746
    %6748 = vrot.lane.b32.xlu0 %v6671, 64
    %v6749 = vpop.permute.xlu0 %6748
    %6750 = vrot.lane.b32.xlu0 %v6673, 64
    %v6751 = vpop.permute.xlu0 %6750
    %6752 = vrot.lane.b32.xlu0 %v6675, 64
    %v6753 = vpop.permute.xlu0 %6752
    %6754 = vrot.lane.b32.xlu0 %v6677, 64
    %v6755 = vpop.permute.xlu0 %6754
    %6756 = vrot.lane.b32.xlu0 %v6679, 64
    %v6757 = vpop.permute.xlu0 %6756
    %6758 = vrot.lane.b32.xlu0 %v6681, 64
    %v6759 = vpop.permute.xlu0 %6758
    %6760 = vrot.lane.b32.xlu0 %v6683, 64
    %v6761 = vpop.permute.xlu0 %6760
    %6762 = vrot.lane.b32.xlu0 %v6685, 64
    %v6763 = vpop.permute.xlu0 %6762
    %6764 = vrot.lane.b32.xlu0 %v6687, 64
    %v6765 = vpop.permute.xlu0 %6764
    %6766 = vrot.lane.b32.xlu0 %v6689, 64
    %v6767 = vpop.permute.xlu0 %6766
    %6768 = vrot.lane.b32.xlu0 %v6691, 64
    %v6769 = vpop.permute.xlu0 %6768
    %6770 = vrot.lane.b32.xlu0 %v6693, 64
    %v6771 = vpop.permute.xlu0 %6770
    %6772 = vrot.lane.b32.xlu0 %v6695, 64
    %v6773 = vpop.permute.xlu0 %6772
    %6774 = vrot.lane.b32.xlu0 %v6697, 64
    %v6775 = vpop.permute.xlu0 %6774
    %6776 = vrot.lane.b32.xlu0 %v6699, 64
    %v6777 = vpop.permute.xlu0 %6776
    %6778 = vrot.lane.b32.xlu0 %v6701, 64
    %v6779 = vpop.permute.xlu0 %6778
    %6780 = vrot.lane.b32.xlu0 %v6703, 64
    %v6781 = vpop.permute.xlu0 %6780
    %6782 = vrot.lane.b32.xlu0 %v6705, 64
    %v6783 = vpop.permute.xlu0 %6782
    %6784 = vrot.lane.b32.xlu0 %v6707, 64
    %v6785 = vpop.permute.xlu0 %6784
    %6786 = vrot.lane.b32.xlu0 %v6709, 64
    %v6787 = vpop.permute.xlu0 %6786
    %6788 = vrot.lane.b32.xlu0 %v6711, 64
    %v6789 = vpop.permute.xlu0 %6788
    %6790 = vrot.lane.b32.xlu0 %v6713, 64
    %v6791 = vpop.permute.xlu0 %6790
    %6792 = vrot.lane.b32.xlu0 %v6715, 64
    %v6793 = vpop.permute.xlu0 %6792
    %6794 = vrot.lane.b32.xlu0 %v6717, 64
    %v6795 = vpop.permute.xlu0 %6794
    %6796 = vrot.lane.b32.xlu0 %v6719, 64
    %v6797 = vpop.permute.xlu0 %6796
    %6798 = vrot.lane.b32.xlu0 %v6721, 64
    %v6799 = vpop.permute.xlu0 %6798
    %6800 = vrot.lane.b32.xlu0 %v6723, 64
    %v6801 = vpop.permute.xlu0 %6800
    %6802 = vrot.lane.b32.xlu0 %v6725, 64
    %v6803 = vpop.permute.xlu0 %6802
    %6804 = vrot.lane.b32.xlu0 %v6727, 64
    %v6805 = vpop.permute.xlu0 %6804
    %6806 = vrot.lane.b32.xlu0 %v6729, 64
    %v6807 = vpop.permute.xlu0 %6806
    %6808 = vrot.lane.b32.xlu0 %v6731, 64
    %v6809 = vpop.permute.xlu0 %6808
    %6810 = vrot.lane.b32.xlu0 %v6733, 64
    %v6811 = vpop.permute.xlu0 %6810
    %6812 = vrot.lane.b32.xlu0 %v6735, 64
    %v6813 = vpop.permute.xlu0 %6812
    %6814 = vrot.lane.b32.xlu0 %v6737, 64
    %v6815 = vpop.permute.xlu0 %6814
    %6816 = vrot.lane.b32.xlu0 %v6739, 64
    %v6817 = vpop.permute.xlu0 %6816
    %v6823 = vunpack.c.l.b16 %v6052
    %v6824 = vunpack.c.l.b16 %v6053
    %v6825 = vunpack.c.l.b16 %v6054
    %v6826 = vunpack.c.l.b16 %v6055
    %v6827 = vunpack.c.l.b16 %v6056
    %v6828 = vpack.c.b16 %v6148, %v6823
    %v6829 = vpack.c.b16 %v6150, %v6149
    %v6830 = vpack.c.b16 %v6152, %v6151
    %v6831 = vpack.c.b16 %v6154, %v6153
    %v6832 = vpack.c.b16 %v6156, %v6155
    %v6833 = vpack.c.b16 %v6158, %v6157
    %v6834 = vpack.c.b16 %v6160, %v6159
    %v6835 = vpack.c.b16 %v6162, %v6161
    %v6836 = vpack.c.b16 %v6164, %v6163
    %v6837 = vpack.c.b16 %v6166, %v6165
    %v6838 = vpack.c.b16 %v6168, %v6167
    %v6839 = vpack.c.b16 %v6170, %v6169
    %v6840 = vpack.c.b16 %v6172, %v6171
    %v6841 = vpack.c.b16 %v6174, %v6173
    %v6842 = vpack.c.b16 %v6176, %v6175
    %v6843 = vpack.c.b16 %v6178, %v6177
    %v6844 = vpack.c.b16 %v6180, %v6179
    %v6845 = vpack.c.b16 %v6182, %v6181
    %v6846 = vpack.c.b16 %v6184, %v6183
    %v6847 = vpack.c.b16 %v6186, %v6185
    %v6848 = vpack.c.b16 %v6188, %v6187
    %v6849 = vpack.c.b16 %v6190, %v6189
    %v6850 = vpack.c.b16 %v6192, %v6191
    %v6851 = vpack.c.b16 %v6194, %v6193
    %v6852 = vpack.c.b16 %v6196, %v6195
    %v6853 = vpack.c.b16 %v6198, %v6197
    %v6854 = vpack.c.b16 %v6200, %v6199
    %v6855 = vpack.c.b16 %v6202, %v6201
    %v6856 = vpack.c.b16 %v6204, %v6203
    %v6857 = vpack.c.b16 %v6206, %v6205
    %v6858 = vpack.c.b16 %v6208, %v6207
    %v6859 = vpack.c.b16 %v6210, %v6209
    %v6860 = vpack.c.b16 %v6212, %v6211
    %v6861 = vpack.c.b16 %v6214, %v6213
    %v6862 = vpack.c.b16 %v6216, %v6215
    %v6863 = vpack.c.b16 %v6218, %v6217
    %v6864 = vpack.c.b16 %v6220, %v6219
    %v6865 = vpack.c.b16 %v6824, %v6221
    %v6866 = vpack.c.b16 %v6826, %v6825
    %v6867 = vpack.c.b16 %v6827, %v6827
    %v6868 = vrot.slane %v6828, 1
    %v6869 = vrot.slane %v6829, 1
    %v6870 = vsel %vm1673, %v6868, %v6869
    %v6871 = vrot.slane %v6830, 1
    %v6872 = vsel %vm1673, %v6869, %v6871
    %v6873 = vrot.slane %v6831, 1
    %v6874 = vsel %vm1673, %v6871, %v6873
    %v6875 = vrot.slane %v6832, 1
    %v6876 = vsel %vm1673, %v6873, %v6875
    %v6877 = vrot.slane %v6833, 1
    %v6878 = vsel %vm1673, %v6875, %v6877
    %v6879 = vrot.slane %v6834, 1
    %v6880 = vsel %vm1673, %v6877, %v6879
    %v6881 = vrot.slane %v6835, 1
    %v6882 = vsel %vm1673, %v6879, %v6881
    %v6883 = vrot.slane %v6836, 1
    %v6884 = vsel %vm1673, %v6881, %v6883
    %v6885 = vrot.slane %v6837, 1
    %v6886 = vsel %vm1673, %v6883, %v6885
    %v6887 = vrot.slane %v6838, 1
    %v6888 = vsel %vm1673, %v6885, %v6887
    %v6889 = vrot.slane %v6839, 1
    %v6890 = vsel %vm1673, %v6887, %v6889
    %v6891 = vrot.slane %v6840, 1
    %v6892 = vsel %vm1673, %v6889, %v6891
    %v6893 = vrot.slane %v6841, 1
    %v6894 = vsel %vm1673, %v6891, %v6893
    %v6895 = vrot.slane %v6842, 1
    %v6896 = vsel %vm1673, %v6893, %v6895
    %v6897 = vrot.slane %v6843, 1
    %v6898 = vsel %vm1673, %v6895, %v6897
    %v6899 = vrot.slane %v6844, 1
    %v6900 = vsel %vm1673, %v6897, %v6899
    %v6901 = vrot.slane %v6845, 1
    %v6902 = vsel %vm1673, %v6899, %v6901
    %v6903 = vrot.slane %v6846, 1
    %v6904 = vsel %vm1673, %v6901, %v6903
    %v6905 = vrot.slane %v6847, 1
    %v6906 = vsel %vm1673, %v6903, %v6905
    %v6907 = vrot.slane %v6848, 1
    %v6908 = vsel %vm1673, %v6905, %v6907
    %v6909 = vrot.slane %v6849, 1
    %v6910 = vsel %vm1673, %v6907, %v6909
    %v6911 = vrot.slane %v6850, 1
    %v6912 = vsel %vm1673, %v6909, %v6911
    %v6913 = vrot.slane %v6851, 1
    %v6914 = vsel %vm1673, %v6911, %v6913
    %v6915 = vrot.slane %v6852, 1
    %v6916 = vsel %vm1673, %v6913, %v6915
    %v6917 = vrot.slane %v6853, 1
    %v6918 = vsel %vm1673, %v6915, %v6917
    %v6919 = vrot.slane %v6854, 1
    %v6920 = vsel %vm1673, %v6917, %v6919
    %v6921 = vrot.slane %v6855, 1
    %v6922 = vsel %vm1673, %v6919, %v6921
    %v6923 = vrot.slane %v6856, 1
    %v6924 = vsel %vm1673, %v6921, %v6923
    %v6925 = vrot.slane %v6857, 1
    %v6926 = vsel %vm1673, %v6923, %v6925
    %v6927 = vrot.slane %v6858, 1
    %v6928 = vsel %vm1673, %v6925, %v6927
    %v6929 = vrot.slane %v6859, 1
    %v6930 = vsel %vm1673, %v6927, %v6929
    %v6931 = vrot.slane %v6860, 1
    %v6932 = vsel %vm1673, %v6929, %v6931
    %v6933 = vrot.slane %v6861, 1
    %v6934 = vsel %vm1673, %v6931, %v6933
    %v6935 = vrot.slane %v6862, 1
    %v6936 = vsel %vm1673, %v6933, %v6935
    %v6937 = vrot.slane %v6863, 1
    %v6938 = vsel %vm1673, %v6935, %v6937
    %v6939 = vrot.slane %v6864, 1
    %v6940 = vsel %vm1673, %v6937, %v6939
    %v6941 = vrot.slane %v6865, 1
    %v6942 = vsel %vm1673, %v6939, %v6941
    %v6943 = vrot.slane %v6866, 1
    %v6944 = vsel %vm1673, %v6941, %v6943
    %v6945 = vrot.slane %v6867, 1
    %v6946 = vsel %vm1673, %v6943, %v6945
    %6947 = vrot.lane.b32.xlu0 %v6870, 96
    %v6948 = vpop.permute.xlu0 %6947
    %6949 = vrot.lane.b32.xlu0 %v6872, 96
    %v6950 = vpop.permute.xlu0 %6949
    %6951 = vrot.lane.b32.xlu0 %v6874, 96
    %v6952 = vpop.permute.xlu0 %6951
    %6953 = vrot.lane.b32.xlu0 %v6876, 96
    %v6954 = vpop.permute.xlu0 %6953
    %6955 = vrot.lane.b32.xlu0 %v6878, 96
    %v6956 = vpop.permute.xlu0 %6955
    %6957 = vrot.lane.b32.xlu0 %v6880, 96
    %v6958 = vpop.permute.xlu0 %6957
    %6959 = vrot.lane.b32.xlu0 %v6882, 96
    %v6960 = vpop.permute.xlu0 %6959
    %6961 = vrot.lane.b32.xlu0 %v6884, 96
    %v6962 = vpop.permute.xlu0 %6961
    %6963 = vrot.lane.b32.xlu0 %v6886, 96
    %v6964 = vpop.permute.xlu0 %6963
    %6965 = vrot.lane.b32.xlu0 %v6888, 96
    %v6966 = vpop.permute.xlu0 %6965
    %6967 = vrot.lane.b32.xlu0 %v6890, 96
    %v6968 = vpop.permute.xlu0 %6967
    %6969 = vrot.lane.b32.xlu0 %v6892, 96
    %v6970 = vpop.permute.xlu0 %6969
    %6971 = vrot.lane.b32.xlu0 %v6894, 96
    %v6972 = vpop.permute.xlu0 %6971
    %6973 = vrot.lane.b32.xlu0 %v6896, 96
    %v6974 = vpop.permute.xlu0 %6973
    %6975 = vrot.lane.b32.xlu0 %v6898, 96
    %v6976 = vpop.permute.xlu0 %6975
    %6977 = vrot.lane.b32.xlu0 %v6900, 96
    %v6978 = vpop.permute.xlu0 %6977
    %6979 = vrot.lane.b32.xlu0 %v6902, 96
    %v6980 = vpop.permute.xlu0 %6979
    %6981 = vrot.lane.b32.xlu0 %v6904, 96
    %v6982 = vpop.permute.xlu0 %6981
    %6983 = vrot.lane.b32.xlu0 %v6906, 96
    %v6984 = vpop.permute.xlu0 %6983
    %6985 = vrot.lane.b32.xlu0 %v6908, 96
    %v6986 = vpop.permute.xlu0 %6985
    %6987 = vrot.lane.b32.xlu0 %v6910, 96
    %v6988 = vpop.permute.xlu0 %6987
    %6989 = vrot.lane.b32.xlu0 %v6912, 96
    %v6990 = vpop.permute.xlu0 %6989
    %6991 = vrot.lane.b32.xlu0 %v6914, 96
    %v6992 = vpop.permute.xlu0 %6991
    %6993 = vrot.lane.b32.xlu0 %v6916, 96
    %v6994 = vpop.permute.xlu0 %6993
    %6995 = vrot.lane.b32.xlu0 %v6918, 96
    %v6996 = vpop.permute.xlu0 %6995
    %6997 = vrot.lane.b32.xlu0 %v6920, 96
    %v6998 = vpop.permute.xlu0 %6997
    %6999 = vrot.lane.b32.xlu0 %v6922, 96
    %v7000 = vpop.permute.xlu0 %6999
    %7001 = vrot.lane.b32.xlu0 %v6924, 96
    %v7002 = vpop.permute.xlu0 %7001
    %7003 = vrot.lane.b32.xlu0 %v6926, 96
    %v7004 = vpop.permute.xlu0 %7003
    %7005 = vrot.lane.b32.xlu0 %v6928, 96
    %v7006 = vpop.permute.xlu0 %7005
    %7007 = vrot.lane.b32.xlu0 %v6930, 96
    %v7008 = vpop.permute.xlu0 %7007
    %7009 = vrot.lane.b32.xlu0 %v6932, 96
    %v7010 = vpop.permute.xlu0 %7009
    %7011 = vrot.lane.b32.xlu0 %v6934, 96
    %v7012 = vpop.permute.xlu0 %7011
    %7013 = vrot.lane.b32.xlu0 %v6936, 96
    %v7014 = vpop.permute.xlu0 %7013
    %7015 = vrot.lane.b32.xlu0 %v6938, 96
    %v7016 = vpop.permute.xlu0 %7015
    %7017 = vrot.lane.b32.xlu0 %v6940, 96
    %v7018 = vpop.permute.xlu0 %7017
    %7019 = vrot.lane.b32.xlu0 %v6942, 96
    %v7020 = vpop.permute.xlu0 %7019
    %7021 = vrot.lane.b32.xlu0 %v6944, 96
    %v7022 = vpop.permute.xlu0 %7021
    %7023 = vrot.lane.b32.xlu0 %v6946, 96
    %v7024 = vpop.permute.xlu0 %7023
    %v7026 = vunpack.c.l.b16 %v6057
    %v7027 = vpack.c.b16 %v7026, %v7026
    %v7029 = vshrl.u32 %v6828, 16
    %v7031 = vrot.slane %v7029, 1
    %v7032 = vshll.u32 %v6828, 16
    %v7034 = vrot.slane %v7032, 2
    %v7035 = vor.u32 %v7031, %v7034
    %v7037 = vshrl.u32 %v6829, 16
    %v7039 = vrot.slane %v7037, 1
    %v7040 = vshll.u32 %v6829, 16
    %v7042 = vrot.slane %v7040, 2
    %v7043 = vor.u32 %v7039, %v7042
    %v7044 = vsel %vm2041, %v7035, %v7043
    %v7046 = vshrl.u32 %v6830, 16
    %v7048 = vrot.slane %v7046, 1
    %v7049 = vshll.u32 %v6830, 16
    %v7051 = vrot.slane %v7049, 2
    %v7052 = vor.u32 %v7048, %v7051
    %v7053 = vsel %vm2041, %v7043, %v7052
    %v7055 = vshrl.u32 %v6831, 16
    %v7057 = vrot.slane %v7055, 1
    %v7058 = vshll.u32 %v6831, 16
    %v7060 = vrot.slane %v7058, 2
    %v7061 = vor.u32 %v7057, %v7060
    %v7062 = vsel %vm2041, %v7052, %v7061
    %v7064 = vshrl.u32 %v6832, 16
    %v7066 = vrot.slane %v7064, 1
    %v7067 = vshll.u32 %v6832, 16
    %v7069 = vrot.slane %v7067, 2
    %v7070 = vor.u32 %v7066, %v7069
    %v7071 = vsel %vm2041, %v7061, %v7070
    %v7073 = vshrl.u32 %v6833, 16
    %v7075 = vrot.slane %v7073, 1
    %v7076 = vshll.u32 %v6833, 16
    %v7078 = vrot.slane %v7076, 2
    %v7079 = vor.u32 %v7075, %v7078
    %v7080 = vsel %vm2041, %v7070, %v7079
    %v7082 = vshrl.u32 %v6834, 16
    %v7084 = vrot.slane %v7082, 1
    %v7085 = vshll.u32 %v6834, 16
    %v7087 = vrot.slane %v7085, 2
    %v7088 = vor.u32 %v7084, %v7087
    %v7089 = vsel %vm2041, %v7079, %v7088
    %v7091 = vshrl.u32 %v6835, 16
    %v7093 = vrot.slane %v7091, 1
    %v7094 = vshll.u32 %v6835, 16
    %v7096 = vrot.slane %v7094, 2
    %v7097 = vor.u32 %v7093, %v7096
    %v7098 = vsel %vm2041, %v7088, %v7097
    %v7100 = vshrl.u32 %v6836, 16
    %v7102 = vrot.slane %v7100, 1
    %v7103 = vshll.u32 %v6836, 16
    %v7105 = vrot.slane %v7103, 2
    %v7106 = vor.u32 %v7102, %v7105
    %v7107 = vsel %vm2041, %v7097, %v7106
    %v7109 = vshrl.u32 %v6837, 16
    %v7111 = vrot.slane %v7109, 1
    %v7112 = vshll.u32 %v6837, 16
    %v7114 = vrot.slane %v7112, 2
    %v7115 = vor.u32 %v7111, %v7114
    %v7116 = vsel %vm2041, %v7106, %v7115
    %v7118 = vshrl.u32 %v6838, 16
    %v7120 = vrot.slane %v7118, 1
    %v7121 = vshll.u32 %v6838, 16
    %v7123 = vrot.slane %v7121, 2
    %v7124 = vor.u32 %v7120, %v7123
    %v7125 = vsel %vm2041, %v7115, %v7124
    %v7127 = vshrl.u32 %v6839, 16
    %v7129 = vrot.slane %v7127, 1
    %v7130 = vshll.u32 %v6839, 16
    %v7132 = vrot.slane %v7130, 2
    %v7133 = vor.u32 %v7129, %v7132
    %v7134 = vsel %vm2041, %v7124, %v7133
    %v7136 = vshrl.u32 %v6840, 16
    %v7138 = vrot.slane %v7136, 1
    %v7139 = vshll.u32 %v6840, 16
    %v7141 = vrot.slane %v7139, 2
    %v7142 = vor.u32 %v7138, %v7141
    %v7143 = vsel %vm2041, %v7133, %v7142
    %v7145 = vshrl.u32 %v6841, 16
    %v7147 = vrot.slane %v7145, 1
    %v7148 = vshll.u32 %v6841, 16
    %v7150 = vrot.slane %v7148, 2
    %v7151 = vor.u32 %v7147, %v7150
    %v7152 = vsel %vm2041, %v7142, %v7151
    %v7154 = vshrl.u32 %v6842, 16
    %v7156 = vrot.slane %v7154, 1
    %v7157 = vshll.u32 %v6842, 16
    %v7159 = vrot.slane %v7157, 2
    %v7160 = vor.u32 %v7156, %v7159
    %v7161 = vsel %vm2041, %v7151, %v7160
    %v7163 = vshrl.u32 %v6843, 16
    %v7165 = vrot.slane %v7163, 1
    %v7166 = vshll.u32 %v6843, 16
    %v7168 = vrot.slane %v7166, 2
    %v7169 = vor.u32 %v7165, %v7168
    %v7170 = vsel %vm2041, %v7160, %v7169
    %v7172 = vshrl.u32 %v6844, 16
    %v7174 = vrot.slane %v7172, 1
    %v7175 = vshll.u32 %v6844, 16
    %v7177 = vrot.slane %v7175, 2
    %v7178 = vor.u32 %v7174, %v7177
    %v7179 = vsel %vm2041, %v7169, %v7178
    %v7181 = vshrl.u32 %v6845, 16
    %v7183 = vrot.slane %v7181, 1
    %v7184 = vshll.u32 %v6845, 16
    %v7186 = vrot.slane %v7184, 2
    %v7187 = vor.u32 %v7183, %v7186
    %v7188 = vsel %vm2041, %v7178, %v7187
    %v7190 = vshrl.u32 %v6846, 16
    %v7192 = vrot.slane %v7190, 1
    %v7193 = vshll.u32 %v6846, 16
    %v7195 = vrot.slane %v7193, 2
    %v7196 = vor.u32 %v7192, %v7195
    %v7197 = vsel %vm2041, %v7187, %v7196
    %v7199 = vshrl.u32 %v6847, 16
    %v7201 = vrot.slane %v7199, 1
    %v7202 = vshll.u32 %v6847, 16
    %v7204 = vrot.slane %v7202, 2
    %v7205 = vor.u32 %v7201, %v7204
    %v7206 = vsel %vm2041, %v7196, %v7205
    %v7208 = vshrl.u32 %v6848, 16
    %v7210 = vrot.slane %v7208, 1
    %v7211 = vshll.u32 %v6848, 16
    %v7213 = vrot.slane %v7211, 2
    %v7214 = vor.u32 %v7210, %v7213
    %v7215 = vsel %vm2041, %v7205, %v7214
    %v7217 = vshrl.u32 %v6849, 16
    %v7219 = vrot.slane %v7217, 1
    %v7220 = vshll.u32 %v6849, 16
    %v7222 = vrot.slane %v7220, 2
    %v7223 = vor.u32 %v7219, %v7222
    %v7224 = vsel %vm2041, %v7214, %v7223
    %v7226 = vshrl.u32 %v6850, 16
    %v7228 = vrot.slane %v7226, 1
    %v7229 = vshll.u32 %v6850, 16
    %v7231 = vrot.slane %v7229, 2
    %v7232 = vor.u32 %v7228, %v7231
    %v7233 = vsel %vm2041, %v7223, %v7232
    %v7235 = vshrl.u32 %v6851, 16
    %v7237 = vrot.slane %v7235, 1
    %v7238 = vshll.u32 %v6851, 16
    %v7240 = vrot.slane %v7238, 2
    %v7241 = vor.u32 %v7237, %v7240
    %v7242 = vsel %vm2041, %v7232, %v7241
    %v7244 = vshrl.u32 %v6852, 16
    %v7246 = vrot.slane %v7244, 1
    %v7247 = vshll.u32 %v6852, 16
    %v7249 = vrot.slane %v7247, 2
    %v7250 = vor.u32 %v7246, %v7249
    %v7251 = vsel %vm2041, %v7241, %v7250
    %v7253 = vshrl.u32 %v6853, 16
    %v7255 = vrot.slane %v7253, 1
    %v7256 = vshll.u32 %v6853, 16
    %v7258 = vrot.slane %v7256, 2
    %v7259 = vor.u32 %v7255, %v7258
    %v7260 = vsel %vm2041, %v7250, %v7259
    %v7262 = vshrl.u32 %v6854, 16
    %v7264 = vrot.slane %v7262, 1
    %v7265 = vshll.u32 %v6854, 16
    %v7267 = vrot.slane %v7265, 2
    %v7268 = vor.u32 %v7264, %v7267
    %v7269 = vsel %vm2041, %v7259, %v7268
    %v7271 = vshrl.u32 %v6855, 16
    %v7273 = vrot.slane %v7271, 1
    %v7274 = vshll.u32 %v6855, 16
    %v7276 = vrot.slane %v7274, 2
    %v7277 = vor.u32 %v7273, %v7276
    %v7278 = vsel %vm2041, %v7268, %v7277
    %v7280 = vshrl.u32 %v6856, 16
    %v7282 = vrot.slane %v7280, 1
    %v7283 = vshll.u32 %v6856, 16
    %v7285 = vrot.slane %v7283, 2
    %v7286 = vor.u32 %v7282, %v7285
    %v7287 = vsel %vm2041, %v7277, %v7286
    %v7289 = vshrl.u32 %v6857, 16
    %v7291 = vrot.slane %v7289, 1
    %v7292 = vshll.u32 %v6857, 16
    %v7294 = vrot.slane %v7292, 2
    %v7295 = vor.u32 %v7291, %v7294
    %v7296 = vsel %vm2041, %v7286, %v7295
    %v7298 = vshrl.u32 %v6858, 16
    %v7300 = vrot.slane %v7298, 1
    %v7301 = vshll.u32 %v6858, 16
    %v7303 = vrot.slane %v7301, 2
    %v7304 = vor.u32 %v7300, %v7303
    %v7305 = vsel %vm2041, %v7295, %v7304
    %v7307 = vshrl.u32 %v6859, 16
    %v7309 = vrot.slane %v7307, 1
    %v7310 = vshll.u32 %v6859, 16
    %v7312 = vrot.slane %v7310, 2
    %v7313 = vor.u32 %v7309, %v7312
    %v7314 = vsel %vm2041, %v7304, %v7313
    %v7316 = vshrl.u32 %v6860, 16
    %v7318 = vrot.slane %v7316, 1
    %v7319 = vshll.u32 %v6860, 16
    %v7321 = vrot.slane %v7319, 2
    %v7322 = vor.u32 %v7318, %v7321
    %v7323 = vsel %vm2041, %v7313, %v7322
    %v7325 = vshrl.u32 %v6861, 16
    %v7327 = vrot.slane %v7325, 1
    %v7328 = vshll.u32 %v6861, 16
    %v7330 = vrot.slane %v7328, 2
    %v7331 = vor.u32 %v7327, %v7330
    %v7332 = vsel %vm2041, %v7322, %v7331
    %v7334 = vshrl.u32 %v6862, 16
    %v7336 = vrot.slane %v7334, 1
    %v7337 = vshll.u32 %v6862, 16
    %v7339 = vrot.slane %v7337, 2
    %v7340 = vor.u32 %v7336, %v7339
    %v7341 = vsel %vm2041, %v7331, %v7340
    %v7343 = vshrl.u32 %v6863, 16
    %v7345 = vrot.slane %v7343, 1
    %v7346 = vshll.u32 %v6863, 16
    %v7348 = vrot.slane %v7346, 2
    %v7349 = vor.u32 %v7345, %v7348
    %v7350 = vsel %vm2041, %v7340, %v7349
    %v7352 = vshrl.u32 %v6864, 16
    %v7354 = vrot.slane %v7352, 1
    %v7355 = vshll.u32 %v6864, 16
    %v7357 = vrot.slane %v7355, 2
    %v7358 = vor.u32 %v7354, %v7357
    %v7359 = vsel %vm2041, %v7349, %v7358
    %v7361 = vshrl.u32 %v6865, 16
    %v7363 = vrot.slane %v7361, 1
    %v7364 = vshll.u32 %v6865, 16
    %v7366 = vrot.slane %v7364, 2
    %v7367 = vor.u32 %v7363, %v7366
    %v7368 = vsel %vm2041, %v7358, %v7367
    %v7370 = vshrl.u32 %v6866, 16
    %v7372 = vrot.slane %v7370, 1
    %v7373 = vshll.u32 %v6866, 16
    %v7375 = vrot.slane %v7373, 2
    %v7376 = vor.u32 %v7372, %v7375
    %v7377 = vsel %vm2041, %v7367, %v7376
    %v7379 = vshrl.u32 %v7027, 16
    %v7381 = vrot.slane %v7379, 1
    %v7382 = vshll.u32 %v7027, 16
    %v7384 = vrot.slane %v7382, 2
    %v7385 = vor.u32 %v7381, %v7384
    %v7386 = vsel %vm2041, %v7376, %v7385
    %v7388 = vunpack.c.l.b16 %v6058
    %v7389 = vpack.c.b16 %v6148, %v7388
    %v7390 = vrot.slane %v7389, 2
    %v7391 = vrot.slane %v6829, 2
    %v7392 = vsel %vm2404, %v7390, %v7391
    %v7393 = vrot.slane %v6830, 2
    %v7394 = vsel %vm2404, %v7391, %v7393
    %v7395 = vrot.slane %v6831, 2
    %v7396 = vsel %vm2404, %v7393, %v7395
    %v7397 = vrot.slane %v6832, 2
    %v7398 = vsel %vm2404, %v7395, %v7397
    %v7399 = vrot.slane %v6833, 2
    %v7400 = vsel %vm2404, %v7397, %v7399
    %v7401 = vrot.slane %v6834, 2
    %v7402 = vsel %vm2404, %v7399, %v7401
    %v7403 = vrot.slane %v6835, 2
    %v7404 = vsel %vm2404, %v7401, %v7403
    %v7405 = vrot.slane %v6836, 2
    %v7406 = vsel %vm2404, %v7403, %v7405
    %v7407 = vrot.slane %v6837, 2
    %v7408 = vsel %vm2404, %v7405, %v7407
    %v7409 = vrot.slane %v6838, 2
    %v7410 = vsel %vm2404, %v7407, %v7409
    %v7411 = vrot.slane %v6839, 2
    %v7412 = vsel %vm2404, %v7409, %v7411
    %v7413 = vrot.slane %v6840, 2
    %v7414 = vsel %vm2404, %v7411, %v7413
    %v7415 = vrot.slane %v6841, 2
    %v7416 = vsel %vm2404, %v7413, %v7415
    %v7417 = vrot.slane %v6842, 2
    %v7418 = vsel %vm2404, %v7415, %v7417
    %v7419 = vrot.slane %v6843, 2
    %v7420 = vsel %vm2404, %v7417, %v7419
    %v7421 = vrot.slane %v6844, 2
    %v7422 = vsel %vm2404, %v7419, %v7421
    %v7423 = vrot.slane %v6845, 2
    %v7424 = vsel %vm2404, %v7421, %v7423
    %v7425 = vrot.slane %v6846, 2
    %v7426 = vsel %vm2404, %v7423, %v7425
    %v7427 = vrot.slane %v6847, 2
    %v7428 = vsel %vm2404, %v7425, %v7427
    %v7429 = vrot.slane %v6848, 2
    %v7430 = vsel %vm2404, %v7427, %v7429
    %v7431 = vrot.slane %v6849, 2
    %v7432 = vsel %vm2404, %v7429, %v7431
    %v7433 = vrot.slane %v6850, 2
    %v7434 = vsel %vm2404, %v7431, %v7433
    %v7435 = vrot.slane %v6851, 2
    %v7436 = vsel %vm2404, %v7433, %v7435
    %v7437 = vrot.slane %v6852, 2
    %v7438 = vsel %vm2404, %v7435, %v7437
    %v7439 = vrot.slane %v6853, 2
    %v7440 = vsel %vm2404, %v7437, %v7439
    %v7441 = vrot.slane %v6854, 2
    %v7442 = vsel %vm2404, %v7439, %v7441
    %v7443 = vrot.slane %v6855, 2
    %v7444 = vsel %vm2404, %v7441, %v7443
    %v7445 = vrot.slane %v6856, 2
    %v7446 = vsel %vm2404, %v7443, %v7445
    %v7447 = vrot.slane %v6857, 2
    %v7448 = vsel %vm2404, %v7445, %v7447
    %v7449 = vrot.slane %v6858, 2
    %v7450 = vsel %vm2404, %v7447, %v7449
    %v7451 = vrot.slane %v6859, 2
    %v7452 = vsel %vm2404, %v7449, %v7451
    %v7453 = vrot.slane %v6860, 2
    %v7454 = vsel %vm2404, %v7451, %v7453
    %v7455 = vrot.slane %v6861, 2
    %v7456 = vsel %vm2404, %v7453, %v7455
    %v7457 = vrot.slane %v6862, 2
    %v7458 = vsel %vm2404, %v7455, %v7457
    %v7459 = vrot.slane %v6863, 2
    %v7460 = vsel %vm2404, %v7457, %v7459
    %v7461 = vrot.slane %v6864, 2
    %v7462 = vsel %vm2404, %v7459, %v7461
    %v7463 = vrot.slane %v6865, 2
    %v7464 = vsel %vm2404, %v7461, %v7463
    %v7465 = vrot.slane %v6866, 2
    %v7466 = vsel %vm2404, %v7463, %v7465
    %v7467 = vrot.slane %v7027, 2
    %v7468 = vsel %vm2404, %v7465, %v7467
    %7469 = vrot.lane.b32.xlu0 %v7392, 32
    %v7470 = vpop.permute.xlu0 %7469
    %7471 = vrot.lane.b32.xlu0 %v7394, 32
    %v7472 = vpop.permute.xlu0 %7471
    %7473 = vrot.lane.b32.xlu0 %v7396, 32
    %v7474 = vpop.permute.xlu0 %7473
    %7475 = vrot.lane.b32.xlu0 %v7398, 32
    %v7476 = vpop.permute.xlu0 %7475
    %7477 = vrot.lane.b32.xlu0 %v7400, 32
    %v7478 = vpop.permute.xlu0 %7477
    %7479 = vrot.lane.b32.xlu0 %v7402, 32
    %v7480 = vpop.permute.xlu0 %7479
    %7481 = vrot.lane.b32.xlu0 %v7404, 32
    %v7482 = vpop.permute.xlu0 %7481
    %7483 = vrot.lane.b32.xlu0 %v7406, 32
    %v7484 = vpop.permute.xlu0 %7483
    %7485 = vrot.lane.b32.xlu0 %v7408, 32
    %v7486 = vpop.permute.xlu0 %7485
    %7487 = vrot.lane.b32.xlu0 %v7410, 32
    %v7488 = vpop.permute.xlu0 %7487
    %7489 = vrot.lane.b32.xlu0 %v7412, 32
    %v7490 = vpop.permute.xlu0 %7489
    %7491 = vrot.lane.b32.xlu0 %v7414, 32
    %v7492 = vpop.permute.xlu0 %7491
    %7493 = vrot.lane.b32.xlu0 %v7416, 32
    %v7494 = vpop.permute.xlu0 %7493
    %7495 = vrot.lane.b32.xlu0 %v7418, 32
    %v7496 = vpop.permute.xlu0 %7495
    %7497 = vrot.lane.b32.xlu0 %v7420, 32
    %v7498 = vpop.permute.xlu0 %7497
    %7499 = vrot.lane.b32.xlu0 %v7422, 32
    %v7500 = vpop.permute.xlu0 %7499
    %7501 = vrot.lane.b32.xlu0 %v7424, 32
    %v7502 = vpop.permute.xlu0 %7501
    %7503 = vrot.lane.b32.xlu0 %v7426, 32
    %v7504 = vpop.permute.xlu0 %7503
    %7505 = vrot.lane.b32.xlu0 %v7428, 32
    %v7506 = vpop.permute.xlu0 %7505
    %7507 = vrot.lane.b32.xlu0 %v7430, 32
    %v7508 = vpop.permute.xlu0 %7507
    %7509 = vrot.lane.b32.xlu0 %v7432, 32
    %v7510 = vpop.permute.xlu0 %7509
    %7511 = vrot.lane.b32.xlu0 %v7434, 32
    %v7512 = vpop.permute.xlu0 %7511
    %7513 = vrot.lane.b32.xlu0 %v7436, 32
    %v7514 = vpop.permute.xlu0 %7513
    %7515 = vrot.lane.b32.xlu0 %v7438, 32
    %v7516 = vpop.permute.xlu0 %7515
    %7517 = vrot.lane.b32.xlu0 %v7440, 32
    %v7518 = vpop.permute.xlu0 %7517
    %7519 = vrot.lane.b32.xlu0 %v7442, 32
    %v7520 = vpop.permute.xlu0 %7519
    %7521 = vrot.lane.b32.xlu0 %v7444, 32
    %v7522 = vpop.permute.xlu0 %7521
    %7523 = vrot.lane.b32.xlu0 %v7446, 32
    %v7524 = vpop.permute.xlu0 %7523
    %7525 = vrot.lane.b32.xlu0 %v7448, 32
    %v7526 = vpop.permute.xlu0 %7525
    %7527 = vrot.lane.b32.xlu0 %v7450, 32
    %v7528 = vpop.permute.xlu0 %7527
    %7529 = vrot.lane.b32.xlu0 %v7452, 32
    %v7530 = vpop.permute.xlu0 %7529
    %7531 = vrot.lane.b32.xlu0 %v7454, 32
    %v7532 = vpop.permute.xlu0 %7531
    %7533 = vrot.lane.b32.xlu0 %v7456, 32
    %v7534 = vpop.permute.xlu0 %7533
    %7535 = vrot.lane.b32.xlu0 %v7458, 32
    %v7536 = vpop.permute.xlu0 %7535
    %7537 = vrot.lane.b32.xlu0 %v7460, 32
    %v7538 = vpop.permute.xlu0 %7537
    %7539 = vrot.lane.b32.xlu0 %v7462, 32
    %v7540 = vpop.permute.xlu0 %7539
    %7541 = vrot.lane.b32.xlu0 %v7464, 32
    %v7542 = vpop.permute.xlu0 %7541
    %7543 = vrot.lane.b32.xlu0 %v7466, 32
    %v7544 = vpop.permute.xlu0 %7543
    %7545 = vrot.lane.b32.xlu0 %v7468, 32
    %v7546 = vpop.permute.xlu0 %7545
    %v7552 = vunpack.c.l.b16 %v6059
    %v7553 = vunpack.c.l.b16 %v6060
    %v7554 = vunpack.c.l.b16 %v6061
    %v7555 = vunpack.c.l.b16 %v6062
    %v7556 = vunpack.c.l.b16 %v6063
    %v7557 = vpack.c.b16 %v6151, %v7552
    %v7558 = vpack.c.b16 %v6825, %v6824
    %v7559 = vpack.c.b16 %v7553, %v6826
    %v7560 = vpack.c.b16 %v7555, %v7554
    %v7561 = vpack.c.b16 %v7556, %v7556
    %v7562 = vrot.slane %v7557, 2
    %v7563 = vrot.slane %v6226, 2
    %v7564 = vsel %vm2404, %v7562, %v7563
    %v7565 = vrot.slane %v6227, 2
    %v7566 = vsel %vm2404, %v7563, %v7565
    %v7567 = vrot.slane %v6228, 2
    %v7568 = vsel %vm2404, %v7565, %v7567
    %v7569 = vrot.slane %v6229, 2
    %v7570 = vsel %vm2404, %v7567, %v7569
    %v7571 = vrot.slane %v6230, 2
    %v7572 = vsel %vm2404, %v7569, %v7571
    %v7573 = vrot.slane %v6231, 2
    %v7574 = vsel %vm2404, %v7571, %v7573
    %v7575 = vrot.slane %v6232, 2
    %v7576 = vsel %vm2404, %v7573, %v7575
    %v7577 = vrot.slane %v6233, 2
    %v7578 = vsel %vm2404, %v7575, %v7577
    %v7579 = vrot.slane %v6234, 2
    %v7580 = vsel %vm2404, %v7577, %v7579
    %v7581 = vrot.slane %v6235, 2
    %v7582 = vsel %vm2404, %v7579, %v7581
    %v7583 = vrot.slane %v6236, 2
    %v7584 = vsel %vm2404, %v7581, %v7583
    %v7585 = vrot.slane %v6237, 2
    %v7586 = vsel %vm2404, %v7583, %v7585
    %v7587 = vrot.slane %v6238, 2
    %v7588 = vsel %vm2404, %v7585, %v7587
    %v7589 = vrot.slane %v6239, 2
    %v7590 = vsel %vm2404, %v7587, %v7589
    %v7591 = vrot.slane %v6240, 2
    %v7592 = vsel %vm2404, %v7589, %v7591
    %v7593 = vrot.slane %v6241, 2
    %v7594 = vsel %vm2404, %v7591, %v7593
    %v7595 = vrot.slane %v6242, 2
    %v7596 = vsel %vm2404, %v7593, %v7595
    %v7597 = vrot.slane %v6243, 2
    %v7598 = vsel %vm2404, %v7595, %v7597
    %v7599 = vrot.slane %v6244, 2
    %v7600 = vsel %vm2404, %v7597, %v7599
    %v7601 = vrot.slane %v6245, 2
    %v7602 = vsel %vm2404, %v7599, %v7601
    %v7603 = vrot.slane %v6246, 2
    %v7604 = vsel %vm2404, %v7601, %v7603
    %v7605 = vrot.slane %v6247, 2
    %v7606 = vsel %vm2404, %v7603, %v7605
    %v7607 = vrot.slane %v6248, 2
    %v7608 = vsel %vm2404, %v7605, %v7607
    %v7609 = vrot.slane %v6249, 2
    %v7610 = vsel %vm2404, %v7607, %v7609
    %v7611 = vrot.slane %v6250, 2
    %v7612 = vsel %vm2404, %v7609, %v7611
    %v7613 = vrot.slane %v6251, 2
    %v7614 = vsel %vm2404, %v7611, %v7613
    %v7615 = vrot.slane %v6252, 2
    %v7616 = vsel %vm2404, %v7613, %v7615
    %v7617 = vrot.slane %v6253, 2
    %v7618 = vsel %vm2404, %v7615, %v7617
    %v7619 = vrot.slane %v6254, 2
    %v7620 = vsel %vm2404, %v7617, %v7619
    %v7621 = vrot.slane %v6255, 2
    %v7622 = vsel %vm2404, %v7619, %v7621
    %v7623 = vrot.slane %v6256, 2
    %v7624 = vsel %vm2404, %v7621, %v7623
    %v7625 = vrot.slane %v6257, 2
    %v7626 = vsel %vm2404, %v7623, %v7625
    %v7627 = vrot.slane %v6258, 2
    %v7628 = vsel %vm2404, %v7625, %v7627
    %v7629 = vrot.slane %v6259, 2
    %v7630 = vsel %vm2404, %v7627, %v7629
    %v7631 = vrot.slane %v6260, 2
    %v7632 = vsel %vm2404, %v7629, %v7631
    %v7633 = vrot.slane %v7558, 2
    %v7634 = vsel %vm2404, %v7631, %v7633
    %v7635 = vrot.slane %v7559, 2
    %v7636 = vsel %vm2404, %v7633, %v7635
    %v7637 = vrot.slane %v7560, 2
    %v7638 = vsel %vm2404, %v7635, %v7637
    %v7639 = vrot.slane %v7561, 2
    %v7640 = vsel %vm2404, %v7637, %v7639
    %7641 = vrot.lane.b32.xlu0 %v7564, 64
    %v7642 = vpop.permute.xlu0 %7641
    %7643 = vrot.lane.b32.xlu0 %v7566, 64
    %v7644 = vpop.permute.xlu0 %7643
    %7645 = vrot.lane.b32.xlu0 %v7568, 64
    %v7646 = vpop.permute.xlu0 %7645
    %7647 = vrot.lane.b32.xlu0 %v7570, 64
    %v7648 = vpop.permute.xlu0 %7647
    %7649 = vrot.lane.b32.xlu0 %v7572, 64
    %v7650 = vpop.permute.xlu0 %7649
    %7651 = vrot.lane.b32.xlu0 %v7574, 64
    %v7652 = vpop.permute.xlu0 %7651
    %7653 = vrot.lane.b32.xlu0 %v7576, 64
    %v7654 = vpop.permute.xlu0 %7653
    %7655 = vrot.lane.b32.xlu0 %v7578, 64
    %v7656 = vpop.permute.xlu0 %7655
    %7657 = vrot.lane.b32.xlu0 %v7580, 64
    %v7658 = vpop.permute.xlu0 %7657
    %7659 = vrot.lane.b32.xlu0 %v7582, 64
    %v7660 = vpop.permute.xlu0 %7659
    %7661 = vrot.lane.b32.xlu0 %v7584, 64
    %v7662 = vpop.permute.xlu0 %7661
    %7663 = vrot.lane.b32.xlu0 %v7586, 64
    %v7664 = vpop.permute.xlu0 %7663
    %7665 = vrot.lane.b32.xlu0 %v7588, 64
    %v7666 = vpop.permute.xlu0 %7665
    %7667 = vrot.lane.b32.xlu0 %v7590, 64
    %v7668 = vpop.permute.xlu0 %7667
    %7669 = vrot.lane.b32.xlu0 %v7592, 64
    %v7670 = vpop.permute.xlu0 %7669
    %7671 = vrot.lane.b32.xlu0 %v7594, 64
    %v7672 = vpop.permute.xlu0 %7671
    %7673 = vrot.lane.b32.xlu0 %v7596, 64
    %v7674 = vpop.permute.xlu0 %7673
    %7675 = vrot.lane.b32.xlu0 %v7598, 64
    %v7676 = vpop.permute.xlu0 %7675
    %7677 = vrot.lane.b32.xlu0 %v7600, 64
    %v7678 = vpop.permute.xlu0 %7677
    %7679 = vrot.lane.b32.xlu0 %v7602, 64
    %v7680 = vpop.permute.xlu0 %7679
    %7681 = vrot.lane.b32.xlu0 %v7604, 64
    %v7682 = vpop.permute.xlu0 %7681
    %7683 = vrot.lane.b32.xlu0 %v7606, 64
    %v7684 = vpop.permute.xlu0 %7683
    %7685 = vrot.lane.b32.xlu0 %v7608, 64
    %v7686 = vpop.permute.xlu0 %7685
    %7687 = vrot.lane.b32.xlu0 %v7610, 64
    %v7688 = vpop.permute.xlu0 %7687
    %7689 = vrot.lane.b32.xlu0 %v7612, 64
    %v7690 = vpop.permute.xlu0 %7689
    %7691 = vrot.lane.b32.xlu0 %v7614, 64
    %v7692 = vpop.permute.xlu0 %7691
    %7693 = vrot.lane.b32.xlu0 %v7616, 64
    %v7694 = vpop.permute.xlu0 %7693
    %7695 = vrot.lane.b32.xlu0 %v7618, 64
    %v7696 = vpop.permute.xlu0 %7695
    %7697 = vrot.lane.b32.xlu0 %v7620, 64
    %v7698 = vpop.permute.xlu0 %7697
    %7699 = vrot.lane.b32.xlu0 %v7622, 64
    %v7700 = vpop.permute.xlu0 %7699
    %7701 = vrot.lane.b32.xlu0 %v7624, 64
    %v7702 = vpop.permute.xlu0 %7701
    %7703 = vrot.lane.b32.xlu0 %v7626, 64
    %v7704 = vpop.permute.xlu0 %7703
    %7705 = vrot.lane.b32.xlu0 %v7628, 64
    %v7706 = vpop.permute.xlu0 %7705
    %7707 = vrot.lane.b32.xlu0 %v7630, 64
    %v7708 = vpop.permute.xlu0 %7707
    %7709 = vrot.lane.b32.xlu0 %v7632, 64
    %v7710 = vpop.permute.xlu0 %7709
    %7711 = vrot.lane.b32.xlu0 %v7634, 64
    %v7712 = vpop.permute.xlu0 %7711
    %7713 = vrot.lane.b32.xlu0 %v7636, 64
    %v7714 = vpop.permute.xlu0 %7713
    %7715 = vrot.lane.b32.xlu0 %v7638, 64
    %v7716 = vpop.permute.xlu0 %7715
    %7717 = vrot.lane.b32.xlu0 %v7640, 64
    %v7718 = vpop.permute.xlu0 %7717
    %v7720 = vunpack.c.l.b16 %v6064
    %v7721 = vpack.c.b16 %v7720, %v7720
    %v7723 = vshrl.u32 %v7557, 16
    %v7725 = vrot.slane %v7723, 2
    %v7726 = vshll.u32 %v7557, 16
    %v7728 = vrot.slane %v7726, 3
    %v7729 = vor.u32 %v7725, %v7728
    %v7730 = vrot.slane %v6300, 2
    %v7731 = vrot.slane %v6296, 3
    %v7732 = vor.u32 %v7730, %v7731
    %v7733 = vsel %vm2737, %v7729, %v7732
    %v7734 = vrot.slane %v6308, 2
    %v7735 = vrot.slane %v6304, 3
    %v7736 = vor.u32 %v7734, %v7735
    %v7737 = vsel %vm2737, %v7732, %v7736
    %v7738 = vrot.slane %v6316, 2
    %v7739 = vrot.slane %v6312, 3
    %v7740 = vor.u32 %v7738, %v7739
    %v7741 = vsel %vm2737, %v7736, %v7740
    %v7742 = vrot.slane %v6324, 2
    %v7743 = vrot.slane %v6320, 3
    %v7744 = vor.u32 %v7742, %v7743
    %v7745 = vsel %vm2737, %v7740, %v7744
    %v7746 = vrot.slane %v6332, 2
    %v7747 = vrot.slane %v6328, 3
    %v7748 = vor.u32 %v7746, %v7747
    %v7749 = vsel %vm2737, %v7744, %v7748
    %v7750 = vrot.slane %v6340, 2
    %v7751 = vrot.slane %v6336, 3
    %v7752 = vor.u32 %v7750, %v7751
    %v7753 = vsel %vm2737, %v7748, %v7752
    %v7754 = vrot.slane %v6348, 2
    %v7755 = vrot.slane %v6344, 3
    %v7756 = vor.u32 %v7754, %v7755
    %v7757 = vsel %vm2737, %v7752, %v7756
    %v7758 = vrot.slane %v6356, 2
    %v7759 = vrot.slane %v6352, 3
    %v7760 = vor.u32 %v7758, %v7759
    %v7761 = vsel %vm2737, %v7756, %v7760
    %v7762 = vrot.slane %v6364, 2
    %v7763 = vrot.slane %v6360, 3
    %v7764 = vor.u32 %v7762, %v7763
    %v7765 = vsel %vm2737, %v7760, %v7764
    %v7766 = vrot.slane %v6372, 2
    %v7767 = vrot.slane %v6368, 3
    %v7768 = vor.u32 %v7766, %v7767
    %v7769 = vsel %vm2737, %v7764, %v7768
    %v7770 = vrot.slane %v6380, 2
    %v7771 = vrot.slane %v6376, 3
    %v7772 = vor.u32 %v7770, %v7771
    %v7773 = vsel %vm2737, %v7768, %v7772
    %v7774 = vrot.slane %v6388, 2
    %v7775 = vrot.slane %v6384, 3
    %v7776 = vor.u32 %v7774, %v7775
    %v7777 = vsel %vm2737, %v7772, %v7776
    %v7778 = vrot.slane %v6396, 2
    %v7779 = vrot.slane %v6392, 3
    %v7780 = vor.u32 %v7778, %v7779
    %v7781 = vsel %vm2737, %v7776, %v7780
    %v7782 = vrot.slane %v6404, 2
    %v7783 = vrot.slane %v6400, 3
    %v7784 = vor.u32 %v7782, %v7783
    %v7785 = vsel %vm2737, %v7780, %v7784
    %v7786 = vrot.slane %v6412, 2
    %v7787 = vrot.slane %v6408, 3
    %v7788 = vor.u32 %v7786, %v7787
    %v7789 = vsel %vm2737, %v7784, %v7788
    %v7790 = vrot.slane %v6420, 2
    %v7791 = vrot.slane %v6416, 3
    %v7792 = vor.u32 %v7790, %v7791
    %v7793 = vsel %vm2737, %v7788, %v7792
    %v7794 = vrot.slane %v6428, 2
    %v7795 = vrot.slane %v6424, 3
    %v7796 = vor.u32 %v7794, %v7795
    %v7797 = vsel %vm2737, %v7792, %v7796
    %v7798 = vrot.slane %v6436, 2
    %v7799 = vrot.slane %v6432, 3
    %v7800 = vor.u32 %v7798, %v7799
    %v7801 = vsel %vm2737, %v7796, %v7800
    %v7802 = vrot.slane %v6444, 2
    %v7803 = vrot.slane %v6440, 3
    %v7804 = vor.u32 %v7802, %v7803
    %v7805 = vsel %vm2737, %v7800, %v7804
    %v7806 = vrot.slane %v6452, 2
    %v7807 = vrot.slane %v6448, 3
    %v7808 = vor.u32 %v7806, %v7807
    %v7809 = vsel %vm2737, %v7804, %v7808
    %v7810 = vrot.slane %v6460, 2
    %v7811 = vrot.slane %v6456, 3
    %v7812 = vor.u32 %v7810, %v7811
    %v7813 = vsel %vm2737, %v7808, %v7812
    %v7814 = vrot.slane %v6468, 2
    %v7815 = vrot.slane %v6464, 3
    %v7816 = vor.u32 %v7814, %v7815
    %v7817 = vsel %vm2737, %v7812, %v7816
    %v7818 = vrot.slane %v6476, 2
    %v7819 = vrot.slane %v6472, 3
    %v7820 = vor.u32 %v7818, %v7819
    %v7821 = vsel %vm2737, %v7816, %v7820
    %v7822 = vrot.slane %v6484, 2
    %v7823 = vrot.slane %v6480, 3
    %v7824 = vor.u32 %v7822, %v7823
    %v7825 = vsel %vm2737, %v7820, %v7824
    %v7826 = vrot.slane %v6492, 2
    %v7827 = vrot.slane %v6488, 3
    %v7828 = vor.u32 %v7826, %v7827
    %v7829 = vsel %vm2737, %v7824, %v7828
    %v7830 = vrot.slane %v6500, 2
    %v7831 = vrot.slane %v6496, 3
    %v7832 = vor.u32 %v7830, %v7831
    %v7833 = vsel %vm2737, %v7828, %v7832
    %v7834 = vrot.slane %v6508, 2
    %v7835 = vrot.slane %v6504, 3
    %v7836 = vor.u32 %v7834, %v7835
    %v7837 = vsel %vm2737, %v7832, %v7836
    %v7838 = vrot.slane %v6516, 2
    %v7839 = vrot.slane %v6512, 3
    %v7840 = vor.u32 %v7838, %v7839
    %v7841 = vsel %vm2737, %v7836, %v7840
    %v7842 = vrot.slane %v6524, 2
    %v7843 = vrot.slane %v6520, 3
    %v7844 = vor.u32 %v7842, %v7843
    %v7845 = vsel %vm2737, %v7840, %v7844
    %v7846 = vrot.slane %v6532, 2
    %v7847 = vrot.slane %v6528, 3
    %v7848 = vor.u32 %v7846, %v7847
    %v7849 = vsel %vm2737, %v7844, %v7848
    %v7850 = vrot.slane %v6540, 2
    %v7851 = vrot.slane %v6536, 3
    %v7852 = vor.u32 %v7850, %v7851
    %v7853 = vsel %vm2737, %v7848, %v7852
    %v7854 = vrot.slane %v6548, 2
    %v7855 = vrot.slane %v6544, 3
    %v7856 = vor.u32 %v7854, %v7855
    %v7857 = vsel %vm2737, %v7852, %v7856
    %v7858 = vrot.slane %v6556, 2
    %v7859 = vrot.slane %v6552, 3
    %v7860 = vor.u32 %v7858, %v7859
    %v7861 = vsel %vm2737, %v7856, %v7860
    %v7862 = vrot.slane %v6564, 2
    %v7863 = vrot.slane %v6560, 3
    %v7864 = vor.u32 %v7862, %v7863
    %v7865 = vsel %vm2737, %v7860, %v7864
    %v7866 = vrot.slane %v6572, 2
    %v7867 = vrot.slane %v6568, 3
    %v7868 = vor.u32 %v7866, %v7867
    %v7869 = vsel %vm2737, %v7864, %v7868
    %v7871 = vshrl.u32 %v7558, 16
    %v7873 = vrot.slane %v7871, 2
    %v7874 = vshll.u32 %v7558, 16
    %v7876 = vrot.slane %v7874, 3
    %v7877 = vor.u32 %v7873, %v7876
    %v7878 = vsel %vm2737, %v7868, %v7877
    %v7880 = vshrl.u32 %v7559, 16
    %v7882 = vrot.slane %v7880, 2
    %v7883 = vshll.u32 %v7559, 16
    %v7885 = vrot.slane %v7883, 3
    %v7886 = vor.u32 %v7882, %v7885
    %v7887 = vsel %vm2737, %v7877, %v7886
    %v7889 = vshrl.u32 %v7560, 16
    %v7891 = vrot.slane %v7889, 2
    %v7892 = vshll.u32 %v7560, 16
    %v7894 = vrot.slane %v7892, 3
    %v7895 = vor.u32 %v7891, %v7894
    %v7896 = vsel %vm2737, %v7886, %v7895
    %v7898 = vshrl.u32 %v7721, 16
    %v7900 = vrot.slane %v7898, 2
    %v7901 = vshll.u32 %v7721, 16
    %v7903 = vrot.slane %v7901, 3
    %v7904 = vor.u32 %v7900, %v7903
    %v7905 = vsel %vm2737, %v7895, %v7904
    %7906 = vrot.lane.b32.xlu0 %v7733, 96
    %v7907 = vpop.permute.xlu0 %7906
    %7908 = vrot.lane.b32.xlu0 %v7737, 96
    %v7909 = vpop.permute.xlu0 %7908
    %7910 = vrot.lane.b32.xlu0 %v7741, 96
    %v7911 = vpop.permute.xlu0 %7910
    %7912 = vrot.lane.b32.xlu0 %v7745, 96
    %v7913 = vpop.permute.xlu0 %7912
    %7914 = vrot.lane.b32.xlu0 %v7749, 96
    %v7915 = vpop.permute.xlu0 %7914
    %7916 = vrot.lane.b32.xlu0 %v7753, 96
    %v7917 = vpop.permute.xlu0 %7916
    %7918 = vrot.lane.b32.xlu0 %v7757, 96
    %v7919 = vpop.permute.xlu0 %7918
    %7920 = vrot.lane.b32.xlu0 %v7761, 96
    %v7921 = vpop.permute.xlu0 %7920
    %7922 = vrot.lane.b32.xlu0 %v7765, 96
    %v7923 = vpop.permute.xlu0 %7922
    %7924 = vrot.lane.b32.xlu0 %v7769, 96
    %v7925 = vpop.permute.xlu0 %7924
    %7926 = vrot.lane.b32.xlu0 %v7773, 96
    %v7927 = vpop.permute.xlu0 %7926
    %7928 = vrot.lane.b32.xlu0 %v7777, 96
    %v7929 = vpop.permute.xlu0 %7928
    %7930 = vrot.lane.b32.xlu0 %v7781, 96
    %v7931 = vpop.permute.xlu0 %7930
    %7932 = vrot.lane.b32.xlu0 %v7785, 96
    %v7933 = vpop.permute.xlu0 %7932
    %7934 = vrot.lane.b32.xlu0 %v7789, 96
    %v7935 = vpop.permute.xlu0 %7934
    %7936 = vrot.lane.b32.xlu0 %v7793, 96
    %v7937 = vpop.permute.xlu0 %7936
    %7938 = vrot.lane.b32.xlu0 %v7797, 96
    %v7939 = vpop.permute.xlu0 %7938
    %7940 = vrot.lane.b32.xlu0 %v7801, 96
    %v7941 = vpop.permute.xlu0 %7940
    %7942 = vrot.lane.b32.xlu0 %v7805, 96
    %v7943 = vpop.permute.xlu0 %7942
    %7944 = vrot.lane.b32.xlu0 %v7809, 96
    %v7945 = vpop.permute.xlu0 %7944
    %7946 = vrot.lane.b32.xlu0 %v7813, 96
    %v7947 = vpop.permute.xlu0 %7946
    %7948 = vrot.lane.b32.xlu0 %v7817, 96
    %v7949 = vpop.permute.xlu0 %7948
    %7950 = vrot.lane.b32.xlu0 %v7821, 96
    %v7951 = vpop.permute.xlu0 %7950
    %7952 = vrot.lane.b32.xlu0 %v7825, 96
    %v7953 = vpop.permute.xlu0 %7952
    %7954 = vrot.lane.b32.xlu0 %v7829, 96
    %v7955 = vpop.permute.xlu0 %7954
    %7956 = vrot.lane.b32.xlu0 %v7833, 96
    %v7957 = vpop.permute.xlu0 %7956
    %7958 = vrot.lane.b32.xlu0 %v7837, 96
    %v7959 = vpop.permute.xlu0 %7958
    %7960 = vrot.lane.b32.xlu0 %v7841, 96
    %v7961 = vpop.permute.xlu0 %7960
    %7962 = vrot.lane.b32.xlu0 %v7845, 96
    %v7963 = vpop.permute.xlu0 %7962
    %7964 = vrot.lane.b32.xlu0 %v7849, 96
    %v7965 = vpop.permute.xlu0 %7964
    %7966 = vrot.lane.b32.xlu0 %v7853, 96
    %v7967 = vpop.permute.xlu0 %7966
    %7968 = vrot.lane.b32.xlu0 %v7857, 96
    %v7969 = vpop.permute.xlu0 %7968
    %7970 = vrot.lane.b32.xlu0 %v7861, 96
    %v7971 = vpop.permute.xlu0 %7970
    %7972 = vrot.lane.b32.xlu0 %v7865, 96
    %v7973 = vpop.permute.xlu0 %7972
    %7974 = vrot.lane.b32.xlu0 %v7869, 96
    %v7975 = vpop.permute.xlu0 %7974
    %7976 = vrot.lane.b32.xlu0 %v7878, 96
    %v7977 = vpop.permute.xlu0 %7976
    %7978 = vrot.lane.b32.xlu0 %v7887, 96
    %v7979 = vpop.permute.xlu0 %7978
    %7980 = vrot.lane.b32.xlu0 %v7896, 96
    %v7981 = vpop.permute.xlu0 %7980
    %7982 = vrot.lane.b32.xlu0 %v7905, 96
    %v7983 = vpop.permute.xlu0 %7982
    %v7985 = vunpack.c.l.b16 %v6065
    %v7986 = vpack.c.b16 %v6151, %v7985
    %v7987 = vrot.slane %v7986, 3
    %v7988 = vrot.slane %v6226, 3
    %v7989 = vsel %vm3003, %v7987, %v7988
    %v7990 = vrot.slane %v6227, 3
    %v7991 = vsel %vm3003, %v7988, %v7990
    %v7992 = vrot.slane %v6228, 3
    %v7993 = vsel %vm3003, %v7990, %v7992
    %v7994 = vrot.slane %v6229, 3
    %v7995 = vsel %vm3003, %v7992, %v7994
    %v7996 = vrot.slane %v6230, 3
    %v7997 = vsel %vm3003, %v7994, %v7996
    %v7998 = vrot.slane %v6231, 3
    %v7999 = vsel %vm3003, %v7996, %v7998
    %v8000 = vrot.slane %v6232, 3
    %v8001 = vsel %vm3003, %v7998, %v8000
    %v8002 = vrot.slane %v6233, 3
    %v8003 = vsel %vm3003, %v8000, %v8002
    %v8004 = vrot.slane %v6234, 3
    %v8005 = vsel %vm3003, %v8002, %v8004
    %v8006 = vrot.slane %v6235, 3
    %v8007 = vsel %vm3003, %v8004, %v8006
    %v8008 = vrot.slane %v6236, 3
    %v8009 = vsel %vm3003, %v8006, %v8008
    %v8010 = vrot.slane %v6237, 3
    %v8011 = vsel %vm3003, %v8008, %v8010
    %v8012 = vrot.slane %v6238, 3
    %v8013 = vsel %vm3003, %v8010, %v8012
    %v8014 = vrot.slane %v6239, 3
    %v8015 = vsel %vm3003, %v8012, %v8014
    %v8016 = vrot.slane %v6240, 3
    %v8017 = vsel %vm3003, %v8014, %v8016
    %v8018 = vrot.slane %v6241, 3
    %v8019 = vsel %vm3003, %v8016, %v8018
    %v8020 = vrot.slane %v6242, 3
    %v8021 = vsel %vm3003, %v8018, %v8020
    %v8022 = vrot.slane %v6243, 3
    %v8023 = vsel %vm3003, %v8020, %v8022
    %v8024 = vrot.slane %v6244, 3
    %v8025 = vsel %vm3003, %v8022, %v8024
    %v8026 = vrot.slane %v6245, 3
    %v8027 = vsel %vm3003, %v8024, %v8026
    %v8028 = vrot.slane %v6246, 3
    %v8029 = vsel %vm3003, %v8026, %v8028
    %v8030 = vrot.slane %v6247, 3
    %v8031 = vsel %vm3003, %v8028, %v8030
    %v8032 = vrot.slane %v6248, 3
    %v8033 = vsel %vm3003, %v8030, %v8032
    %v8034 = vrot.slane %v6249, 3
    %v8035 = vsel %vm3003, %v8032, %v8034
    %v8036 = vrot.slane %v6250, 3
    %v8037 = vsel %vm3003, %v8034, %v8036
    %v8038 = vrot.slane %v6251, 3
    %v8039 = vsel %vm3003, %v8036, %v8038
    %v8040 = vrot.slane %v6252, 3
    %v8041 = vsel %vm3003, %v8038, %v8040
    %v8042 = vrot.slane %v6253, 3
    %v8043 = vsel %vm3003, %v8040, %v8042
    %v8044 = vrot.slane %v6254, 3
    %v8045 = vsel %vm3003, %v8042, %v8044
    %v8046 = vrot.slane %v6255, 3
    %v8047 = vsel %vm3003, %v8044, %v8046
    %v8048 = vrot.slane %v6256, 3
    %v8049 = vsel %vm3003, %v8046, %v8048
    %v8050 = vrot.slane %v6257, 3
    %v8051 = vsel %vm3003, %v8048, %v8050
    %v8052 = vrot.slane %v6258, 3
    %v8053 = vsel %vm3003, %v8050, %v8052
    %v8054 = vrot.slane %v6259, 3
    %v8055 = vsel %vm3003, %v8052, %v8054
    %v8056 = vrot.slane %v6260, 3
    %v8057 = vsel %vm3003, %v8054, %v8056
    %v8058 = vrot.slane %v7558, 3
    %v8059 = vsel %vm3003, %v8056, %v8058
    %v8060 = vrot.slane %v7559, 3
    %v8061 = vsel %vm3003, %v8058, %v8060
    %v8062 = vrot.slane %v7560, 3
    %v8063 = vsel %vm3003, %v8060, %v8062
    %v8064 = vrot.slane %v7721, 3
    %v8065 = vsel %vm3003, %v8062, %v8064
    %v8067 = vsel %vm3083, %v6222, %v6581
    %v8069 = vsel %vm3083, %v6223, %v6583
    %v8071 = vsel %vm3083, %v6224, %v6585
    %v8073 = vsel %vm3083, %v6225, %v6587
    %v8075 = vsel %vm3083, %v6226, %v6589
    %v8077 = vsel %vm3083, %v6227, %v6591
    %v8079 = vsel %vm3083, %v6228, %v6593
    %v8081 = vsel %vm3083, %v6229, %v6595
    %v8083 = vsel %vm3083, %v6230, %v6597
    %v8085 = vsel %vm3083, %v6231, %v6599
    %v8087 = vsel %vm3083, %v6232, %v6601
    %v8089 = vsel %vm3083, %v6233, %v6603
    %v8091 = vsel %vm3083, %v6234, %v6605
    %v8093 = vsel %vm3083, %v6235, %v6607
    %v8095 = vsel %vm3083, %v6236, %v6609
    %v8097 = vsel %vm3083, %v6237, %v6611
    %v8099 = vsel %vm3083, %v6238, %v6613
    %v8101 = vsel %vm3083, %v6239, %v6615
    %v8103 = vsel %vm3083, %v6240, %v6617
    %v8105 = vsel %vm3083, %v6241, %v6619
    %v8107 = vsel %vm3083, %v6242, %v6621
    %v8109 = vsel %vm3083, %v6243, %v6623
    %v8111 = vsel %vm3083, %v6244, %v6625
    %v8113 = vsel %vm3083, %v6245, %v6627
    %v8115 = vsel %vm3083, %v6246, %v6629
    %v8117 = vsel %vm3083, %v6247, %v6631
    %v8119 = vsel %vm3083, %v6248, %v6633
    %v8121 = vsel %vm3083, %v6249, %v6635
    %v8123 = vsel %vm3083, %v6250, %v6637
    %v8125 = vsel %vm3083, %v6251, %v6639
    %v8127 = vsel %vm3083, %v6252, %v6641
    %v8129 = vsel %vm3083, %v6253, %v6643
    %v8131 = vsel %vm3083, %v6254, %v6645
    %v8133 = vsel %vm3083, %v6255, %v6647
    %v8135 = vsel %vm3083, %v6256, %v6649
    %v8137 = vsel %vm3083, %v6257, %v6651
    %v8139 = vsel %vm3083, %v6258, %v6653
    %v8141 = vsel %vm3083, %v6259, %v6655
    %v8143 = vsel %vm3083, %v6260, %v6657
    %v8145 = vsel %vm3162, %v8067, %v6741
    %v8147 = vsel %vm3162, %v8069, %v6743
    %v8149 = vsel %vm3162, %v8071, %v6745
    %v8151 = vsel %vm3162, %v8073, %v6747
    %v8153 = vsel %vm3162, %v8075, %v6749
    %v8155 = vsel %vm3162, %v8077, %v6751
    %v8157 = vsel %vm3162, %v8079, %v6753
    %v8159 = vsel %vm3162, %v8081, %v6755
    %v8161 = vsel %vm3162, %v8083, %v6757
    %v8163 = vsel %vm3162, %v8085, %v6759
    %v8165 = vsel %vm3162, %v8087, %v6761
    %v8167 = vsel %vm3162, %v8089, %v6763
    %v8169 = vsel %vm3162, %v8091, %v6765
    %v8171 = vsel %vm3162, %v8093, %v6767
    %v8173 = vsel %vm3162, %v8095, %v6769
    %v8175 = vsel %vm3162, %v8097, %v6771
    %v8177 = vsel %vm3162, %v8099, %v6773
    %v8179 = vsel %vm3162, %v8101, %v6775
    %v8181 = vsel %vm3162, %v8103, %v6777
    %v8183 = vsel %vm3162, %v8105, %v6779
    %v8185 = vsel %vm3162, %v8107, %v6781
    %v8187 = vsel %vm3162, %v8109, %v6783
    %v8189 = vsel %vm3162, %v8111, %v6785
    %v8191 = vsel %vm3162, %v8113, %v6787
    %v8193 = vsel %vm3162, %v8115, %v6789
    %v8195 = vsel %vm3162, %v8117, %v6791
    %v8197 = vsel %vm3162, %v8119, %v6793
    %v8199 = vsel %vm3162, %v8121, %v6795
    %v8201 = vsel %vm3162, %v8123, %v6797
    %v8203 = vsel %vm3162, %v8125, %v6799
    %v8205 = vsel %vm3162, %v8127, %v6801
    %v8207 = vsel %vm3162, %v8129, %v6803
    %v8209 = vsel %vm3162, %v8131, %v6805
    %v8211 = vsel %vm3162, %v8133, %v6807
    %v8213 = vsel %vm3162, %v8135, %v6809
    %v8215 = vsel %vm3162, %v8137, %v6811
    %v8217 = vsel %vm3162, %v8139, %v6813
    %v8219 = vsel %vm3162, %v8141, %v6815
    %v8221 = vsel %vm3162, %v8143, %v6817
    %v8223 = vsel %vm3241, %v8145, %v6948
    %v8226 = vsel %vm3241, %v8147, %v6950
    %v8229 = vsel %vm3241, %v8149, %v6952
    %v8232 = vsel %vm3241, %v8151, %v6954
    %v8235 = vsel %vm3241, %v8153, %v6956
    %v8238 = vsel %vm3241, %v8155, %v6958
    %v8241 = vsel %vm3241, %v8157, %v6960
    %v8244 = vsel %vm3241, %v8159, %v6962
    %v8247 = vsel %vm3241, %v8161, %v6964
    %v8250 = vsel %vm3241, %v8163, %v6966
    %v8253 = vsel %vm3241, %v8165, %v6968
    %v8256 = vsel %vm3241, %v8167, %v6970
    %v8259 = vsel %vm3241, %v8169, %v6972
    %v8262 = vsel %vm3241, %v8171, %v6974
    %v8265 = vsel %vm3241, %v8173, %v6976
    %v8268 = vsel %vm3241, %v8175, %v6978
    %v8271 = vsel %vm3241, %v8177, %v6980
    %v8274 = vsel %vm3241, %v8179, %v6982
    %v8277 = vsel %vm3241, %v8181, %v6984
    %v8280 = vsel %vm3241, %v8183, %v6986
    %v8283 = vsel %vm3241, %v8185, %v6988
    %v8286 = vsel %vm3241, %v8187, %v6990
    %v8289 = vsel %vm3241, %v8189, %v6992
    %v8292 = vsel %vm3241, %v8191, %v6994
    %v8295 = vsel %vm3241, %v8193, %v6996
    %v8298 = vsel %vm3241, %v8195, %v6998
    %v8301 = vsel %vm3241, %v8197, %v7000
    %v8304 = vsel %vm3241, %v8199, %v7002
    %v8307 = vsel %vm3241, %v8201, %v7004
    %v8310 = vsel %vm3241, %v8203, %v7006
    %v8313 = vsel %vm3241, %v8205, %v7008
    %v8316 = vsel %vm3241, %v8207, %v7010
    %v8319 = vsel %vm3241, %v8209, %v7012
    %v8322 = vsel %vm3241, %v8211, %v7014
    %v8325 = vsel %vm3241, %v8213, %v7016
    %v8328 = vsel %vm3241, %v8215, %v7018
    %v8331 = vsel %vm3241, %v8217, %v7020
    %v8334 = vsel %vm3241, %v8219, %v7022
    %v8337 = vsel %vm3241, %v8221, %v7024
    %v8341 = vsel %vm3083, %v7044, %v7470
    %v8344 = vsel %vm3083, %v7053, %v7472
    %v8347 = vsel %vm3083, %v7062, %v7474
    %v8350 = vsel %vm3083, %v7071, %v7476
    %v8353 = vsel %vm3083, %v7080, %v7478
    %v8356 = vsel %vm3083, %v7089, %v7480
    %v8359 = vsel %vm3083, %v7098, %v7482
    %v8362 = vsel %vm3083, %v7107, %v7484
    %v8365 = vsel %vm3083, %v7116, %v7486
    %v8368 = vsel %vm3083, %v7125, %v7488
    %v8371 = vsel %vm3083, %v7134, %v7490
    %v8374 = vsel %vm3083, %v7143, %v7492
    %v8377 = vsel %vm3083, %v7152, %v7494
    %v8380 = vsel %vm3083, %v7161, %v7496
    %v8383 = vsel %vm3083, %v7170, %v7498
    %v8386 = vsel %vm3083, %v7179, %v7500
    %v8389 = vsel %vm3083, %v7188, %v7502
    %v8392 = vsel %vm3083, %v7197, %v7504
    %v8395 = vsel %vm3083, %v7206, %v7506
    %v8398 = vsel %vm3083, %v7215, %v7508
    %v8401 = vsel %vm3083, %v7224, %v7510
    %v8404 = vsel %vm3083, %v7233, %v7512
    %v8407 = vsel %vm3083, %v7242, %v7514
    %v8410 = vsel %vm3083, %v7251, %v7516
    %v8413 = vsel %vm3083, %v7260, %v7518
    %v8416 = vsel %vm3083, %v7269, %v7520
    %v8419 = vsel %vm3083, %v7278, %v7522
    %v8422 = vsel %vm3083, %v7287, %v7524
    %v8425 = vsel %vm3083, %v7296, %v7526
    %v8428 = vsel %vm3083, %v7305, %v7528
    %v8431 = vsel %vm3083, %v7314, %v7530
    %v8434 = vsel %vm3083, %v7323, %v7532
    %v8437 = vsel %vm3083, %v7332, %v7534
    %v8440 = vsel %vm3083, %v7341, %v7536
    %v8443 = vsel %vm3083, %v7350, %v7538
    %v8446 = vsel %vm3083, %v7359, %v7540
    %v8449 = vsel %vm3083, %v7368, %v7542
    %v8452 = vsel %vm3083, %v7377, %v7544
    %v8455 = vsel %vm3083, %v7386, %v7546
    %v8457 = vsel %vm3162, %v8341, %v7642
    %v8459 = vsel %vm3162, %v8344, %v7644
    %v8461 = vsel %vm3162, %v8347, %v7646
    %v8463 = vsel %vm3162, %v8350, %v7648
    %v8465 = vsel %vm3162, %v8353, %v7650
    %v8467 = vsel %vm3162, %v8356, %v7652
    %v8469 = vsel %vm3162, %v8359, %v7654
    %v8471 = vsel %vm3162, %v8362, %v7656
    %v8473 = vsel %vm3162, %v8365, %v7658
    %v8475 = vsel %vm3162, %v8368, %v7660
    %v8477 = vsel %vm3162, %v8371, %v7662
    %v8479 = vsel %vm3162, %v8374, %v7664
    %v8481 = vsel %vm3162, %v8377, %v7666
    %v8483 = vsel %vm3162, %v8380, %v7668
    %v8485 = vsel %vm3162, %v8383, %v7670
    %v8487 = vsel %vm3162, %v8386, %v7672
    %v8489 = vsel %vm3162, %v8389, %v7674
    %v8491 = vsel %vm3162, %v8392, %v7676
    %v8493 = vsel %vm3162, %v8395, %v7678
    %v8495 = vsel %vm3162, %v8398, %v7680
    %v8497 = vsel %vm3162, %v8401, %v7682
    %v8499 = vsel %vm3162, %v8404, %v7684
    %v8501 = vsel %vm3162, %v8407, %v7686
    %v8503 = vsel %vm3162, %v8410, %v7688
    %v8505 = vsel %vm3162, %v8413, %v7690
    %v8507 = vsel %vm3162, %v8416, %v7692
    %v8509 = vsel %vm3162, %v8419, %v7694
    %v8511 = vsel %vm3162, %v8422, %v7696
    %v8513 = vsel %vm3162, %v8425, %v7698
    %v8515 = vsel %vm3162, %v8428, %v7700
    %v8517 = vsel %vm3162, %v8431, %v7702
    %v8519 = vsel %vm3162, %v8434, %v7704
    %v8521 = vsel %vm3162, %v8437, %v7706
    %v8523 = vsel %vm3162, %v8440, %v7708
    %v8525 = vsel %vm3162, %v8443, %v7710
    %v8527 = vsel %vm3162, %v8446, %v7712
    %v8529 = vsel %vm3162, %v8449, %v7714
    %v8531 = vsel %vm3162, %v8452, %v7716
    %v8533 = vsel %vm3162, %v8455, %v7718
    %v8535 = vsel %vm3241, %v8457, %v7907
    %v8538 = vsel %vm3241, %v8459, %v7909
    %v8541 = vsel %vm3241, %v8461, %v7911
    %v8544 = vsel %vm3241, %v8463, %v7913
    %v8547 = vsel %vm3241, %v8465, %v7915
    %v8550 = vsel %vm3241, %v8467, %v7917
    %v8553 = vsel %vm3241, %v8469, %v7919
    %v8556 = vsel %vm3241, %v8471, %v7921
    %v8559 = vsel %vm3241, %v8473, %v7923
    %v8562 = vsel %vm3241, %v8475, %v7925
    %v8565 = vsel %vm3241, %v8477, %v7927
    %v8568 = vsel %vm3241, %v8479, %v7929
    %v8571 = vsel %vm3241, %v8481, %v7931
    %v8574 = vsel %vm3241, %v8483, %v7933
    %v8577 = vsel %vm3241, %v8485, %v7935
    %v8580 = vsel %vm3241, %v8487, %v7937
    %v8583 = vsel %vm3241, %v8489, %v7939
    %v8586 = vsel %vm3241, %v8491, %v7941
    %v8589 = vsel %vm3241, %v8493, %v7943
    %v8592 = vsel %vm3241, %v8495, %v7945
    %v8595 = vsel %vm3241, %v8497, %v7947
    %v8598 = vsel %vm3241, %v8499, %v7949
    %v8601 = vsel %vm3241, %v8501, %v7951
    %v8604 = vsel %vm3241, %v8503, %v7953
    %v8607 = vsel %vm3241, %v8505, %v7955
    %v8610 = vsel %vm3241, %v8507, %v7957
    %v8613 = vsel %vm3241, %v8509, %v7959
    %v8616 = vsel %vm3241, %v8511, %v7961
    %v8619 = vsel %vm3241, %v8513, %v7963
    %v8622 = vsel %vm3241, %v8515, %v7965
    %v8625 = vsel %vm3241, %v8517, %v7967
    %v8628 = vsel %vm3241, %v8519, %v7969
    %v8631 = vsel %vm3241, %v8521, %v7971
    %v8634 = vsel %vm3241, %v8523, %v7973
    %v8637 = vsel %vm3241, %v8525, %v7975
    %v8640 = vsel %vm3241, %v8527, %v7977
    %v8643 = vsel %vm3241, %v8529, %v7979
    %v8646 = vsel %vm3241, %v8531, %v7981
    %v8649 = vsel %vm3241, %v8533, %v7983
    %v8651 = vld [vmem:[%s3] sm:$0xf]
    %v8652 = vld [vmem:[%s3 + $0x4] sm:$0xf]
    %v8653 = vld [vmem:[%s3 + $0x8] sm:$0xf]
    %v8654 = vld [vmem:[%s3 + $0xc] sm:$0xf]
    %v8655 = vld [vmem:[%s3 + $0x10] sm:$0xf]
    %v8656 = vld [vmem:[%s3 + $0x14] sm:$0xf]
    %v8657 = vld [vmem:[%s3 + $0x18] sm:$0xf]
    %v8658 = vld [vmem:[%s3 + $0x1c] sm:$0xf]
    %v8659 = vld [vmem:[%s3 + $0x20] sm:$0xf]
    %v8660 = vld [vmem:[%s3 + $0x24] sm:$0xf]
    %v8661 = vld [vmem:[%s3 + $0x28] sm:$0xf]
    %v8662 = vld [vmem:[%s3 + $0x2c] sm:$0xf]
    %v8663 = vld [vmem:[%s3 + $0x30] sm:$0xf]
    %v8664 = vld [vmem:[%s3 + $0x34] sm:$0xf]
    %v8665 = vld [vmem:[%s3 + $0x38] sm:$0xf]
    %v8666 = vld [vmem:[%s3 + $0x3c] sm:$0xf]
    %v8667 = vld [vmem:[%s3 + $0x40] sm:$0xf]
    %v8668 = vld [vmem:[%s3 + $0x44] sm:$0xf]
    %v8669 = vld [vmem:[%s3 + $0x48] sm:$0xf]
    %v8670 = vld [vmem:[%s3 + $0x4c] sm:$0xf]
    %v8671 = vld [vmem:[%s3 + $0x50] sm:$0xf]
    %v8672 = vld [vmem:[%s3 + $0x54] sm:$0xf]
    %v8673 = vld [vmem:[%s3 + $0x58] sm:$0xf]
    %v8674 = vld [vmem:[%s3 + $0x5c] sm:$0xf]
    %v8675 = vld [vmem:[%s3 + $0x60] sm:$0xf]
    %v8676 = vld [vmem:[%s3 + $0x64] sm:$0xf]
    %v8677 = vld [vmem:[%s3 + $0x68] sm:$0xf]
    %v8678 = vld [vmem:[%s3 + $0x6c] sm:$0xf]
    %v8679 = vld [vmem:[%s3 + $0x70] sm:$0xf]
    %v8680 = vld [vmem:[%s3 + $0x74] sm:$0xf]
    %v8681 = vld [vmem:[%s3 + $0x78] sm:$0xf]
    %v8682 = vld [vmem:[%s3 + $0x7c] sm:$0xf]
    %v8683 = vld [vmem:[%s3 + $0x80] sm:$0xf]
    %v8684 = vld [vmem:[%s3 + $0x84] sm:$0xf]
    %v8685 = vld [vmem:[%s3 + $0x88] sm:$0xf]
    %v8686 = vld [vmem:[%s3 + $0x8c] sm:$0xf]
    %v8687 = vld [vmem:[#allocation8] sm:$0x1]
    %v8689 = vperm.slane %v8687, 0
    %v8727 = vunpack.c.l.b16 %v8651
    %v8728 = vunpack.c.l.b16 %v8652
    %v8729 = vunpack.c.l.b16 %v8653
    %v8730 = vunpack.c.l.b16 %v8654
    %v8731 = vunpack.c.l.b16 %v8655
    %v8732 = vunpack.c.l.b16 %v8656
    %v8733 = vunpack.c.l.b16 %v8657
    %v8734 = vunpack.c.l.b16 %v8658
    %v8735 = vunpack.c.l.b16 %v8659
    %v8736 = vunpack.c.l.b16 %v8660
    %v8737 = vunpack.c.l.b16 %v8661
    %v8738 = vunpack.c.l.b16 %v8662
    %v8739 = vunpack.c.l.b16 %v8663
    %v8740 = vunpack.c.l.b16 %v8664
    %v8741 = vunpack.c.l.b16 %v8665
    %v8742 = vunpack.c.l.b16 %v8666
    %v8743 = vunpack.c.l.b16 %v8667
    %v8744 = vunpack.c.l.b16 %v8668
    %v8745 = vunpack.c.l.b16 %v8669
    %v8746 = vunpack.c.l.b16 %v8670
    %v8747 = vunpack.c.l.b16 %v8671
    %v8748 = vunpack.c.l.b16 %v8672
    %v8749 = vunpack.c.l.b16 %v8673
    %v8750 = vunpack.c.l.b16 %v8674
    %v8751 = vunpack.c.l.b16 %v8675
    %v8752 = vunpack.c.l.b16 %v8676
    %v8753 = vunpack.c.l.b16 %v8677
    %v8754 = vunpack.c.l.b16 %v8678
    %v8755 = vunpack.c.l.b16 %v8679
    %v8756 = vunpack.c.l.b16 %v8680
    %v8757 = vunpack.c.l.b16 %v8681
    %v8758 = vunpack.c.l.b16 %v8682
    %v8759 = vunpack.c.l.b16 %v8683
    %v8760 = vunpack.c.l.b16 %v8684
    %v8761 = vunpack.c.l.b16 %v8685
    %v8762 = vunpack.c.l.b16 %v8686
    %v8763 = vpack.c.b16 %v8728, %v8727
    %v8764 = vpack.c.b16 %v8730, %v8729
    %v8765 = vpack.c.b16 %v8732, %v8731
    %v8766 = vpack.c.b16 %v8734, %v8733
    %v8767 = vpack.c.b16 %v8736, %v8735
    %v8768 = vpack.c.b16 %v8738, %v8737
    %v8769 = vpack.c.b16 %v8740, %v8739
    %v8770 = vpack.c.b16 %v8742, %v8741
    %v8771 = vpack.c.b16 %v8744, %v8743
    %v8772 = vpack.c.b16 %v8746, %v8745
    %v8773 = vpack.c.b16 %v8748, %v8747
    %v8774 = vpack.c.b16 %v8750, %v8749
    %v8775 = vpack.c.b16 %v8752, %v8751
    %v8776 = vpack.c.b16 %v8754, %v8753
    %v8777 = vpack.c.b16 %v8756, %v8755
    %v8778 = vpack.c.b16 %v8758, %v8757
    %v8779 = vpack.c.b16 %v8760, %v8759
    %v8780 = vpack.c.b16 %v8762, %v8761
    %v8800 = vsel %vm3083, %v7989, 0
    %v8803 = vsel %vm3083, %v7991, 0
    %v8806 = vsel %vm3083, %v7993, 0
    %v8809 = vsel %vm3083, %v7995, 0
    %v8812 = vsel %vm3083, %v7997, 0
    %v8815 = vsel %vm3083, %v7999, 0
    %v8818 = vsel %vm3083, %v8001, 0
    %v8821 = vsel %vm3083, %v8003, 0
    %v8824 = vsel %vm3083, %v8005, 0
    %v8827 = vsel %vm3083, %v8007, 0
    %v8830 = vsel %vm3083, %v8009, 0
    %v8833 = vsel %vm3083, %v8011, 0
    %v8836 = vsel %vm3083, %v8013, 0
    %v8839 = vsel %vm3083, %v8015, 0
    %v8842 = vsel %vm3083, %v8017, 0
    %v8845 = vsel %vm3083, %v8019, 0
    %v8848 = vsel %vm3083, %v8021, 0
    %v8851 = vsel %vm3083, %v8023, 0
    %v8854 = vsel %vm3083, %v8025, 0
    %v8857 = vsel %vm3083, %v8027, 0
    %v8860 = vsel %vm3083, %v8029, 0
    %v8863 = vsel %vm3083, %v8031, 0
    %v8866 = vsel %vm3083, %v8033, 0
    %v8869 = vsel %vm3083, %v8035, 0
    %v8872 = vsel %vm3083, %v8037, 0
    %v8875 = vsel %vm3083, %v8039, 0
    %v8878 = vsel %vm3083, %v8041, 0
    %v8881 = vsel %vm3083, %v8043, 0
    %v8884 = vsel %vm3083, %v8045, 0
    %v8887 = vsel %vm3083, %v8047, 0
    %v8890 = vsel %vm3083, %v8049, 0
    %v8893 = vsel %vm3083, %v8051, 0
    %v8896 = vsel %vm3083, %v8053, 0
    %v8899 = vsel %vm3083, %v8055, 0
    %v8902 = vsel %vm3083, %v8057, 0
    %v8905 = vsel %vm3083, %v8059, 0
    %v8908 = vsel %vm3083, %v8061, 0
    %v8911 = vsel %vm3083, %v8063, 0
    %v8914 = vsel %vm3083, %v8065, 0
    %8916 = vmatpush.bf16.msra.mxu0 %v8770
    %8917 = vmatpush.bf16.msra.mxu0 %v8769
    %8918 = vmatpush.bf16.msra.mxu0 %v8768
    %8919 = vmatpush.bf16.msra.mxu0 %v8767
    %8920 = vmatpush.bf16.msra.mxu0 %v8766
    %8921 = vmatpush.bf16.msra.mxu0 %v8765
    %8922 = vmatpush.bf16.msra.mxu0 %v8764
    %8923 = vmatpush.bf16.msra.mxu0 %v8763
    %8924 = vmatmul.bf16.gmra.mxu0 %v8223
    %v8925 = vpop.f32.mrf.mxu0
    %v8926 = vadd.f32 %v8689, %v8925
    %v8927 = vpop.f32.mrf.mxu0
    %v8928 = vadd.f32 %v8689, %v8927
    %8929 = vmatmul.bf16.gmra.mxu0 %v8226
    %v8930 = vpop.f32.mrf.mxu0
    %v8931 = vadd.f32 %v8689, %v8930
    %v8932 = vpop.f32.mrf.mxu0
    %v8933 = vadd.f32 %v8689, %v8932
    %8934 = vmatmul.bf16.gmra.mxu0 %v8229
    %v8935 = vpop.f32.mrf.mxu0
    %v8936 = vadd.f32 %v8689, %v8935
    %v8937 = vpop.f32.mrf.mxu0
    %v8938 = vadd.f32 %v8689, %v8937
    %8939 = vmatmul.bf16.gmra.mxu0 %v8232
    %v8940 = vpop.f32.mrf.mxu0
    %v8941 = vadd.f32 %v8689, %v8940
    %v8942 = vpop.f32.mrf.mxu0
    %v8943 = vadd.f32 %v8689, %v8942
    %8944 = vmatmul.bf16.gmra.mxu0 %v8235
    %v8945 = vpop.f32.mrf.mxu0
    %v8946 = vadd.f32 %v8689, %v8945
    %v8947 = vpop.f32.mrf.mxu0
    %v8948 = vadd.f32 %v8689, %v8947
    %8949 = vmatmul.bf16.gmra.mxu0 %v8238
    %v8950 = vpop.f32.mrf.mxu0
    %v8951 = vadd.f32 %v8689, %v8950
    %v8952 = vpop.f32.mrf.mxu0
    %v8953 = vadd.f32 %v8689, %v8952
    %8954 = vmatmul.bf16.gmra.mxu0 %v8241
    %v8955 = vpop.f32.mrf.mxu0
    %v8956 = vadd.f32 %v8689, %v8955
    %v8957 = vpop.f32.mrf.mxu0
    %v8958 = vadd.f32 %v8689, %v8957
    %8959 = vmatmul.bf16.gmra.mxu0 %v8244
    %v8960 = vpop.f32.mrf.mxu0
    %v8961 = vadd.f32 %v8689, %v8960
    %v8962 = vpop.f32.mrf.mxu0
    %v8963 = vadd.f32 %v8689, %v8962
    %8964 = vmatmul.bf16.gmra.mxu0 %v8247
    %v8965 = vpop.f32.mrf.mxu0
    %v8966 = vadd.f32 %v8689, %v8965
    %v8967 = vpop.f32.mrf.mxu0
    %v8968 = vadd.f32 %v8689, %v8967
    %8969 = vmatmul.bf16.gmra.mxu0 %v8250
    %v8970 = vpop.f32.mrf.mxu0
    %v8971 = vadd.f32 %v8689, %v8970
    %v8972 = vpop.f32.mrf.mxu0
    %v8973 = vadd.f32 %v8689, %v8972
    %8974 = vmatmul.bf16.gmra.mxu0 %v8253
    %v8975 = vpop.f32.mrf.mxu0
    %v8976 = vadd.f32 %v8689, %v8975
    %v8977 = vpop.f32.mrf.mxu0
    %v8978 = vadd.f32 %v8689, %v8977
    %8979 = vmatmul.bf16.gmra.mxu0 %v8256
    %v8980 = vpop.f32.mrf.mxu0
    %v8981 = vadd.f32 %v8689, %v8980
    %v8982 = vpop.f32.mrf.mxu0
    %v8983 = vadd.f32 %v8689, %v8982
    %8984 = vmatmul.bf16.gmra.mxu0 %v8259
    %v8985 = vpop.f32.mrf.mxu0
    %v8986 = vadd.f32 %v8689, %v8985
    %v8987 = vpop.f32.mrf.mxu0
    %v8988 = vadd.f32 %v8689, %v8987
    %8989 = vmatmul.bf16.gmra.mxu0 %v8262
    %v8990 = vpop.f32.mrf.mxu0
    %v8991 = vadd.f32 %v8689, %v8990
    %v8992 = vpop.f32.mrf.mxu0
    %v8993 = vadd.f32 %v8689, %v8992
    %8994 = vmatmul.bf16.gmra.mxu0 %v8265
    %v8995 = vpop.f32.mrf.mxu0
    %v8996 = vadd.f32 %v8689, %v8995
    %v8997 = vpop.f32.mrf.mxu0
    %v8998 = vadd.f32 %v8689, %v8997
    %8999 = vmatmul.bf16.gmra.mxu0 %v8268
    %v9000 = vpop.f32.mrf.mxu0
    %v9001 = vadd.f32 %v8689, %v9000
    %v9002 = vpop.f32.mrf.mxu0
    %v9003 = vadd.f32 %v8689, %v9002
    %9004 = vmatmul.bf16.gmra.mxu0 %v8271
    %v9005 = vpop.f32.mrf.mxu0
    %v9006 = vadd.f32 %v8689, %v9005
    %v9007 = vpop.f32.mrf.mxu0
    %v9008 = vadd.f32 %v8689, %v9007
    %9009 = vmatmul.bf16.gmra.mxu0 %v8274
    %v9010 = vpop.f32.mrf.mxu0
    %v9011 = vadd.f32 %v8689, %v9010
    %v9012 = vpop.f32.mrf.mxu0
    %v9013 = vadd.f32 %v8689, %v9012
    %9014 = vmatmul.bf16.gmra.mxu0 %v8277
    %v9015 = vpop.f32.mrf.mxu0
    %v9016 = vadd.f32 %v8689, %v9015
    %v9017 = vpop.f32.mrf.mxu0
    %v9018 = vadd.f32 %v8689, %v9017
    %9019 = vmatmul.bf16.gmra.mxu0 %v8280
    %v9020 = vpop.f32.mrf.mxu0
    %v9021 = vadd.f32 %v8689, %v9020
    %v9022 = vpop.f32.mrf.mxu0
    %v9023 = vadd.f32 %v8689, %v9022
    %9024 = vmatmul.bf16.gmra.mxu0 %v8283
    %v9025 = vpop.f32.mrf.mxu0
    %v9026 = vadd.f32 %v8689, %v9025
    %v9027 = vpop.f32.mrf.mxu0
    %v9028 = vadd.f32 %v8689, %v9027
    %9029 = vmatmul.bf16.gmra.mxu0 %v8286
    %v9030 = vpop.f32.mrf.mxu0
    %v9031 = vadd.f32 %v8689, %v9030
    %v9032 = vpop.f32.mrf.mxu0
    %v9033 = vadd.f32 %v8689, %v9032
    %9034 = vmatmul.bf16.gmra.mxu0 %v8289
    %v9035 = vpop.f32.mrf.mxu0
    %v9036 = vadd.f32 %v8689, %v9035
    %v9037 = vpop.f32.mrf.mxu0
    %v9038 = vadd.f32 %v8689, %v9037
    %9039 = vmatmul.bf16.gmra.mxu0 %v8292
    %v9040 = vpop.f32.mrf.mxu0
    %v9041 = vadd.f32 %v8689, %v9040
    %v9042 = vpop.f32.mrf.mxu0
    %v9043 = vadd.f32 %v8689, %v9042
    %9044 = vmatmul.bf16.gmra.mxu0 %v8295
    %v9045 = vpop.f32.mrf.mxu0
    %v9046 = vadd.f32 %v8689, %v9045
    %v9047 = vpop.f32.mrf.mxu0
    %v9048 = vadd.f32 %v8689, %v9047
    %9049 = vmatmul.bf16.gmra.mxu0 %v8298
    %v9050 = vpop.f32.mrf.mxu0
    %v9051 = vadd.f32 %v8689, %v9050
    %v9052 = vpop.f32.mrf.mxu0
    %v9053 = vadd.f32 %v8689, %v9052
    %9054 = vmatmul.bf16.gmra.mxu0 %v8301
    %v9055 = vpop.f32.mrf.mxu0
    %v9056 = vadd.f32 %v8689, %v9055
    %v9057 = vpop.f32.mrf.mxu0
    %v9058 = vadd.f32 %v8689, %v9057
    %9059 = vmatmul.bf16.gmra.mxu0 %v8304
    %v9060 = vpop.f32.mrf.mxu0
    %v9061 = vadd.f32 %v8689, %v9060
    %v9062 = vpop.f32.mrf.mxu0
    %v9063 = vadd.f32 %v8689, %v9062
    %9064 = vmatmul.bf16.gmra.mxu0 %v8307
    %v9065 = vpop.f32.mrf.mxu0
    %v9066 = vadd.f32 %v8689, %v9065
    %v9067 = vpop.f32.mrf.mxu0
    %v9068 = vadd.f32 %v8689, %v9067
    %9069 = vmatmul.bf16.gmra.mxu0 %v8310
    %v9070 = vpop.f32.mrf.mxu0
    %v9071 = vadd.f32 %v8689, %v9070
    %v9072 = vpop.f32.mrf.mxu0
    %v9073 = vadd.f32 %v8689, %v9072
    %9074 = vmatmul.bf16.gmra.mxu0 %v8313
    %v9075 = vpop.f32.mrf.mxu0
    %v9076 = vadd.f32 %v8689, %v9075
    %v9077 = vpop.f32.mrf.mxu0
    %v9078 = vadd.f32 %v8689, %v9077
    %9079 = vmatmul.bf16.gmra.mxu0 %v8316
    %v9080 = vpop.f32.mrf.mxu0
    %v9081 = vadd.f32 %v8689, %v9080
    %v9082 = vpop.f32.mrf.mxu0
    %v9083 = vadd.f32 %v8689, %v9082
    %9084 = vmatmul.bf16.gmra.mxu0 %v8319
    %v9085 = vpop.f32.mrf.mxu0
    %v9086 = vadd.f32 %v8689, %v9085
    %v9087 = vpop.f32.mrf.mxu0
    %v9088 = vadd.f32 %v8689, %v9087
    %9089 = vmatmul.bf16.gmra.mxu0 %v8322
    %v9090 = vpop.f32.mrf.mxu0
    %v9091 = vadd.f32 %v8689, %v9090
    %v9092 = vpop.f32.mrf.mxu0
    %v9093 = vadd.f32 %v8689, %v9092
    %9094 = vmatmul.bf16.gmra.mxu0 %v8325
    %v9095 = vpop.f32.mrf.mxu0
    %v9096 = vadd.f32 %v8689, %v9095
    %v9097 = vpop.f32.mrf.mxu0
    %v9098 = vadd.f32 %v8689, %v9097
    %9099 = vmatmul.bf16.gmra.mxu0 %v8328
    %v9100 = vpop.f32.mrf.mxu0
    %v9101 = vadd.f32 %v8689, %v9100
    %v9102 = vpop.f32.mrf.mxu0
    %v9103 = vadd.f32 %v8689, %v9102
    %9104 = vmatmul.bf16.gmra.mxu0 %v8331
    %v9105 = vpop.f32.mrf.mxu0
    %v9106 = vadd.f32 %v8689, %v9105
    %v9107 = vpop.f32.mrf.mxu0
    %v9108 = vadd.f32 %v8689, %v9107
    %9109 = vmatmul.bf16.gmra.mxu0 %v8334
    %v9110 = vpop.f32.mrf.mxu0
    %v9111 = vadd.f32 %v8689, %v9110
    %v9112 = vpop.f32.mrf.mxu0
    %v9113 = vadd.f32 %v8689, %v9112
    %9114 = vmatmul.bf16.gmra.mxu0 %v8337
    %v9115 = vpop.f32.mrf.mxu0
    %v9116 = vadd.f32 %v8689, %v9115
    %v9117 = vpop.f32.mrf.mxu0
    %v9118 = vadd.f32 %v8689, %v9117
    %9119 = vdwg.mxu0
    %9120 = vmatpush.bf16.msra.mxu0 %v8778
    %9121 = vmatpush.bf16.msra.mxu0 %v8777
    %9122 = vmatpush.bf16.msra.mxu0 %v8776
    %9123 = vmatpush.bf16.msra.mxu0 %v8775
    %9124 = vmatpush.bf16.msra.mxu0 %v8774
    %9125 = vmatpush.bf16.msra.mxu0 %v8773
    %9126 = vmatpush.bf16.msra.mxu0 %v8772
    %9127 = vmatpush.bf16.msra.mxu0 %v8771
    %9128 = vmatmul.bf16.gmra.mxu0 %v8535
    %v9129 = vpop.f32.mrf.mxu0
    %v9130 = vadd.f32 %v8926, %v9129
    %v9131 = vpop.f32.mrf.mxu0
    %v9132 = vadd.f32 %v8928, %v9131
    %9133 = vmatmul.bf16.gmra.mxu0 %v8538
    %v9134 = vpop.f32.mrf.mxu0
    %v9135 = vadd.f32 %v8931, %v9134
    %v9136 = vpop.f32.mrf.mxu0
    %v9137 = vadd.f32 %v8933, %v9136
    %9138 = vmatmul.bf16.gmra.mxu0 %v8541
    %v9139 = vpop.f32.mrf.mxu0
    %v9140 = vadd.f32 %v8936, %v9139
    %v9141 = vpop.f32.mrf.mxu0
    %v9142 = vadd.f32 %v8938, %v9141
    %9143 = vmatmul.bf16.gmra.mxu0 %v8544
    %v9144 = vpop.f32.mrf.mxu0
    %v9145 = vadd.f32 %v8941, %v9144
    %v9146 = vpop.f32.mrf.mxu0
    %v9147 = vadd.f32 %v8943, %v9146
    %9148 = vmatmul.bf16.gmra.mxu0 %v8547
    %v9149 = vpop.f32.mrf.mxu0
    %v9150 = vadd.f32 %v8946, %v9149
    %v9151 = vpop.f32.mrf.mxu0
    %v9152 = vadd.f32 %v8948, %v9151
    %9153 = vmatmul.bf16.gmra.mxu0 %v8550
    %v9154 = vpop.f32.mrf.mxu0
    %v9155 = vadd.f32 %v8951, %v9154
    %v9156 = vpop.f32.mrf.mxu0
    %v9157 = vadd.f32 %v8953, %v9156
    %9158 = vmatmul.bf16.gmra.mxu0 %v8553
    %v9159 = vpop.f32.mrf.mxu0
    %v9160 = vadd.f32 %v8956, %v9159
    %v9161 = vpop.f32.mrf.mxu0
    %v9162 = vadd.f32 %v8958, %v9161
    %9163 = vmatmul.bf16.gmra.mxu0 %v8556
    %v9164 = vpop.f32.mrf.mxu0
    %v9165 = vadd.f32 %v8961, %v9164
    %v9166 = vpop.f32.mrf.mxu0
    %v9167 = vadd.f32 %v8963, %v9166
    %9168 = vmatmul.bf16.gmra.mxu0 %v8559
    %v9169 = vpop.f32.mrf.mxu0
    %v9170 = vadd.f32 %v8966, %v9169
    %v9171 = vpop.f32.mrf.mxu0
    %v9172 = vadd.f32 %v8968, %v9171
    %9173 = vmatmul.bf16.gmra.mxu0 %v8562
    %v9174 = vpop.f32.mrf.mxu0
    %v9175 = vadd.f32 %v8971, %v9174
    %v9176 = vpop.f32.mrf.mxu0
    %v9177 = vadd.f32 %v8973, %v9176
    %9178 = vmatmul.bf16.gmra.mxu0 %v8565
    %v9179 = vpop.f32.mrf.mxu0
    %v9180 = vadd.f32 %v8976, %v9179
    %v9181 = vpop.f32.mrf.mxu0
    %v9182 = vadd.f32 %v8978, %v9181
    %9183 = vmatmul.bf16.gmra.mxu0 %v8568
    %v9184 = vpop.f32.mrf.mxu0
    %v9185 = vadd.f32 %v8981, %v9184
    %v9186 = vpop.f32.mrf.mxu0
    %v9187 = vadd.f32 %v8983, %v9186
    %9188 = vmatmul.bf16.gmra.mxu0 %v8571
    %v9189 = vpop.f32.mrf.mxu0
    %v9190 = vadd.f32 %v8986, %v9189
    %v9191 = vpop.f32.mrf.mxu0
    %v9192 = vadd.f32 %v8988, %v9191
    %9193 = vmatmul.bf16.gmra.mxu0 %v8574
    %v9194 = vpop.f32.mrf.mxu0
    %v9195 = vadd.f32 %v8991, %v9194
    %v9196 = vpop.f32.mrf.mxu0
    %v9197 = vadd.f32 %v8993, %v9196
    %9198 = vmatmul.bf16.gmra.mxu0 %v8577
    %v9199 = vpop.f32.mrf.mxu0
    %v9200 = vadd.f32 %v8996, %v9199
    %v9201 = vpop.f32.mrf.mxu0
    %v9202 = vadd.f32 %v8998, %v9201
    %9203 = vmatmul.bf16.gmra.mxu0 %v8580
    %v9204 = vpop.f32.mrf.mxu0
    %v9205 = vadd.f32 %v9001, %v9204
    %v9206 = vpop.f32.mrf.mxu0
    %v9207 = vadd.f32 %v9003, %v9206
    %9208 = vmatmul.bf16.gmra.mxu0 %v8583
    %v9209 = vpop.f32.mrf.mxu0
    %v9210 = vadd.f32 %v9006, %v9209
    %v9211 = vpop.f32.mrf.mxu0
    %v9212 = vadd.f32 %v9008, %v9211
    %9213 = vmatmul.bf16.gmra.mxu0 %v8586
    %v9214 = vpop.f32.mrf.mxu0
    %v9215 = vadd.f32 %v9011, %v9214
    %v9216 = vpop.f32.mrf.mxu0
    %v9217 = vadd.f32 %v9013, %v9216
    %9218 = vmatmul.bf16.gmra.mxu0 %v8589
    %v9219 = vpop.f32.mrf.mxu0
    %v9220 = vadd.f32 %v9016, %v9219
    %v9221 = vpop.f32.mrf.mxu0
    %v9222 = vadd.f32 %v9018, %v9221
    %9223 = vmatmul.bf16.gmra.mxu0 %v8592
    %v9224 = vpop.f32.mrf.mxu0
    %v9225 = vadd.f32 %v9021, %v9224
    %v9226 = vpop.f32.mrf.mxu0
    %v9227 = vadd.f32 %v9023, %v9226
    %9228 = vmatmul.bf16.gmra.mxu0 %v8595
    %v9229 = vpop.f32.mrf.mxu0
    %v9230 = vadd.f32 %v9026, %v9229
    %v9231 = vpop.f32.mrf.mxu0
    %v9232 = vadd.f32 %v9028, %v9231
    %9233 = vmatmul.bf16.gmra.mxu0 %v8598
    %v9234 = vpop.f32.mrf.mxu0
    %v9235 = vadd.f32 %v9031, %v9234
    %v9236 = vpop.f32.mrf.mxu0
    %v9237 = vadd.f32 %v9033, %v9236
    %9238 = vmatmul.bf16.gmra.mxu0 %v8601
    %v9239 = vpop.f32.mrf.mxu0
    %v9240 = vadd.f32 %v9036, %v9239
    %v9241 = vpop.f32.mrf.mxu0
    %v9242 = vadd.f32 %v9038, %v9241
    %9243 = vmatmul.bf16.gmra.mxu0 %v8604
    %v9244 = vpop.f32.mrf.mxu0
    %v9245 = vadd.f32 %v9041, %v9244
    %v9246 = vpop.f32.mrf.mxu0
    %v9247 = vadd.f32 %v9043, %v9246
    %9248 = vmatmul.bf16.gmra.mxu0 %v8607
    %v9249 = vpop.f32.mrf.mxu0
    %v9250 = vadd.f32 %v9046, %v9249
    %v9251 = vpop.f32.mrf.mxu0
    %v9252 = vadd.f32 %v9048, %v9251
    %9253 = vmatmul.bf16.gmra.mxu0 %v8610
    %v9254 = vpop.f32.mrf.mxu0
    %v9255 = vadd.f32 %v9051, %v9254
    %v9256 = vpop.f32.mrf.mxu0
    %v9257 = vadd.f32 %v9053, %v9256
    %9258 = vmatmul.bf16.gmra.mxu0 %v8613
    %v9259 = vpop.f32.mrf.mxu0
    %v9260 = vadd.f32 %v9056, %v9259
    %v9261 = vpop.f32.mrf.mxu0
    %v9262 = vadd.f32 %v9058, %v9261
    %9263 = vmatmul.bf16.gmra.mxu0 %v8616
    %v9264 = vpop.f32.mrf.mxu0
    %v9265 = vadd.f32 %v9061, %v9264
    %v9266 = vpop.f32.mrf.mxu0
    %v9267 = vadd.f32 %v9063, %v9266
    %9268 = vmatmul.bf16.gmra.mxu0 %v8619
    %v9269 = vpop.f32.mrf.mxu0
    %v9270 = vadd.f32 %v9066, %v9269
    %v9271 = vpop.f32.mrf.mxu0
    %v9272 = vadd.f32 %v9068, %v9271
    %9273 = vmatmul.bf16.gmra.mxu0 %v8622
    %v9274 = vpop.f32.mrf.mxu0
    %v9275 = vadd.f32 %v9071, %v9274
    %v9276 = vpop.f32.mrf.mxu0
    %v9277 = vadd.f32 %v9073, %v9276
    %9278 = vmatmul.bf16.gmra.mxu0 %v8625
    %v9279 = vpop.f32.mrf.mxu0
    %v9280 = vadd.f32 %v9076, %v9279
    %v9281 = vpop.f32.mrf.mxu0
    %v9282 = vadd.f32 %v9078, %v9281
    %9283 = vmatmul.bf16.gmra.mxu0 %v8628
    %v9284 = vpop.f32.mrf.mxu0
    %v9285 = vadd.f32 %v9081, %v9284
    %v9286 = vpop.f32.mrf.mxu0
    %v9287 = vadd.f32 %v9083, %v9286
    %9288 = vmatmul.bf16.gmra.mxu0 %v8631
    %v9289 = vpop.f32.mrf.mxu0
    %v9290 = vadd.f32 %v9086, %v9289
    %v9291 = vpop.f32.mrf.mxu0
    %v9292 = vadd.f32 %v9088, %v9291
    %9293 = vmatmul.bf16.gmra.mxu0 %v8634
    %v9294 = vpop.f32.mrf.mxu0
    %v9295 = vadd.f32 %v9091, %v9294
    %v9296 = vpop.f32.mrf.mxu0
    %v9297 = vadd.f32 %v9093, %v9296
    %9298 = vmatmul.bf16.gmra.mxu0 %v8637
    %v9299 = vpop.f32.mrf.mxu0
    %v9300 = vadd.f32 %v9096, %v9299
    %v9301 = vpop.f32.mrf.mxu0
    %v9302 = vadd.f32 %v9098, %v9301
    %9303 = vmatmul.bf16.gmra.mxu0 %v8640
    %v9304 = vpop.f32.mrf.mxu0
    %v9305 = vadd.f32 %v9101, %v9304
    %v9306 = vpop.f32.mrf.mxu0
    %v9307 = vadd.f32 %v9103, %v9306
    %9308 = vmatmul.bf16.gmra.mxu0 %v8643
    %v9309 = vpop.f32.mrf.mxu0
    %v9310 = vadd.f32 %v9106, %v9309
    %v9311 = vpop.f32.mrf.mxu0
    %v9312 = vadd.f32 %v9108, %v9311
    %9313 = vmatmul.bf16.gmra.mxu0 %v8646
    %v9314 = vpop.f32.mrf.mxu0
    %v9315 = vadd.f32 %v9111, %v9314
    %v9316 = vpop.f32.mrf.mxu0
    %v9317 = vadd.f32 %v9113, %v9316
    %9318 = vmatmul.bf16.gmra.mxu0 %v8649
    %v9319 = vpop.f32.mrf.mxu0
    %v9320 = vadd.f32 %v9116, %v9319
    %v9321 = vpop.f32.mrf.mxu0
    %v9322 = vadd.f32 %v9118, %v9321
    %9323 = vdwg.mxu0
    %9324 = vmatpush.bf16.msra.mxu0 0
    %9325 = vmatpush.bf16.msra.mxu0 0
    %9326 = vmatpush.bf16.msra.mxu0 0
    %9327 = vmatpush.bf16.msra.mxu0 0
    %9328 = vmatpush.bf16.msra.mxu0 0
    %9329 = vmatpush.bf16.msra.mxu0 0
    %9330 = vmatpush.bf16.msra.mxu0 %v8780
    %9331 = vmatpush.bf16.msra.mxu0 %v8779
    %9332 = vmatmul.bf16.gmra.mxu0 %v8800
    %v9333 = vpop.f32.mrf.mxu0
    %v9334 = vadd.f32 %v9130, %v9333
    %v9335 = vpop.f32.mrf.mxu0
    %v9336 = vadd.f32 %v9132, %v9335
    %9337 = vmatmul.bf16.gmra.mxu0 %v8803
    %v9338 = vpop.f32.mrf.mxu0
    %v9339 = vadd.f32 %v9135, %v9338
    %v9340 = vpop.f32.mrf.mxu0
    %v9341 = vadd.f32 %v9137, %v9340
    %9342 = vmatmul.bf16.gmra.mxu0 %v8806
    %v9343 = vpop.f32.mrf.mxu0
    %v9344 = vadd.f32 %v9140, %v9343
    %v9345 = vpop.f32.mrf.mxu0
    %v9346 = vadd.f32 %v9142, %v9345
    %9347 = vmatmul.bf16.gmra.mxu0 %v8809
    %v9348 = vpop.f32.mrf.mxu0
    %v9349 = vadd.f32 %v9145, %v9348
    %v9350 = vpop.f32.mrf.mxu0
    %v9351 = vadd.f32 %v9147, %v9350
    %9352 = vmatmul.bf16.gmra.mxu0 %v8812
    %v9353 = vpop.f32.mrf.mxu0
    %v9354 = vadd.f32 %v9150, %v9353
    %v9355 = vpop.f32.mrf.mxu0
    %v9356 = vadd.f32 %v9152, %v9355
    %9357 = vmatmul.bf16.gmra.mxu0 %v8815
    %v9358 = vpop.f32.mrf.mxu0
    %v9359 = vadd.f32 %v9155, %v9358
    %v9360 = vpop.f32.mrf.mxu0
    %v9361 = vadd.f32 %v9157, %v9360
    %9362 = vmatmul.bf16.gmra.mxu0 %v8818
    %v9363 = vpop.f32.mrf.mxu0
    %v9364 = vadd.f32 %v9160, %v9363
    %v9365 = vpop.f32.mrf.mxu0
    %v9366 = vadd.f32 %v9162, %v9365
    %9367 = vmatmul.bf16.gmra.mxu0 %v8821
    %v9368 = vpop.f32.mrf.mxu0
    %v9369 = vadd.f32 %v9165, %v9368
    %v9370 = vpop.f32.mrf.mxu0
    %v9371 = vadd.f32 %v9167, %v9370
    %9372 = vmatmul.bf16.gmra.mxu0 %v8824
    %v9373 = vpop.f32.mrf.mxu0
    %v9374 = vadd.f32 %v9170, %v9373
    %v9375 = vpop.f32.mrf.mxu0
    %v9376 = vadd.f32 %v9172, %v9375
    %9377 = vmatmul.bf16.gmra.mxu0 %v8827
    %v9378 = vpop.f32.mrf.mxu0
    %v9379 = vadd.f32 %v9175, %v9378
    %v9380 = vpop.f32.mrf.mxu0
    %v9381 = vadd.f32 %v9177, %v9380
    %9382 = vmatmul.bf16.gmra.mxu0 %v8830
    %v9383 = vpop.f32.mrf.mxu0
    %v9384 = vadd.f32 %v9180, %v9383
    %v9385 = vpop.f32.mrf.mxu0
    %v9386 = vadd.f32 %v9182, %v9385
    %9387 = vmatmul.bf16.gmra.mxu0 %v8833
    %v9388 = vpop.f32.mrf.mxu0
    %v9389 = vadd.f32 %v9185, %v9388
    %v9390 = vpop.f32.mrf.mxu0
    %v9391 = vadd.f32 %v9187, %v9390
    %9392 = vmatmul.bf16.gmra.mxu0 %v8836
    %v9393 = vpop.f32.mrf.mxu0
    %v9394 = vadd.f32 %v9190, %v9393
    %v9395 = vpop.f32.mrf.mxu0
    %v9396 = vadd.f32 %v9192, %v9395
    %9397 = vmatmul.bf16.gmra.mxu0 %v8839
    %v9398 = vpop.f32.mrf.mxu0
    %v9399 = vadd.f32 %v9195, %v9398
    %v9400 = vpop.f32.mrf.mxu0
    %v9401 = vadd.f32 %v9197, %v9400
    %9402 = vmatmul.bf16.gmra.mxu0 %v8842
    %v9403 = vpop.f32.mrf.mxu0
    %v9404 = vadd.f32 %v9200, %v9403
    %v9405 = vpop.f32.mrf.mxu0
    %v9406 = vadd.f32 %v9202, %v9405
    %9407 = vmatmul.bf16.gmra.mxu0 %v8845
    %v9408 = vpop.f32.mrf.mxu0
    %v9409 = vadd.f32 %v9205, %v9408
    %v9410 = vpop.f32.mrf.mxu0
    %v9411 = vadd.f32 %v9207, %v9410
    %9412 = vmatmul.bf16.gmra.mxu0 %v8848
    %v9413 = vpop.f32.mrf.mxu0
    %v9414 = vadd.f32 %v9210, %v9413
    %v9415 = vpop.f32.mrf.mxu0
    %v9416 = vadd.f32 %v9212, %v9415
    %9417 = vmatmul.bf16.gmra.mxu0 %v8851
    %v9418 = vpop.f32.mrf.mxu0
    %v9419 = vadd.f32 %v9215, %v9418
    %v9420 = vpop.f32.mrf.mxu0
    %v9421 = vadd.f32 %v9217, %v9420
    %9422 = vmatmul.bf16.gmra.mxu0 %v8854
    %v9423 = vpop.f32.mrf.mxu0
    %v9424 = vadd.f32 %v9220, %v9423
    %v9425 = vpop.f32.mrf.mxu0
    %v9426 = vadd.f32 %v9222, %v9425
    %9427 = vmatmul.bf16.gmra.mxu0 %v8857
    %v9428 = vpop.f32.mrf.mxu0
    %v9429 = vadd.f32 %v9225, %v9428
    %v9430 = vpop.f32.mrf.mxu0
    %v9431 = vadd.f32 %v9227, %v9430
    %9432 = vmatmul.bf16.gmra.mxu0 %v8860
    %v9433 = vpop.f32.mrf.mxu0
    %v9434 = vadd.f32 %v9230, %v9433
    %v9435 = vpop.f32.mrf.mxu0
    %v9436 = vadd.f32 %v9232, %v9435
    %9437 = vmatmul.bf16.gmra.mxu0 %v8863
    %v9438 = vpop.f32.mrf.mxu0
    %v9439 = vadd.f32 %v9235, %v9438
    %v9440 = vpop.f32.mrf.mxu0
    %v9441 = vadd.f32 %v9237, %v9440
    %9442 = vmatmul.bf16.gmra.mxu0 %v8866
    %v9443 = vpop.f32.mrf.mxu0
    %v9444 = vadd.f32 %v9240, %v9443
    %v9445 = vpop.f32.mrf.mxu0
    %v9446 = vadd.f32 %v9242, %v9445
    %9447 = vmatmul.bf16.gmra.mxu0 %v8869
    %v9448 = vpop.f32.mrf.mxu0
    %v9449 = vadd.f32 %v9245, %v9448
    %v9450 = vpop.f32.mrf.mxu0
    %v9451 = vadd.f32 %v9247, %v9450
    %9452 = vmatmul.bf16.gmra.mxu0 %v8872
    %v9453 = vpop.f32.mrf.mxu0
    %v9454 = vadd.f32 %v9250, %v9453
    %v9455 = vpop.f32.mrf.mxu0
    %v9456 = vadd.f32 %v9252, %v9455
    %9457 = vmatmul.bf16.gmra.mxu0 %v8875
    %v9458 = vpop.f32.mrf.mxu0
    %v9459 = vadd.f32 %v9255, %v9458
    %v9460 = vpop.f32.mrf.mxu0
    %v9461 = vadd.f32 %v9257, %v9460
    %9462 = vmatmul.bf16.gmra.mxu0 %v8878
    %v9463 = vpop.f32.mrf.mxu0
    %v9464 = vadd.f32 %v9260, %v9463
    %v9465 = vpop.f32.mrf.mxu0
    %v9466 = vadd.f32 %v9262, %v9465
    %9467 = vmatmul.bf16.gmra.mxu0 %v8881
    %v9468 = vpop.f32.mrf.mxu0
    %v9469 = vadd.f32 %v9265, %v9468
    %v9470 = vpop.f32.mrf.mxu0
    %v9471 = vadd.f32 %v9267, %v9470
    %9472 = vmatmul.bf16.gmra.mxu0 %v8884
    %v9473 = vpop.f32.mrf.mxu0
    %v9474 = vadd.f32 %v9270, %v9473
    %v9475 = vpop.f32.mrf.mxu0
    %v9476 = vadd.f32 %v9272, %v9475
    %9477 = vmatmul.bf16.gmra.mxu0 %v8887
    %v9478 = vpop.f32.mrf.mxu0
    %v9479 = vadd.f32 %v9275, %v9478
    %v9480 = vpop.f32.mrf.mxu0
    %v9481 = vadd.f32 %v9277, %v9480
    %9482 = vmatmul.bf16.gmra.mxu0 %v8890
    %v9483 = vpop.f32.mrf.mxu0
    %v9484 = vadd.f32 %v9280, %v9483
    %v9485 = vpop.f32.mrf.mxu0
    %v9486 = vadd.f32 %v9282, %v9485
    %9487 = vmatmul.bf16.gmra.mxu0 %v8893
    %v9488 = vpop.f32.mrf.mxu0
    %v9489 = vadd.f32 %v9285, %v9488
    %v9490 = vpop.f32.mrf.mxu0
    %v9491 = vadd.f32 %v9287, %v9490
    %9492 = vmatmul.bf16.gmra.mxu0 %v8896
    %v9493 = vpop.f32.mrf.mxu0
    %v9494 = vadd.f32 %v9290, %v9493
    %v9495 = vpop.f32.mrf.mxu0
    %v9496 = vadd.f32 %v9292, %v9495
    %9497 = vmatmul.bf16.gmra.mxu0 %v8899
    %v9498 = vpop.f32.mrf.mxu0
    %v9499 = vadd.f32 %v9295, %v9498
    %v9500 = vpop.f32.mrf.mxu0
    %v9501 = vadd.f32 %v9297, %v9500
    %9502 = vmatmul.bf16.gmra.mxu0 %v8902
    %v9503 = vpop.f32.mrf.mxu0
    %v9504 = vadd.f32 %v9300, %v9503
    %v9505 = vpop.f32.mrf.mxu0
    %v9506 = vadd.f32 %v9302, %v9505
    %9507 = vmatmul.bf16.gmra.mxu0 %v8905
    %v9508 = vpop.f32.mrf.mxu0
    %v9509 = vadd.f32 %v9305, %v9508
    %v9510 = vpop.f32.mrf.mxu0
    %v9511 = vadd.f32 %v9307, %v9510
    %9512 = vmatmul.bf16.gmra.mxu0 %v8908
    %v9513 = vpop.f32.mrf.mxu0
    %v9514 = vadd.f32 %v9310, %v9513
    %v9515 = vpop.f32.mrf.mxu0
    %v9516 = vadd.f32 %v9312, %v9515
    %9517 = vmatmul.bf16.gmra.mxu0 %v8911
    %v9518 = vpop.f32.mrf.mxu0
    %v9519 = vadd.f32 %v9315, %v9518
    %v9520 = vpop.f32.mrf.mxu0
    %v9521 = vadd.f32 %v9317, %v9520
    %9522 = vmatmul.bf16.gmra.mxu0 %v8914
    %v9523 = vpop.f32.mrf.mxu0
    %v9524 = vadd.f32 %v9320, %v9523
    %v9525 = vpop.f32.mrf.mxu0
    %v9526 = vadd.f32 %v9322, %v9525
    %9527 = vdwg.mxu0
    %v9528 = vmax.f32 %v9334, 0.0
    %v9529 = vmax.f32 %v9336, 0.0
    %v9530 = vmax.f32 %v9339, 0.0
    %v9531 = vmax.f32 %v9341, 0.0
    %v9532 = vmax.f32 %v9344, 0.0
    %v9533 = vmax.f32 %v9346, 0.0
    %v9534 = vmax.f32 %v9349, 0.0
    %v9535 = vmax.f32 %v9351, 0.0
    %v9536 = vmax.f32 %v9354, 0.0
    %v9537 = vmax.f32 %v9356, 0.0
    %v9538 = vmax.f32 %v9359, 0.0
    %v9539 = vmax.f32 %v9361, 0.0
    %v9540 = vmax.f32 %v9364, 0.0
    %v9541 = vmax.f32 %v9366, 0.0
    %v9542 = vmax.f32 %v9369, 0.0
    %v9543 = vmax.f32 %v9371, 0.0
    %v9544 = vmax.f32 %v9374, 0.0
    %v9545 = vmax.f32 %v9376, 0.0
    %v9546 = vmax.f32 %v9379, 0.0
    %v9547 = vmax.f32 %v9381, 0.0
    %v9548 = vmax.f32 %v9384, 0.0
    %v9549 = vmax.f32 %v9386, 0.0
    %v9550 = vmax.f32 %v9389, 0.0
    %v9551 = vmax.f32 %v9391, 0.0
    %v9552 = vmax.f32 %v9394, 0.0
    %v9553 = vmax.f32 %v9396, 0.0
    %v9554 = vmax.f32 %v9399, 0.0
    %v9555 = vmax.f32 %v9401, 0.0
    %v9556 = vmax.f32 %v9404, 0.0
    %v9557 = vmax.f32 %v9406, 0.0
    %v9558 = vmax.f32 %v9409, 0.0
    %v9559 = vmax.f32 %v9411, 0.0
    %v9560 = vmax.f32 %v9414, 0.0
    %v9561 = vmax.f32 %v9416, 0.0
    %v9562 = vmax.f32 %v9419, 0.0
    %v9563 = vmax.f32 %v9421, 0.0
    %v9564 = vmax.f32 %v9424, 0.0
    %v9565 = vmax.f32 %v9426, 0.0
    %v9566 = vmax.f32 %v9429, 0.0
    %v9567 = vmax.f32 %v9431, 0.0
    %v9568 = vmax.f32 %v9434, 0.0
    %v9569 = vmax.f32 %v9436, 0.0
    %v9570 = vmax.f32 %v9439, 0.0
    %v9571 = vmax.f32 %v9441, 0.0
    %v9572 = vmax.f32 %v9444, 0.0
    %v9573 = vmax.f32 %v9446, 0.0
    %v9574 = vmax.f32 %v9449, 0.0
    %v9575 = vmax.f32 %v9451, 0.0
    %v9576 = vmax.f32 %v9454, 0.0
    %v9577 = vmax.f32 %v9456, 0.0
    %v9578 = vmax.f32 %v9459, 0.0
    %v9579 = vmax.f32 %v9461, 0.0
    %v9580 = vmax.f32 %v9464, 0.0
    %v9581 = vmax.f32 %v9466, 0.0
    %v9582 = vmax.f32 %v9469, 0.0
    %v9583 = vmax.f32 %v9471, 0.0
    %v9584 = vmax.f32 %v9474, 0.0
    %v9585 = vmax.f32 %v9476, 0.0
    %v9586 = vmax.f32 %v9479, 0.0
    %v9587 = vmax.f32 %v9481, 0.0
    %v9588 = vmax.f32 %v9484, 0.0
    %v9589 = vmax.f32 %v9486, 0.0
    %v9590 = vmax.f32 %v9489, 0.0
    %v9591 = vmax.f32 %v9491, 0.0
    %v9592 = vmax.f32 %v9494, 0.0
    %v9593 = vmax.f32 %v9496, 0.0
    %v9594 = vmax.f32 %v9499, 0.0
    %v9595 = vmax.f32 %v9501, 0.0
    %v9596 = vmax.f32 %v9504, 0.0
    %v9597 = vmax.f32 %v9506, 0.0
    %v9598 = vmax.f32 %v9509, 0.0
    %v9599 = vmax.f32 %v9511, 0.0
    %v9600 = vmax.f32 %v9514, 0.0
    %v9601 = vmax.f32 %v9516, 0.0
    %v9602 = vmax.f32 %v9519, 0.0
    %v9603 = vmax.f32 %v9521, 0.0
    %v9604 = vmax.f32 %v9524, 0.0
    %v9605 = vmax.f32 %v9526, 0.0
    %9606 = vst.msk [vmem:[#allocation3] sm:$0xff] %vm3162, %v9528
    %9607 = vst.msk [vmem:[#allocation3 + $0x8] sm:$0xff] %vm3162, %v9529
    %9608 = vst.msk [vmem:[#allocation3 + $0x10] sm:$0xff] %vm3162, %v9530
    %9609 = vst.msk [vmem:[#allocation3 + $0x18] sm:$0xff] %vm3162, %v9531
    %9610 = vst.msk [vmem:[#allocation3 + $0x20] sm:$0xff] %vm3162, %v9532
    %9611 = vst.msk [vmem:[#allocation3 + $0x28] sm:$0xff] %vm3162, %v9533
    %9612 = vst.msk [vmem:[#allocation3 + $0x30] sm:$0xff] %vm3162, %v9534
    %9613 = vst.msk [vmem:[#allocation3 + $0x38] sm:$0xff] %vm3162, %v9535
    %9614 = vst.msk [vmem:[#allocation3 + $0x40] sm:$0xff] %vm3162, %v9536
    %9615 = vst.msk [vmem:[#allocation3 + $0x48] sm:$0xff] %vm3162, %v9537
    %9616 = vst.msk [vmem:[#allocation3 + $0x50] sm:$0xff] %vm3162, %v9538
    %9617 = vst.msk [vmem:[#allocation3 + $0x58] sm:$0xff] %vm3162, %v9539
    %9618 = vst.msk [vmem:[#allocation3 + $0x60] sm:$0xff] %vm3162, %v9540
    %9619 = vst.msk [vmem:[#allocation3 + $0x68] sm:$0xff] %vm3162, %v9541
    %9620 = vst.msk [vmem:[#allocation3 + $0x70] sm:$0xff] %vm3162, %v9542
    %9621 = vst.msk [vmem:[#allocation3 + $0x78] sm:$0xff] %vm3162, %v9543
    %9622 = vst.msk [vmem:[#allocation3 + $0x80] sm:$0xff] %vm3162, %v9544
    %9623 = vst.msk [vmem:[#allocation3 + $0x88] sm:$0xff] %vm3162, %v9545
    %9624 = vst.msk [vmem:[#allocation3 + $0x90] sm:$0xff] %vm3162, %v9546
    %9625 = vst.msk [vmem:[#allocation3 + $0x98] sm:$0xff] %vm3162, %v9547
    %9626 = vst.msk [vmem:[#allocation3 + $0xa0] sm:$0xff] %vm3162, %v9548
    %9627 = vst.msk [vmem:[#allocation3 + $0xa8] sm:$0xff] %vm3162, %v9549
    %9628 = vst.msk [vmem:[#allocation3 + $0xb0] sm:$0xff] %vm3162, %v9550
    %9629 = vst.msk [vmem:[#allocation3 + $0xb8] sm:$0xff] %vm3162, %v9551
    %9630 = vst.msk [vmem:[#allocation3 + $0xc0] sm:$0xff] %vm3162, %v9552
    %9631 = vst.msk [vmem:[#allocation3 + $0xc8] sm:$0xff] %vm3162, %v9553
    %9632 = vst.msk [vmem:[#allocation3 + $0xd0] sm:$0xff] %vm3162, %v9554
    %9633 = vst.msk [vmem:[#allocation3 + $0xd8] sm:$0xff] %vm3162, %v9555
    %9634 = vst.msk [vmem:[#allocation3 + $0xe0] sm:$0xff] %vm3162, %v9556
    %9635 = vst.msk [vmem:[#allocation3 + $0xe8] sm:$0xff] %vm3162, %v9557
    %9636 = vst.msk [vmem:[#allocation3 + $0xf0] sm:$0xff] %vm3162, %v9558
    %9637 = vst.msk [vmem:[#allocation3 + $0xf8] sm:$0xff] %vm3162, %v9559
    %9638 = vst.msk [vmem:[#allocation3 + $0x100] sm:$0xff] %vm3162, %v9560
    %9639 = vst.msk [vmem:[#allocation3 + $0x108] sm:$0xff] %vm3162, %v9561
    %9640 = vst.msk [vmem:[#allocation3 + $0x110] sm:$0xff] %vm3162, %v9562
    %9641 = vst.msk [vmem:[#allocation3 + $0x118] sm:$0xff] %vm3162, %v9563
    %9642 = vst.msk [vmem:[#allocation3 + $0x120] sm:$0xff] %vm3162, %v9564
    %9643 = vst.msk [vmem:[#allocation3 + $0x128] sm:$0xff] %vm3162, %v9565
    %9644 = vst.msk [vmem:[#allocation3 + $0x130] sm:$0xff] %vm3162, %v9566
    %9645 = vst.msk [vmem:[#allocation3 + $0x138] sm:$0xff] %vm3162, %v9567
    %9646 = vst.msk [vmem:[#allocation3 + $0x140] sm:$0xff] %vm3162, %v9568
    %9647 = vst.msk [vmem:[#allocation3 + $0x148] sm:$0xff] %vm3162, %v9569
    %9648 = vst.msk [vmem:[#allocation3 + $0x150] sm:$0xff] %vm3162, %v9570
    %9649 = vst.msk [vmem:[#allocation3 + $0x158] sm:$0xff] %vm3162, %v9571
    %9650 = vst.msk [vmem:[#allocation3 + $0x160] sm:$0xff] %vm3162, %v9572
    %9651 = vst.msk [vmem:[#allocation3 + $0x168] sm:$0xff] %vm3162, %v9573
    %9652 = vst.msk [vmem:[#allocation3 + $0x170] sm:$0xff] %vm3162, %v9574
    %9653 = vst.msk [vmem:[#allocation3 + $0x178] sm:$0xff] %vm3162, %v9575
    %9654 = vst.msk [vmem:[#allocation3 + $0x180] sm:$0xff] %vm3162, %v9576
    %9655 = vst.msk [vmem:[#allocation3 + $0x188] sm:$0xff] %vm3162, %v9577
    %9656 = vst.msk [vmem:[#allocation3 + $0x190] sm:$0xff] %vm3162, %v9578
    %9657 = vst.msk [vmem:[#allocation3 + $0x198] sm:$0xff] %vm3162, %v9579
    %9658 = vst.msk [vmem:[#allocation3 + $0x1a0] sm:$0xff] %vm3162, %v9580
    %9659 = vst.msk [vmem:[#allocation3 + $0x1a8] sm:$0xff] %vm3162, %v9581
    %9660 = vst.msk [vmem:[#allocation3 + $0x1b0] sm:$0xff] %vm3162, %v9582
    %9661 = vst.msk [vmem:[#allocation3 + $0x1b8] sm:$0xff] %vm3162, %v9583
    %9662 = vst.msk [vmem:[#allocation3 + $0x1c0] sm:$0xff] %vm3162, %v9584
    %9663 = vst.msk [vmem:[#allocation3 + $0x1c8] sm:$0xff] %vm3162, %v9585
    %9664 = vst.msk [vmem:[#allocation3 + $0x1d0] sm:$0xff] %vm3162, %v9586
    %9665 = vst.msk [vmem:[#allocation3 + $0x1d8] sm:$0xff] %vm3162, %v9587
    %9666 = vst.msk [vmem:[#allocation3 + $0x1e0] sm:$0xff] %vm3162, %v9588
    %9667 = vst.msk [vmem:[#allocation3 + $0x1e8] sm:$0xff] %vm3162, %v9589
    %9668 = vst.msk [vmem:[#allocation3 + $0x1f0] sm:$0xff] %vm3162, %v9590
    %9669 = vst.msk [vmem:[#allocation3 + $0x1f8] sm:$0xff] %vm3162, %v9591
    %9670 = vst.msk [vmem:[#allocation3 + $0x200] sm:$0xff] %vm3162, %v9592
    %9671 = vst.msk [vmem:[#allocation3 + $0x208] sm:$0xff] %vm3162, %v9593
    %9672 = vst.msk [vmem:[#allocation3 + $0x210] sm:$0xff] %vm3162, %v9594
    %9673 = vst.msk [vmem:[#allocation3 + $0x218] sm:$0xff] %vm3162, %v9595
    %9674 = vst.msk [vmem:[#allocation3 + $0x220] sm:$0xff] %vm3162, %v9596
    %9675 = vst.msk [vmem:[#allocation3 + $0x228] sm:$0xff] %vm3162, %v9597
    %9676 = vst.msk [vmem:[#allocation3 + $0x230] sm:$0xff] %vm3162, %v9598
    %9677 = vst.msk [vmem:[#allocation3 + $0x238] sm:$0xff] %vm3162, %v9599
    %9678 = vst.msk [vmem:[#allocation3 + $0x240] sm:$0xff] %vm3162, %v9600
    %9679 = vst.msk [vmem:[#allocation3 + $0x248] sm:$0xff] %vm3162, %v9601
    %9680 = vst.msk [vmem:[#allocation3 + $0x250] sm:$0xff] %vm3162, %v9602
    %9681 = vst.msk [vmem:[#allocation3 + $0x258] sm:$0xff] %vm3162, %v9603
    %9682 = vst.msk [vmem:[#allocation3 + $0x260] sm:$0xff] %vm3162, %v9604
    %9683 = vst.msk [vmem:[#allocation3 + $0x268] sm:$0xff] %vm3162, %v9605
    %v9684 = vld [vmem:[#allocation3] ss:$2 sm:$0xff]
    %v9685 = vld [vmem:[%s4705] ss:$2 sm:$0xf]
    %v9686 = vld [vmem:[%s4707] ss:$2 sm:$0xff]
    %v9687 = vld [vmem:[%s4709] ss:$2 sm:$0xf]
    %v9688 = vld [vmem:[%s4711] ss:$2 sm:$0xff]
    %v9689 = vld [vmem:[%s4713] ss:$2 sm:$0xf]
    %v9690 = vld [vmem:[%s4715] ss:$2 sm:$0xff]
    %v9691 = vld [vmem:[%s4717] ss:$2 sm:$0xf]
    %v9692 = vmax.f32 %v9684, %v9686
    %v9693 = vmax.f32 %v9685, %v9687
    %v9694 = vmax.f32 %v9688, %v9690
    %v9695 = vmax.f32 %v9689, %v9691
    %v9696 = vmax.f32 %v9692, %v9694
    %v9697 = vmax.f32 %v9693, %v9695
    %v9698 = vld [vmem:[%s4725] ss:$2 sm:$0xff]
    %v9699 = vld [vmem:[%s4727] ss:$2 sm:$0xf]
    %v9700 = vld [vmem:[%s4729] ss:$2 sm:$0xff]
    %v9701 = vld [vmem:[%s4731] ss:$2 sm:$0xf]
    %v9702 = vld [vmem:[%s4733] ss:$2 sm:$0xff]
    %v9703 = vld [vmem:[%s4735] ss:$2 sm:$0xf]
    %v9704 = vld [vmem:[%s4737] ss:$2 sm:$0xff]
    %v9705 = vld [vmem:[%s4739] ss:$2 sm:$0xf]
    %v9706 = vmax.f32 %v9698, %v9700
    %v9707 = vmax.f32 %v9699, %v9701
    %v9708 = vmax.f32 %v9702, %v9704
    %v9709 = vmax.f32 %v9703, %v9705
    %v9710 = vmax.f32 %v9706, %v9708
    %v9711 = vmax.f32 %v9707, %v9709
    %v9712 = vld [vmem:[%s4747] ss:$2 sm:$0xff]
    %v9713 = vld [vmem:[%s4749] ss:$2 sm:$0xf]
    %v9714 = vld [vmem:[%s4751] ss:$2 sm:$0xff]
    %v9715 = vld [vmem:[%s4753] ss:$2 sm:$0xf]
    %v9716 = vld [vmem:[%s4755] ss:$2 sm:$0xff]
    %v9717 = vld [vmem:[%s4757] ss:$2 sm:$0xf]
    %v9718 = vld [vmem:[%s4759] ss:$2 sm:$0xff]
    %v9719 = vld [vmem:[%s4761] ss:$2 sm:$0xf]
    %v9720 = vmax.f32 %v9712, %v9714
    %v9721 = vmax.f32 %v9713, %v9715
    %v9722 = vmax.f32 %v9716, %v9718
    %v9723 = vmax.f32 %v9717, %v9719
    %v9724 = vmax.f32 %v9720, %v9722
    %v9725 = vmax.f32 %v9721, %v9723
    %v9726 = vld [vmem:[%s4769] ss:$2 sm:$0xff]
    %v9727 = vld [vmem:[%s4771] ss:$2 sm:$0xf]
    %v9728 = vld [vmem:[%s4773] ss:$2 sm:$0xff]
    %v9729 = vld [vmem:[%s4775] ss:$2 sm:$0xf]
    %v9730 = vld [vmem:[%s4777] ss:$2 sm:$0xff]
    %v9731 = vld [vmem:[%s4779] ss:$2 sm:$0xf]
    %v9732 = vld [vmem:[%s4781] ss:$2 sm:$0xff]
    %v9733 = vld [vmem:[%s4783] ss:$2 sm:$0xf]
    %v9734 = vmax.f32 %v9726, %v9728
    %v9735 = vmax.f32 %v9727, %v9729
    %v9736 = vmax.f32 %v9730, %v9732
    %v9737 = vmax.f32 %v9731, %v9733
    %v9738 = vmax.f32 %v9734, %v9736
    %v9739 = vmax.f32 %v9735, %v9737
    %v9740 = vld [vmem:[%s4791] ss:$2 sm:$0xff]
    %v9741 = vld [vmem:[%s4793] ss:$2 sm:$0xf]
    %v9742 = vld [vmem:[%s4795] ss:$2 sm:$0xff]
    %v9743 = vld [vmem:[%s4797] ss:$2 sm:$0xf]
    %v9744 = vld [vmem:[%s4799] ss:$2 sm:$0xff]
    %v9745 = vld [vmem:[%s4801] ss:$2 sm:$0xf]
    %v9746 = vld [vmem:[%s4803] ss:$2 sm:$0xff]
    %v9747 = vld [vmem:[%s4805] ss:$2 sm:$0xf]
    %v9748 = vmax.f32 %v9740, %v9742
    %v9749 = vmax.f32 %v9741, %v9743
    %v9750 = vmax.f32 %v9744, %v9746
    %v9751 = vmax.f32 %v9745, %v9747
    %v9752 = vmax.f32 %v9748, %v9750
    %v9753 = vmax.f32 %v9749, %v9751
    %v9754 = vld [vmem:[%s4813] ss:$2 sm:$0xff]
    %v9755 = vld [vmem:[%s4815] ss:$2 sm:$0xf]
    %v9756 = vld [vmem:[%s4817] ss:$2 sm:$0xff]
    %v9757 = vld [vmem:[%s4819] ss:$2 sm:$0xf]
    %v9758 = vld [vmem:[%s4821] ss:$2 sm:$0xff]
    %v9759 = vld [vmem:[%s4823] ss:$2 sm:$0xf]
    %v9760 = vld [vmem:[%s4825] ss:$2 sm:$0xff]
    %v9761 = vld [vmem:[%s4827] ss:$2 sm:$0xf]
    %v9762 = vmax.f32 %v9754, %v9756
    %v9763 = vmax.f32 %v9755, %v9757
    %v9764 = vmax.f32 %v9758, %v9760
    %v9765 = vmax.f32 %v9759, %v9761
    %v9766 = vmax.f32 %v9762, %v9764
    %v9767 = vmax.f32 %v9763, %v9765
    %v9768 = vld [vmem:[%s4835] ss:$2 sm:$0xff]
    %v9769 = vld [vmem:[%s4837] ss:$2 sm:$0xf]
    %v9770 = vld [vmem:[%s4839] ss:$2 sm:$0xff]
    %v9771 = vld [vmem:[%s4841] ss:$2 sm:$0xf]
    %v9772 = vld [vmem:[%s4843] ss:$2 sm:$0xff]
    %v9773 = vld [vmem:[%s4845] ss:$2 sm:$0xf]
    %v9774 = vld [vmem:[%s4847] ss:$2 sm:$0xff]
    %v9775 = vld [vmem:[%s4849] ss:$2 sm:$0xf]
    %v9776 = vmax.f32 %v9768, %v9770
    %v9777 = vmax.f32 %v9769, %v9771
    %v9778 = vmax.f32 %v9772, %v9774
    %v9779 = vmax.f32 %v9773, %v9775
    %v9780 = vmax.f32 %v9776, %v9778
    %v9781 = vmax.f32 %v9777, %v9779
    %v9782 = vld [vmem:[%s4857] ss:$2 sm:$0xff]
    %v9783 = vld [vmem:[%s4859] ss:$2 sm:$0xf]
    %v9784 = vld [vmem:[%s4861] ss:$2 sm:$0xff]
    %v9785 = vld [vmem:[%s4863] ss:$2 sm:$0xf]
    %v9786 = vld [vmem:[%s4865] ss:$2 sm:$0xff]
    %v9787 = vld [vmem:[%s4867] ss:$2 sm:$0xf]
    %v9788 = vld [vmem:[%s4869] ss:$2 sm:$0xff]
    %v9789 = vld [vmem:[%s4871] ss:$2 sm:$0xf]
    %v9790 = vmax.f32 %v9782, %v9784
    %v9791 = vmax.f32 %v9783, %v9785
    %v9792 = vmax.f32 %v9786, %v9788
    %v9793 = vmax.f32 %v9787, %v9789
    %v9794 = vmax.f32 %v9790, %v9792
    %v9795 = vmax.f32 %v9791, %v9793
    %v9796 = vld [vmem:[%s4879] ss:$2 sm:$0xff]
    %v9797 = vld [vmem:[%s4881] ss:$2 sm:$0xf]
    %v9798 = vld [vmem:[%s4883] ss:$2 sm:$0xff]
    %v9799 = vld [vmem:[%s4885] ss:$2 sm:$0xf]
    %v9800 = vld [vmem:[%s4887] ss:$2 sm:$0xff]
    %v9801 = vld [vmem:[%s4889] ss:$2 sm:$0xf]
    %v9802 = vld [vmem:[%s4891] ss:$2 sm:$0xff]
    %v9803 = vld [vmem:[%s4893] ss:$2 sm:$0xf]
    %v9804 = vmax.f32 %v9796, %v9798
    %v9805 = vmax.f32 %v9797, %v9799
    %v9806 = vmax.f32 %v9800, %v9802
    %v9807 = vmax.f32 %v9801, %v9803
    %v9808 = vmax.f32 %v9804, %v9806
    %v9809 = vmax.f32 %v9805, %v9807
    %v9810 = vld [vmem:[%s4901] ss:$2 sm:$0xff]
    %v9811 = vld [vmem:[%s4903] ss:$2 sm:$0xf]
    %v9812 = vld [vmem:[%s4905] ss:$2 sm:$0xff]
    %v9813 = vld [vmem:[%s4907] ss:$2 sm:$0xf]
    %v9814 = vld [vmem:[%s4909] ss:$2 sm:$0xff]
    %v9815 = vld [vmem:[%s4911] ss:$2 sm:$0xf]
    %v9816 = vld [vmem:[%s4913] ss:$2 sm:$0xff]
    %v9817 = vld [vmem:[%s4915] ss:$2 sm:$0xf]
    %v9818 = vmax.f32 %v9810, %v9812
    %v9819 = vmax.f32 %v9811, %v9813
    %v9820 = vmax.f32 %v9814, %v9816
    %v9821 = vmax.f32 %v9815, %v9817
    %v9822 = vmax.f32 %v9818, %v9820
    %v9823 = vmax.f32 %v9819, %v9821
    %v9824 = vld [vmem:[%s4923] ss:$2 sm:$0xff]
    %v9825 = vld [vmem:[%s4925] ss:$2 sm:$0xf]
    %v9826 = vld [vmem:[%s4927] ss:$2 sm:$0xff]
    %v9827 = vld [vmem:[%s4929] ss:$2 sm:$0xf]
    %v9828 = vld [vmem:[%s4931] ss:$2 sm:$0xff]
    %v9829 = vld [vmem:[%s4933] ss:$2 sm:$0xf]
    %v9830 = vld [vmem:[%s4935] ss:$2 sm:$0xff]
    %v9831 = vld [vmem:[%s4937] ss:$2 sm:$0xf]
    %v9832 = vmax.f32 %v9824, %v9826
    %v9833 = vmax.f32 %v9825, %v9827
    %v9834 = vmax.f32 %v9828, %v9830
    %v9835 = vmax.f32 %v9829, %v9831
    %v9836 = vmax.f32 %v9832, %v9834
    %v9837 = vmax.f32 %v9833, %v9835
    %v9838 = vld [vmem:[%s4945] ss:$2 sm:$0xff]
    %v9839 = vld [vmem:[%s4947] ss:$2 sm:$0xf]
    %v9840 = vld [vmem:[%s4949] ss:$2 sm:$0xff]
    %v9841 = vld [vmem:[%s4951] ss:$2 sm:$0xf]
    %v9842 = vld [vmem:[%s4953] ss:$2 sm:$0xff]
    %v9843 = vld [vmem:[%s4955] ss:$2 sm:$0xf]
    %v9844 = vld [vmem:[%s4957] ss:$2 sm:$0xff]
    %v9845 = vld [vmem:[%s4959] ss:$2 sm:$0xf]
    %v9846 = vmax.f32 %v9838, %v9840
    %v9847 = vmax.f32 %v9839, %v9841
    %v9848 = vmax.f32 %v9842, %v9844
    %v9849 = vmax.f32 %v9843, %v9845
    %v9850 = vmax.f32 %v9846, %v9848
    %v9851 = vmax.f32 %v9847, %v9849
    %v9854 = vrot.slane %v9710, 4
    %v9855 = vrot.slane %v9711, 4
    %v9856 = vsel %vm4969, %v9854, %v9855
    %v9861 = vrot.slane %v9738, 4
    %v9862 = vrot.slane %v9739, 4
    %v9863 = vsel %vm4969, %v9861, %v9862
    %v9868 = vrot.slane %v9766, 4
    %v9869 = vrot.slane %v9767, 4
    %v9870 = vsel %vm4969, %v9868, %v9869
    %v9875 = vrot.slane %v9794, 4
    %v9876 = vrot.slane %v9795, 4
    %v9877 = vsel %vm4969, %v9875, %v9876
    %v9882 = vrot.slane %v9822, 4
    %v9883 = vrot.slane %v9823, 4
    %v9884 = vsel %vm4969, %v9882, %v9883
    %v9889 = vrot.slane %v9850, 4
    %v9890 = vrot.slane %v9851, 4
    %v9891 = vsel %vm4969, %v9889, %v9890
    %v9894 = vsel %vm4969, %v9697, %v9854
    %v9895 = vsel %vm4969, %v9725, %v9861
    %v9896 = vsel %vm4969, %v9753, %v9868
    %v9897 = vsel %vm4969, %v9781, %v9875
    %v9898 = vsel %vm4969, %v9809, %v9882
    %v9899 = vsel %vm4969, %v9837, %v9889
    %v9900 = vpack.c.bf16 %v9696, %v9696
    %v9901 = vpack.c.bf16 %v9894, %v9894
    %v9902 = vpack.c.bf16 %v9856, %v9856
    %v9903 = vpack.c.bf16 %v9724, %v9724
    %v9904 = vpack.c.bf16 %v9895, %v9895
    %v9905 = vpack.c.bf16 %v9863, %v9863
    %v9906 = vpack.c.bf16 %v9752, %v9752
    %v9907 = vpack.c.bf16 %v9896, %v9896
    %v9908 = vpack.c.bf16 %v9870, %v9870
    %v9909 = vpack.c.bf16 %v9780, %v9780
    %v9910 = vpack.c.bf16 %v9897, %v9897
    %v9911 = vpack.c.bf16 %v9877, %v9877
    %v9912 = vpack.c.bf16 %v9808, %v9808
    %v9913 = vpack.c.bf16 %v9898, %v9898
    %v9914 = vpack.c.bf16 %v9884, %v9884
    %v9915 = vpack.c.bf16 %v9836, %v9836
    %v9916 = vpack.c.bf16 %v9899, %v9899
    %v9917 = vpack.c.bf16 %v9891, %v9891
    %s9918 = scalar_lea.vmem %s5, 72
    %9919 = vst.msk [vmem:[%s9918] sm:$0xf] %vm5034, %v9900
    %9920 = vst.msk [vmem:[%s9918 + $0x4] sm:$0xf] %vm5034, %v9901
    %9921 = vst.msk [vmem:[%s9918 + $0x8] sm:$0xf] %vm5034, %v9902
    %9922 = vst.msk [vmem:[%s9918 + $0xc] sm:$0xf] %vm5034, %v9903
    %9923 = vst.msk [vmem:[%s9918 + $0x10] sm:$0xf] %vm5034, %v9904
    %9924 = vst.msk [vmem:[%s9918 + $0x14] sm:$0xf] %vm5034, %v9905
    %9925 = vst.msk [vmem:[%s9918 + $0x18] sm:$0xf] %vm5034, %v9906
    %9926 = vst.msk [vmem:[%s9918 + $0x1c] sm:$0xf] %vm5034, %v9907
    %9927 = vst.msk [vmem:[%s9918 + $0x20] sm:$0xf] %vm5034, %v9908
    %9928 = vst.msk [vmem:[%s9918 + $0x24] sm:$0xf] %vm5034, %v9909
    %9929 = vst.msk [vmem:[%s9918 + $0x28] sm:$0xf] %vm5034, %v9910
    %9930 = vst.msk [vmem:[%s9918 + $0x2c] sm:$0xf] %vm5034, %v9911
    %9931 = vst.msk [vmem:[%s9918 + $0x30] sm:$0xf] %vm5034, %v9912
    %9932 = vst.msk [vmem:[%s9918 + $0x34] sm:$0xf] %vm5034, %v9913
    %9933 = vst.msk [vmem:[%s9918 + $0x38] sm:$0xf] %vm5034, %v9914
    %9934 = vst.msk [vmem:[%s9918 + $0x3c] sm:$0xf] %vm5034, %v9915
    %9935 = vst.msk [vmem:[%s9918 + $0x40] sm:$0xf] %vm5034, %v9916
    %9936 = vst.msk [vmem:[%s9918 + $0x44] sm:$0xf] %vm5034, %v9917
    // Predicated region
    $region34: #{simple_cnn_forward.2} parent=1 // pred_check
      _
    $region35: #{simple_cnn_forward.2} parent=1 // pred_check_branch
      %9938 = sbr.rel (0) target = $region37
    $region36: #{simple_cnn_forward.2} parent=1 // pred_region
      _
    $region37: #{simple_cnn_forward.2} parent=1 // pred_fallthru
      _
    // Predicated region
    $region38: #{simple_cnn_forward.2} parent=1 // pred_check
      _
    $region39: #{simple_cnn_forward.2} parent=1 // pred_check_branch
      %9940 = sbr.rel (0) target = $region41
    $region40: #{simple_cnn_forward.2} parent=1 // pred_region
      _
    $region41: #{simple_cnn_forward.2} parent=1 // pred_fallthru
      _
    %9941 = vsyncpa [#allocation5], 1
    %9942 = vsyncpa [#allocation7], 1

</llo_original>
